<compile_context>
chip_gen: v7x
topology: tpu7x:2x2x1
jax: 0.10.0
libtpu: 0.0.40
codegen_flags: <defaults>
</compile_context>

<pallas_src>
import functools

import jax
import jax.numpy as jnp
from jax import lax
from jax.experimental import pallas as pl
from jax.experimental.pallas import tpu as pltpu

LRELU_SLOPE = 0.2
BN_EPS = 1e-5
KSIZE = 4
PADW = 1
IN_CPAD = 8        # channel padding of the raw network inputs (3 -> 8, 1 -> 8)
LANE = 128
VMEM_LIMIT = 48 * 1024 * 1024   # fits v7x's 64 MiB VMEM with headroom


def _round_up(x, m):
    return ((x + m - 1) // m) * m


def _pick_tile(dim, candidates=(512, 256, 128)):
    for c in candidates:
        if dim % c == 0:
            return c
    return dim


def _cpad(c):
    return max(LANE, _round_up(c, LANE))


# ---------------------------------------------------------------------------
# Kernel 1: tiled conv-as-matmul with fused spectral-norm scale, bias and
#           (optionally) LeakyReLU epilogue.
# ---------------------------------------------------------------------------
def _matmul_fused_kernel(scale_ref, a_ref, w_ref, b_ref, o_ref, acc_ref, *, act):
    k = pl.program_id(2)

    @pl.when(k == 0)
    def _init():
        acc_ref[...] = jnp.zeros_like(acc_ref)

    acc_ref[...] += jnp.dot(a_ref[...], w_ref[...],
                            preferred_element_type=jnp.float32)

    @pl.when(k == pl.num_programs(2) - 1)
    def _finalize():
        y = acc_ref[...] * scale_ref[0, 0] + b_ref[...]
        if act == "lrelu":
            y = jnp.where(y >= 0.0, y, LRELU_SLOPE * y)
        o_ref[...] = y.astype(o_ref.dtype)


def conv_matmul(patches, wmat, bias, inv_sigma, *, act, out_dtype):
    """(M,K)bf16 @ (K,N)bf16 * inv_sigma + bias [+ LeakyReLU] -> (Mp,N)."""
    M, K = patches.shape
    K2, Np = wmat.shape
    assert K == K2 and K % LANE == 0 and Np % LANE == 0
    tm = 256 if M > 256 else _round_up(M, 16)
    Mp = _round_up(M, tm)
    if Mp != M:
        patches = jnp.pad(patches, ((0, Mp - M), (0, 0)))
    tk = _pick_tile(K)
    tn = _pick_tile(Np)
    grid = (Mp // tm, Np // tn, K // tk)

    out = pl.pallas_call(
        functools.partial(_matmul_fused_kernel, act=act),
        out_shape=jax.ShapeDtypeStruct((Mp, Np), out_dtype),
        grid=grid,
        in_specs=[
            pl.BlockSpec(memory_space=pltpu.MemorySpace.SMEM),   # 1/sigma scalar
            pl.BlockSpec((tm, tk), lambda i, j, k: (i, k)),      # im2col patches
            pl.BlockSpec((tk, tn), lambda i, j, k: (k, j)),      # packed weights
            pl.BlockSpec((1, tn), lambda i, j, k: (0, j)),       # bias row
        ],
        out_specs=pl.BlockSpec((tm, tn), lambda i, j, k: (i, j)),
        scratch_shapes=[pltpu.VMEM((tm, tn), jnp.float32)],
        compiler_params=pltpu.CompilerParams(
            dimension_semantics=("parallel", "parallel", "arbitrary"),
            vmem_limit_bytes=VMEM_LIMIT),
    )(inv_sigma, patches, wmat, bias)
    return out


# ---------------------------------------------------------------------------
# Kernel 2: BatchNorm2d batch statistics (per-channel sum / sum-of-squares,
#           accumulated across the row grid axis).
# ---------------------------------------------------------------------------
def _bn_stats_kernel(y_ref, sum_ref, sq_ref, *, inv_rows):
    i = pl.program_id(1)

    @pl.when(i == 0)
    def _init():
        sum_ref[...] = jnp.zeros_like(sum_ref)
        sq_ref[...] = jnp.zeros_like(sq_ref)

    y = y_ref[...].astype(jnp.float32)
    sum_ref[...] += jnp.sum(y, axis=0, keepdims=True)
    sq_ref[...] += jnp.sum(y * y, axis=0, keepdims=True)

    @pl.when(i == pl.num_programs(1) - 1)
    def _finalize():
        mean = sum_ref[...] * inv_rows
        var = jnp.maximum(sq_ref[...] * inv_rows - mean * mean, 0.0)
        sum_ref[...] = mean
        sq_ref[...] = var


def batch_norm_stats(y, n_rows):
    Mp, Np = y.shape
    tm = Mp if Mp <= 512 else _pick_tile(Mp, (256, 128))
    tn = _pick_tile(Np)
    grid = (Np // tn, Mp // tm)          # channel tiles outer, row tiles inner
    mean, var = pl.pallas_call(
        functools.partial(_bn_stats_kernel, inv_rows=1.0 / float(n_rows)),
        out_shape=(jax.ShapeDtypeStruct((1, Np), jnp.float32),
                   jax.ShapeDtypeStruct((1, Np), jnp.float32)),
        grid=grid,
        in_specs=[pl.BlockSpec((tm, tn), lambda j, i: (i, j))],
        out_specs=(pl.BlockSpec((1, tn), lambda j, i: (0, j)),
                   pl.BlockSpec((1, tn), lambda j, i: (0, j))),
        compiler_params=pltpu.CompilerParams(
            dimension_semantics=("parallel", "arbitrary"),
            vmem_limit_bytes=VMEM_LIMIT),
    )(y)
    return mean, var


# ---------------------------------------------------------------------------
# Kernel 3: fused BatchNorm scale/shift + LeakyReLU apply.
# ---------------------------------------------------------------------------
def _bn_apply_lrelu_kernel(y_ref, mean_ref, var_ref, g_ref, b_ref, o_ref):
    scale = g_ref[...] * lax.rsqrt(var_ref[...] + BN_EPS)
    shift = b_ref[...] - mean_ref[...] * scale
    y = y_ref[...].astype(jnp.float32) * scale + shift
    o_ref[...] = jnp.where(y >= 0.0, y, LRELU_SLOPE * y).astype(o_ref.dtype)


def batch_norm_lrelu(y, mean, var, gamma, beta, *, out_dtype):
    Mp, Np = y.shape
    tm = Mp if Mp <= 512 else _pick_tile(Mp, (256, 128))
    tn = _pick_tile(Np)
    grid = (Mp // tm, Np // tn)
    return pl.pallas_call(
        _bn_apply_lrelu_kernel,
        out_shape=jax.ShapeDtypeStruct((Mp, Np), out_dtype),
        grid=grid,
        in_specs=[
            pl.BlockSpec((tm, tn), lambda i, j: (i, j)),
            pl.BlockSpec((1, tn), lambda i, j: (0, j)),
            pl.BlockSpec((1, tn), lambda i, j: (0, j)),
            pl.BlockSpec((1, tn), lambda i, j: (0, j)),
            pl.BlockSpec((1, tn), lambda i, j: (0, j)),
        ],
        out_specs=pl.BlockSpec((tm, tn), lambda i, j: (i, j)),
        compiler_params=pltpu.CompilerParams(
            dimension_semantics=("parallel", "parallel"),
            vmem_limit_bytes=VMEM_LIMIT),
    )(y, mean, var, gamma, beta)


# ---------------------------------------------------------------------------
# JAX glue: NHWC tap-stacking (im2col), spectral-norm sigma, params.
# ---------------------------------------------------------------------------
def _im2col_nhwc(x, k, stride, pad):
    """(N,H,W,C) -> (N*Ho*Wo, k*k*C); K ordering = tap-major, channel-minor."""
    N, H, W, C = x.shape
    if pad:
        x = jnp.pad(x, ((0, 0), (pad, pad), (pad, pad), (0, 0)))
    Hp, Wp = H + 2 * pad, W + 2 * pad
    Ho = (Hp - k) // stride + 1
    Wo = (Wp - k) // stride + 1
    taps = []
    for i in range(k):
        for j in range(k):
            taps.append(x[:, i:i + stride * (Ho - 1) + 1:stride,
                          j:j + stride * (Wo - 1) + 1:stride, :])
    p = jnp.stack(taps, axis=3)                    # (N, Ho, Wo, k*k, C)
    return p.reshape(N * Ho * Wo, k * k * C), Ho, Wo


def _l2normalize(v, eps=1e-12):
    return v / (jnp.linalg.norm(v) + eps)


def _spectral_inv_sigma(w2d, u, v, power_iterations=1):
    # One power iteration on the tiny (Cout, Cin*k*k) matrix, like SpectralNorm.
    for _ in range(power_iterations):
        v = _l2normalize(jnp.matmul(w2d.T, u))
        u = _l2normalize(jnp.matmul(w2d, v))
    sigma = jnp.dot(u, jnp.matmul(w2d, v))
    return (1.0 / sigma).reshape(1, 1).astype(jnp.float32)


def _build_wmat(w, cin_pad, cout_pad, cin_splits):
    """OIHW torch weight -> (k*k*cin_pad, cout_pad) bf16, built once at init."""
    Cout, Cin, kh, kw = w.shape
    wtap = jnp.transpose(w, (2, 3, 1, 0))          # (kh, kw, Cin, Cout)
    buf = jnp.zeros((kh, kw, cin_pad, cout_pad), jnp.float32)
    for src, length, dst in cin_splits:
        buf = buf.at[:, :, dst:dst + length, :Cout].set(
            wtap[:, :, src:src + length, :])
    return buf.reshape(kh * kw * cin_pad, cout_pad).astype(jnp.bfloat16)


def _make_conv_layer(key, cin, cout, cin_pad, cout_pad, *, use_bias, bn,
                     cin_splits=None):
    kw_, kb_, ku_, kv_ = jax.random.split(key, 4)
    w = jax.random.normal(kw_, (cout, cin, KSIZE, KSIZE), jnp.float32) * 0.1
    # A conv bias feeding train-mode BatchNorm cancels exactly -> drop it.
    if use_bias and not bn:
        b = jax.random.normal(kb_, (cout,), jnp.float32) * 0.1
    else:
        b = jnp.zeros((cout,), jnp.float32)
    if cin_splits is None:
        cin_splits = [(0, cin, 0)]
    layer = dict(
        wmat=_build_wmat(w, cin_pad, cout_pad, cin_splits),
        bias=jnp.zeros((1, cout_pad), jnp.float32).at[0, :cout].set(b),
        w2d=w.reshape(cout, cin * KSIZE * KSIZE),
        u=_l2normalize(jax.random.normal(ku_, (cout,), jnp.float32)),
        v=_l2normalize(jax.random.normal(kv_, (cin * KSIZE * KSIZE,), jnp.float32)),
    )
    if bn:
        layer["gamma"] = jnp.zeros((1, cout_pad), jnp.float32).at[0, :cout].set(1.0)
        layer["beta"] = jnp.zeros((1, cout_pad), jnp.float32)
    return layer


def init_discriminator(key, *, input_nc=3, ndf=16, n_layers=3, num_masks=2):
    keys = iter(jax.random.split(key, 4 * n_layers + 8))

    def make_extractor(in_ch):
        layers, cfg = [], []
        layers.append(_make_conv_layer(next(keys), in_ch, ndf, IN_CPAD,
                                       _cpad(ndf), use_bias=True, bn=False))
        cfg.append(dict(stride=2, bn=False, act="lrelu", out_dtype=jnp.bfloat16))
        nf_mult = 1
        for n in range(1, n_layers):
            nf_prev, nf_mult = nf_mult, min(2 ** n, 8)
            layers.append(_make_conv_layer(
                next(keys), ndf * nf_prev, ndf * nf_mult,
                _cpad(ndf * nf_prev), _cpad(ndf * nf_mult),
                use_bias=False, bn=True))
            cfg.append(dict(stride=2, bn=True, act="lrelu", out_dtype=jnp.bfloat16))
        return layers, cfg

    img_layers, img_cfg = make_extractor(input_nc)
    mask_layers, mask_cfg = make_extractor(1)

    ndf2 = 2 * ndf
    nf_prev = min(2 ** (n_layers - 1), 8)
    nf_mult = min(2 ** n_layers, 8)
    feat_c = ndf * nf_prev                 # real channels of each feature map
    feat_cpad = _cpad(feat_c)
    cls_in, cls_mid = ndf2 * nf_prev, ndf2 * nf_mult
    cls0 = _make_conv_layer(
        next(keys), cls_in, cls_mid, 2 * feat_cpad, _cpad(cls_mid),
        use_bias=True, bn=True,
        cin_splits=[(0, feat_c, 0), (feat_c, feat_c, feat_cpad)])
    cls1 = _make_conv_layer(next(keys), cls_mid, 1, _cpad(cls_mid), _cpad(1),
                            use_bias=True, bn=False)

    params = dict(image_encoder=img_layers, mask_encoder=mask_layers,
                  classifier=[cls0, cls1])
    config = dict(
        image_encoder=img_cfg, mask_encoder=mask_cfg,
        classifier=[dict(stride=1, bn=True, act="lrelu", out_dtype=jnp.bfloat16),
                    dict(stride=1, bn=False, act=None, out_dtype=jnp.float32)],
        input_nc=input_nc, num_masks=num_masks)
    return params, config


# ---------------------------------------------------------------------------
# Forward
# ---------------------------------------------------------------------------
def apply_conv_block(x, layer, cfg):
    """x: (N, H, W, Cpad) bf16 channels-last lane-padded. Same layout out."""
    N = x.shape[0]
    patches, Ho, Wo = _im2col_nhwc(x, KSIZE, cfg["stride"], PADW)
    M = N * Ho * Wo
    inv_sigma = _spectral_inv_sigma(layer["w2d"], layer["u"], layer["v"])
    if cfg["bn"]:
        y = conv_matmul(patches, layer["wmat"], layer["bias"], inv_sigma,
                        act=None, out_dtype=jnp.bfloat16)
        mean, var = batch_norm_stats(y, M)
        y = batch_norm_lrelu(y, mean, var, layer["gamma"], layer["beta"],
                             out_dtype=cfg["out_dtype"])
    else:
        y = conv_matmul(patches, layer["wmat"], layer["bias"], inv_sigma,
                        act=cfg["act"], out_dtype=cfg["out_dtype"])
    return y[:M].reshape(N, Ho, Wo, -1)


def _to_padded_nhwc(x_nchw, cpad):
    x = jnp.transpose(x_nchw, (0, 2, 3, 1))
    c = x.shape[-1]
    if c < cpad:
        x = jnp.pad(x, ((0, 0), (0, 0), (0, 0), (0, cpad - c)))
    return x.astype(jnp.bfloat16)


def discriminator_forward(params, image_masks, *, config):
    input_nc = config["input_nc"]
    image = image_masks[:, :input_nc]
    masks = image_masks[:, input_nc:]

    # mask_existence = masks.mean(0).mean(-1).mean(-1); fallback to mask 0
    exist = jnp.mean(masks, axis=(0, 2, 3))
    exist = jnp.where(jnp.sum(exist) <= 0.0, exist.at[0].set(1.0), exist)

    def run_extractor(layers, cfgs, x):
        for layer, cfg in zip(layers, cfgs):
            x = apply_conv_block(x, layer, cfg)
        return x

    feat_img = run_extractor(params["image_encoder"], config["image_encoder"],
                             _to_padded_nhwc(image, IN_CPAD))

    feat_masks = jnp.zeros_like(feat_img)
    for i in range(config["num_masks"]):
        m = _to_padded_nhwc(masks[:, i:i + 1], IN_CPAD)
        fm = run_extractor(params["mask_encoder"], config["mask_encoder"], m)
        gate = (exist[i] > 0.0).astype(fm.dtype)
        feat_masks = feat_masks + gate * fm

    feat = jnp.concatenate([feat_img, feat_masks], axis=-1)
    y = apply_conv_block(feat, params["classifier"][0], config["classifier"][0])
    y = apply_conv_block(y, params["classifier"][1], config["classifier"][1])
    # real output channel is channel 0 of the lane-padded classifier output
    return jnp.transpose(y[..., :1], (0, 3, 1, 2)).astype(jnp.float32)


# ---------------------------------------------------------------------------
if __name__ == "__main__":
    input_nc, ndf, n_layers, num_masks = 3, 16, 3, 2
    batch, H, W = 2, 64, 64

    key = jax.random.PRNGKey(0)
    k_param, k_img, k_mask = jax.random.split(key, 3)
    params, config = init_discriminator(
        k_param, input_nc=input_nc, ndf=ndf, n_layers=n_layers,
        num_masks=num_masks)

    image = jax.random.normal(k_img, (batch, input_nc, H, W), jnp.float32)
    masks = jax.random.uniform(k_mask, (batch, num_masks, H, W), jnp.float32)
    image_masks = jnp.concatenate([image, masks], axis=1)

    fwd = jax.jit(functools.partial(discriminator_forward, config=config))
    out = jax.block_until_ready(fwd(params, image_masks))

    s = H // (2 ** n_layers) - 2   # two k=4,s=1,p=1 classifier convs: -1 each
    assert out.shape == (batch, 1, s, s), out.shape
    assert bool(jnp.all(jnp.isfinite(out)))
    print("KERNEL_OK")
</pallas_src>

<mosaic_0001>
module attributes {stable_mosaic.version = 11 : i64} {
  func.func @_matmul_fused_kernel(%arg0: i32, %arg1: i32, %arg2: i32, %arg3: memref<1x1xf32, #tpu.memory_space<smem>>, %arg4: memref<256x128xbf16, #tpu.memory_space<vmem>>, %arg5: memref<128x128xbf16, #tpu.memory_space<vmem>>, %arg6: memref<1x128xf32, #tpu.memory_space<vmem>>, %arg7: memref<256x128xbf16, #tpu.memory_space<vmem>>, %arg8: memref<256x128xf32, #tpu.memory_space<vmem>>) attributes {dimension_semantics = [#tpu.dimension_semantics<parallel>, #tpu.dimension_semantics<parallel>, #tpu.dimension_semantics<arbitrary>], iteration_bounds = array<i64: 8, 1, 1>, scalar_prefetch = 0 : i64, scratch_operands = 1 : i64, tpu.core_type = #tpu.core_type<tc>, window_params = [{transform_indices = @transform_0, window_bounds = array<i64: 1, 1>}, {transform_indices = @transform_1, window_bounds = array<i64: 256, 128>}, {transform_indices = @transform_2, window_bounds = array<i64: 128, 128>}, {transform_indices = @transform_3, window_bounds = array<i64: 1, 128>}, {transform_indices = @transform_4, window_bounds = array<i64: 256, 128>}]} {
    %c0_i32 = arith.constant 0 : i32
    %0 = arith.cmpi eq, %arg2, %c0_i32 : i32
    %1 = arith.extui %0 : i1 to i32
    %c0_i32_0 = arith.constant 0 : i32
    %2 = arith.cmpi ne, %1, %c0_i32_0 : i32
    scf.if %2 {
      %cst_10 = arith.constant 0.000000e+00 : f32
      %12 = vector.broadcast %cst_10 : f32 to vector<256x128xf32>
      %c0_11 = arith.constant 0 : index
      %c0_12 = arith.constant 0 : index
      %13 = vector.load %arg8[%c0_11, %c0_12] : memref<256x128xf32, #tpu.memory_space<vmem>>, vector<256x128xf32>
      tpu.vector_store %arg8[%c0_11, %c0_12], %12 {strides = array<i32>} : memref<256x128xf32, #tpu.memory_space<vmem>>, vector<256x128xf32>,
    } else {
    }
    %c0 = arith.constant 0 : index
    %c0_1 = arith.constant 0 : index
    %3 = vector.load %arg8[%c0, %c0_1] : memref<256x128xf32, #tpu.memory_space<vmem>>, vector<256x128xf32>
    %c0_2 = arith.constant 0 : index
    %c0_3 = arith.constant 0 : index
    %4 = vector.load %arg4[%c0_2, %c0_3] : memref<256x128xbf16, #tpu.memory_space<vmem>>, vector<256x128xbf16>
    %c0_4 = arith.constant 0 : index
    %c0_5 = arith.constant 0 : index
    %5 = vector.load %arg5[%c0_4, %c0_5] : memref<128x128xbf16, #tpu.memory_space<vmem>>, vector<128x128xbf16>
    %cst = arith.constant dense<0.000000e+00> : vector<256x128xf32>
    %6 = tpu.matmul %4, %5, %cst {dimension_numbers = #tpu.dot_dimension_numbers<[1], [0], [0], [1], [0, 0, 1, 1], [], []>} : vector<256x128xbf16>, vector<128x128xbf16>, vector<256x128xf32> -> vector<256x128xf32>
    %7 = arith.addf %3, %6 : vector<256x128xf32>
    %c0_6 = arith.constant 0 : index
    %c0_7 = arith.constant 0 : index
    %8 = vector.load %arg8[%c0_6, %c0_7] : memref<256x128xf32, #tpu.memory_space<vmem>>, vector<256x128xf32>
    tpu.vector_store %arg8[%c0_6, %c0_7], %7 {strides = array<i32>} : memref<256x128xf32, #tpu.memory_space<vmem>>, vector<256x128xf32>,
    %c0_i32_8 = arith.constant 0 : i32
    %9 = arith.cmpi eq, %arg2, %c0_i32_8 : i32
    %10 = arith.extui %9 : i1 to i32
    %c0_i32_9 = arith.constant 0 : i32
    %11 = arith.cmpi ne, %10, %c0_i32_9 : i32
    scf.if %11 {
      %c0_10 = arith.constant 0 : index
      %c0_11 = arith.constant 0 : index
      %12 = vector.load %arg8[%c0_10, %c0_11] : memref<256x128xf32, #tpu.memory_space<vmem>>, vector<256x128xf32>
      %c0_12 = arith.constant 0 : index
      %c0_13 = arith.constant 0 : index
      %13 = memref.load %arg3[%c0_12, %c0_13] : memref<1x1xf32, #tpu.memory_space<smem>>
      %14 = vector.broadcast %13 : f32 to vector<256x128xf32>
      %15 = arith.mulf %12, %14 : vector<256x128xf32>
      %c0_14 = arith.constant 0 : index
      %c0_15 = arith.constant 0 : index
      %16 = vector.load %arg6[%c0_14, %c0_15] : memref<1x128xf32, #tpu.memory_space<vmem>>, vector<1x128xf32>
      %17 = vector.broadcast %16 : vector<1x128xf32> to vector<256x128xf32>
      %18 = arith.addf %15, %17 : vector<256x128xf32>
      %cst_16 = arith.constant 0.000000e+00 : f32
      %19 = vector.broadcast %cst_16 : f32 to vector<256x128xf32>
      %20 = arith.cmpf oge, %18, %19 : vector<256x128xf32>
      %cst_17 = arith.constant 2.000000e-01 : f32
      %21 = vector.broadcast %cst_17 : f32 to vector<256x128xf32>
      %22 = arith.mulf %21, %18 : vector<256x128xf32>
      %23 = arith.select %20, %18, %22 : vector<256x128xi1>, vector<256x128xf32>
      %24 = arith.truncf %23 : vector<256x128xf32> to vector<256x128xbf16>
      %c0_18 = arith.constant 0 : index
      %c0_19 = arith.constant 0 : index
      %25 = vector.load %arg7[%c0_18, %c0_19] : memref<256x128xbf16, #tpu.memory_space<vmem>>, vector<256x128xbf16>
      tpu.vector_store %arg7[%c0_18, %c0_19], %24 {strides = array<i32>} : memref<256x128xbf16, #tpu.memory_space<vmem>>, vector<256x128xbf16>,
    } else {
    }
    return
  }
  func.func @transform_0(%arg0: i32, %arg1: i32, %arg2: i32) -> (i32, i32) {
    %c0_i32 = arith.constant 0 : i32
    %c0_i32_0 = arith.constant 0 : i32
    %c0_i32_1 = arith.constant 0 : i32
    return %c0_i32, %c0_i32_0 : i32, i32
  }
  func.func @transform_1(%arg0: i32, %arg1: i32, %arg2: i32) -> (i32, i32) {
    %c0_i32 = arith.constant 0 : i32
    return %arg0, %arg2 : i32, i32
  }
  func.func @transform_2(%arg0: i32, %arg1: i32, %arg2: i32) -> (i32, i32) {
    %c0_i32 = arith.constant 0 : i32
    return %arg2, %arg1 : i32, i32
  }
  func.func @transform_3(%arg0: i32, %arg1: i32, %arg2: i32) -> (i32, i32) {
    %c0_i32 = arith.constant 0 : i32
    %c0_i32_0 = arith.constant 0 : i32
    return %c0_i32, %arg1 : i32, i32
  }
  func.func @transform_4(%arg0: i32, %arg1: i32, %arg2: i32) -> (i32, i32) {
    %c0_i32 = arith.constant 0 : i32
    return %arg0, %arg1 : i32, i32
  }
}

module attributes {stable_mosaic.version = 11 : i64} {
  func.func @_matmul_fused_kernel(%arg0: i32, %arg1: i32, %arg2: i32, %arg3: memref<1x1xf32, #tpu.memory_space<smem>>, %arg4: memref<256x512xbf16, #tpu.memory_space<vmem>>, %arg5: memref<512x128xbf16, #tpu.memory_space<vmem>>, %arg6: memref<1x128xf32, #tpu.memory_space<vmem>>, %arg7: memref<256x128xbf16, #tpu.memory_space<vmem>>, %arg8: memref<256x128xf32, #tpu.memory_space<vmem>>) attributes {dimension_semantics = [#tpu.dimension_semantics<parallel>, #tpu.dimension_semantics<parallel>, #tpu.dimension_semantics<arbitrary>], iteration_bounds = array<i64: 2, 1, 4>, scalar_prefetch = 0 : i64, scratch_operands = 1 : i64, tpu.core_type = #tpu.core_type<tc>, window_params = [{transform_indices = @transform_0, window_bounds = array<i64: 1, 1>}, {transform_indices = @transform_1, window_bounds = array<i64: 256, 512>}, {transform_indices = @transform_2, window_bounds = array<i64: 512, 128>}, {transform_indices = @transform_3, window_bounds = array<i64: 1, 128>}, {transform_indices = @transform_4, window_bounds = array<i64: 256, 128>}]} {
    %c0_i32 = arith.constant 0 : i32
    %0 = arith.cmpi eq, %arg2, %c0_i32 : i32
    %1 = arith.extui %0 : i1 to i32
    %c0_i32_0 = arith.constant 0 : i32
    %2 = arith.cmpi ne, %1, %c0_i32_0 : i32
    scf.if %2 {
      %cst_9 = arith.constant 0.000000e+00 : f32
      %12 = vector.broadcast %cst_9 : f32 to vector<256x128xf32>
      %c0_10 = arith.constant 0 : index
      %c0_11 = arith.constant 0 : index
      %13 = vector.load %arg8[%c0_10, %c0_11] : memref<256x128xf32, #tpu.memory_space<vmem>>, vector<256x128xf32>
      tpu.vector_store %arg8[%c0_10, %c0_11], %12 {strides = array<i32>} : memref<256x128xf32, #tpu.memory_space<vmem>>, vector<256x128xf32>,
    } else {
    }
    %c0 = arith.constant 0 : index
    %c0_1 = arith.constant 0 : index
    %3 = vector.load %arg8[%c0, %c0_1] : memref<256x128xf32, #tpu.memory_space<vmem>>, vector<256x128xf32>
    %c0_2 = arith.constant 0 : index
    %c0_3 = arith.constant 0 : index
    %4 = vector.load %arg4[%c0_2, %c0_3] : memref<256x512xbf16, #tpu.memory_space<vmem>>, vector<256x512xbf16>
    %c0_4 = arith.constant 0 : index
    %c0_5 = arith.constant 0 : index
    %5 = vector.load %arg5[%c0_4, %c0_5] : memref<512x128xbf16, #tpu.memory_space<vmem>>, vector<512x128xbf16>
    %cst = arith.constant dense<0.000000e+00> : vector<256x128xf32>
    %6 = tpu.matmul %4, %5, %cst {dimension_numbers = #tpu.dot_dimension_numbers<[1], [0], [0], [1], [0, 0, 1, 1], [], []>} : vector<256x512xbf16>, vector<512x128xbf16>, vector<256x128xf32> -> vector<256x128xf32>
    %7 = arith.addf %3, %6 : vector<256x128xf32>
    %c0_6 = arith.constant 0 : index
    %c0_7 = arith.constant 0 : index
    %8 = vector.load %arg8[%c0_6, %c0_7] : memref<256x128xf32, #tpu.memory_space<vmem>>, vector<256x128xf32>
    tpu.vector_store %arg8[%c0_6, %c0_7], %7 {strides = array<i32>} : memref<256x128xf32, #tpu.memory_space<vmem>>, vector<256x128xf32>,
    %c3_i32 = arith.constant 3 : i32
    %9 = arith.cmpi eq, %arg2, %c3_i32 : i32
    %10 = arith.extui %9 : i1 to i32
    %c0_i32_8 = arith.constant 0 : i32
    %11 = arith.cmpi ne, %10, %c0_i32_8 : i32
    scf.if %11 {
      %c0_9 = arith.constant 0 : index
      %c0_10 = arith.constant 0 : index
      %12 = vector.load %arg8[%c0_9, %c0_10] : memref<256x128xf32, #tpu.memory_space<vmem>>, vector<256x128xf32>
      %c0_11 = arith.constant 0 : index
      %c0_12 = arith.constant 0 : index
      %13 = memref.load %arg3[%c0_11, %c0_12] : memref<1x1xf32, #tpu.memory_space<smem>>
      %14 = vector.broadcast %13 : f32 to vector<256x128xf32>
      %15 = arith.mulf %12, %14 : vector<256x128xf32>
      %c0_13 = arith.constant 0 : index
      %c0_14 = arith.constant 0 : index
      %16 = vector.load %arg6[%c0_13, %c0_14] : memref<1x128xf32, #tpu.memory_space<vmem>>, vector<1x128xf32>
      %17 = vector.broadcast %16 : vector<1x128xf32> to vector<256x128xf32>
      %18 = arith.addf %15, %17 : vector<256x128xf32>
      %19 = arith.truncf %18 : vector<256x128xf32> to vector<256x128xbf16>
      %c0_15 = arith.constant 0 : index
      %c0_16 = arith.constant 0 : index
      %20 = vector.load %arg7[%c0_15, %c0_16] : memref<256x128xbf16, #tpu.memory_space<vmem>>, vector<256x128xbf16>
      tpu.vector_store %arg7[%c0_15, %c0_16], %19 {strides = array<i32>} : memref<256x128xbf16, #tpu.memory_space<vmem>>, vector<256x128xbf16>,
    } else {
    }
    return
  }
  func.func @transform_0(%arg0: i32, %arg1: i32, %arg2: i32) -> (i32, i32) {
    %c0_i32 = arith.constant 0 : i32
    %c0_i32_0 = arith.constant 0 : i32
    %c0_i32_1 = arith.constant 0 : i32
    return %c0_i32, %c0_i32_0 : i32, i32
  }
  func.func @transform_1(%arg0: i32, %arg1: i32, %arg2: i32) -> (i32, i32) {
    %c0_i32 = arith.constant 0 : i32
    return %arg0, %arg2 : i32, i32
  }
  func.func @transform_2(%arg0: i32, %arg1: i32, %arg2: i32) -> (i32, i32) {
    %c0_i32 = arith.constant 0 : i32
    return %arg2, %arg1 : i32, i32
  }
  func.func @transform_3(%arg0: i32, %arg1: i32, %arg2: i32) -> (i32, i32) {
    %c0_i32 = arith.constant 0 : i32
    %c0_i32_0 = arith.constant 0 : i32
    return %c0_i32, %arg1 : i32, i32
  }
  func.func @transform_4(%arg0: i32, %arg1: i32, %arg2: i32) -> (i32, i32) {
    %c0_i32 = arith.constant 0 : i32
    return %arg0, %arg1 : i32, i32
  }
}

module attributes {stable_mosaic.version = 11 : i64} {
  func.func @_bn_stats_kernel(%arg0: i32, %arg1: i32, %arg2: memref<512x128xbf16, #tpu.memory_space<vmem>>, %arg3: memref<1x128xf32, #tpu.memory_space<vmem>>, %arg4: memref<1x128xf32, #tpu.memory_space<vmem>>) attributes {dimension_semantics = [#tpu.dimension_semantics<parallel>, #tpu.dimension_semantics<arbitrary>], iteration_bounds = array<i64: 1, 1>, scalar_prefetch = 0 : i64, scratch_operands = 0 : i64, tpu.core_type = #tpu.core_type<tc>, window_params = [{transform_indices = @transform_0, window_bounds = array<i64: 512, 128>}, {transform_indices = @transform_1, window_bounds = array<i64: 1, 128>}, {transform_indices = @transform_2, window_bounds = array<i64: 1, 128>}]} {
    %c0_i32 = arith.constant 0 : i32
    %0 = arith.cmpi eq, %arg1, %c0_i32 : i32
    %1 = arith.extui %0 : i1 to i32
    %c0_i32_0 = arith.constant 0 : i32
    %2 = arith.cmpi ne, %1, %c0_i32_0 : i32
    scf.if %2 {
      %cst_13 = arith.constant 0.000000e+00 : f32
      %19 = vector.broadcast %cst_13 : f32 to vector<1x128xf32>
      %c0_14 = arith.constant 0 : index
      %c0_15 = arith.constant 0 : index
      %20 = vector.load %arg3[%c0_14, %c0_15] : memref<1x128xf32, #tpu.memory_space<vmem>>, vector<1x128xf32>
      tpu.vector_store %arg3[%c0_14, %c0_15], %19 {strides = array<i32>} : memref<1x128xf32, #tpu.memory_space<vmem>>, vector<1x128xf32>,
      %cst_16 = arith.constant 0.000000e+00 : f32
      %21 = vector.broadcast %cst_16 : f32 to vector<1x128xf32>
      %c0_17 = arith.constant 0 : index
      %c0_18 = arith.constant 0 : index
      %22 = vector.load %arg4[%c0_17, %c0_18] : memref<1x128xf32, #tpu.memory_space<vmem>>, vector<1x128xf32>
      tpu.vector_store %arg4[%c0_17, %c0_18], %21 {strides = array<i32>} : memref<1x128xf32, #tpu.memory_space<vmem>>, vector<1x128xf32>,
    } else {
    }
    %c0 = arith.constant 0 : index
    %c0_1 = arith.constant 0 : index
    %3 = vector.load %arg2[%c0, %c0_1] : memref<512x128xbf16, #tpu.memory_space<vmem>>, vector<512x128xbf16>
    %4 = arith.extf %3 : vector<512x128xbf16> to vector<512x128xf32>
    %c0_2 = arith.constant 0 : index
    %c0_3 = arith.constant 0 : index
    %5 = vector.load %arg3[%c0_2, %c0_3] : memref<1x128xf32, #tpu.memory_space<vmem>>, vector<1x128xf32>
    %cst = arith.constant dense<0.000000e+00> : vector<128xf32>
    %6 = vector.multi_reduction <add>, %4, %cst [0] : vector<512x128xf32> to vector<128xf32>
    %7 = vector.shape_cast %6 : vector<128xf32> to vector<1x128xf32>
    %8 = arith.addf %5, %7 : vector<1x128xf32>
    %c0_4 = arith.constant 0 : index
    %c0_5 = arith.constant 0 : index
    %9 = vector.load %arg3[%c0_4, %c0_5] : memref<1x128xf32, #tpu.memory_space<vmem>>, vector<1x128xf32>
    tpu.vector_store %arg3[%c0_4, %c0_5], %8 {strides = array<i32>} : memref<1x128xf32, #tpu.memory_space<vmem>>, vector<1x128xf32>,
    %c0_6 = arith.constant 0 : index
    %c0_7 = arith.constant 0 : index
    %10 = vector.load %arg4[%c0_6, %c0_7] : memref<1x128xf32, #tpu.memory_space<vmem>>, vector<1x128xf32>
    %11 = arith.mulf %4, %4 : vector<512x128xf32>
    %cst_8 = arith.constant dense<0.000000e+00> : vector<128xf32>
    %12 = vector.multi_reduction <add>, %11, %cst_8 [0] : vector<512x128xf32> to vector<128xf32>
    %13 = vector.shape_cast %12 : vector<128xf32> to vector<1x128xf32>
    %14 = arith.addf %10, %13 : vector<1x128xf32>
    %c0_9 = arith.constant 0 : index
    %c0_10 = arith.constant 0 : index
    %15 = vector.load %arg4[%c0_9, %c0_10] : memref<1x128xf32, #tpu.memory_space<vmem>>, vector<1x128xf32>
    tpu.vector_store %arg4[%c0_9, %c0_10], %14 {strides = array<i32>} : memref<1x128xf32, #tpu.memory_space<vmem>>, vector<1x128xf32>,
    %c0_i32_11 = arith.constant 0 : i32
    %16 = arith.cmpi eq, %arg1, %c0_i32_11 : i32
    %17 = arith.extui %16 : i1 to i32
    %c0_i32_12 = arith.constant 0 : i32
    %18 = arith.cmpi ne, %17, %c0_i32_12 : i32
    scf.if %18 {
      %c0_13 = arith.constant 0 : index
      %c0_14 = arith.constant 0 : index
      %19 = vector.load %arg3[%c0_13, %c0_14] : memref<1x128xf32, #tpu.memory_space<vmem>>, vector<1x128xf32>
      %cst_15 = arith.constant 0.001953125 : f32
      %20 = vector.broadcast %cst_15 : f32 to vector<1x128xf32>
      %21 = arith.mulf %19, %20 : vector<1x128xf32>
      %c0_16 = arith.constant 0 : index
      %c0_17 = arith.constant 0 : index
      %22 = vector.load %arg4[%c0_16, %c0_17] : memref<1x128xf32, #tpu.memory_space<vmem>>, vector<1x128xf32>
      %cst_18 = arith.constant 0.001953125 : f32
      %23 = vector.broadcast %cst_18 : f32 to vector<1x128xf32>
      %24 = arith.mulf %22, %23 : vector<1x128xf32>
      %25 = arith.mulf %21, %21 : vector<1x128xf32>
      %26 = arith.subf %24, %25 : vector<1x128xf32>
      %cst_19 = arith.constant 0.000000e+00 : f32
      %27 = vector.broadcast %cst_19 : f32 to vector<1x128xf32>
      %28 = arith.maximumf %26, %27 : vector<1x128xf32>
      %c0_20 = arith.constant 0 : index
      %c0_21 = arith.constant 0 : index
      %29 = vector.load %arg3[%c0_20, %c0_21] : memref<1x128xf32, #tpu.memory_space<vmem>>, vector<1x128xf32>
      tpu.vector_store %arg3[%c0_20, %c0_21], %21 {strides = array<i32>} : memref<1x128xf32, #tpu.memory_space<vmem>>, vector<1x128xf32>,
      %c0_22 = arith.constant 0 : index
      %c0_23 = arith.constant 0 : index
      %30 = vector.load %arg4[%c0_22, %c0_23] : memref<1x128xf32, #tpu.memory_space<vmem>>, vector<1x128xf32>
      tpu.vector_store %arg4[%c0_22, %c0_23], %28 {strides = array<i32>} : memref<1x128xf32, #tpu.memory_space<vmem>>, vector<1x128xf32>,
    } else {
    }
    return
  }
  func.func @transform_0(%arg0: i32, %arg1: i32) -> (i32, i32) {
    %c0_i32 = arith.constant 0 : i32
    return %arg1, %arg0 : i32, i32
  }
  func.func @transform_1(%arg0: i32, %arg1: i32) -> (i32, i32) {
    %c0_i32 = arith.constant 0 : i32
    %c0_i32_0 = arith.constant 0 : i32
    return %c0_i32, %arg0 : i32, i32
  }
  func.func @transform_2(%arg0: i32, %arg1: i32) -> (i32, i32) {
    %c0_i32 = arith.constant 0 : i32
    %c0_i32_0 = arith.constant 0 : i32
    return %c0_i32, %arg0 : i32, i32
  }
}

module attributes {stable_mosaic.version = 11 : i64} {
  func.func @_bn_apply_lrelu_kernel(%arg0: i32, %arg1: i32, %arg2: memref<512x128xbf16, #tpu.memory_space<vmem>>, %arg3: memref<1x128xf32, #tpu.memory_space<vmem>>, %arg4: memref<1x128xf32, #tpu.memory_space<vmem>>, %arg5: memref<1x128xf32, #tpu.memory_space<vmem>>, %arg6: memref<1x128xf32, #tpu.memory_space<vmem>>, %arg7: memref<512x128xbf16, #tpu.memory_space<vmem>>) attributes {dimension_semantics = [#tpu.dimension_semantics<parallel>, #tpu.dimension_semantics<parallel>], iteration_bounds = array<i64: 1, 1>, scalar_prefetch = 0 : i64, scratch_operands = 0 : i64, tpu.core_type = #tpu.core_type<tc>, window_params = [{transform_indices = @transform_0, window_bounds = array<i64: 512, 128>}, {transform_indices = @transform_1, window_bounds = array<i64: 1, 128>}, {transform_indices = @transform_2, window_bounds = array<i64: 1, 128>}, {transform_indices = @transform_3, window_bounds = array<i64: 1, 128>}, {transform_indices = @transform_4, window_bounds = array<i64: 1, 128>}, {transform_indices = @transform_5, window_bounds = array<i64: 512, 128>}]} {
    %c0 = arith.constant 0 : index
    %c0_0 = arith.constant 0 : index
    %0 = vector.load %arg5[%c0, %c0_0] : memref<1x128xf32, #tpu.memory_space<vmem>>, vector<1x128xf32>
    %c0_1 = arith.constant 0 : index
    %c0_2 = arith.constant 0 : index
    %1 = vector.load %arg4[%c0_1, %c0_2] : memref<1x128xf32, #tpu.memory_space<vmem>>, vector<1x128xf32>
    %cst = arith.constant 9.99999974E-6 : f32
    %2 = vector.broadcast %cst : f32 to vector<1x128xf32>
    %3 = arith.addf %1, %2 : vector<1x128xf32>
    %4 = math.rsqrt %3 : vector<1x128xf32>
    %5 = arith.mulf %0, %4 : vector<1x128xf32>
    %c0_3 = arith.constant 0 : index
    %c0_4 = arith.constant 0 : index
    %6 = vector.load %arg6[%c0_3, %c0_4] : memref<1x128xf32, #tpu.memory_space<vmem>>, vector<1x128xf32>
    %c0_5 = arith.constant 0 : index
    %c0_6 = arith.constant 0 : index
    %7 = vector.load %arg3[%c0_5, %c0_6] : memref<1x128xf32, #tpu.memory_space<vmem>>, vector<1x128xf32>
    %8 = arith.mulf %7, %5 : vector<1x128xf32>
    %9 = arith.subf %6, %8 : vector<1x128xf32>
    %c0_7 = arith.constant 0 : index
    %c0_8 = arith.constant 0 : index
    %10 = vector.load %arg2[%c0_7, %c0_8] : memref<512x128xbf16, #tpu.memory_space<vmem>>, vector<512x128xbf16>
    %11 = arith.extf %10 : vector<512x128xbf16> to vector<512x128xf32>
    %12 = vector.broadcast %5 : vector<1x128xf32> to vector<512x128xf32>
    %13 = arith.mulf %11, %12 : vector<512x128xf32>
    %14 = vector.broadcast %9 : vector<1x128xf32> to vector<512x128xf32>
    %15 = arith.addf %13, %14 : vector<512x128xf32>
    %cst_9 = arith.constant 0.000000e+00 : f32
    %16 = vector.broadcast %cst_9 : f32 to vector<512x128xf32>
    %17 = arith.cmpf oge, %15, %16 : vector<512x128xf32>
    %cst_10 = arith.constant 2.000000e-01 : f32
    %18 = vector.broadcast %cst_10 : f32 to vector<512x128xf32>
    %19 = arith.mulf %18, %15 : vector<512x128xf32>
    %20 = arith.select %17, %15, %19 : vector<512x128xi1>, vector<512x128xf32>
    %21 = arith.truncf %20 : vector<512x128xf32> to vector<512x128xbf16>
    %c0_11 = arith.constant 0 : index
    %c0_12 = arith.constant 0 : index
    %22 = vector.load %arg7[%c0_11, %c0_12] : memref<512x128xbf16, #tpu.memory_space<vmem>>, vector<512x128xbf16>
    tpu.vector_store %arg7[%c0_11, %c0_12], %21 {strides = array<i32>} : memref<512x128xbf16, #tpu.memory_space<vmem>>, vector<512x128xbf16>,
    return
  }
  func.func @transform_0(%arg0: i32, %arg1: i32) -> (i32, i32) {
    %c0_i32 = arith.constant 0 : i32
    return %arg0, %arg1 : i32, i32
  }
  func.func @transform_1(%arg0: i32, %arg1: i32) -> (i32, i32) {
    %c0_i32 = arith.constant 0 : i32
    %c0_i32_0 = arith.constant 0 : i32
    return %c0_i32, %arg1 : i32, i32
  }
  func.func @transform_2(%arg0: i32, %arg1: i32) -> (i32, i32) {
    %c0_i32 = arith.constant 0 : i32
    %c0_i32_0 = arith.constant 0 : i32
    return %c0_i32, %arg1 : i32, i32
  }
  func.func @transform_3(%arg0: i32, %arg1: i32) -> (i32, i32) {
    %c0_i32 = arith.constant 0 : i32
    %c0_i32_0 = arith.constant 0 : i32
    return %c0_i32, %arg1 : i32, i32
  }
  func.func @transform_4(%arg0: i32, %arg1: i32) -> (i32, i32) {
    %c0_i32 = arith.constant 0 : i32
    %c0_i32_0 = arith.constant 0 : i32
    return %c0_i32, %arg1 : i32, i32
  }
  func.func @transform_5(%arg0: i32, %arg1: i32) -> (i32, i32) {
    %c0_i32 = arith.constant 0 : i32
    return %arg0, %arg1 : i32, i32
  }
}

module attributes {stable_mosaic.version = 11 : i64} {
  func.func @_matmul_fused_kernel(%arg0: i32, %arg1: i32, %arg2: i32, %arg3: memref<1x1xf32, #tpu.memory_space<smem>>, %arg4: memref<128x512xbf16, #tpu.memory_space<vmem>>, %arg5: memref<512x128xbf16, #tpu.memory_space<vmem>>, %arg6: memref<1x128xf32, #tpu.memory_space<vmem>>, %arg7: memref<128x128xbf16, #tpu.memory_space<vmem>>, %arg8: memref<128x128xf32, #tpu.memory_space<vmem>>) attributes {dimension_semantics = [#tpu.dimension_semantics<parallel>, #tpu.dimension_semantics<parallel>, #tpu.dimension_semantics<arbitrary>], iteration_bounds = array<i64: 1, 1, 4>, scalar_prefetch = 0 : i64, scratch_operands = 1 : i64, tpu.core_type = #tpu.core_type<tc>, window_params = [{transform_indices = @transform_0, window_bounds = array<i64: 1, 1>}, {transform_indices = @transform_1, window_bounds = array<i64: 128, 512>}, {transform_indices = @transform_2, window_bounds = array<i64: 512, 128>}, {transform_indices = @transform_3, window_bounds = array<i64: 1, 128>}, {transform_indices = @transform_4, window_bounds = array<i64: 128, 128>}]} {
    %c0_i32 = arith.constant 0 : i32
    %0 = arith.cmpi eq, %arg2, %c0_i32 : i32
    %1 = arith.extui %0 : i1 to i32
    %c0_i32_0 = arith.constant 0 : i32
    %2 = arith.cmpi ne, %1, %c0_i32_0 : i32
    scf.if %2 {
      %cst_9 = arith.constant 0.000000e+00 : f32
      %12 = vector.broadcast %cst_9 : f32 to vector<128x128xf32>
      %c0_10 = arith.constant 0 : index
      %c0_11 = arith.constant 0 : index
      %13 = vector.load %arg8[%c0_10, %c0_11] : memref<128x128xf32, #tpu.memory_space<vmem>>, vector<128x128xf32>
      tpu.vector_store %arg8[%c0_10, %c0_11], %12 {strides = array<i32>} : memref<128x128xf32, #tpu.memory_space<vmem>>, vector<128x128xf32>,
    } else {
    }
    %c0 = arith.constant 0 : index
    %c0_1 = arith.constant 0 : index
    %3 = vector.load %arg8[%c0, %c0_1] : memref<128x128xf32, #tpu.memory_space<vmem>>, vector<128x128xf32>
    %c0_2 = arith.constant 0 : index
    %c0_3 = arith.constant 0 : index
    %4 = vector.load %arg4[%c0_2, %c0_3] : memref<128x512xbf16, #tpu.memory_space<vmem>>, vector<128x512xbf16>
    %c0_4 = arith.constant 0 : index
    %c0_5 = arith.constant 0 : index
    %5 = vector.load %arg5[%c0_4, %c0_5] : memref<512x128xbf16, #tpu.memory_space<vmem>>, vector<512x128xbf16>
    %cst = arith.constant dense<0.000000e+00> : vector<128x128xf32>
    %6 = tpu.matmul %4, %5, %cst {dimension_numbers = #tpu.dot_dimension_numbers<[1], [0], [0], [1], [0, 0, 1, 1], [], []>} : vector<128x512xbf16>, vector<512x128xbf16>, vector<128x128xf32> -> vector<128x128xf32>
    %7 = arith.addf %3, %6 : vector<128x128xf32>
    %c0_6 = arith.constant 0 : index
    %c0_7 = arith.constant 0 : index
    %8 = vector.load %arg8[%c0_6, %c0_7] : memref<128x128xf32, #tpu.memory_space<vmem>>, vector<128x128xf32>
    tpu.vector_store %arg8[%c0_6, %c0_7], %7 {strides = array<i32>} : memref<128x128xf32, #tpu.memory_space<vmem>>, vector<128x128xf32>,
    %c3_i32 = arith.constant 3 : i32
    %9 = arith.cmpi eq, %arg2, %c3_i32 : i32
    %10 = arith.extui %9 : i1 to i32
    %c0_i32_8 = arith.constant 0 : i32
    %11 = arith.cmpi ne, %10, %c0_i32_8 : i32
    scf.if %11 {
      %c0_9 = arith.constant 0 : index
      %c0_10 = arith.constant 0 : index
      %12 = vector.load %arg8[%c0_9, %c0_10] : memref<128x128xf32, #tpu.memory_space<vmem>>, vector<128x128xf32>
      %c0_11 = arith.constant 0 : index
      %c0_12 = arith.constant 0 : index
      %13 = memref.load %arg3[%c0_11, %c0_12] : memref<1x1xf32, #tpu.memory_space<smem>>
      %14 = vector.broadcast %13 : f32 to vector<128x128xf32>
      %15 = arith.mulf %12, %14 : vector<128x128xf32>
      %c0_13 = arith.constant 0 : index
      %c0_14 = arith.constant 0 : index
      %16 = vector.load %arg6[%c0_13, %c0_14] : memref<1x128xf32, #tpu.memory_space<vmem>>, vector<1x128xf32>
      %17 = vector.broadcast %16 : vector<1x128xf32> to vector<128x128xf32>
      %18 = arith.addf %15, %17 : vector<128x128xf32>
      %19 = arith.truncf %18 : vector<128x128xf32> to vector<128x128xbf16>
      %c0_15 = arith.constant 0 : index
      %c0_16 = arith.constant 0 : index
      %20 = vector.load %arg7[%c0_15, %c0_16] : memref<128x128xbf16, #tpu.memory_space<vmem>>, vector<128x128xbf16>
      tpu.vector_store %arg7[%c0_15, %c0_16], %19 {strides = array<i32>} : memref<128x128xbf16, #tpu.memory_space<vmem>>, vector<128x128xbf16>,
    } else {
    }
    return
  }
  func.func @transform_0(%arg0: i32, %arg1: i32, %arg2: i32) -> (i32, i32) {
    %c0_i32 = arith.constant 0 : i32
    %c0_i32_0 = arith.constant 0 : i32
    %c0_i32_1 = arith.constant 0 : i32
    return %c0_i32, %c0_i32_0 : i32, i32
  }
  func.func @transform_1(%arg0: i32, %arg1: i32, %arg2: i32) -> (i32, i32) {
    %c0_i32 = arith.constant 0 : i32
    return %arg0, %arg2 : i32, i32
  }
  func.func @transform_2(%arg0: i32, %arg1: i32, %arg2: i32) -> (i32, i32) {
    %c0_i32 = arith.constant 0 : i32
    return %arg2, %arg1 : i32, i32
  }
  func.func @transform_3(%arg0: i32, %arg1: i32, %arg2: i32) -> (i32, i32) {
    %c0_i32 = arith.constant 0 : i32
    %c0_i32_0 = arith.constant 0 : i32
    return %c0_i32, %arg1 : i32, i32
  }
  func.func @transform_4(%arg0: i32, %arg1: i32, %arg2: i32) -> (i32, i32) {
    %c0_i32 = arith.constant 0 : i32
    return %arg0, %arg1 : i32, i32
  }
}

module attributes {stable_mosaic.version = 11 : i64} {
  func.func @_bn_stats_kernel(%arg0: i32, %arg1: i32, %arg2: memref<128x128xbf16, #tpu.memory_space<vmem>>, %arg3: memref<1x128xf32, #tpu.memory_space<vmem>>, %arg4: memref<1x128xf32, #tpu.memory_space<vmem>>) attributes {dimension_semantics = [#tpu.dimension_semantics<parallel>, #tpu.dimension_semantics<arbitrary>], iteration_bounds = array<i64: 1, 1>, scalar_prefetch = 0 : i64, scratch_operands = 0 : i64, tpu.core_type = #tpu.core_type<tc>, window_params = [{transform_indices = @transform_0, window_bounds = array<i64: 128, 128>}, {transform_indices = @transform_1, window_bounds = array<i64: 1, 128>}, {transform_indices = @transform_2, window_bounds = array<i64: 1, 128>}]} {
    %c0_i32 = arith.constant 0 : i32
    %0 = arith.cmpi eq, %arg1, %c0_i32 : i32
    %1 = arith.extui %0 : i1 to i32
    %c0_i32_0 = arith.constant 0 : i32
    %2 = arith.cmpi ne, %1, %c0_i32_0 : i32
    scf.if %2 {
      %cst_13 = arith.constant 0.000000e+00 : f32
      %19 = vector.broadcast %cst_13 : f32 to vector<1x128xf32>
      %c0_14 = arith.constant 0 : index
      %c0_15 = arith.constant 0 : index
      %20 = vector.load %arg3[%c0_14, %c0_15] : memref<1x128xf32, #tpu.memory_space<vmem>>, vector<1x128xf32>
      tpu.vector_store %arg3[%c0_14, %c0_15], %19 {strides = array<i32>} : memref<1x128xf32, #tpu.memory_space<vmem>>, vector<1x128xf32>,
      %cst_16 = arith.constant 0.000000e+00 : f32
      %21 = vector.broadcast %cst_16 : f32 to vector<1x128xf32>
      %c0_17 = arith.constant 0 : index
      %c0_18 = arith.constant 0 : index
      %22 = vector.load %arg4[%c0_17, %c0_18] : memref<1x128xf32, #tpu.memory_space<vmem>>, vector<1x128xf32>
      tpu.vector_store %arg4[%c0_17, %c0_18], %21 {strides = array<i32>} : memref<1x128xf32, #tpu.memory_space<vmem>>, vector<1x128xf32>,
    } else {
    }
    %c0 = arith.constant 0 : index
    %c0_1 = arith.constant 0 : index
    %3 = vector.load %arg2[%c0, %c0_1] : memref<128x128xbf16, #tpu.memory_space<vmem>>, vector<128x128xbf16>
    %4 = arith.extf %3 : vector<128x128xbf16> to vector<128x128xf32>
    %c0_2 = arith.constant 0 : index
    %c0_3 = arith.constant 0 : index
    %5 = vector.load %arg3[%c0_2, %c0_3] : memref<1x128xf32, #tpu.memory_space<vmem>>, vector<1x128xf32>
    %cst = arith.constant dense<0.000000e+00> : vector<128xf32>
    %6 = vector.multi_reduction <add>, %4, %cst [0] : vector<128x128xf32> to vector<128xf32>
    %7 = vector.shape_cast %6 : vector<128xf32> to vector<1x128xf32>
    %8 = arith.addf %5, %7 : vector<1x128xf32>
    %c0_4 = arith.constant 0 : index
    %c0_5 = arith.constant 0 : index
    %9 = vector.load %arg3[%c0_4, %c0_5] : memref<1x128xf32, #tpu.memory_space<vmem>>, vector<1x128xf32>
    tpu.vector_store %arg3[%c0_4, %c0_5], %8 {strides = array<i32>} : memref<1x128xf32, #tpu.memory_space<vmem>>, vector<1x128xf32>,
    %c0_6 = arith.constant 0 : index
    %c0_7 = arith.constant 0 : index
    %10 = vector.load %arg4[%c0_6, %c0_7] : memref<1x128xf32, #tpu.memory_space<vmem>>, vector<1x128xf32>
    %11 = arith.mulf %4, %4 : vector<128x128xf32>
    %cst_8 = arith.constant dense<0.000000e+00> : vector<128xf32>
    %12 = vector.multi_reduction <add>, %11, %cst_8 [0] : vector<128x128xf32> to vector<128xf32>
    %13 = vector.shape_cast %12 : vector<128xf32> to vector<1x128xf32>
    %14 = arith.addf %10, %13 : vector<1x128xf32>
    %c0_9 = arith.constant 0 : index
    %c0_10 = arith.constant 0 : index
    %15 = vector.load %arg4[%c0_9, %c0_10] : memref<1x128xf32, #tpu.memory_space<vmem>>, vector<1x128xf32>
    tpu.vector_store %arg4[%c0_9, %c0_10], %14 {strides = array<i32>} : memref<1x128xf32, #tpu.memory_space<vmem>>, vector<1x128xf32>,
    %c0_i32_11 = arith.constant 0 : i32
    %16 = arith.cmpi eq, %arg1, %c0_i32_11 : i32
    %17 = arith.extui %16 : i1 to i32
    %c0_i32_12 = arith.constant 0 : i32
    %18 = arith.cmpi ne, %17, %c0_i32_12 : i32
    scf.if %18 {
      %c0_13 = arith.constant 0 : index
      %c0_14 = arith.constant 0 : index
      %19 = vector.load %arg3[%c0_13, %c0_14] : memref<1x128xf32, #tpu.memory_space<vmem>>, vector<1x128xf32>
      %cst_15 = arith.constant 7.812500e-03 : f32
      %20 = vector.broadcast %cst_15 : f32 to vector<1x128xf32>
      %21 = arith.mulf %19, %20 : vector<1x128xf32>
      %c0_16 = arith.constant 0 : index
      %c0_17 = arith.constant 0 : index
      %22 = vector.load %arg4[%c0_16, %c0_17] : memref<1x128xf32, #tpu.memory_space<vmem>>, vector<1x128xf32>
      %cst_18 = arith.constant 7.812500e-03 : f32
      %23 = vector.broadcast %cst_18 : f32 to vector<1x128xf32>
      %24 = arith.mulf %22, %23 : vector<1x128xf32>
      %25 = arith.mulf %21, %21 : vector<1x128xf32>
      %26 = arith.subf %24, %25 : vector<1x128xf32>
      %cst_19 = arith.constant 0.000000e+00 : f32
      %27 = vector.broadcast %cst_19 : f32 to vector<1x128xf32>
      %28 = arith.maximumf %26, %27 : vector<1x128xf32>
      %c0_20 = arith.constant 0 : index
      %c0_21 = arith.constant 0 : index
      %29 = vector.load %arg3[%c0_20, %c0_21] : memref<1x128xf32, #tpu.memory_space<vmem>>, vector<1x128xf32>
      tpu.vector_store %arg3[%c0_20, %c0_21], %21 {strides = array<i32>} : memref<1x128xf32, #tpu.memory_space<vmem>>, vector<1x128xf32>,
      %c0_22 = arith.constant 0 : index
      %c0_23 = arith.constant 0 : index
      %30 = vector.load %arg4[%c0_22, %c0_23] : memref<1x128xf32, #tpu.memory_space<vmem>>, vector<1x128xf32>
      tpu.vector_store %arg4[%c0_22, %c0_23], %28 {strides = array<i32>} : memref<1x128xf32, #tpu.memory_space<vmem>>, vector<1x128xf32>,
    } else {
    }
    return
  }
  func.func @transform_0(%arg0: i32, %arg1: i32) -> (i32, i32) {
    %c0_i32 = arith.constant 0 : i32
    return %arg1, %arg0 : i32, i32
  }
  func.func @transform_1(%arg0: i32, %arg1: i32) -> (i32, i32) {
    %c0_i32 = arith.constant 0 : i32
    %c0_i32_0 = arith.constant 0 : i32
    return %c0_i32, %arg0 : i32, i32
  }
  func.func @transform_2(%arg0: i32, %arg1: i32) -> (i32, i32) {
    %c0_i32 = arith.constant 0 : i32
    %c0_i32_0 = arith.constant 0 : i32
    return %c0_i32, %arg0 : i32, i32
  }
}

module attributes {stable_mosaic.version = 11 : i64} {
  func.func @_bn_apply_lrelu_kernel(%arg0: i32, %arg1: i32, %arg2: memref<128x128xbf16, #tpu.memory_space<vmem>>, %arg3: memref<1x128xf32, #tpu.memory_space<vmem>>, %arg4: memref<1x128xf32, #tpu.memory_space<vmem>>, %arg5: memref<1x128xf32, #tpu.memory_space<vmem>>, %arg6: memref<1x128xf32, #tpu.memory_space<vmem>>, %arg7: memref<128x128xbf16, #tpu.memory_space<vmem>>) attributes {dimension_semantics = [#tpu.dimension_semantics<parallel>, #tpu.dimension_semantics<parallel>], iteration_bounds = array<i64: 1, 1>, scalar_prefetch = 0 : i64, scratch_operands = 0 : i64, tpu.core_type = #tpu.core_type<tc>, window_params = [{transform_indices = @transform_0, window_bounds = array<i64: 128, 128>}, {transform_indices = @transform_1, window_bounds = array<i64: 1, 128>}, {transform_indices = @transform_2, window_bounds = array<i64: 1, 128>}, {transform_indices = @transform_3, window_bounds = array<i64: 1, 128>}, {transform_indices = @transform_4, window_bounds = array<i64: 1, 128>}, {transform_indices = @transform_5, window_bounds = array<i64: 128, 128>}]} {
    %c0 = arith.constant 0 : index
    %c0_0 = arith.constant 0 : index
    %0 = vector.load %arg5[%c0, %c0_0] : memref<1x128xf32, #tpu.memory_space<vmem>>, vector<1x128xf32>
    %c0_1 = arith.constant 0 : index
    %c0_2 = arith.constant 0 : index
    %1 = vector.load %arg4[%c0_1, %c0_2] : memref<1x128xf32, #tpu.memory_space<vmem>>, vector<1x128xf32>
    %cst = arith.constant 9.99999974E-6 : f32
    %2 = vector.broadcast %cst : f32 to vector<1x128xf32>
    %3 = arith.addf %1, %2 : vector<1x128xf32>
    %4 = math.rsqrt %3 : vector<1x128xf32>
    %5 = arith.mulf %0, %4 : vector<1x128xf32>
    %c0_3 = arith.constant 0 : index
    %c0_4 = arith.constant 0 : index
    %6 = vector.load %arg6[%c0_3, %c0_4] : memref<1x128xf32, #tpu.memory_space<vmem>>, vector<1x128xf32>
    %c0_5 = arith.constant 0 : index
    %c0_6 = arith.constant 0 : index
    %7 = vector.load %arg3[%c0_5, %c0_6] : memref<1x128xf32, #tpu.memory_space<vmem>>, vector<1x128xf32>
    %8 = arith.mulf %7, %5 : vector<1x128xf32>
    %9 = arith.subf %6, %8 : vector<1x128xf32>
    %c0_7 = arith.constant 0 : index
    %c0_8 = arith.constant 0 : index
    %10 = vector.load %arg2[%c0_7, %c0_8] : memref<128x128xbf16, #tpu.memory_space<vmem>>, vector<128x128xbf16>
    %11 = arith.extf %10 : vector<128x128xbf16> to vector<128x128xf32>
    %12 = vector.broadcast %5 : vector<1x128xf32> to vector<128x128xf32>
    %13 = arith.mulf %11, %12 : vector<128x128xf32>
    %14 = vector.broadcast %9 : vector<1x128xf32> to vector<128x128xf32>
    %15 = arith.addf %13, %14 : vector<128x128xf32>
    %cst_9 = arith.constant 0.000000e+00 : f32
    %16 = vector.broadcast %cst_9 : f32 to vector<128x128xf32>
    %17 = arith.cmpf oge, %15, %16 : vector<128x128xf32>
    %cst_10 = arith.constant 2.000000e-01 : f32
    %18 = vector.broadcast %cst_10 : f32 to vector<128x128xf32>
    %19 = arith.mulf %18, %15 : vector<128x128xf32>
    %20 = arith.select %17, %15, %19 : vector<128x128xi1>, vector<128x128xf32>
    %21 = arith.truncf %20 : vector<128x128xf32> to vector<128x128xbf16>
    %c0_11 = arith.constant 0 : index
    %c0_12 = arith.constant 0 : index
    %22 = vector.load %arg7[%c0_11, %c0_12] : memref<128x128xbf16, #tpu.memory_space<vmem>>, vector<128x128xbf16>
    tpu.vector_store %arg7[%c0_11, %c0_12], %21 {strides = array<i32>} : memref<128x128xbf16, #tpu.memory_space<vmem>>, vector<128x128xbf16>,
    return
  }
  func.func @transform_0(%arg0: i32, %arg1: i32) -> (i32, i32) {
    %c0_i32 = arith.constant 0 : i32
    return %arg0, %arg1 : i32, i32
  }
  func.func @transform_1(%arg0: i32, %arg1: i32) -> (i32, i32) {
    %c0_i32 = arith.constant 0 : i32
    %c0_i32_0 = arith.constant 0 : i32
    return %c0_i32, %arg1 : i32, i32
  }
  func.func @transform_2(%arg0: i32, %arg1: i32) -> (i32, i32) {
    %c0_i32 = arith.constant 0 : i32
    %c0_i32_0 = arith.constant 0 : i32
    return %c0_i32, %arg1 : i32, i32
  }
  func.func @transform_3(%arg0: i32, %arg1: i32) -> (i32, i32) {
    %c0_i32 = arith.constant 0 : i32
    %c0_i32_0 = arith.constant 0 : i32
    return %c0_i32, %arg1 : i32, i32
  }
  func.func @transform_4(%arg0: i32, %arg1: i32) -> (i32, i32) {
    %c0_i32 = arith.constant 0 : i32
    %c0_i32_0 = arith.constant 0 : i32
    return %c0_i32, %arg1 : i32, i32
  }
  func.func @transform_5(%arg0: i32, %arg1: i32) -> (i32, i32) {
    %c0_i32 = arith.constant 0 : i32
    return %arg0, %arg1 : i32, i32
  }
}

module attributes {stable_mosaic.version = 11 : i64} {
  func.func @_bn_stats_kernel(%arg0: i32, %arg1: i32, %arg2: memref<112x256xbf16, #tpu.memory_space<vmem>>, %arg3: memref<1x256xf32, #tpu.memory_space<vmem>>, %arg4: memref<1x256xf32, #tpu.memory_space<vmem>>) attributes {dimension_semantics = [#tpu.dimension_semantics<parallel>, #tpu.dimension_semantics<arbitrary>], iteration_bounds = array<i64: 1, 1>, scalar_prefetch = 0 : i64, scratch_operands = 0 : i64, tpu.core_type = #tpu.core_type<tc>, window_params = [{transform_indices = @transform_0, window_bounds = array<i64: 112, 256>}, {transform_indices = @transform_1, window_bounds = array<i64: 1, 256>}, {transform_indices = @transform_2, window_bounds = array<i64: 1, 256>}]} {
    %c0_i32 = arith.constant 0 : i32
    %0 = arith.cmpi eq, %arg1, %c0_i32 : i32
    %1 = arith.extui %0 : i1 to i32
    %c0_i32_0 = arith.constant 0 : i32
    %2 = arith.cmpi ne, %1, %c0_i32_0 : i32
    scf.if %2 {
      %cst_13 = arith.constant 0.000000e+00 : f32
      %19 = vector.broadcast %cst_13 : f32 to vector<1x256xf32>
      %c0_14 = arith.constant 0 : index
      %c0_15 = arith.constant 0 : index
      %20 = vector.load %arg3[%c0_14, %c0_15] : memref<1x256xf32, #tpu.memory_space<vmem>>, vector<1x256xf32>
      tpu.vector_store %arg3[%c0_14, %c0_15], %19 {strides = array<i32>} : memref<1x256xf32, #tpu.memory_space<vmem>>, vector<1x256xf32>,
      %cst_16 = arith.constant 0.000000e+00 : f32
      %21 = vector.broadcast %cst_16 : f32 to vector<1x256xf32>
      %c0_17 = arith.constant 0 : index
      %c0_18 = arith.constant 0 : index
      %22 = vector.load %arg4[%c0_17, %c0_18] : memref<1x256xf32, #tpu.memory_space<vmem>>, vector<1x256xf32>
      tpu.vector_store %arg4[%c0_17, %c0_18], %21 {strides = array<i32>} : memref<1x256xf32, #tpu.memory_space<vmem>>, vector<1x256xf32>,
    } else {
    }
    %c0 = arith.constant 0 : index
    %c0_1 = arith.constant 0 : index
    %3 = vector.load %arg2[%c0, %c0_1] : memref<112x256xbf16, #tpu.memory_space<vmem>>, vector<112x256xbf16>
    %4 = arith.extf %3 : vector<112x256xbf16> to vector<112x256xf32>
    %c0_2 = arith.constant 0 : index
    %c0_3 = arith.constant 0 : index
    %5 = vector.load %arg3[%c0_2, %c0_3] : memref<1x256xf32, #tpu.memory_space<vmem>>, vector<1x256xf32>
    %cst = arith.constant dense<0.000000e+00> : vector<256xf32>
    %6 = vector.multi_reduction <add>, %4, %cst [0] : vector<112x256xf32> to vector<256xf32>
    %7 = vector.shape_cast %6 : vector<256xf32> to vector<1x256xf32>
    %8 = arith.addf %5, %7 : vector<1x256xf32>
    %c0_4 = arith.constant 0 : index
    %c0_5 = arith.constant 0 : index
    %9 = vector.load %arg3[%c0_4, %c0_5] : memref<1x256xf32, #tpu.memory_space<vmem>>, vector<1x256xf32>
    tpu.vector_store %arg3[%c0_4, %c0_5], %8 {strides = array<i32>} : memref<1x256xf32, #tpu.memory_space<vmem>>, vector<1x256xf32>,
    %c0_6 = arith.constant 0 : index
    %c0_7 = arith.constant 0 : index
    %10 = vector.load %arg4[%c0_6, %c0_7] : memref<1x256xf32, #tpu.memory_space<vmem>>, vector<1x256xf32>
    %11 = arith.mulf %4, %4 : vector<112x256xf32>
    %cst_8 = arith.constant dense<0.000000e+00> : vector<256xf32>
    %12 = vector.multi_reduction <add>, %11, %cst_8 [0] : vector<112x256xf32> to vector<256xf32>
    %13 = vector.shape_cast %12 : vector<256xf32> to vector<1x256xf32>
    %14 = arith.addf %10, %13 : vector<1x256xf32>
    %c0_9 = arith.constant 0 : index
    %c0_10 = arith.constant 0 : index
    %15 = vector.load %arg4[%c0_9, %c0_10] : memref<1x256xf32, #tpu.memory_space<vmem>>, vector<1x256xf32>
    tpu.vector_store %arg4[%c0_9, %c0_10], %14 {strides = array<i32>} : memref<1x256xf32, #tpu.memory_space<vmem>>, vector<1x256xf32>,
    %c0_i32_11 = arith.constant 0 : i32
    %16 = arith.cmpi eq, %arg1, %c0_i32_11 : i32
    %17 = arith.extui %16 : i1 to i32
    %c0_i32_12 = arith.constant 0 : i32
    %18 = arith.cmpi ne, %17, %c0_i32_12 : i32
    scf.if %18 {
      %c0_13 = arith.constant 0 : index
      %c0_14 = arith.constant 0 : index
      %19 = vector.load %arg3[%c0_13, %c0_14] : memref<1x256xf32, #tpu.memory_space<vmem>>, vector<1x256xf32>
      %cst_15 = arith.constant 0.0102040814 : f32
      %20 = vector.broadcast %cst_15 : f32 to vector<1x256xf32>
      %21 = arith.mulf %19, %20 : vector<1x256xf32>
      %c0_16 = arith.constant 0 : index
      %c0_17 = arith.constant 0 : index
      %22 = vector.load %arg4[%c0_16, %c0_17] : memref<1x256xf32, #tpu.memory_space<vmem>>, vector<1x256xf32>
      %cst_18 = arith.constant 0.0102040814 : f32
      %23 = vector.broadcast %cst_18 : f32 to vector<1x256xf32>
      %24 = arith.mulf %22, %23 : vector<1x256xf32>
      %25 = arith.mulf %21, %21 : vector<1x256xf32>
      %26 = arith.subf %24, %25 : vector<1x256xf32>
      %cst_19 = arith.constant 0.000000e+00 : f32
      %27 = vector.broadcast %cst_19 : f32 to vector<1x256xf32>
      %28 = arith.maximumf %26, %27 : vector<1x256xf32>
      %c0_20 = arith.constant 0 : index
      %c0_21 = arith.constant 0 : index
      %29 = vector.load %arg3[%c0_20, %c0_21] : memref<1x256xf32, #tpu.memory_space<vmem>>, vector<1x256xf32>
      tpu.vector_store %arg3[%c0_20, %c0_21], %21 {strides = array<i32>} : memref<1x256xf32, #tpu.memory_space<vmem>>, vector<1x256xf32>,
      %c0_22 = arith.constant 0 : index
      %c0_23 = arith.constant 0 : index
      %30 = vector.load %arg4[%c0_22, %c0_23] : memref<1x256xf32, #tpu.memory_space<vmem>>, vector<1x256xf32>
      tpu.vector_store %arg4[%c0_22, %c0_23], %28 {strides = array<i32>} : memref<1x256xf32, #tpu.memory_space<vmem>>, vector<1x256xf32>,
    } else {
    }
    return
  }
  func.func @transform_0(%arg0: i32, %arg1: i32) -> (i32, i32) {
    %c0_i32 = arith.constant 0 : i32
    return %arg1, %arg0 : i32, i32
  }
  func.func @transform_1(%arg0: i32, %arg1: i32) -> (i32, i32) {
    %c0_i32 = arith.constant 0 : i32
    %c0_i32_0 = arith.constant 0 : i32
    return %c0_i32, %arg0 : i32, i32
  }
  func.func @transform_2(%arg0: i32, %arg1: i32) -> (i32, i32) {
    %c0_i32 = arith.constant 0 : i32
    %c0_i32_0 = arith.constant 0 : i32
    return %c0_i32, %arg0 : i32, i32
  }
}

module attributes {stable_mosaic.version = 11 : i64} {
  func.func @_matmul_fused_kernel(%arg0: i32, %arg1: i32, %arg2: i32, %arg3: memref<1x1xf32, #tpu.memory_space<smem>>, %arg4: memref<112x512xbf16, #tpu.memory_space<vmem>>, %arg5: memref<512x256xbf16, #tpu.memory_space<vmem>>, %arg6: memref<1x256xf32, #tpu.memory_space<vmem>>, %arg7: memref<112x256xbf16, #tpu.memory_space<vmem>>, %arg8: memref<112x256xf32, #tpu.memory_space<vmem>>) attributes {dimension_semantics = [#tpu.dimension_semantics<parallel>, #tpu.dimension_semantics<parallel>, #tpu.dimension_semantics<arbitrary>], iteration_bounds = array<i64: 1, 1, 8>, scalar_prefetch = 0 : i64, scratch_operands = 1 : i64, tpu.core_type = #tpu.core_type<tc>, window_params = [{transform_indices = @transform_0, window_bounds = array<i64: 1, 1>}, {transform_indices = @transform_1, window_bounds = array<i64: 112, 512>}, {transform_indices = @transform_2, window_bounds = array<i64: 512, 256>}, {transform_indices = @transform_3, window_bounds = array<i64: 1, 256>}, {transform_indices = @transform_4, window_bounds = array<i64: 112, 256>}]} {
    %c0_i32 = arith.constant 0 : i32
    %0 = arith.cmpi eq, %arg2, %c0_i32 : i32
    %1 = arith.extui %0 : i1 to i32
    %c0_i32_0 = arith.constant 0 : i32
    %2 = arith.cmpi ne, %1, %c0_i32_0 : i32
    scf.if %2 {
      %cst_9 = arith.constant 0.000000e+00 : f32
      %12 = vector.broadcast %cst_9 : f32 to vector<112x256xf32>
      %c0_10 = arith.constant 0 : index
      %c0_11 = arith.constant 0 : index
      %13 = vector.load %arg8[%c0_10, %c0_11] : memref<112x256xf32, #tpu.memory_space<vmem>>, vector<112x256xf32>
      tpu.vector_store %arg8[%c0_10, %c0_11], %12 {strides = array<i32>} : memref<112x256xf32, #tpu.memory_space<vmem>>, vector<112x256xf32>,
    } else {
    }
    %c0 = arith.constant 0 : index
    %c0_1 = arith.constant 0 : index
    %3 = vector.load %arg8[%c0, %c0_1] : memref<112x256xf32, #tpu.memory_space<vmem>>, vector<112x256xf32>
    %c0_2 = arith.constant 0 : index
    %c0_3 = arith.constant 0 : index
    %4 = vector.load %arg4[%c0_2, %c0_3] : memref<112x512xbf16, #tpu.memory_space<vmem>>, vector<112x512xbf16>
    %c0_4 = arith.constant 0 : index
    %c0_5 = arith.constant 0 : index
    %5 = vector.load %arg5[%c0_4, %c0_5] : memref<512x256xbf16, #tpu.memory_space<vmem>>, vector<512x256xbf16>
    %cst = arith.constant dense<0.000000e+00> : vector<112x256xf32>
    %6 = tpu.matmul %4, %5, %cst {dimension_numbers = #tpu.dot_dimension_numbers<[1], [0], [0], [1], [0, 0, 1, 1], [], []>} : vector<112x512xbf16>, vector<512x256xbf16>, vector<112x256xf32> -> vector<112x256xf32>
    %7 = arith.addf %3, %6 : vector<112x256xf32>
    %c0_6 = arith.constant 0 : index
    %c0_7 = arith.constant 0 : index
    %8 = vector.load %arg8[%c0_6, %c0_7] : memref<112x256xf32, #tpu.memory_space<vmem>>, vector<112x256xf32>
    tpu.vector_store %arg8[%c0_6, %c0_7], %7 {strides = array<i32>} : memref<112x256xf32, #tpu.memory_space<vmem>>, vector<112x256xf32>,
    %c7_i32 = arith.constant 7 : i32
    %9 = arith.cmpi eq, %arg2, %c7_i32 : i32
    %10 = arith.extui %9 : i1 to i32
    %c0_i32_8 = arith.constant 0 : i32
    %11 = arith.cmpi ne, %10, %c0_i32_8 : i32
    scf.if %11 {
      %c0_9 = arith.constant 0 : index
      %c0_10 = arith.constant 0 : index
      %12 = vector.load %arg8[%c0_9, %c0_10] : memref<112x256xf32, #tpu.memory_space<vmem>>, vector<112x256xf32>
      %c0_11 = arith.constant 0 : index
      %c0_12 = arith.constant 0 : index
      %13 = memref.load %arg3[%c0_11, %c0_12] : memref<1x1xf32, #tpu.memory_space<smem>>
      %14 = vector.broadcast %13 : f32 to vector<112x256xf32>
      %15 = arith.mulf %12, %14 : vector<112x256xf32>
      %c0_13 = arith.constant 0 : index
      %c0_14 = arith.constant 0 : index
      %16 = vector.load %arg6[%c0_13, %c0_14] : memref<1x256xf32, #tpu.memory_space<vmem>>, vector<1x256xf32>
      %17 = vector.broadcast %16 : vector<1x256xf32> to vector<112x256xf32>
      %18 = arith.addf %15, %17 : vector<112x256xf32>
      %19 = arith.truncf %18 : vector<112x256xf32> to vector<112x256xbf16>
      %c0_15 = arith.constant 0 : index
      %c0_16 = arith.constant 0 : index
      %20 = vector.load %arg7[%c0_15, %c0_16] : memref<112x256xbf16, #tpu.memory_space<vmem>>, vector<112x256xbf16>
      tpu.vector_store %arg7[%c0_15, %c0_16], %19 {strides = array<i32>} : memref<112x256xbf16, #tpu.memory_space<vmem>>, vector<112x256xbf16>,
    } else {
    }
    return
  }
  func.func @transform_0(%arg0: i32, %arg1: i32, %arg2: i32) -> (i32, i32) {
    %c0_i32 = arith.constant 0 : i32
    %c0_i32_0 = arith.constant 0 : i32
    %c0_i32_1 = arith.constant 0 : i32
    return %c0_i32, %c0_i32_0 : i32, i32
  }
  func.func @transform_1(%arg0: i32, %arg1: i32, %arg2: i32) -> (i32, i32) {
    %c0_i32 = arith.constant 0 : i32
    return %arg0, %arg2 : i32, i32
  }
  func.func @transform_2(%arg0: i32, %arg1: i32, %arg2: i32) -> (i32, i32) {
    %c0_i32 = arith.constant 0 : i32
    return %arg2, %arg1 : i32, i32
  }
  func.func @transform_3(%arg0: i32, %arg1: i32, %arg2: i32) -> (i32, i32) {
    %c0_i32 = arith.constant 0 : i32
    %c0_i32_0 = arith.constant 0 : i32
    return %c0_i32, %arg1 : i32, i32
  }
  func.func @transform_4(%arg0: i32, %arg1: i32, %arg2: i32) -> (i32, i32) {
    %c0_i32 = arith.constant 0 : i32
    return %arg0, %arg1 : i32, i32
  }
}

module attributes {stable_mosaic.version = 11 : i64} {
  func.func @_bn_apply_lrelu_kernel(%arg0: i32, %arg1: i32, %arg2: memref<112x256xbf16, #tpu.memory_space<vmem>>, %arg3: memref<1x256xf32, #tpu.memory_space<vmem>>, %arg4: memref<1x256xf32, #tpu.memory_space<vmem>>, %arg5: memref<1x256xf32, #tpu.memory_space<vmem>>, %arg6: memref<1x256xf32, #tpu.memory_space<vmem>>, %arg7: memref<112x256xbf16, #tpu.memory_space<vmem>>) attributes {dimension_semantics = [#tpu.dimension_semantics<parallel>, #tpu.dimension_semantics<parallel>], iteration_bounds = array<i64: 1, 1>, scalar_prefetch = 0 : i64, scratch_operands = 0 : i64, tpu.core_type = #tpu.core_type<tc>, window_params = [{transform_indices = @transform_0, window_bounds = array<i64: 112, 256>}, {transform_indices = @transform_1, window_bounds = array<i64: 1, 256>}, {transform_indices = @transform_2, window_bounds = array<i64: 1, 256>}, {transform_indices = @transform_3, window_bounds = array<i64: 1, 256>}, {transform_indices = @transform_4, window_bounds = array<i64: 1, 256>}, {transform_indices = @transform_5, window_bounds = array<i64: 112, 256>}]} {
    %c0 = arith.constant 0 : index
    %c0_0 = arith.constant 0 : index
    %0 = vector.load %arg5[%c0, %c0_0] : memref<1x256xf32, #tpu.memory_space<vmem>>, vector<1x256xf32>
    %c0_1 = arith.constant 0 : index
    %c0_2 = arith.constant 0 : index
    %1 = vector.load %arg4[%c0_1, %c0_2] : memref<1x256xf32, #tpu.memory_space<vmem>>, vector<1x256xf32>
    %cst = arith.constant 9.99999974E-6 : f32
    %2 = vector.broadcast %cst : f32 to vector<1x256xf32>
    %3 = arith.addf %1, %2 : vector<1x256xf32>
    %4 = math.rsqrt %3 : vector<1x256xf32>
    %5 = arith.mulf %0, %4 : vector<1x256xf32>
    %c0_3 = arith.constant 0 : index
    %c0_4 = arith.constant 0 : index
    %6 = vector.load %arg6[%c0_3, %c0_4] : memref<1x256xf32, #tpu.memory_space<vmem>>, vector<1x256xf32>
    %c0_5 = arith.constant 0 : index
    %c0_6 = arith.constant 0 : index
    %7 = vector.load %arg3[%c0_5, %c0_6] : memref<1x256xf32, #tpu.memory_space<vmem>>, vector<1x256xf32>
    %8 = arith.mulf %7, %5 : vector<1x256xf32>
    %9 = arith.subf %6, %8 : vector<1x256xf32>
    %c0_7 = arith.constant 0 : index
    %c0_8 = arith.constant 0 : index
    %10 = vector.load %arg2[%c0_7, %c0_8] : memref<112x256xbf16, #tpu.memory_space<vmem>>, vector<112x256xbf16>
    %11 = arith.extf %10 : vector<112x256xbf16> to vector<112x256xf32>
    %12 = vector.broadcast %5 : vector<1x256xf32> to vector<112x256xf32>
    %13 = arith.mulf %11, %12 : vector<112x256xf32>
    %14 = vector.broadcast %9 : vector<1x256xf32> to vector<112x256xf32>
    %15 = arith.addf %13, %14 : vector<112x256xf32>
    %cst_9 = arith.constant 0.000000e+00 : f32
    %16 = vector.broadcast %cst_9 : f32 to vector<112x256xf32>
    %17 = arith.cmpf oge, %15, %16 : vector<112x256xf32>
    %cst_10 = arith.constant 2.000000e-01 : f32
    %18 = vector.broadcast %cst_10 : f32 to vector<112x256xf32>
    %19 = arith.mulf %18, %15 : vector<112x256xf32>
    %20 = arith.select %17, %15, %19 : vector<112x256xi1>, vector<112x256xf32>
    %21 = arith.truncf %20 : vector<112x256xf32> to vector<112x256xbf16>
    %c0_11 = arith.constant 0 : index
    %c0_12 = arith.constant 0 : index
    %22 = vector.load %arg7[%c0_11, %c0_12] : memref<112x256xbf16, #tpu.memory_space<vmem>>, vector<112x256xbf16>
    tpu.vector_store %arg7[%c0_11, %c0_12], %21 {strides = array<i32>} : memref<112x256xbf16, #tpu.memory_space<vmem>>, vector<112x256xbf16>,
    return
  }
  func.func @transform_0(%arg0: i32, %arg1: i32) -> (i32, i32) {
    %c0_i32 = arith.constant 0 : i32
    return %arg0, %arg1 : i32, i32
  }
  func.func @transform_1(%arg0: i32, %arg1: i32) -> (i32, i32) {
    %c0_i32 = arith.constant 0 : i32
    %c0_i32_0 = arith.constant 0 : i32
    return %c0_i32, %arg1 : i32, i32
  }
  func.func @transform_2(%arg0: i32, %arg1: i32) -> (i32, i32) {
    %c0_i32 = arith.constant 0 : i32
    %c0_i32_0 = arith.constant 0 : i32
    return %c0_i32, %arg1 : i32, i32
  }
  func.func @transform_3(%arg0: i32, %arg1: i32) -> (i32, i32) {
    %c0_i32 = arith.constant 0 : i32
    %c0_i32_0 = arith.constant 0 : i32
    return %c0_i32, %arg1 : i32, i32
  }
  func.func @transform_4(%arg0: i32, %arg1: i32) -> (i32, i32) {
    %c0_i32 = arith.constant 0 : i32
    %c0_i32_0 = arith.constant 0 : i32
    return %c0_i32, %arg1 : i32, i32
  }
  func.func @transform_5(%arg0: i32, %arg1: i32) -> (i32, i32) {
    %c0_i32 = arith.constant 0 : i32
    return %arg0, %arg1 : i32, i32
  }
}

module attributes {stable_mosaic.version = 11 : i64} {
  func.func @_matmul_fused_kernel(%arg0: i32, %arg1: i32, %arg2: i32, %arg3: memref<1x1xf32, #tpu.memory_space<smem>>, %arg4: memref<80x512xbf16, #tpu.memory_space<vmem>>, %arg5: memref<512x128xbf16, #tpu.memory_space<vmem>>, %arg6: memref<1x128xf32, #tpu.memory_space<vmem>>, %arg7: memref<80x128xf32, #tpu.memory_space<vmem>>, %arg8: memref<80x128xf32, #tpu.memory_space<vmem>>) attributes {dimension_semantics = [#tpu.dimension_semantics<parallel>, #tpu.dimension_semantics<parallel>, #tpu.dimension_semantics<arbitrary>], iteration_bounds = array<i64: 1, 1, 8>, scalar_prefetch = 0 : i64, scratch_operands = 1 : i64, tpu.core_type = #tpu.core_type<tc>, window_params = [{transform_indices = @transform_0, window_bounds = array<i64: 1, 1>}, {transform_indices = @transform_1, window_bounds = array<i64: 80, 512>}, {transform_indices = @transform_2, window_bounds = array<i64: 512, 128>}, {transform_indices = @transform_3, window_bounds = array<i64: 1, 128>}, {transform_indices = @transform_4, window_bounds = array<i64: 80, 128>}]} {
    %c0_i32 = arith.constant 0 : i32
    %0 = arith.cmpi eq, %arg2, %c0_i32 : i32
    %1 = arith.extui %0 : i1 to i32
    %c0_i32_0 = arith.constant 0 : i32
    %2 = arith.cmpi ne, %1, %c0_i32_0 : i32
    scf.if %2 {
      %cst_9 = arith.constant 0.000000e+00 : f32
      %12 = vector.broadcast %cst_9 : f32 to vector<80x128xf32>
      %c0_10 = arith.constant 0 : index
      %c0_11 = arith.constant 0 : index
      %13 = vector.load %arg8[%c0_10, %c0_11] : memref<80x128xf32, #tpu.memory_space<vmem>>, vector<80x128xf32>
      tpu.vector_store %arg8[%c0_10, %c0_11], %12 {strides = array<i32>} : memref<80x128xf32, #tpu.memory_space<vmem>>, vector<80x128xf32>,
    } else {
    }
    %c0 = arith.constant 0 : index
    %c0_1 = arith.constant 0 : index
    %3 = vector.load %arg8[%c0, %c0_1] : memref<80x128xf32, #tpu.memory_space<vmem>>, vector<80x128xf32>
    %c0_2 = arith.constant 0 : index
    %c0_3 = arith.constant 0 : index
    %4 = vector.load %arg4[%c0_2, %c0_3] : memref<80x512xbf16, #tpu.memory_space<vmem>>, vector<80x512xbf16>
    %c0_4 = arith.constant 0 : index
    %c0_5 = arith.constant 0 : index
    %5 = vector.load %arg5[%c0_4, %c0_5] : memref<512x128xbf16, #tpu.memory_space<vmem>>, vector<512x128xbf16>
    %cst = arith.constant dense<0.000000e+00> : vector<80x128xf32>
    %6 = tpu.matmul %4, %5, %cst {dimension_numbers = #tpu.dot_dimension_numbers<[1], [0], [0], [1], [0, 0, 1, 1], [], []>} : vector<80x512xbf16>, vector<512x128xbf16>, vector<80x128xf32> -> vector<80x128xf32>
    %7 = arith.addf %3, %6 : vector<80x128xf32>
    %c0_6 = arith.constant 0 : index
    %c0_7 = arith.constant 0 : index
    %8 = vector.load %arg8[%c0_6, %c0_7] : memref<80x128xf32, #tpu.memory_space<vmem>>, vector<80x128xf32>
    tpu.vector_store %arg8[%c0_6, %c0_7], %7 {strides = array<i32>} : memref<80x128xf32, #tpu.memory_space<vmem>>, vector<80x128xf32>,
    %c7_i32 = arith.constant 7 : i32
    %9 = arith.cmpi eq, %arg2, %c7_i32 : i32
    %10 = arith.extui %9 : i1 to i32
    %c0_i32_8 = arith.constant 0 : i32
    %11 = arith.cmpi ne, %10, %c0_i32_8 : i32
    scf.if %11 {
      %c0_9 = arith.constant 0 : index
      %c0_10 = arith.constant 0 : index
      %12 = vector.load %arg8[%c0_9, %c0_10] : memref<80x128xf32, #tpu.memory_space<vmem>>, vector<80x128xf32>
      %c0_11 = arith.constant 0 : index
      %c0_12 = arith.constant 0 : index
      %13 = memref.load %arg3[%c0_11, %c0_12] : memref<1x1xf32, #tpu.memory_space<smem>>
      %14 = vector.broadcast %13 : f32 to vector<80x128xf32>
      %15 = arith.mulf %12, %14 : vector<80x128xf32>
      %c0_13 = arith.constant 0 : index
      %c0_14 = arith.constant 0 : index
      %16 = vector.load %arg6[%c0_13, %c0_14] : memref<1x128xf32, #tpu.memory_space<vmem>>, vector<1x128xf32>
      %17 = vector.broadcast %16 : vector<1x128xf32> to vector<80x128xf32>
      %18 = arith.addf %15, %17 : vector<80x128xf32>
      %c0_15 = arith.constant 0 : index
      %c0_16 = arith.constant 0 : index
      %19 = vector.load %arg7[%c0_15, %c0_16] : memref<80x128xf32, #tpu.memory_space<vmem>>, vector<80x128xf32>
      tpu.vector_store %arg7[%c0_15, %c0_16], %18 {strides = array<i32>} : memref<80x128xf32, #tpu.memory_space<vmem>>, vector<80x128xf32>,
    } else {
    }
    return
  }
  func.func @transform_0(%arg0: i32, %arg1: i32, %arg2: i32) -> (i32, i32) {
    %c0_i32 = arith.constant 0 : i32
    %c0_i32_0 = arith.constant 0 : i32
    %c0_i32_1 = arith.constant 0 : i32
    return %c0_i32, %c0_i32_0 : i32, i32
  }
  func.func @transform_1(%arg0: i32, %arg1: i32, %arg2: i32) -> (i32, i32) {
    %c0_i32 = arith.constant 0 : i32
    return %arg0, %arg2 : i32, i32
  }
  func.func @transform_2(%arg0: i32, %arg1: i32, %arg2: i32) -> (i32, i32) {
    %c0_i32 = arith.constant 0 : i32
    return %arg2, %arg1 : i32, i32
  }
  func.func @transform_3(%arg0: i32, %arg1: i32, %arg2: i32) -> (i32, i32) {
    %c0_i32 = arith.constant 0 : i32
    %c0_i32_0 = arith.constant 0 : i32
    return %c0_i32, %arg1 : i32, i32
  }
  func.func @transform_4(%arg0: i32, %arg1: i32, %arg2: i32) -> (i32, i32) {
    %c0_i32 = arith.constant 0 : i32
    return %arg0, %arg1 : i32, i32
  }
}

</mosaic_0001>

<llo_original>
// kernel: discriminator_forward.25
$region0: #{discriminator_forward.25}
  #allocation0 [shape = 'u32[]', space=smem, size = 0x4, offset = 0x4, fixed_abs, tag = 'smem constant byte address 0x4 - core index']
  #allocation1 [shape = 'u32[144,128]{1,0:T(1,128)}', space=vmem, size = 0x12000, scoped, tag = 'internal scratch']
  #allocation2 [shape = 'f32[256,128]{1,0:T(8,128)}', space=vmem, size = 0x20000, scoped, tag = 'scratch operand']
  #allocation3 [shape = 'f32[1,1]{1,0:T(1,128)S(6)}', space=smem, size = 0x200, scoped, tag = 'scoped memory for discriminator_forward.25']
  %s0 = inlined_call_operand.<no memory space> [shape: f32[1,1], index: 0, kind: input, shape index: {}]
  %s1 = inlined_call_operand.vmem [shape: bf16[2048,128], index: 1, kind: input, shape index: {}]
  %s2 = inlined_call_operand.vmem [shape: bf16[128,128], index: 2, kind: input, shape index: {}]
  %s3 = inlined_call_operand.vmem [shape: f32[1,128], index: 3, kind: input, shape index: {}]
  %s4 = inlined_call_operand.vmem [shape: bf16[2048,128], index: 4, kind: output, shape index: {}]
  %s5 = sld [smem:[#allocation0]]
  $region57: #{discriminator_forward.25} parent=0
    _
  %s7 = ssub.s32 1, %s5
  %s8 = scalar_select 0, %s7, %s5
  %9 = sst [smem:[#allocation3]] %s0
  loop: start=0, step=1, limit=10
  $region2: #{discriminator_forward.25} parent=0 // loop_pre_header
    _
  $region3: #{discriminator_forward.25} parent=0 // loop_header
    %s11 = sphi 0, %s15
    %p12 = scmp.ge.s32.totalorder %s11, 10
    %s18 = sphi 0, %s37
    %s19 = sphi 0, %s33
    %s20 = sphi 0, %s29
    %s21 = sphi 0, %s18
    %s22 = sphi 0, %s19
    %s23 = sphi 0, %s20
    %s24 = sphi 0, %s21
    %s25 = sphi 0, %s22
    %s26 = sphi 0, %s23
    %s38 = sphi 0, %s38
    %s40 = sphi 0, %s38
    %s41 = sphi 0, %s40
    %s55 = sphi 0, %s41
    %s63 = sphi 0, %s65
    %s66 = sphi 0, %s63
    %s67 = sphi 0, %s66
    %s83 = sphi 0, %s67
    %s91 = sphi 0, %s93
    %s94 = sphi 0, %s91
    %s95 = sphi 0, %s94
    %s111 = sphi 0, %s95
    %s117 = sphi 0, %s119
    %s120 = sphi 0, %s117
    %s121 = sphi 0, %s120
    %s137 = sphi 0, %s121
    %s145 = sphi 0, %s147
    %s148 = sphi 0, %s145
    %s149 = sphi 0, %s148
    %s165 = sphi 0, %s149
  $region4: #{discriminator_forward.25} parent=0 // loop_header_branch
    %14 = sbr.rel (%p12) target = $region8
  $region5: #{discriminator_forward.25} parent=0 // loop_body
    %s16 = ssub.s32 %s11, 1
    %s17 = ssub.s32 %s11, 2
    %s27 = sadd.s32 1, %s20
    %p28 = scmp.ge.s32.totalorder %s27, 1
    %s29 = scalar_select %p28, 0, %s27
    %s30 = sadd.s32 1, %s19
    %s31 = scalar_select %p28, %s30, %s19
    %p32 = scmp.ge.s32.totalorder %s31, 1
    %s33 = scalar_select %p32, 0, %s31
    %s34 = sadd.s32 1, %s18
    %s35 = scalar_select %p32, %s34, %s18
    %p36 = scmp.ge.s32.totalorder %s35, 8
    %s37 = scalar_select %p36, 0, %s35
    %s39 = sadd.s32 %s38, 1
    %p42 = scmp.eq.s32.totalorder %s11, 7
    %p43 = scmp.ne.s32.totalorder %s38, %s40
    %p44 = scmp.eq.s32.totalorder %s11, 0
    %p45 = por %p43, %p44
    %p46 = scmp.ne.s32.totalorder %s38, %s40
    %p47 = scmp.eq.s32.totalorder %s16, 7
    %p48 = por %p46, %p47
    %p49 = scmp.ne.s32.totalorder %s40, %s41
    %p50 = scmp.eq.s32.totalorder %s16, 0
    %p51 = por %p49, %p50
    %p52 = scmp.ne.s32.totalorder %s40, %s41
    %p53 = scmp.eq.s32.totalorder %s17, 7
    %p54 = por %p52, %p53
    %p56 = scmp.ne.s32.totalorder %s41, %s55
    %p57 = scmp.eq.s32.totalorder %s17, 0
    %p58 = por %p56, %p57
    %s59 = ssub.s32 %s18, %s37
    %s60 = ssub.s32 %s20, %s29
    %s61 = sor.u32 %s59, %s60
    %p62 = scmp.eq.s32.totalorder %s61, 0
    %s64 = sadd.s32 %s63, 1
    %s65 = scalar_select %p62, %s63, %s64
    %p68 = pneg %p62
    %p69 = scmp.eq.s32.totalorder %s11, 7
    %p70 = por %p68, %p69
    %p71 = scmp.ne.s32.totalorder %s63, %s66
    %p72 = scmp.eq.s32.totalorder %s11, 0
    %p73 = por %p71, %p72
    %p74 = scmp.ne.s32.totalorder %s63, %s66
    %p75 = scmp.eq.s32.totalorder %s16, 7
    %p76 = por %p74, %p75
    %p77 = scmp.ne.s32.totalorder %s66, %s67
    %p78 = scmp.eq.s32.totalorder %s16, 0
    %p79 = por %p77, %p78
    %p80 = scmp.ne.s32.totalorder %s66, %s67
    %p81 = scmp.eq.s32.totalorder %s17, 7
    %p82 = por %p80, %p81
    %p84 = scmp.ne.s32.totalorder %s67, %s83
    %p85 = scmp.eq.s32.totalorder %s17, 0
    %p86 = por %p84, %p85
    %s87 = ssub.s32 %s20, %s29
    %s88 = ssub.s32 %s19, %s33
    %s89 = sor.u32 %s87, %s88
    %p90 = scmp.eq.s32.totalorder %s89, 0
    %s92 = sadd.s32 %s91, 1
    %s93 = scalar_select %p90, %s91, %s92
    %p96 = pneg %p90
    %p97 = scmp.eq.s32.totalorder %s11, 7
    %p98 = por %p96, %p97
    %p99 = scmp.ne.s32.totalorder %s91, %s94
    %p100 = scmp.eq.s32.totalorder %s11, 0
    %p101 = por %p99, %p100
    %p102 = scmp.ne.s32.totalorder %s91, %s94
    %p103 = scmp.eq.s32.totalorder %s16, 7
    %p104 = por %p102, %p103
    %p105 = scmp.ne.s32.totalorder %s94, %s95
    %p106 = scmp.eq.s32.totalorder %s16, 0
    %p107 = por %p105, %p106
    %p108 = scmp.ne.s32.totalorder %s94, %s95
    %p109 = scmp.eq.s32.totalorder %s17, 7
    %p110 = por %p108, %p109
    %p112 = scmp.ne.s32.totalorder %s95, %s111
    %p113 = scmp.eq.s32.totalorder %s17, 0
    %p114 = por %p112, %p113
    %s115 = ssub.s32 %s19, %s33
    %p116 = scmp.eq.s32.totalorder %s115, 0
    %s118 = sadd.s32 %s117, 1
    %s119 = scalar_select %p116, %s117, %s118
    %p122 = pneg %p116
    %p123 = scmp.eq.s32.totalorder %s11, 7
    %p124 = por %p122, %p123
    %p125 = scmp.ne.s32.totalorder %s117, %s120
    %p126 = scmp.eq.s32.totalorder %s11, 0
    %p127 = por %p125, %p126
    %p128 = scmp.ne.s32.totalorder %s117, %s120
    %p129 = scmp.eq.s32.totalorder %s16, 7
    %p130 = por %p128, %p129
    %p131 = scmp.ne.s32.totalorder %s120, %s121
    %p132 = scmp.eq.s32.totalorder %s16, 0
    %p133 = por %p131, %p132
    %p134 = scmp.ne.s32.totalorder %s120, %s121
    %p135 = scmp.eq.s32.totalorder %s17, 7
    %p136 = por %p134, %p135
    %p138 = scmp.ne.s32.totalorder %s121, %s137
    %p139 = scmp.eq.s32.totalorder %s17, 0
    %p140 = por %p138, %p139
    %s141 = ssub.s32 %s18, %s37
    %s142 = ssub.s32 %s19, %s33
    %s143 = sor.u32 %s141, %s142
    %p144 = scmp.eq.s32.totalorder %s143, 0
    %s146 = sadd.s32 %s145, 1
    %s147 = scalar_select %p144, %s145, %s146
    %p150 = pneg %p144
    %p151 = scmp.eq.s32.totalorder %s11, 7
    %p152 = por %p150, %p151
    %p153 = scmp.ne.s32.totalorder %s145, %s148
    %p154 = scmp.eq.s32.totalorder %s11, 0
    %p155 = por %p153, %p154
    %p156 = scmp.ne.s32.totalorder %s145, %s148
    %p157 = scmp.eq.s32.totalorder %s16, 7
    %p158 = por %p156, %p157
    %p159 = scmp.ne.s32.totalorder %s148, %s149
    %p160 = scmp.eq.s32.totalorder %s16, 0
    %p161 = por %p159, %p160
    %p162 = scmp.ne.s32.totalorder %s148, %s149
    %p163 = scmp.eq.s32.totalorder %s17, 7
    %p164 = por %p162, %p163
    %p166 = scmp.ne.s32.totalorder %s149, %s165
    %p167 = scmp.eq.s32.totalorder %s17, 0
    %p168 = por %p166, %p167
    %p169 = scmp.le.s32.totalorder 1, %s11
    %p170 = scmp.lt.s32.totalorder %s11, 9
    %p171 = pnand %p169, %p170
    %p172 = pneg %p171
    // Predicated region
    $region9: #{discriminator_forward.25} parent=5 // pred_check
      _
    $region10: #{discriminator_forward.25} parent=5 // pred_check_branch
      %174 = sbr.rel (%p171) target = $region12
    $region11: #{discriminator_forward.25} parent=5 // pred_region
      %s175 = ssub.s32 %s11, 1
      // Predicated region
      $region13: #{discriminator_forward.25} parent=11 // pred_check
        %p176 = pneg %p51
      $region14: #{discriminator_forward.25} parent=11 // pred_check_branch
        %178 = sbr.rel (%p176) target = $region16
      $region15: #{discriminator_forward.25} parent=11 // pred_region
        _
      $region16: #{discriminator_forward.25} parent=11 // pred_fallthru
        _
      // Predicated region
      $region17: #{discriminator_forward.25} parent=11 // pred_check
        %p179 = pneg %p107
      $region18: #{discriminator_forward.25} parent=11 // pred_check_branch
        %181 = sbr.rel (%p179) target = $region20
      $region19: #{discriminator_forward.25} parent=11 // pred_region
        %s182 = smul.u32 16, %s23
        %p183 = scmp.lt.s32.totalorder %s182, 15
        %s184 = scalar_select %p183, %s182, 15
        %p185 = scmp.lt.s32.totalorder %s22, 0
        %s186 = scalar_select %p185, %s22, 0
        %s187 = sadd.s32 %s186, %s184
        %s188 = smul.addr %s187, 4
        %s189 = scalar_lea.vmem %s2, %s188
        %s190 = smul.u32 16, %s23
      $region20: #{discriminator_forward.25} parent=11 // pred_fallthru
        _
      // Predicated region
      $region21: #{discriminator_forward.25} parent=11 // pred_check
        %p191 = pneg %p133
      $region22: #{discriminator_forward.25} parent=11 // pred_check_branch
        %193 = sbr.rel (%p191) target = $region24
      $region23: #{discriminator_forward.25} parent=11 // pred_region
        %p194 = scmp.lt.s32.totalorder %s22, 0
        %s195 = scalar_select %p194, %s22, 0
        %s196 = scalar_lea.vmem %s3, %s195
      $region24: #{discriminator_forward.25} parent=11 // pred_fallthru
        _
    $region12: #{discriminator_forward.25} parent=5 // pred_fallthru
      _
    %p197 = scmp.lt.s32.totalorder %s11, 8
    // Predicated region
    $region25: #{discriminator_forward.25} parent=5 // pred_check
      %p198 = pneg %p197
    $region26: #{discriminator_forward.25} parent=5 // pred_check_branch
      %200 = sbr.rel (%p198) target = $region28
    $region27: #{discriminator_forward.25} parent=5 // pred_region
      // Predicated region
      $region29: #{discriminator_forward.25} parent=27 // pred_check
        %p201 = pneg %p73
      $region30: #{discriminator_forward.25} parent=27 // pred_check_branch
        %203 = sbr.rel (%p201) target = $region32
      $region31: #{discriminator_forward.25} parent=27 // pred_region
        %s204 = smul.u32 32, %s18
        %p205 = scmp.lt.s32.totalorder %s204, 255
        %s206 = scalar_select %p205, %s204, 255
        %p207 = scmp.lt.s32.totalorder %s20, 0
        %s208 = scalar_select %p207, %s20, 0
        %s209 = sadd.s32 %s208, %s206
        %s210 = smul.addr %s209, 4
        %s211 = scalar_lea.vmem %s1, %s210
        %s212 = smul.u32 32, %s18
      $region32: #{discriminator_forward.25} parent=27 // pred_fallthru
        _
    $region28: #{discriminator_forward.25} parent=5 // pred_fallthru
      _
    %p213 = scmp.le.s32.totalorder 1, %s11
    %p214 = scmp.lt.s32.totalorder %s11, 9
    %p215 = pnand %p213, %p214
    %p216 = pneg %p215
    // Predicated region
    $region33: #{discriminator_forward.25} parent=5 // pred_check
      _
    $region34: #{discriminator_forward.25} parent=5 // pred_check_branch
      %218 = sbr.rel (%p215) target = $region36
    $region35: #{discriminator_forward.25} parent=5 // pred_region
      %s219 = ssub.s32 %s11, 1
      %p220 = pneg %p51
      %p221 = pneg %p48
      %s222 = smul.u32 32, %s21
      %p223 = scmp.lt.s32.totalorder %s222, 255
      %s224 = scalar_select %p223, %s222, 255
      %p225 = scmp.lt.s32.totalorder %s23, 0
      %s226 = scalar_select %p225, %s23, 0
      %s227 = sadd.s32 %s226, %s224
      %s228 = smul.addr %s227, 4
      %s229 = scalar_lea.vmem %s1, %s228
      %p230 = pneg %p79
      %p231 = pneg %p76
      %s232 = smul.u32 16, %s23
      %p233 = scmp.lt.s32.totalorder %s232, 15
      %s234 = scalar_select %p233, %s232, 15
      %p235 = scmp.lt.s32.totalorder %s22, 0
      %s236 = scalar_select %p235, %s22, 0
      %s237 = sadd.s32 %s236, %s234
      %s238 = smul.addr %s237, 4
      %s239 = scalar_lea.vmem %s2, %s238
      %p240 = pneg %p107
      %p241 = pneg %p104
      %p242 = scmp.lt.s32.totalorder %s22, 0
      %s243 = scalar_select %p242, %s22, 0
      %s244 = scalar_lea.vmem %s3, %s243
      %p245 = pneg %p133
      %p246 = pneg %p130
      %p247 = pneg %p161
      %p248 = pneg %p158
      %s249 = smul.u32 32, %s21
      %p250 = scmp.lt.s32.totalorder %s249, 255
      %s251 = scalar_select %p250, %s249, 255
      %p252 = scmp.lt.s32.totalorder %s22, 0
      %s253 = scalar_select %p252, %s22, 0
      %s254 = sadd.s32 %s253, %s251
      %s255 = smul.addr %s254, 4
      %s256 = scalar_lea.vmem %s4, %s255
      %s257 = smul.u32 32, %s21
      %p258 = scmp.lt.s32.totalorder %s257, 255
      %s259 = scalar_select %p258, %s257, 255
      %p260 = scmp.lt.s32.totalorder %s23, 0
      %s261 = scalar_select %p260, %s23, 0
      %s262 = sadd.s32 %s261, %s259
      %s263 = smul.addr %s262, 4
      %s264 = scalar_lea.vmem %s1, %s263
      %s265 = smul.u32 32, %s21
      %s266 = smul.u32 16, %s23
      %p267 = scmp.lt.s32.totalorder %s266, 15
      %s268 = scalar_select %p267, %s266, 15
      %p269 = scmp.lt.s32.totalorder %s22, 0
      %s270 = scalar_select %p269, %s22, 0
      %s271 = sadd.s32 %s270, %s268
      %s272 = smul.addr %s271, 4
      %s273 = scalar_lea.vmem %s2, %s272
      %s274 = smul.u32 16, %s23
      %p275 = scmp.lt.s32.totalorder %s22, 0
      %s276 = scalar_select %p275, %s22, 0
      %s277 = scalar_lea.vmem %s3, %s276
      %s278 = smul.u32 32, %s21
      %p279 = scmp.lt.s32.totalorder %s278, 255
      %s280 = scalar_select %p279, %s278, 255
      %p281 = scmp.lt.s32.totalorder %s22, 0
      %s282 = scalar_select %p281, %s22, 0
      %s283 = sadd.s32 %s282, %s280
      %s284 = smul.addr %s283, 4
      %s285 = scalar_lea.vmem %s4, %s284
      %s286 = smul.u32 32, %s21
      %p288 = scmp.eq.s32.totalorder %s23, 0
      // Predicated region
      $region37: #{discriminator_forward.25} parent=35 // pred_check
        %p289 = pneg %p288
      $region38: #{discriminator_forward.25} parent=35 // pred_check_branch
        %291 = sbr.rel (%p289) target = $region40
      $region39: #{discriminator_forward.25} parent=35 // pred_region
        %292 = vst [vmem:[#allocation2] sm:$0xff] 0.0
        %293 = vst [vmem:[#allocation2 + $0x8] sm:$0xff] 0.0
        %294 = vst [vmem:[#allocation2 + $0x10] sm:$0xff] 0.0
        %295 = vst [vmem:[#allocation2 + $0x18] sm:$0xff] 0.0
        %296 = vst [vmem:[#allocation2 + $0x20] sm:$0xff] 0.0
        %297 = vst [vmem:[#allocation2 + $0x28] sm:$0xff] 0.0
        %298 = vst [vmem:[#allocation2 + $0x30] sm:$0xff] 0.0
        %299 = vst [vmem:[#allocation2 + $0x38] sm:$0xff] 0.0
        %300 = vst [vmem:[#allocation2 + $0x40] sm:$0xff] 0.0
        %301 = vst [vmem:[#allocation2 + $0x48] sm:$0xff] 0.0
        %302 = vst [vmem:[#allocation2 + $0x50] sm:$0xff] 0.0
        %303 = vst [vmem:[#allocation2 + $0x58] sm:$0xff] 0.0
        %304 = vst [vmem:[#allocation2 + $0x60] sm:$0xff] 0.0
        %305 = vst [vmem:[#allocation2 + $0x68] sm:$0xff] 0.0
        %306 = vst [vmem:[#allocation2 + $0x70] sm:$0xff] 0.0
        %307 = vst [vmem:[#allocation2 + $0x78] sm:$0xff] 0.0
        %308 = vst [vmem:[#allocation2 + $0x80] sm:$0xff] 0.0
        %309 = vst [vmem:[#allocation2 + $0x88] sm:$0xff] 0.0
        %310 = vst [vmem:[#allocation2 + $0x90] sm:$0xff] 0.0
        %311 = vst [vmem:[#allocation2 + $0x98] sm:$0xff] 0.0
        %312 = vst [vmem:[#allocation2 + $0xa0] sm:$0xff] 0.0
        %313 = vst [vmem:[#allocation2 + $0xa8] sm:$0xff] 0.0
        %314 = vst [vmem:[#allocation2 + $0xb0] sm:$0xff] 0.0
        %315 = vst [vmem:[#allocation2 + $0xb8] sm:$0xff] 0.0
        %316 = vst [vmem:[#allocation2 + $0xc0] sm:$0xff] 0.0
        %317 = vst [vmem:[#allocation2 + $0xc8] sm:$0xff] 0.0
        %318 = vst [vmem:[#allocation2 + $0xd0] sm:$0xff] 0.0
        %319 = vst [vmem:[#allocation2 + $0xd8] sm:$0xff] 0.0
        %320 = vst [vmem:[#allocation2 + $0xe0] sm:$0xff] 0.0
        %321 = vst [vmem:[#allocation2 + $0xe8] sm:$0xff] 0.0
        %322 = vst [vmem:[#allocation2 + $0xf0] sm:$0xff] 0.0
        %323 = vst [vmem:[#allocation2 + $0xf8] sm:$0xff] 0.0
      $region40: #{discriminator_forward.25} parent=35 // pred_fallthru
        _
      %v324 = vld [vmem:[#allocation2] sm:$0xff]
      %v325 = vld [vmem:[#allocation2 + $0x8] sm:$0xff]
      %v326 = vld [vmem:[#allocation2 + $0x10] sm:$0xff]
      %v327 = vld [vmem:[#allocation2 + $0x18] sm:$0xff]
      %v328 = vld [vmem:[#allocation2 + $0x20] sm:$0xff]
      %v329 = vld [vmem:[#allocation2 + $0x28] sm:$0xff]
      %v330 = vld [vmem:[#allocation2 + $0x30] sm:$0xff]
      %v331 = vld [vmem:[#allocation2 + $0x38] sm:$0xff]
      %v332 = vld [vmem:[#allocation2 + $0x40] sm:$0xff]
      %v333 = vld [vmem:[#allocation2 + $0x48] sm:$0xff]
      %v334 = vld [vmem:[#allocation2 + $0x50] sm:$0xff]
      %v335 = vld [vmem:[#allocation2 + $0x58] sm:$0xff]
      %v336 = vld [vmem:[#allocation2 + $0x60] sm:$0xff]
      %v337 = vld [vmem:[#allocation2 + $0x68] sm:$0xff]
      %v338 = vld [vmem:[#allocation2 + $0x70] sm:$0xff]
      %v339 = vld [vmem:[#allocation2 + $0x78] sm:$0xff]
      %v340 = vld [vmem:[#allocation2 + $0x80] sm:$0xff]
      %v341 = vld [vmem:[#allocation2 + $0x88] sm:$0xff]
      %v342 = vld [vmem:[#allocation2 + $0x90] sm:$0xff]
      %v343 = vld [vmem:[#allocation2 + $0x98] sm:$0xff]
      %v344 = vld [vmem:[#allocation2 + $0xa0] sm:$0xff]
      %v345 = vld [vmem:[#allocation2 + $0xa8] sm:$0xff]
      %v346 = vld [vmem:[#allocation2 + $0xb0] sm:$0xff]
      %v347 = vld [vmem:[#allocation2 + $0xb8] sm:$0xff]
      %v348 = vld [vmem:[#allocation2 + $0xc0] sm:$0xff]
      %v349 = vld [vmem:[#allocation2 + $0xc8] sm:$0xff]
      %v350 = vld [vmem:[#allocation2 + $0xd0] sm:$0xff]
      %v351 = vld [vmem:[#allocation2 + $0xd8] sm:$0xff]
      %v352 = vld [vmem:[#allocation2 + $0xe0] sm:$0xff]
      %v353 = vld [vmem:[#allocation2 + $0xe8] sm:$0xff]
      %v354 = vld [vmem:[#allocation2 + $0xf0] sm:$0xff]
      %v355 = vld [vmem:[#allocation2 + $0xf8] sm:$0xff]
      %v356 = vld [vmem:[%s264] sm:$0xf]
      %v357 = vld [vmem:[%s264 + $0x4] sm:$0xf]
      %v358 = vld [vmem:[%s264 + $0x8] sm:$0xf]
      %v359 = vld [vmem:[%s264 + $0xc] sm:$0xf]
      %v360 = vld [vmem:[%s264 + $0x10] sm:$0xf]
      %v361 = vld [vmem:[%s264 + $0x14] sm:$0xf]
      %v362 = vld [vmem:[%s264 + $0x18] sm:$0xf]
      %v363 = vld [vmem:[%s264 + $0x1c] sm:$0xf]
      %v364 = vld [vmem:[%s264 + $0x20] sm:$0xf]
      %v365 = vld [vmem:[%s264 + $0x24] sm:$0xf]
      %v366 = vld [vmem:[%s264 + $0x28] sm:$0xf]
      %v367 = vld [vmem:[%s264 + $0x2c] sm:$0xf]
      %v368 = vld [vmem:[%s264 + $0x30] sm:$0xf]
      %v369 = vld [vmem:[%s264 + $0x34] sm:$0xf]
      %v370 = vld [vmem:[%s264 + $0x38] sm:$0xf]
      %v371 = vld [vmem:[%s264 + $0x3c] sm:$0xf]
      %v372 = vld [vmem:[%s264 + $0x40] sm:$0xf]
      %v373 = vld [vmem:[%s264 + $0x44] sm:$0xf]
      %v374 = vld [vmem:[%s264 + $0x48] sm:$0xf]
      %v375 = vld [vmem:[%s264 + $0x4c] sm:$0xf]
      %v376 = vld [vmem:[%s264 + $0x50] sm:$0xf]
      %v377 = vld [vmem:[%s264 + $0x54] sm:$0xf]
      %v378 = vld [vmem:[%s264 + $0x58] sm:$0xf]
      %v379 = vld [vmem:[%s264 + $0x5c] sm:$0xf]
      %v380 = vld [vmem:[%s264 + $0x60] sm:$0xf]
      %v381 = vld [vmem:[%s264 + $0x64] sm:$0xf]
      %v382 = vld [vmem:[%s264 + $0x68] sm:$0xf]
      %v383 = vld [vmem:[%s264 + $0x6c] sm:$0xf]
      %v384 = vld [vmem:[%s264 + $0x70] sm:$0xf]
      %v385 = vld [vmem:[%s264 + $0x74] sm:$0xf]
      %v386 = vld [vmem:[%s264 + $0x78] sm:$0xf]
      %v387 = vld [vmem:[%s264 + $0x7c] sm:$0xf]
      %v388 = vld [vmem:[%s273] sm:$0xf]
      %v389 = vld [vmem:[%s273 + $0x4] sm:$0xf]
      %v390 = vld [vmem:[%s273 + $0x8] sm:$0xf]
      %v391 = vld [vmem:[%s273 + $0xc] sm:$0xf]
      %v392 = vld [vmem:[%s273 + $0x10] sm:$0xf]
      %v393 = vld [vmem:[%s273 + $0x14] sm:$0xf]
      %v394 = vld [vmem:[%s273 + $0x18] sm:$0xf]
      %v395 = vld [vmem:[%s273 + $0x1c] sm:$0xf]
      %v396 = vld [vmem:[%s273 + $0x20] sm:$0xf]
      %v397 = vld [vmem:[%s273 + $0x24] sm:$0xf]
      %v398 = vld [vmem:[%s273 + $0x28] sm:$0xf]
      %v399 = vld [vmem:[%s273 + $0x2c] sm:$0xf]
      %v400 = vld [vmem:[%s273 + $0x30] sm:$0xf]
      %v401 = vld [vmem:[%s273 + $0x34] sm:$0xf]
      %v402 = vld [vmem:[%s273 + $0x38] sm:$0xf]
      %v403 = vld [vmem:[%s273 + $0x3c] sm:$0xf]
      %v436 = vunpack.c.l.b16 %v356
      %v437 = vunpack.c.l.b16 %v357
      %v438 = vunpack.c.l.b16 %v358
      %v439 = vunpack.c.l.b16 %v359
      %v440 = vunpack.c.l.b16 %v360
      %v441 = vunpack.c.l.b16 %v361
      %v442 = vunpack.c.l.b16 %v362
      %v443 = vunpack.c.l.b16 %v363
      %v444 = vunpack.c.l.b16 %v364
      %v445 = vunpack.c.l.b16 %v365
      %v446 = vunpack.c.l.b16 %v366
      %v447 = vunpack.c.l.b16 %v367
      %v448 = vunpack.c.l.b16 %v368
      %v449 = vunpack.c.l.b16 %v369
      %v450 = vunpack.c.l.b16 %v370
      %v451 = vunpack.c.l.b16 %v371
      %v452 = vunpack.c.l.b16 %v372
      %v453 = vunpack.c.l.b16 %v373
      %v454 = vunpack.c.l.b16 %v374
      %v455 = vunpack.c.l.b16 %v375
      %v456 = vunpack.c.l.b16 %v376
      %v457 = vunpack.c.l.b16 %v377
      %v458 = vunpack.c.l.b16 %v378
      %v459 = vunpack.c.l.b16 %v379
      %v460 = vunpack.c.l.b16 %v380
      %v461 = vunpack.c.l.b16 %v381
      %v462 = vunpack.c.l.b16 %v382
      %v463 = vunpack.c.l.b16 %v383
      %v464 = vunpack.c.l.b16 %v384
      %v465 = vunpack.c.l.b16 %v385
      %v466 = vunpack.c.l.b16 %v386
      %v467 = vunpack.c.l.b16 %v387
      %v468 = vpack.c.b16 %v437, %v436
      %v469 = vpack.c.b16 %v439, %v438
      %v470 = vpack.c.b16 %v441, %v440
      %v471 = vpack.c.b16 %v443, %v442
      %v472 = vpack.c.b16 %v445, %v444
      %v473 = vpack.c.b16 %v447, %v446
      %v474 = vpack.c.b16 %v449, %v448
      %v475 = vpack.c.b16 %v451, %v450
      %v476 = vpack.c.b16 %v453, %v452
      %v477 = vpack.c.b16 %v455, %v454
      %v478 = vpack.c.b16 %v457, %v456
      %v479 = vpack.c.b16 %v459, %v458
      %v480 = vpack.c.b16 %v461, %v460
      %v481 = vpack.c.b16 %v463, %v462
      %v482 = vpack.c.b16 %v465, %v464
      %v483 = vpack.c.b16 %v467, %v466
      %v516 = vunpack.c.l.b16 %v388
      %v517 = vunpack.c.l.b16 %v389
      %v518 = vunpack.c.l.b16 %v390
      %v519 = vunpack.c.l.b16 %v391
      %v520 = vunpack.c.l.b16 %v392
      %v521 = vunpack.c.l.b16 %v393
      %v522 = vunpack.c.l.b16 %v394
      %v523 = vunpack.c.l.b16 %v395
      %v524 = vunpack.c.l.b16 %v396
      %v525 = vunpack.c.l.b16 %v397
      %v526 = vunpack.c.l.b16 %v398
      %v527 = vunpack.c.l.b16 %v399
      %v528 = vunpack.c.l.b16 %v400
      %v529 = vunpack.c.l.b16 %v401
      %v530 = vunpack.c.l.b16 %v402
      %v531 = vunpack.c.l.b16 %v403
      %v532 = vpack.c.b16 %v517, %v516
      %v533 = vpack.c.b16 %v519, %v518
      %v534 = vpack.c.b16 %v521, %v520
      %v535 = vpack.c.b16 %v523, %v522
      %v536 = vpack.c.b16 %v525, %v524
      %v537 = vpack.c.b16 %v527, %v526
      %v538 = vpack.c.b16 %v529, %v528
      %v539 = vpack.c.b16 %v531, %v530
      %548 = vmatprep.subr.bf16.mxu0 0
      %549 = vmatpush1.bf16.msra.mxu0 %v532
      %550 = vmatprep.subr.bf16.mxu0 0
      %551 = vmatpush1.bf16.msra.mxu0 %v533
      %552 = vmatprep.subr.bf16.mxu0 0
      %553 = vmatpush1.bf16.msra.mxu0 %v534
      %554 = vmatprep.subr.bf16.mxu0 0
      %555 = vmatpush1.bf16.msra.mxu0 %v535
      %556 = vmatprep.subr.bf16.mxu0 0
      %557 = vmatpush1.bf16.msra.mxu0 %v536
      %558 = vmatprep.subr.bf16.mxu0 0
      %559 = vmatpush1.bf16.msra.mxu0 %v537
      %560 = vmatprep.subr.bf16.mxu0 0
      %561 = vmatpush1.bf16.msra.mxu0 %v538
      %562 = vmatprep.subr.bf16.mxu0 0
      %563 = vmatpush1.bf16.msra.mxu0 %v539
      %564 = vmatprep.subr.bf16.mxu0 0
      %565 = vmatpush1.bf16.msra.mxu0 0
      %566 = vmatprep.subr.bf16.mxu0 0
      %567 = vmatpush1.bf16.msra.mxu0 0
      %568 = vmatprep.subr.bf16.mxu0 0
      %569 = vmatpush1.bf16.msra.mxu0 0
      %570 = vmatprep.subr.bf16.mxu0 0
      %571 = vmatpush1.bf16.msra.mxu0 0
      %572 = vmatprep.subr.bf16.mxu0 0
      %573 = vmatpush1.bf16.msra.mxu0 0
      %574 = vmatprep.subr.bf16.mxu0 0
      %575 = vmatpush1.bf16.msra.mxu0 0
      %576 = vmatprep.subr.bf16.mxu0 0
      %577 = vmatpush1.bf16.msra.mxu0 0
      %578 = vmatprep.subr.bf16.mxu0 0
      %579 = vmatpush1.bf16.msra.mxu0 0
      %580 = vmatprep.mubr.bf16.mxu0 0
      %581 = vmatmul.mubr.bf16.gmra.mrb[0].mxu0 %v468
      %v582 = vpop.f32.mrb[0].mxu0
      %v583 = vadd.f32 0.0, %v582
      %v584 = vpop.f32.mrb[0].mxu0
      %v585 = vpop.f32.mrb[0].mxu0
      %v586 = vadd.f32 0.0, %v585
      %v587 = vpop.f32.mrb[0].mxu0
      %588 = vmatprep.mubr.bf16.mxu0 0
      %589 = vmatmul.mubr.bf16.gmra.mrb[0].mxu0 %v469
      %v590 = vpop.f32.mrb[0].mxu0
      %v591 = vadd.f32 0.0, %v590
      %v592 = vpop.f32.mrb[0].mxu0
      %v593 = vpop.f32.mrb[0].mxu0
      %v594 = vadd.f32 0.0, %v593
      %v595 = vpop.f32.mrb[0].mxu0
      %596 = vmatprep.mubr.bf16.mxu0 0
      %597 = vmatmul.mubr.bf16.gmra.mrb[0].mxu0 %v470
      %v598 = vpop.f32.mrb[0].mxu0
      %v599 = vadd.f32 0.0, %v598
      %v600 = vpop.f32.mrb[0].mxu0
      %v601 = vpop.f32.mrb[0].mxu0
      %v602 = vadd.f32 0.0, %v601
      %v603 = vpop.f32.mrb[0].mxu0
      %604 = vmatprep.mubr.bf16.mxu0 0
      %605 = vmatmul.mubr.bf16.gmra.mrb[0].mxu0 %v471
      %v606 = vpop.f32.mrb[0].mxu0
      %v607 = vadd.f32 0.0, %v606
      %v608 = vpop.f32.mrb[0].mxu0
      %v609 = vpop.f32.mrb[0].mxu0
      %v610 = vadd.f32 0.0, %v609
      %v611 = vpop.f32.mrb[0].mxu0
      %612 = vmatprep.mubr.bf16.mxu0 0
      %613 = vmatmul.mubr.bf16.gmra.mrb[0].mxu0 %v472
      %v614 = vpop.f32.mrb[0].mxu0
      %v615 = vadd.f32 0.0, %v614
      %v616 = vpop.f32.mrb[0].mxu0
      %v617 = vpop.f32.mrb[0].mxu0
      %v618 = vadd.f32 0.0, %v617
      %v619 = vpop.f32.mrb[0].mxu0
      %620 = vmatprep.mubr.bf16.mxu0 0
      %621 = vmatmul.mubr.bf16.gmra.mrb[0].mxu0 %v473
      %v622 = vpop.f32.mrb[0].mxu0
      %v623 = vadd.f32 0.0, %v622
      %v624 = vpop.f32.mrb[0].mxu0
      %v625 = vpop.f32.mrb[0].mxu0
      %v626 = vadd.f32 0.0, %v625
      %v627 = vpop.f32.mrb[0].mxu0
      %628 = vmatprep.mubr.bf16.mxu0 0
      %629 = vmatmul.mubr.bf16.gmra.mrb[0].mxu0 %v474
      %v630 = vpop.f32.mrb[0].mxu0
      %v631 = vadd.f32 0.0, %v630
      %v632 = vpop.f32.mrb[0].mxu0
      %v633 = vpop.f32.mrb[0].mxu0
      %v634 = vadd.f32 0.0, %v633
      %v635 = vpop.f32.mrb[0].mxu0
      %636 = vmatprep.mubr.bf16.mxu0 0
      %637 = vmatmul.mubr.bf16.gmra.mrb[0].mxu0 %v475
      %v638 = vpop.f32.mrb[0].mxu0
      %v639 = vadd.f32 0.0, %v638
      %v640 = vpop.f32.mrb[0].mxu0
      %v641 = vpop.f32.mrb[0].mxu0
      %v642 = vadd.f32 0.0, %v641
      %v643 = vpop.f32.mrb[0].mxu0
      %644 = vmatprep.mubr.bf16.mxu0 0
      %645 = vmatmul.mubr.bf16.gmra.mrb[0].mxu0 %v476
      %v646 = vpop.f32.mrb[0].mxu0
      %v647 = vadd.f32 0.0, %v646
      %v648 = vpop.f32.mrb[0].mxu0
      %v649 = vpop.f32.mrb[0].mxu0
      %v650 = vadd.f32 0.0, %v649
      %v651 = vpop.f32.mrb[0].mxu0
      %652 = vmatprep.mubr.bf16.mxu0 0
      %653 = vmatmul.mubr.bf16.gmra.mrb[0].mxu0 %v477
      %v654 = vpop.f32.mrb[0].mxu0
      %v655 = vadd.f32 0.0, %v654
      %v656 = vpop.f32.mrb[0].mxu0
      %v657 = vpop.f32.mrb[0].mxu0
      %v658 = vadd.f32 0.0, %v657
      %v659 = vpop.f32.mrb[0].mxu0
      %660 = vmatprep.mubr.bf16.mxu0 0
      %661 = vmatmul.mubr.bf16.gmra.mrb[0].mxu0 %v478
      %v662 = vpop.f32.mrb[0].mxu0
      %v663 = vadd.f32 0.0, %v662
      %v664 = vpop.f32.mrb[0].mxu0
      %v665 = vpop.f32.mrb[0].mxu0
      %v666 = vadd.f32 0.0, %v665
      %v667 = vpop.f32.mrb[0].mxu0
      %668 = vmatprep.mubr.bf16.mxu0 0
      %669 = vmatmul.mubr.bf16.gmra.mrb[0].mxu0 %v479
      %v670 = vpop.f32.mrb[0].mxu0
      %v671 = vadd.f32 0.0, %v670
      %v672 = vpop.f32.mrb[0].mxu0
      %v673 = vpop.f32.mrb[0].mxu0
      %v674 = vadd.f32 0.0, %v673
      %v675 = vpop.f32.mrb[0].mxu0
      %676 = vmatprep.mubr.bf16.mxu0 0
      %677 = vmatmul.mubr.bf16.gmra.mrb[0].mxu0 %v480
      %v678 = vpop.f32.mrb[0].mxu0
      %v679 = vadd.f32 0.0, %v678
      %v680 = vpop.f32.mrb[0].mxu0
      %v681 = vpop.f32.mrb[0].mxu0
      %v682 = vadd.f32 0.0, %v681
      %v683 = vpop.f32.mrb[0].mxu0
      %684 = vmatprep.mubr.bf16.mxu0 0
      %685 = vmatmul.mubr.bf16.gmra.mrb[0].mxu0 %v481
      %v686 = vpop.f32.mrb[0].mxu0
      %v687 = vadd.f32 0.0, %v686
      %v688 = vpop.f32.mrb[0].mxu0
      %v689 = vpop.f32.mrb[0].mxu0
      %v690 = vadd.f32 0.0, %v689
      %v691 = vpop.f32.mrb[0].mxu0
      %692 = vmatprep.mubr.bf16.mxu0 0
      %693 = vmatmul.mubr.bf16.gmra.mrb[0].mxu0 %v482
      %v694 = vpop.f32.mrb[0].mxu0
      %v695 = vadd.f32 0.0, %v694
      %v696 = vpop.f32.mrb[0].mxu0
      %v697 = vpop.f32.mrb[0].mxu0
      %v698 = vadd.f32 0.0, %v697
      %v699 = vpop.f32.mrb[0].mxu0
      %700 = vmatprep.mubr.bf16.mxu0 0
      %701 = vmatmul.mubr.bf16.gmra.mrb[0].mxu0 %v483
      %v702 = vpop.f32.mrb[0].mxu0
      %v703 = vadd.f32 0.0, %v702
      %v704 = vpop.f32.mrb[0].mxu0
      %v705 = vpop.f32.mrb[0].mxu0
      %v706 = vadd.f32 0.0, %v705
      %v707 = vpop.f32.mrb[0].mxu0
      %708 = vdwg.mxu0
      %v709 = vadd.f32 %v324, %v583
      %v710 = vadd.f32 %v325, %v586
      %v711 = vadd.f32 %v326, %v591
      %v712 = vadd.f32 %v327, %v594
      %v713 = vadd.f32 %v328, %v599
      %v714 = vadd.f32 %v329, %v602
      %v715 = vadd.f32 %v330, %v607
      %v716 = vadd.f32 %v331, %v610
      %v717 = vadd.f32 %v332, %v615
      %v718 = vadd.f32 %v333, %v618
      %v719 = vadd.f32 %v334, %v623
      %v720 = vadd.f32 %v335, %v626
      %v721 = vadd.f32 %v336, %v631
      %v722 = vadd.f32 %v337, %v634
      %v723 = vadd.f32 %v338, %v639
      %v724 = vadd.f32 %v339, %v642
      %v725 = vadd.f32 %v340, %v647
      %v726 = vadd.f32 %v341, %v650
      %v727 = vadd.f32 %v342, %v655
      %v728 = vadd.f32 %v343, %v658
      %v729 = vadd.f32 %v344, %v663
      %v730 = vadd.f32 %v345, %v666
      %v731 = vadd.f32 %v346, %v671
      %v732 = vadd.f32 %v347, %v674
      %v733 = vadd.f32 %v348, %v679
      %v734 = vadd.f32 %v349, %v682
      %v735 = vadd.f32 %v350, %v687
      %v736 = vadd.f32 %v351, %v690
      %v737 = vadd.f32 %v352, %v695
      %v738 = vadd.f32 %v353, %v698
      %v739 = vadd.f32 %v354, %v703
      %v740 = vadd.f32 %v355, %v706
      %741 = vst [vmem:[#allocation2] sm:$0xff] %v709
      %742 = vst [vmem:[#allocation2 + $0x8] sm:$0xff] %v710
      %743 = vst [vmem:[#allocation2 + $0x10] sm:$0xff] %v711
      %744 = vst [vmem:[#allocation2 + $0x18] sm:$0xff] %v712
      %745 = vst [vmem:[#allocation2 + $0x20] sm:$0xff] %v713
      %746 = vst [vmem:[#allocation2 + $0x28] sm:$0xff] %v714
      %747 = vst [vmem:[#allocation2 + $0x30] sm:$0xff] %v715
      %748 = vst [vmem:[#allocation2 + $0x38] sm:$0xff] %v716
      %749 = vst [vmem:[#allocation2 + $0x40] sm:$0xff] %v717
      %750 = vst [vmem:[#allocation2 + $0x48] sm:$0xff] %v718
      %751 = vst [vmem:[#allocation2 + $0x50] sm:$0xff] %v719
      %752 = vst [vmem:[#allocation2 + $0x58] sm:$0xff] %v720
      %753 = vst [vmem:[#allocation2 + $0x60] sm:$0xff] %v721
      %754 = vst [vmem:[#allocation2 + $0x68] sm:$0xff] %v722
      %755 = vst [vmem:[#allocation2 + $0x70] sm:$0xff] %v723
      %756 = vst [vmem:[#allocation2 + $0x78] sm:$0xff] %v724
      %757 = vst [vmem:[#allocation2 + $0x80] sm:$0xff] %v725
      %758 = vst [vmem:[#allocation2 + $0x88] sm:$0xff] %v726
      %759 = vst [vmem:[#allocation2 + $0x90] sm:$0xff] %v727
      %760 = vst [vmem:[#allocation2 + $0x98] sm:$0xff] %v728
      %761 = vst [vmem:[#allocation2 + $0xa0] sm:$0xff] %v729
      %762 = vst [vmem:[#allocation2 + $0xa8] sm:$0xff] %v730
      %763 = vst [vmem:[#allocation2 + $0xb0] sm:$0xff] %v731
      %764 = vst [vmem:[#allocation2 + $0xb8] sm:$0xff] %v732
      %765 = vst [vmem:[#allocation2 + $0xc0] sm:$0xff] %v733
      %766 = vst [vmem:[#allocation2 + $0xc8] sm:$0xff] %v734
      %767 = vst [vmem:[#allocation2 + $0xd0] sm:$0xff] %v735
      %768 = vst [vmem:[#allocation2 + $0xd8] sm:$0xff] %v736
      %769 = vst [vmem:[#allocation2 + $0xe0] sm:$0xff] %v737
      %770 = vst [vmem:[#allocation2 + $0xe8] sm:$0xff] %v738
      %771 = vst [vmem:[#allocation2 + $0xf0] sm:$0xff] %v739
      %772 = vst [vmem:[#allocation2 + $0xf8] sm:$0xff] %v740
      // Predicated region
      $region41: #{discriminator_forward.25} parent=35 // pred_check
        %p773 = pneg %p288
      $region42: #{discriminator_forward.25} parent=35 // pred_check_branch
        %775 = sbr.rel (%p773) target = $region44
      $region43: #{discriminator_forward.25} parent=35 // pred_region
        %v776 = vld [vmem:[#allocation2] sm:$0xff]
        %v777 = vld [vmem:[#allocation2 + $0x8] sm:$0xff]
        %v778 = vld [vmem:[#allocation2 + $0x10] sm:$0xff]
        %v779 = vld [vmem:[#allocation2 + $0x18] sm:$0xff]
        %v780 = vld [vmem:[#allocation2 + $0x20] sm:$0xff]
        %v781 = vld [vmem:[#allocation2 + $0x28] sm:$0xff]
        %v782 = vld [vmem:[#allocation2 + $0x30] sm:$0xff]
        %v783 = vld [vmem:[#allocation2 + $0x38] sm:$0xff]
        %v784 = vld [vmem:[#allocation2 + $0x40] sm:$0xff]
        %v785 = vld [vmem:[#allocation2 + $0x48] sm:$0xff]
        %v786 = vld [vmem:[#allocation2 + $0x50] sm:$0xff]
        %v787 = vld [vmem:[#allocation2 + $0x58] sm:$0xff]
        %v788 = vld [vmem:[#allocation2 + $0x60] sm:$0xff]
        %v789 = vld [vmem:[#allocation2 + $0x68] sm:$0xff]
        %v790 = vld [vmem:[#allocation2 + $0x70] sm:$0xff]
        %v791 = vld [vmem:[#allocation2 + $0x78] sm:$0xff]
        %v792 = vld [vmem:[#allocation2 + $0x80] sm:$0xff]
        %v793 = vld [vmem:[#allocation2 + $0x88] sm:$0xff]
        %v794 = vld [vmem:[#allocation2 + $0x90] sm:$0xff]
        %v795 = vld [vmem:[#allocation2 + $0x98] sm:$0xff]
        %v796 = vld [vmem:[#allocation2 + $0xa0] sm:$0xff]
        %v797 = vld [vmem:[#allocation2 + $0xa8] sm:$0xff]
        %v798 = vld [vmem:[#allocation2 + $0xb0] sm:$0xff]
        %v799 = vld [vmem:[#allocation2 + $0xb8] sm:$0xff]
        %v800 = vld [vmem:[#allocation2 + $0xc0] sm:$0xff]
        %v801 = vld [vmem:[#allocation2 + $0xc8] sm:$0xff]
        %v802 = vld [vmem:[#allocation2 + $0xd0] sm:$0xff]
        %v803 = vld [vmem:[#allocation2 + $0xd8] sm:$0xff]
        %v804 = vld [vmem:[#allocation2 + $0xe0] sm:$0xff]
        %v805 = vld [vmem:[#allocation2 + $0xe8] sm:$0xff]
        %v806 = vld [vmem:[#allocation2 + $0xf0] sm:$0xff]
        %v807 = vld [vmem:[#allocation2 + $0xf8] sm:$0xff]
        %s808 = sld [smem:[#allocation3]]
        %v809 = vstv %s808
        %v810 = vmul.f32 %v776, %v809
        %v811 = vmul.f32 %v777, %v809
        %v812 = vmul.f32 %v778, %v809
        %v813 = vmul.f32 %v779, %v809
        %v814 = vmul.f32 %v780, %v809
        %v815 = vmul.f32 %v781, %v809
        %v816 = vmul.f32 %v782, %v809
        %v817 = vmul.f32 %v783, %v809
        %v818 = vmul.f32 %v784, %v809
        %v819 = vmul.f32 %v785, %v809
        %v820 = vmul.f32 %v786, %v809
        %v821 = vmul.f32 %v787, %v809
        %v822 = vmul.f32 %v788, %v809
        %v823 = vmul.f32 %v789, %v809
        %v824 = vmul.f32 %v790, %v809
        %v825 = vmul.f32 %v791, %v809
        %v826 = vmul.f32 %v792, %v809
        %v827 = vmul.f32 %v793, %v809
        %v828 = vmul.f32 %v794, %v809
        %v829 = vmul.f32 %v795, %v809
        %v830 = vmul.f32 %v796, %v809
        %v831 = vmul.f32 %v797, %v809
        %v832 = vmul.f32 %v798, %v809
        %v833 = vmul.f32 %v799, %v809
        %v834 = vmul.f32 %v800, %v809
        %v835 = vmul.f32 %v801, %v809
        %v836 = vmul.f32 %v802, %v809
        %v837 = vmul.f32 %v803, %v809
        %v838 = vmul.f32 %v804, %v809
        %v839 = vmul.f32 %v805, %v809
        %v840 = vmul.f32 %v806, %v809
        %v841 = vmul.f32 %v807, %v809
        %v842 = vld [vmem:[%s277] sm:$0x1]
        %v844 = vlaneseq
        %v845 = vshrl.u32 %v844, 7
        %v846 = vsub.s32 0, %v845
        %v847 = vrot.slane %v842, %v846
        %v849 = vadd.f32 %v810, %v847
        %v850 = vadd.f32 %v811, %v847
        %v851 = vadd.f32 %v812, %v847
        %v852 = vadd.f32 %v813, %v847
        %v853 = vadd.f32 %v814, %v847
        %v854 = vadd.f32 %v815, %v847
        %v855 = vadd.f32 %v816, %v847
        %v856 = vadd.f32 %v817, %v847
        %v857 = vadd.f32 %v818, %v847
        %v858 = vadd.f32 %v819, %v847
        %v859 = vadd.f32 %v820, %v847
        %v860 = vadd.f32 %v821, %v847
        %v861 = vadd.f32 %v822, %v847
        %v862 = vadd.f32 %v823, %v847
        %v863 = vadd.f32 %v824, %v847
        %v864 = vadd.f32 %v825, %v847
        %v865 = vadd.f32 %v826, %v847
        %v866 = vadd.f32 %v827, %v847
        %v867 = vadd.f32 %v828, %v847
        %v868 = vadd.f32 %v829, %v847
        %v869 = vadd.f32 %v830, %v847
        %v870 = vadd.f32 %v831, %v847
        %v871 = vadd.f32 %v832, %v847
        %v872 = vadd.f32 %v833, %v847
        %v873 = vadd.f32 %v834, %v847
        %v874 = vadd.f32 %v835, %v847
        %v875 = vadd.f32 %v836, %v847
        %v876 = vadd.f32 %v837, %v847
        %v877 = vadd.f32 %v838, %v847
        %v878 = vadd.f32 %v839, %v847
        %v879 = vadd.f32 %v840, %v847
        %v880 = vadd.f32 %v841, %v847
        %vm881 = vcmp.ge.f32.partialorder %v849, 0.0
        %vm882 = vcmp.ge.f32.partialorder %v850, 0.0
        %vm883 = vcmp.ge.f32.partialorder %v851, 0.0
        %vm884 = vcmp.ge.f32.partialorder %v852, 0.0
        %vm885 = vcmp.ge.f32.partialorder %v853, 0.0
        %vm886 = vcmp.ge.f32.partialorder %v854, 0.0
        %vm887 = vcmp.ge.f32.partialorder %v855, 0.0
        %vm888 = vcmp.ge.f32.partialorder %v856, 0.0
        %vm889 = vcmp.ge.f32.partialorder %v857, 0.0
        %vm890 = vcmp.ge.f32.partialorder %v858, 0.0
        %vm891 = vcmp.ge.f32.partialorder %v859, 0.0
        %vm892 = vcmp.ge.f32.partialorder %v860, 0.0
        %vm893 = vcmp.ge.f32.partialorder %v861, 0.0
        %vm894 = vcmp.ge.f32.partialorder %v862, 0.0
        %vm895 = vcmp.ge.f32.partialorder %v863, 0.0
        %vm896 = vcmp.ge.f32.partialorder %v864, 0.0
        %vm897 = vcmp.ge.f32.partialorder %v865, 0.0
        %vm898 = vcmp.ge.f32.partialorder %v866, 0.0
        %vm899 = vcmp.ge.f32.partialorder %v867, 0.0
        %vm900 = vcmp.ge.f32.partialorder %v868, 0.0
        %vm901 = vcmp.ge.f32.partialorder %v869, 0.0
        %vm902 = vcmp.ge.f32.partialorder %v870, 0.0
        %vm903 = vcmp.ge.f32.partialorder %v871, 0.0
        %vm904 = vcmp.ge.f32.partialorder %v872, 0.0
        %vm905 = vcmp.ge.f32.partialorder %v873, 0.0
        %vm906 = vcmp.ge.f32.partialorder %v874, 0.0
        %vm907 = vcmp.ge.f32.partialorder %v875, 0.0
        %vm908 = vcmp.ge.f32.partialorder %v876, 0.0
        %vm909 = vcmp.ge.f32.partialorder %v877, 0.0
        %vm910 = vcmp.ge.f32.partialorder %v878, 0.0
        %vm911 = vcmp.ge.f32.partialorder %v879, 0.0
        %vm912 = vcmp.ge.f32.partialorder %v880, 0.0
        %v913 = vmul.f32 %v849, 0.2
        %v914 = vmul.f32 %v850, 0.2
        %v915 = vmul.f32 %v851, 0.2
        %v916 = vmul.f32 %v852, 0.2
        %v917 = vmul.f32 %v853, 0.2
        %v918 = vmul.f32 %v854, 0.2
        %v919 = vmul.f32 %v855, 0.2
        %v920 = vmul.f32 %v856, 0.2
        %v921 = vmul.f32 %v857, 0.2
        %v922 = vmul.f32 %v858, 0.2
        %v923 = vmul.f32 %v859, 0.2
        %v924 = vmul.f32 %v860, 0.2
        %v925 = vmul.f32 %v861, 0.2
        %v926 = vmul.f32 %v862, 0.2
        %v927 = vmul.f32 %v863, 0.2
        %v928 = vmul.f32 %v864, 0.2
        %v929 = vmul.f32 %v865, 0.2
        %v930 = vmul.f32 %v866, 0.2
        %v931 = vmul.f32 %v867, 0.2
        %v932 = vmul.f32 %v868, 0.2
        %v933 = vmul.f32 %v869, 0.2
        %v934 = vmul.f32 %v870, 0.2
        %v935 = vmul.f32 %v871, 0.2
        %v936 = vmul.f32 %v872, 0.2
        %v937 = vmul.f32 %v873, 0.2
        %v938 = vmul.f32 %v874, 0.2
        %v939 = vmul.f32 %v875, 0.2
        %v940 = vmul.f32 %v876, 0.2
        %v941 = vmul.f32 %v877, 0.2
        %v942 = vmul.f32 %v878, 0.2
        %v943 = vmul.f32 %v879, 0.2
        %v944 = vmul.f32 %v880, 0.2
        %v945 = vsel %vm881, %v849, %v913
        %v946 = vsel %vm882, %v850, %v914
        %v947 = vsel %vm883, %v851, %v915
        %v948 = vsel %vm884, %v852, %v916
        %v949 = vsel %vm885, %v853, %v917
        %v950 = vsel %vm886, %v854, %v918
        %v951 = vsel %vm887, %v855, %v919
        %v952 = vsel %vm888, %v856, %v920
        %v953 = vsel %vm889, %v857, %v921
        %v954 = vsel %vm890, %v858, %v922
        %v955 = vsel %vm891, %v859, %v923
        %v956 = vsel %vm892, %v860, %v924
        %v957 = vsel %vm893, %v861, %v925
        %v958 = vsel %vm894, %v862, %v926
        %v959 = vsel %vm895, %v863, %v927
        %v960 = vsel %vm896, %v864, %v928
        %v961 = vsel %vm897, %v865, %v929
        %v962 = vsel %vm898, %v866, %v930
        %v963 = vsel %vm899, %v867, %v931
        %v964 = vsel %vm900, %v868, %v932
        %v965 = vsel %vm901, %v869, %v933
        %v966 = vsel %vm902, %v870, %v934
        %v967 = vsel %vm903, %v871, %v935
        %v968 = vsel %vm904, %v872, %v936
        %v969 = vsel %vm905, %v873, %v937
        %v970 = vsel %vm906, %v874, %v938
        %v971 = vsel %vm907, %v875, %v939
        %v972 = vsel %vm908, %v876, %v940
        %v973 = vsel %vm909, %v877, %v941
        %v974 = vsel %vm910, %v878, %v942
        %v975 = vsel %vm911, %v879, %v943
        %v976 = vsel %vm912, %v880, %v944
        %v977 = vpack.c.bf16 %v946, %v945
        %v978 = vpack.c.bf16 %v948, %v947
        %v979 = vpack.c.bf16 %v950, %v949
        %v980 = vpack.c.bf16 %v952, %v951
        %v981 = vpack.c.bf16 %v954, %v953
        %v982 = vpack.c.bf16 %v956, %v955
        %v983 = vpack.c.bf16 %v958, %v957
        %v984 = vpack.c.bf16 %v960, %v959
        %v985 = vpack.c.bf16 %v962, %v961
        %v986 = vpack.c.bf16 %v964, %v963
        %v987 = vpack.c.bf16 %v966, %v965
        %v988 = vpack.c.bf16 %v968, %v967
        %v989 = vpack.c.bf16 %v970, %v969
        %v990 = vpack.c.bf16 %v972, %v971
        %v991 = vpack.c.bf16 %v974, %v973
        %v992 = vpack.c.bf16 %v976, %v975
        %v1009 = vunpack.c.l.b16 %v977
        %v1010 = vunpack.c.h.b16 %v977
        %v1011 = vunpack.c.l.b16 %v978
        %v1012 = vunpack.c.h.b16 %v978
        %v1013 = vunpack.c.l.b16 %v979
        %v1014 = vunpack.c.h.b16 %v979
        %v1015 = vunpack.c.l.b16 %v980
        %v1016 = vunpack.c.h.b16 %v980
        %v1017 = vunpack.c.l.b16 %v981
        %v1018 = vunpack.c.h.b16 %v981
        %v1019 = vunpack.c.l.b16 %v982
        %v1020 = vunpack.c.h.b16 %v982
        %v1021 = vunpack.c.l.b16 %v983
        %v1022 = vunpack.c.h.b16 %v983
        %v1023 = vunpack.c.l.b16 %v984
        %v1024 = vunpack.c.h.b16 %v984
        %v1025 = vunpack.c.l.b16 %v985
        %v1026 = vunpack.c.h.b16 %v985
        %v1027 = vunpack.c.l.b16 %v986
        %v1028 = vunpack.c.h.b16 %v986
        %v1029 = vunpack.c.l.b16 %v987
        %v1030 = vunpack.c.h.b16 %v987
        %v1031 = vunpack.c.l.b16 %v988
        %v1032 = vunpack.c.h.b16 %v988
        %v1033 = vunpack.c.l.b16 %v989
        %v1034 = vunpack.c.h.b16 %v989
        %v1035 = vunpack.c.l.b16 %v990
        %v1036 = vunpack.c.h.b16 %v990
        %v1037 = vunpack.c.l.b16 %v991
        %v1038 = vunpack.c.h.b16 %v991
        %v1039 = vunpack.c.l.b16 %v992
        %v1040 = vunpack.c.h.b16 %v992
        %v1041 = vpack.c.b16 %v1009, %v1009
        %v1042 = vpack.c.b16 %v1010, %v1010
        %v1043 = vpack.c.b16 %v1011, %v1011
        %v1044 = vpack.c.b16 %v1012, %v1012
        %v1045 = vpack.c.b16 %v1013, %v1013
        %v1046 = vpack.c.b16 %v1014, %v1014
        %v1047 = vpack.c.b16 %v1015, %v1015
        %v1048 = vpack.c.b16 %v1016, %v1016
        %v1049 = vpack.c.b16 %v1017, %v1017
        %v1050 = vpack.c.b16 %v1018, %v1018
        %v1051 = vpack.c.b16 %v1019, %v1019
        %v1052 = vpack.c.b16 %v1020, %v1020
        %v1053 = vpack.c.b16 %v1021, %v1021
        %v1054 = vpack.c.b16 %v1022, %v1022
        %v1055 = vpack.c.b16 %v1023, %v1023
        %v1056 = vpack.c.b16 %v1024, %v1024
        %v1057 = vpack.c.b16 %v1025, %v1025
        %v1058 = vpack.c.b16 %v1026, %v1026
        %v1059 = vpack.c.b16 %v1027, %v1027
        %v1060 = vpack.c.b16 %v1028, %v1028
        %v1061 = vpack.c.b16 %v1029, %v1029
        %v1062 = vpack.c.b16 %v1030, %v1030
        %v1063 = vpack.c.b16 %v1031, %v1031
        %v1064 = vpack.c.b16 %v1032, %v1032
        %v1065 = vpack.c.b16 %v1033, %v1033
        %v1066 = vpack.c.b16 %v1034, %v1034
        %v1067 = vpack.c.b16 %v1035, %v1035
        %v1068 = vpack.c.b16 %v1036, %v1036
        %v1069 = vpack.c.b16 %v1037, %v1037
        %v1070 = vpack.c.b16 %v1038, %v1038
        %v1071 = vpack.c.b16 %v1039, %v1039
        %v1072 = vpack.c.b16 %v1040, %v1040
        %1105 = vst [vmem:[%s285] sm:$0xf] %v1041
        %1106 = vst [vmem:[%s285 + $0x4] sm:$0xf] %v1042
        %1107 = vst [vmem:[%s285 + $0x8] sm:$0xf] %v1043
        %1108 = vst [vmem:[%s285 + $0xc] sm:$0xf] %v1044
        %1109 = vst [vmem:[%s285 + $0x10] sm:$0xf] %v1045
        %1110 = vst [vmem:[%s285 + $0x14] sm:$0xf] %v1046
        %1111 = vst [vmem:[%s285 + $0x18] sm:$0xf] %v1047
        %1112 = vst [vmem:[%s285 + $0x1c] sm:$0xf] %v1048
        %1113 = vst [vmem:[%s285 + $0x20] sm:$0xf] %v1049
        %1114 = vst [vmem:[%s285 + $0x24] sm:$0xf] %v1050
        %1115 = vst [vmem:[%s285 + $0x28] sm:$0xf] %v1051
        %1116 = vst [vmem:[%s285 + $0x2c] sm:$0xf] %v1052
        %1117 = vst [vmem:[%s285 + $0x30] sm:$0xf] %v1053
        %1118 = vst [vmem:[%s285 + $0x34] sm:$0xf] %v1054
        %1119 = vst [vmem:[%s285 + $0x38] sm:$0xf] %v1055
        %1120 = vst [vmem:[%s285 + $0x3c] sm:$0xf] %v1056
        %1121 = vst [vmem:[%s285 + $0x40] sm:$0xf] %v1057
        %1122 = vst [vmem:[%s285 + $0x44] sm:$0xf] %v1058
        %1123 = vst [vmem:[%s285 + $0x48] sm:$0xf] %v1059
        %1124 = vst [vmem:[%s285 + $0x4c] sm:$0xf] %v1060
        %1125 = vst [vmem:[%s285 + $0x50] sm:$0xf] %v1061
        %1126 = vst [vmem:[%s285 + $0x54] sm:$0xf] %v1062
        %1127 = vst [vmem:[%s285 + $0x58] sm:$0xf] %v1063
        %1128 = vst [vmem:[%s285 + $0x5c] sm:$0xf] %v1064
        %1129 = vst [vmem:[%s285 + $0x60] sm:$0xf] %v1065
        %1130 = vst [vmem:[%s285 + $0x64] sm:$0xf] %v1066
        %1131 = vst [vmem:[%s285 + $0x68] sm:$0xf] %v1067
        %1132 = vst [vmem:[%s285 + $0x6c] sm:$0xf] %v1068
        %1133 = vst [vmem:[%s285 + $0x70] sm:$0xf] %v1069
        %1134 = vst [vmem:[%s285 + $0x74] sm:$0xf] %v1070
        %1135 = vst [vmem:[%s285 + $0x78] sm:$0xf] %v1071
        %1136 = vst [vmem:[%s285 + $0x7c] sm:$0xf] %v1072
      $region44: #{discriminator_forward.25} parent=35 // pred_fallthru
        _
      %s1137 = smul.u32 32, %s21
      %p1138 = scmp.lt.s32.totalorder %s1137, 255
      %s1139 = scalar_select %p1138, %s1137, 255
      %p1140 = scmp.lt.s32.totalorder %s22, 0
      %s1141 = scalar_select %p1140, %s22, 0
      %s1142 = sadd.s32 %s1141, %s1139
      %s1143 = smul.addr %s1142, 4
      %s1144 = scalar_lea.vmem %s4, %s1143
      // Predicated region
      $region45: #{discriminator_forward.25} parent=35 // pred_check
        %p1145 = pneg %p158
      $region46: #{discriminator_forward.25} parent=35 // pred_check_branch
        %1147 = sbr.rel (%p1145) target = $region48
      $region47: #{discriminator_forward.25} parent=35 // pred_region
        %s1148 = smul.u32 32, %s21
      $region48: #{discriminator_forward.25} parent=35 // pred_fallthru
        _
    $region36: #{discriminator_forward.25} parent=5 // pred_fallthru
      _
    %p1149 = scmp.le.s32.totalorder 2, %s11
    // Predicated region
    $region49: #{discriminator_forward.25} parent=5 // pred_check
      %p1150 = pneg %p1149
    $region50: #{discriminator_forward.25} parent=5 // pred_check_branch
      %1152 = sbr.rel (%p1150) target = $region52
    $region51: #{discriminator_forward.25} parent=5 // pred_region
      %s1153 = ssub.s32 %s11, 2
      // Predicated region
      $region53: #{discriminator_forward.25} parent=51 // pred_check
        %p1154 = pneg %p164
      $region54: #{discriminator_forward.25} parent=51 // pred_check_branch
        %1156 = sbr.rel (%p1154) target = $region56
      $region55: #{discriminator_forward.25} parent=51 // pred_region
        %s1157 = smul.u32 32, %s24
        %p1158 = scmp.lt.s32.totalorder %s1157, 255
        %s1159 = scalar_select %p1158, %s1157, 255
        %p1160 = scmp.lt.s32.totalorder %s25, 0
        %s1161 = scalar_select %p1160, %s25, 0
        %s1162 = sadd.s32 %s1161, %s1159
        %s1163 = smul.addr %s1162, 4
        %s1164 = scalar_lea.vmem %s4, %s1163
      $region56: #{discriminator_forward.25} parent=51 // pred_fallthru
        _
    $region52: #{discriminator_forward.25} parent=5 // pred_fallthru
      _
  $region6: #{discriminator_forward.25} parent=0 // loop_footer
    %s15 = sadd.s32 1, %s11
  $region7: #{discriminator_forward.25} parent=0 // loop_footer_branch
    %10 = sbr.rel target = $region3
  $region8: #{discriminator_forward.25} parent=0 // loop_exit
    _

// kernel: discriminator_forward.26
$region0: #{discriminator_forward.26}
  #allocation0 [shape = 'u32[]', space=smem, size = 0x4, offset = 0x4, fixed_abs, tag = 'smem constant byte address 0x4 - core index']
  #allocation1 [shape = 'u32[144,128]{1,0:T(1,128)}', space=vmem, size = 0x12000, scoped, tag = 'internal scratch']
  #allocation2 [shape = 'f32[256,128]{1,0:T(8,128)}', space=vmem, size = 0x20000, scoped, tag = 'scratch operand']
  #allocation3 [shape = 'f32[1,1]{1,0:T(1,128)S(6)}', space=smem, size = 0x200, scoped, tag = 'scoped memory for discriminator_forward.26']
  %s0 = inlined_call_operand.<no memory space> [shape: f32[1,1], index: 0, kind: input, shape index: {}]
  %s1 = inlined_call_operand.vmem [shape: bf16[512,2048], index: 1, kind: input, shape index: {}]
  %s2 = inlined_call_operand.vmem [shape: bf16[2048,128], index: 2, kind: input, shape index: {}]
  %s3 = inlined_call_operand.vmem [shape: f32[1,128], index: 3, kind: input, shape index: {}]
  %s4 = inlined_call_operand.vmem [shape: bf16[512,128], index: 4, kind: output, shape index: {}]
  %s5 = sld [smem:[#allocation0]]
  $region80: #{discriminator_forward.26} parent=0
    _
  %s7 = ssub.s32 1, %s5
  %s8 = scalar_select 0, %s7, %s5
  %9 = sst [smem:[#allocation3]] %s0
  $region1: #{discriminator_forward.26} parent=0
    #allocation4 [shape = 'u8[524288]{0}', space=vmem, size = 0x80000, scoped, tag = 'input window, operand 1']
    loop: start=0, step=1, limit=10
    $region2: #{discriminator_forward.26} parent=1 // loop_pre_header
      _
    $region3: #{discriminator_forward.26} parent=1 // loop_header
      %s11 = sphi 0, %s15
      %p12 = scmp.ge.s32.totalorder %s11, 10
      %s18 = sphi 0, %s37
      %s19 = sphi 0, %s33
      %s20 = sphi 0, %s29
      %s21 = sphi 0, %s18
      %s22 = sphi 0, %s19
      %s23 = sphi 0, %s20
      %s24 = sphi 0, %s21
      %s25 = sphi 0, %s22
      %s26 = sphi 0, %s23
      %s38 = sphi 0, %s38
      %s40 = sphi 0, %s38
      %s41 = sphi 0, %s40
      %s55 = sphi 0, %s41
      %s63 = sphi 0, %s65
      %s66 = sphi 0, %s63
      %s67 = sphi 0, %s66
      %s83 = sphi 0, %s67
      %s91 = sphi 0, %s93
      %s94 = sphi 0, %s91
      %s95 = sphi 0, %s94
      %s111 = sphi 0, %s95
      %s117 = sphi 0, %s119
      %s120 = sphi 0, %s117
      %s121 = sphi 0, %s120
      %s137 = sphi 0, %s121
      %s145 = sphi 0, %s147
      %s148 = sphi 0, %s145
      %s149 = sphi 0, %s148
      %s165 = sphi 0, %s149
    $region4: #{discriminator_forward.26} parent=1 // loop_header_branch
      %14 = sbr.rel (%p12) target = $region8
    $region5: #{discriminator_forward.26} parent=1 // loop_body
      %s16 = ssub.s32 %s11, 1
      %s17 = ssub.s32 %s11, 2
      %s27 = sadd.s32 1, %s20
      %p28 = scmp.ge.s32.totalorder %s27, 4
      %s29 = scalar_select %p28, 0, %s27
      %s30 = sadd.s32 1, %s19
      %s31 = scalar_select %p28, %s30, %s19
      %p32 = scmp.ge.s32.totalorder %s31, 1
      %s33 = scalar_select %p32, 0, %s31
      %s34 = sadd.s32 1, %s18
      %s35 = scalar_select %p32, %s34, %s18
      %p36 = scmp.ge.s32.totalorder %s35, 2
      %s37 = scalar_select %p36, 0, %s35
      %s39 = sadd.s32 %s38, 1
      %p42 = scmp.eq.s32.totalorder %s11, 7
      %p43 = scmp.ne.s32.totalorder %s38, %s40
      %p44 = scmp.eq.s32.totalorder %s11, 0
      %p45 = por %p43, %p44
      %p46 = scmp.ne.s32.totalorder %s38, %s40
      %p47 = scmp.eq.s32.totalorder %s16, 7
      %p48 = por %p46, %p47
      %p49 = scmp.ne.s32.totalorder %s40, %s41
      %p50 = scmp.eq.s32.totalorder %s16, 0
      %p51 = por %p49, %p50
      %p52 = scmp.ne.s32.totalorder %s40, %s41
      %p53 = scmp.eq.s32.totalorder %s17, 7
      %p54 = por %p52, %p53
      %p56 = scmp.ne.s32.totalorder %s41, %s55
      %p57 = scmp.eq.s32.totalorder %s17, 0
      %p58 = por %p56, %p57
      %s59 = ssub.s32 %s18, %s37
      %s60 = ssub.s32 %s20, %s29
      %s61 = sor.u32 %s59, %s60
      %p62 = scmp.eq.s32.totalorder %s61, 0
      %s64 = sadd.s32 %s63, 1
      %s65 = scalar_select %p62, %s63, %s64
      %p68 = pneg %p62
      %p69 = scmp.eq.s32.totalorder %s11, 7
      %p70 = por %p68, %p69
      %p71 = scmp.ne.s32.totalorder %s63, %s66
      %p72 = scmp.eq.s32.totalorder %s11, 0
      %p73 = por %p71, %p72
      %p74 = scmp.ne.s32.totalorder %s63, %s66
      %p75 = scmp.eq.s32.totalorder %s16, 7
      %p76 = por %p74, %p75
      %p77 = scmp.ne.s32.totalorder %s66, %s67
      %p78 = scmp.eq.s32.totalorder %s16, 0
      %p79 = por %p77, %p78
      %p80 = scmp.ne.s32.totalorder %s66, %s67
      %p81 = scmp.eq.s32.totalorder %s17, 7
      %p82 = por %p80, %p81
      %p84 = scmp.ne.s32.totalorder %s67, %s83
      %p85 = scmp.eq.s32.totalorder %s17, 0
      %p86 = por %p84, %p85
      %s87 = ssub.s32 %s20, %s29
      %s88 = ssub.s32 %s19, %s33
      %s89 = sor.u32 %s87, %s88
      %p90 = scmp.eq.s32.totalorder %s89, 0
      %s92 = sadd.s32 %s91, 1
      %s93 = scalar_select %p90, %s91, %s92
      %p96 = pneg %p90
      %p97 = scmp.eq.s32.totalorder %s11, 7
      %p98 = por %p96, %p97
      %p99 = scmp.ne.s32.totalorder %s91, %s94
      %p100 = scmp.eq.s32.totalorder %s11, 0
      %p101 = por %p99, %p100
      %p102 = scmp.ne.s32.totalorder %s91, %s94
      %p103 = scmp.eq.s32.totalorder %s16, 7
      %p104 = por %p102, %p103
      %p105 = scmp.ne.s32.totalorder %s94, %s95
      %p106 = scmp.eq.s32.totalorder %s16, 0
      %p107 = por %p105, %p106
      %p108 = scmp.ne.s32.totalorder %s94, %s95
      %p109 = scmp.eq.s32.totalorder %s17, 7
      %p110 = por %p108, %p109
      %p112 = scmp.ne.s32.totalorder %s95, %s111
      %p113 = scmp.eq.s32.totalorder %s17, 0
      %p114 = por %p112, %p113
      %s115 = ssub.s32 %s19, %s33
      %p116 = scmp.eq.s32.totalorder %s115, 0
      %s118 = sadd.s32 %s117, 1
      %s119 = scalar_select %p116, %s117, %s118
      %p122 = pneg %p116
      %p123 = scmp.eq.s32.totalorder %s11, 7
      %p124 = por %p122, %p123
      %p125 = scmp.ne.s32.totalorder %s117, %s120
      %p126 = scmp.eq.s32.totalorder %s11, 0
      %p127 = por %p125, %p126
      %p128 = scmp.ne.s32.totalorder %s117, %s120
      %p129 = scmp.eq.s32.totalorder %s16, 7
      %p130 = por %p128, %p129
      %p131 = scmp.ne.s32.totalorder %s120, %s121
      %p132 = scmp.eq.s32.totalorder %s16, 0
      %p133 = por %p131, %p132
      %p134 = scmp.ne.s32.totalorder %s120, %s121
      %p135 = scmp.eq.s32.totalorder %s17, 7
      %p136 = por %p134, %p135
      %p138 = scmp.ne.s32.totalorder %s121, %s137
      %p139 = scmp.eq.s32.totalorder %s17, 0
      %p140 = por %p138, %p139
      %s141 = ssub.s32 %s18, %s37
      %s142 = ssub.s32 %s19, %s33
      %s143 = sor.u32 %s141, %s142
      %p144 = scmp.eq.s32.totalorder %s143, 0
      %s146 = sadd.s32 %s145, 1
      %s147 = scalar_select %p144, %s145, %s146
      %p150 = pneg %p144
      %p151 = scmp.eq.s32.totalorder %s11, 7
      %p152 = por %p150, %p151
      %p153 = scmp.ne.s32.totalorder %s145, %s148
      %p154 = scmp.eq.s32.totalorder %s11, 0
      %p155 = por %p153, %p154
      %p156 = scmp.ne.s32.totalorder %s145, %s148
      %p157 = scmp.eq.s32.totalorder %s16, 7
      %p158 = por %p156, %p157
      %p159 = scmp.ne.s32.totalorder %s148, %s149
      %p160 = scmp.eq.s32.totalorder %s16, 0
      %p161 = por %p159, %p160
      %p162 = scmp.ne.s32.totalorder %s148, %s149
      %p163 = scmp.eq.s32.totalorder %s17, 7
      %p164 = por %p162, %p163
      %p166 = scmp.ne.s32.totalorder %s149, %s165
      %p167 = scmp.eq.s32.totalorder %s17, 0
      %p168 = por %p166, %p167
      %p169 = scmp.le.s32.totalorder 1, %s11
      %p170 = scmp.lt.s32.totalorder %s11, 9
      %p171 = pnand %p169, %p170
      %p172 = pneg %p171
      // Predicated region
      $region9: #{discriminator_forward.26} parent=5 // pred_check
        _
      $region10: #{discriminator_forward.26} parent=5 // pred_check_branch
        %174 = sbr.rel (%p171) target = $region12
      $region11: #{discriminator_forward.26} parent=5 // pred_region
        %s175 = ssub.s32 %s11, 1
        // Predicated region
        $region13: #{discriminator_forward.26} parent=11 // pred_check
          %p176 = pneg %p51
        $region14: #{discriminator_forward.26} parent=11 // pred_check_branch
          %178 = sbr.rel (%p176) target = $region16
        $region15: #{discriminator_forward.26} parent=11 // pred_region
          _
        $region16: #{discriminator_forward.26} parent=11 // pred_fallthru
          _
        // Predicated region
        $region17: #{discriminator_forward.26} parent=11 // pred_check
          %p179 = pneg %p133
        $region18: #{discriminator_forward.26} parent=11 // pred_check_branch
          %181 = sbr.rel (%p179) target = $region20
        $region19: #{discriminator_forward.26} parent=11 // pred_region
          %p182 = scmp.lt.s32.totalorder %s22, 0
          %s183 = scalar_select %p182, %s22, 0
          %s184 = scalar_lea.vmem %s3, %s183
        $region20: #{discriminator_forward.26} parent=11 // pred_fallthru
          _
      $region12: #{discriminator_forward.26} parent=5 // pred_fallthru
        _
      %p185 = scmp.lt.s32.totalorder %s11, 8
      // Predicated region
      $region21: #{discriminator_forward.26} parent=5 // pred_check
        %p186 = pneg %p185
      $region22: #{discriminator_forward.26} parent=5 // pred_check_branch
        %188 = sbr.rel (%p186) target = $region24
      $region23: #{discriminator_forward.26} parent=5 // pred_region
        // Predicated region
        $region25: #{discriminator_forward.26} parent=23 // pred_check
          %p189 = pneg %p73
        $region26: #{discriminator_forward.26} parent=23 // pred_check_branch
          %191 = sbr.rel (%p189) target = $region28
        $region27: #{discriminator_forward.26} parent=23 // pred_region
          %s192 = sand.u32 %s63, 1
          %s193 = sand.u32 %s63, 1
          %s194 = smul.addr %s193, 512
          %s195 = scalar_lea.vmem [#allocation4], %s194
          %s196 = smul.u32 32, %s18
          %s197 = smul.u32 4, %s20
          %s198 = smul.addr %s196, 16
          %s199 = sadd.s32 %s197, %s198
          %s200 = smul.addr %s199, 4
          %s201 = scalar_lea.vmem %s1, %s200
          // Predicated region
          $region29: #{discriminator_forward.26} parent=27 // pred_check
            _
          $region30: #{discriminator_forward.26} parent=27 // pred_check_branch
            %203 = sbr.rel (0) target = $region32
          $region31: #{discriminator_forward.26} parent=27 // pred_region
            // Predicated region
            $region33: #{discriminator_forward.26} parent=31 // pred_check
              _
            $region34: #{discriminator_forward.26} parent=31 // pred_check_branch
              %205 = sbr.rel (0) target = $region36
            $region35: #{discriminator_forward.26} parent=31 // pred_region
              loop: start=0, step=1, limit=1
              $region37: #{discriminator_forward.26} parent=35 // loop_pre_header
                _
              $region38: #{discriminator_forward.26} parent=35 // loop_header
                %s207 = sphi 0, %s211
                %p208 = scmp.ge.s32.totalorder %s207, 1
                %s212 = sphi %s201, %s201
                %s213 = sphi %s195, %s195
              $region39: #{discriminator_forward.26} parent=35 // loop_header_branch
                %210 = sbr.rel (%p208) target = $region43
              $region40: #{discriminator_forward.26} parent=35 // loop_body
                %v214 = vld [vmem:[%s212] sm:$0xff]
                %215 = vst [vmem:[%s213] sm:$0xff] %v214
                %v216 = vld [vmem:[%s212 + $0x8] sm:$0xff]
                %217 = vst [vmem:[%s213 + $0x8] sm:$0xff] %v216
                %v218 = vld [vmem:[%s212 + $0x40] sm:$0xff]
                %219 = vst [vmem:[%s213 + $0x10] sm:$0xff] %v218
                %v220 = vld [vmem:[%s212 + $0x48] sm:$0xff]
                %221 = vst [vmem:[%s213 + $0x18] sm:$0xff] %v220
                %v222 = vld [vmem:[%s212 + $0x80] sm:$0xff]
                %223 = vst [vmem:[%s213 + $0x20] sm:$0xff] %v222
                %v224 = vld [vmem:[%s212 + $0x88] sm:$0xff]
                %225 = vst [vmem:[%s213 + $0x28] sm:$0xff] %v224
                %v226 = vld [vmem:[%s212 + $0xc0] sm:$0xff]
                %227 = vst [vmem:[%s213 + $0x30] sm:$0xff] %v226
                %v228 = vld [vmem:[%s212 + $0xc8] sm:$0xff]
                %229 = vst [vmem:[%s213 + $0x38] sm:$0xff] %v228
                %v230 = vld [vmem:[%s212 + $0x100] sm:$0xff]
                %231 = vst [vmem:[%s213 + $0x40] sm:$0xff] %v230
                %v232 = vld [vmem:[%s212 + $0x108] sm:$0xff]
                %233 = vst [vmem:[%s213 + $0x48] sm:$0xff] %v232
                %v234 = vld [vmem:[%s212 + $0x140] sm:$0xff]
                %235 = vst [vmem:[%s213 + $0x50] sm:$0xff] %v234
                %v236 = vld [vmem:[%s212 + $0x148] sm:$0xff]
                %237 = vst [vmem:[%s213 + $0x58] sm:$0xff] %v236
                %v238 = vld [vmem:[%s212 + $0x180] sm:$0xff]
                %239 = vst [vmem:[%s213 + $0x60] sm:$0xff] %v238
                %v240 = vld [vmem:[%s212 + $0x188] sm:$0xff]
                %241 = vst [vmem:[%s213 + $0x68] sm:$0xff] %v240
                %v242 = vld [vmem:[%s212 + $0x1c0] sm:$0xff]
                %243 = vst [vmem:[%s213 + $0x70] sm:$0xff] %v242
                %v244 = vld [vmem:[%s212 + $0x1c8] sm:$0xff]
                %245 = vst [vmem:[%s213 + $0x78] sm:$0xff] %v244
                %v246 = vld [vmem:[%s212 + $0x200] sm:$0xff]
                %247 = vst [vmem:[%s213 + $0x80] sm:$0xff] %v246
                %v248 = vld [vmem:[%s212 + $0x208] sm:$0xff]
                %249 = vst [vmem:[%s213 + $0x88] sm:$0xff] %v248
                %v250 = vld [vmem:[%s212 + $0x240] sm:$0xff]
                %251 = vst [vmem:[%s213 + $0x90] sm:$0xff] %v250
                %v252 = vld [vmem:[%s212 + $0x248] sm:$0xff]
                %253 = vst [vmem:[%s213 + $0x98] sm:$0xff] %v252
                %v254 = vld [vmem:[%s212 + $0x280] sm:$0xff]
                %255 = vst [vmem:[%s213 + $0xa0] sm:$0xff] %v254
                %v256 = vld [vmem:[%s212 + $0x288] sm:$0xff]
                %257 = vst [vmem:[%s213 + $0xa8] sm:$0xff] %v256
                %v258 = vld [vmem:[%s212 + $0x2c0] sm:$0xff]
                %259 = vst [vmem:[%s213 + $0xb0] sm:$0xff] %v258
                %v260 = vld [vmem:[%s212 + $0x2c8] sm:$0xff]
                %261 = vst [vmem:[%s213 + $0xb8] sm:$0xff] %v260
                %v262 = vld [vmem:[%s212 + $0x300] sm:$0xff]
                %263 = vst [vmem:[%s213 + $0xc0] sm:$0xff] %v262
                %v264 = vld [vmem:[%s212 + $0x308] sm:$0xff]
                %265 = vst [vmem:[%s213 + $0xc8] sm:$0xff] %v264
                %v266 = vld [vmem:[%s212 + $0x340] sm:$0xff]
                %267 = vst [vmem:[%s213 + $0xd0] sm:$0xff] %v266
                %v268 = vld [vmem:[%s212 + $0x348] sm:$0xff]
                %269 = vst [vmem:[%s213 + $0xd8] sm:$0xff] %v268
                %v270 = vld [vmem:[%s212 + $0x380] sm:$0xff]
                %271 = vst [vmem:[%s213 + $0xe0] sm:$0xff] %v270
                %v272 = vld [vmem:[%s212 + $0x388] sm:$0xff]
                %273 = vst [vmem:[%s213 + $0xe8] sm:$0xff] %v272
                %v274 = vld [vmem:[%s212 + $0x3c0] sm:$0xff]
                %275 = vst [vmem:[%s213 + $0xf0] sm:$0xff] %v274
                %v276 = vld [vmem:[%s212 + $0x3c8] sm:$0xff]
                %277 = vst [vmem:[%s213 + $0xf8] sm:$0xff] %v276
                %v278 = vld [vmem:[%s212 + $0x400] sm:$0xff]
                %279 = vst [vmem:[%s213 + $0x100] sm:$0xff] %v278
                %v280 = vld [vmem:[%s212 + $0x408] sm:$0xff]
                %281 = vst [vmem:[%s213 + $0x108] sm:$0xff] %v280
                %v282 = vld [vmem:[%s212 + $0x440] sm:$0xff]
                %283 = vst [vmem:[%s213 + $0x110] sm:$0xff] %v282
                %v284 = vld [vmem:[%s212 + $0x448] sm:$0xff]
                %285 = vst [vmem:[%s213 + $0x118] sm:$0xff] %v284
                %v286 = vld [vmem:[%s212 + $0x480] sm:$0xff]
                %287 = vst [vmem:[%s213 + $0x120] sm:$0xff] %v286
                %v288 = vld [vmem:[%s212 + $0x488] sm:$0xff]
                %289 = vst [vmem:[%s213 + $0x128] sm:$0xff] %v288
                %v290 = vld [vmem:[%s212 + $0x4c0] sm:$0xff]
                %291 = vst [vmem:[%s213 + $0x130] sm:$0xff] %v290
                %v292 = vld [vmem:[%s212 + $0x4c8] sm:$0xff]
                %293 = vst [vmem:[%s213 + $0x138] sm:$0xff] %v292
                %v294 = vld [vmem:[%s212 + $0x500] sm:$0xff]
                %295 = vst [vmem:[%s213 + $0x140] sm:$0xff] %v294
                %v296 = vld [vmem:[%s212 + $0x508] sm:$0xff]
                %297 = vst [vmem:[%s213 + $0x148] sm:$0xff] %v296
                %v298 = vld [vmem:[%s212 + $0x540] sm:$0xff]
                %299 = vst [vmem:[%s213 + $0x150] sm:$0xff] %v298
                %v300 = vld [vmem:[%s212 + $0x548] sm:$0xff]
                %301 = vst [vmem:[%s213 + $0x158] sm:$0xff] %v300
                %v302 = vld [vmem:[%s212 + $0x580] sm:$0xff]
                %303 = vst [vmem:[%s213 + $0x160] sm:$0xff] %v302
                %v304 = vld [vmem:[%s212 + $0x588] sm:$0xff]
                %305 = vst [vmem:[%s213 + $0x168] sm:$0xff] %v304
                %v306 = vld [vmem:[%s212 + $0x5c0] sm:$0xff]
                %307 = vst [vmem:[%s213 + $0x170] sm:$0xff] %v306
                %v308 = vld [vmem:[%s212 + $0x5c8] sm:$0xff]
                %309 = vst [vmem:[%s213 + $0x178] sm:$0xff] %v308
                %v310 = vld [vmem:[%s212 + $0x600] sm:$0xff]
                %311 = vst [vmem:[%s213 + $0x180] sm:$0xff] %v310
                %v312 = vld [vmem:[%s212 + $0x608] sm:$0xff]
                %313 = vst [vmem:[%s213 + $0x188] sm:$0xff] %v312
                %v314 = vld [vmem:[%s212 + $0x640] sm:$0xff]
                %315 = vst [vmem:[%s213 + $0x190] sm:$0xff] %v314
                %v316 = vld [vmem:[%s212 + $0x648] sm:$0xff]
                %317 = vst [vmem:[%s213 + $0x198] sm:$0xff] %v316
                %v318 = vld [vmem:[%s212 + $0x680] sm:$0xff]
                %319 = vst [vmem:[%s213 + $0x1a0] sm:$0xff] %v318
                %v320 = vld [vmem:[%s212 + $0x688] sm:$0xff]
                %321 = vst [vmem:[%s213 + $0x1a8] sm:$0xff] %v320
                %v322 = vld [vmem:[%s212 + $0x6c0] sm:$0xff]
                %323 = vst [vmem:[%s213 + $0x1b0] sm:$0xff] %v322
                %v324 = vld [vmem:[%s212 + $0x6c8] sm:$0xff]
                %325 = vst [vmem:[%s213 + $0x1b8] sm:$0xff] %v324
                %v326 = vld [vmem:[%s212 + $0x700] sm:$0xff]
                %327 = vst [vmem:[%s213 + $0x1c0] sm:$0xff] %v326
                %v328 = vld [vmem:[%s212 + $0x708] sm:$0xff]
                %329 = vst [vmem:[%s213 + $0x1c8] sm:$0xff] %v328
                %v330 = vld [vmem:[%s212 + $0x740] sm:$0xff]
                %331 = vst [vmem:[%s213 + $0x1d0] sm:$0xff] %v330
                %v332 = vld [vmem:[%s212 + $0x748] sm:$0xff]
                %333 = vst [vmem:[%s213 + $0x1d8] sm:$0xff] %v332
                %v334 = vld [vmem:[%s212 + $0x780] sm:$0xff]
                %335 = vst [vmem:[%s213 + $0x1e0] sm:$0xff] %v334
                %v336 = vld [vmem:[%s212 + $0x788] sm:$0xff]
                %337 = vst [vmem:[%s213 + $0x1e8] sm:$0xff] %v336
                %v338 = vld [vmem:[%s212 + $0x7c0] sm:$0xff]
                %339 = vst [vmem:[%s213 + $0x1f0] sm:$0xff] %v338
                %v340 = vld [vmem:[%s212 + $0x7c8] sm:$0xff]
                %341 = vst [vmem:[%s213 + $0x1f8] sm:$0xff] %v340
              $region41: #{discriminator_forward.26} parent=35 // loop_footer
                %s211 = sadd.s32 1, %s207
              $region42: #{discriminator_forward.26} parent=35 // loop_footer_branch
                %206 = sbr.rel target = $region38
              $region43: #{discriminator_forward.26} parent=35 // loop_exit
                _
            $region36: #{discriminator_forward.26} parent=31 // pred_fallthru
              _
            // Predicated region
            $region44: #{discriminator_forward.26} parent=31 // pred_check
              _
            $region45: #{discriminator_forward.26} parent=31 // pred_check_branch
              %343 = sbr.rel target = $region47
            $region46: #{discriminator_forward.26} parent=31 // pred_region
              _
            $region47: #{discriminator_forward.26} parent=31 // pred_fallthru
              _
          $region32: #{discriminator_forward.26} parent=27 // pred_fallthru
            _
          %344 = vnop
        $region28: #{discriminator_forward.26} parent=23 // pred_fallthru
          _
        // Predicated region
        $region48: #{discriminator_forward.26} parent=23 // pred_check
          %p345 = pneg %p101
        $region49: #{discriminator_forward.26} parent=23 // pred_check_branch
          %347 = sbr.rel (%p345) target = $region51
        $region50: #{discriminator_forward.26} parent=23 // pred_region
          %s348 = smul.u32 64, %s20
          %p349 = scmp.lt.s32.totalorder %s348, 255
          %s350 = scalar_select %p349, %s348, 255
          %p351 = scmp.lt.s32.totalorder %s19, 0
          %s352 = scalar_select %p351, %s19, 0
          %s353 = sadd.s32 %s352, %s350
          %s354 = smul.addr %s353, 4
          %s355 = scalar_lea.vmem %s2, %s354
          %s356 = smul.u32 64, %s20
        $region51: #{discriminator_forward.26} parent=23 // pred_fallthru
          _
      $region24: #{discriminator_forward.26} parent=5 // pred_fallthru
        _
      %p357 = scmp.le.s32.totalorder 1, %s11
      %p358 = scmp.lt.s32.totalorder %s11, 9
      %p359 = pnand %p357, %p358
      %p360 = pneg %p359
      // Predicated region
      $region52: #{discriminator_forward.26} parent=5 // pred_check
        _
      $region53: #{discriminator_forward.26} parent=5 // pred_check_branch
        %362 = sbr.rel (%p359) target = $region55
      $region54: #{discriminator_forward.26} parent=5 // pred_region
        %s363 = ssub.s32 %s11, 1
        %s364 = sand.u32 %s66, 1
        %s365 = sand.u32 %s66, 1
        %s366 = smul.addr %s365, 512
        %s367 = scalar_lea.vmem [#allocation4], %s366
        // Predicated region
        $region56: #{discriminator_forward.26} parent=54 // pred_check
          %p368 = pneg %p79
        $region57: #{discriminator_forward.26} parent=54 // pred_check_branch
          %370 = sbr.rel (%p368) target = $region59
        $region58: #{discriminator_forward.26} parent=54 // pred_region
          _
        $region59: #{discriminator_forward.26} parent=54 // pred_fallthru
          _
        %p371 = pneg %p51
        %p372 = pneg %p48
        %s373 = sand.u32 %s66, 1
        %s374 = sand.u32 %s66, 1
        %s375 = smul.addr %s374, 512
        %s376 = scalar_lea.vmem [#allocation4], %s375
        %p377 = pneg %p79
        %p378 = pneg %p76
        %s379 = smul.u32 64, %s23
        %p380 = scmp.lt.s32.totalorder %s379, 255
        %s381 = scalar_select %p380, %s379, 255
        %p382 = scmp.lt.s32.totalorder %s22, 0
        %s383 = scalar_select %p382, %s22, 0
        %s384 = sadd.s32 %s383, %s381
        %s385 = smul.addr %s384, 4
        %s386 = scalar_lea.vmem %s2, %s385
        %p387 = pneg %p107
        %p388 = pneg %p104
        %p389 = scmp.lt.s32.totalorder %s22, 0
        %s390 = scalar_select %p389, %s22, 0
        %s391 = scalar_lea.vmem %s3, %s390
        %p392 = pneg %p133
        %p393 = pneg %p130
        %p394 = pneg %p161
        %p395 = pneg %p158
        %s396 = smul.u32 32, %s21
        %p397 = scmp.lt.s32.totalorder %s396, 63
        %s398 = scalar_select %p397, %s396, 63
        %p399 = scmp.lt.s32.totalorder %s22, 0
        %s400 = scalar_select %p399, %s22, 0
        %s401 = sadd.s32 %s400, %s398
        %s402 = smul.addr %s401, 4
        %s403 = scalar_lea.vmem %s4, %s402
        %s404 = smul.u32 32, %s21
        %s405 = smul.u32 4, %s23
        %s406 = smul.u32 64, %s23
        %p407 = scmp.lt.s32.totalorder %s406, 255
        %s408 = scalar_select %p407, %s406, 255
        %p409 = scmp.lt.s32.totalorder %s22, 0
        %s410 = scalar_select %p409, %s22, 0
        %s411 = sadd.s32 %s410, %s408
        %s412 = smul.addr %s411, 4
        %s413 = scalar_lea.vmem %s2, %s412
        %s414 = smul.u32 64, %s23
        %p415 = scmp.lt.s32.totalorder %s22, 0
        %s416 = scalar_select %p415, %s22, 0
        %s417 = scalar_lea.vmem %s3, %s416
        %s418 = smul.u32 32, %s21
        %p419 = scmp.lt.s32.totalorder %s418, 63
        %s420 = scalar_select %p419, %s418, 63
        %p421 = scmp.lt.s32.totalorder %s22, 0
        %s422 = scalar_select %p421, %s22, 0
        %s423 = sadd.s32 %s422, %s420
        %s424 = smul.addr %s423, 4
        %s425 = scalar_lea.vmem %s4, %s424
        %s426 = smul.u32 32, %s21
        %p428 = scmp.eq.s32.totalorder %s23, 0
        // Predicated region
        $region60: #{discriminator_forward.26} parent=54 // pred_check
          %p429 = pneg %p428
        $region61: #{discriminator_forward.26} parent=54 // pred_check_branch
          %431 = sbr.rel (%p429) target = $region63
        $region62: #{discriminator_forward.26} parent=54 // pred_region
          %432 = vst [vmem:[#allocation2] sm:$0xff] 0.0
          %433 = vst [vmem:[#allocation2 + $0x8] sm:$0xff] 0.0
          %434 = vst [vmem:[#allocation2 + $0x10] sm:$0xff] 0.0
          %435 = vst [vmem:[#allocation2 + $0x18] sm:$0xff] 0.0
          %436 = vst [vmem:[#allocation2 + $0x20] sm:$0xff] 0.0
          %437 = vst [vmem:[#allocation2 + $0x28] sm:$0xff] 0.0
          %438 = vst [vmem:[#allocation2 + $0x30] sm:$0xff] 0.0
          %439 = vst [vmem:[#allocation2 + $0x38] sm:$0xff] 0.0
          %440 = vst [vmem:[#allocation2 + $0x40] sm:$0xff] 0.0
          %441 = vst [vmem:[#allocation2 + $0x48] sm:$0xff] 0.0
          %442 = vst [vmem:[#allocation2 + $0x50] sm:$0xff] 0.0
          %443 = vst [vmem:[#allocation2 + $0x58] sm:$0xff] 0.0
          %444 = vst [vmem:[#allocation2 + $0x60] sm:$0xff] 0.0
          %445 = vst [vmem:[#allocation2 + $0x68] sm:$0xff] 0.0
          %446 = vst [vmem:[#allocation2 + $0x70] sm:$0xff] 0.0
          %447 = vst [vmem:[#allocation2 + $0x78] sm:$0xff] 0.0
          %448 = vst [vmem:[#allocation2 + $0x80] sm:$0xff] 0.0
          %449 = vst [vmem:[#allocation2 + $0x88] sm:$0xff] 0.0
          %450 = vst [vmem:[#allocation2 + $0x90] sm:$0xff] 0.0
          %451 = vst [vmem:[#allocation2 + $0x98] sm:$0xff] 0.0
          %452 = vst [vmem:[#allocation2 + $0xa0] sm:$0xff] 0.0
          %453 = vst [vmem:[#allocation2 + $0xa8] sm:$0xff] 0.0
          %454 = vst [vmem:[#allocation2 + $0xb0] sm:$0xff] 0.0
          %455 = vst [vmem:[#allocation2 + $0xb8] sm:$0xff] 0.0
          %456 = vst [vmem:[#allocation2 + $0xc0] sm:$0xff] 0.0
          %457 = vst [vmem:[#allocation2 + $0xc8] sm:$0xff] 0.0
          %458 = vst [vmem:[#allocation2 + $0xd0] sm:$0xff] 0.0
          %459 = vst [vmem:[#allocation2 + $0xd8] sm:$0xff] 0.0
          %460 = vst [vmem:[#allocation2 + $0xe0] sm:$0xff] 0.0
          %461 = vst [vmem:[#allocation2 + $0xe8] sm:$0xff] 0.0
          %462 = vst [vmem:[#allocation2 + $0xf0] sm:$0xff] 0.0
          %463 = vst [vmem:[#allocation2 + $0xf8] sm:$0xff] 0.0
        $region63: #{discriminator_forward.26} parent=54 // pred_fallthru
          _
        %v464 = vld [vmem:[#allocation2] sm:$0xff]
        %v465 = vld [vmem:[#allocation2 + $0x8] sm:$0xff]
        %v466 = vld [vmem:[#allocation2 + $0x10] sm:$0xff]
        %v467 = vld [vmem:[#allocation2 + $0x18] sm:$0xff]
        %v468 = vld [vmem:[#allocation2 + $0x20] sm:$0xff]
        %v469 = vld [vmem:[#allocation2 + $0x28] sm:$0xff]
        %v470 = vld [vmem:[#allocation2 + $0x30] sm:$0xff]
        %v471 = vld [vmem:[#allocation2 + $0x38] sm:$0xff]
        %v472 = vld [vmem:[#allocation2 + $0x40] sm:$0xff]
        %v473 = vld [vmem:[#allocation2 + $0x48] sm:$0xff]
        %v474 = vld [vmem:[#allocation2 + $0x50] sm:$0xff]
        %v475 = vld [vmem:[#allocation2 + $0x58] sm:$0xff]
        %v476 = vld [vmem:[#allocation2 + $0x60] sm:$0xff]
        %v477 = vld [vmem:[#allocation2 + $0x68] sm:$0xff]
        %v478 = vld [vmem:[#allocation2 + $0x70] sm:$0xff]
        %v479 = vld [vmem:[#allocation2 + $0x78] sm:$0xff]
        %v480 = vld [vmem:[#allocation2 + $0x80] sm:$0xff]
        %v481 = vld [vmem:[#allocation2 + $0x88] sm:$0xff]
        %v482 = vld [vmem:[#allocation2 + $0x90] sm:$0xff]
        %v483 = vld [vmem:[#allocation2 + $0x98] sm:$0xff]
        %v484 = vld [vmem:[#allocation2 + $0xa0] sm:$0xff]
        %v485 = vld [vmem:[#allocation2 + $0xa8] sm:$0xff]
        %v486 = vld [vmem:[#allocation2 + $0xb0] sm:$0xff]
        %v487 = vld [vmem:[#allocation2 + $0xb8] sm:$0xff]
        %v488 = vld [vmem:[#allocation2 + $0xc0] sm:$0xff]
        %v489 = vld [vmem:[#allocation2 + $0xc8] sm:$0xff]
        %v490 = vld [vmem:[#allocation2 + $0xd0] sm:$0xff]
        %v491 = vld [vmem:[#allocation2 + $0xd8] sm:$0xff]
        %v492 = vld [vmem:[#allocation2 + $0xe0] sm:$0xff]
        %v493 = vld [vmem:[#allocation2 + $0xe8] sm:$0xff]
        %v494 = vld [vmem:[#allocation2 + $0xf0] sm:$0xff]
        %v495 = vld [vmem:[#allocation2 + $0xf8] sm:$0xff]
        %v496 = vld [vmem:[%s367] sm:$0xff]
        %v497 = vld [vmem:[%s367 + $0x8] sm:$0xff]
        %v498 = vld [vmem:[%s367 + $0x10] sm:$0xff]
        %v499 = vld [vmem:[%s367 + $0x18] sm:$0xff]
        %v500 = vld [vmem:[%s367 + $0x20] sm:$0xff]
        %v501 = vld [vmem:[%s367 + $0x28] sm:$0xff]
        %v502 = vld [vmem:[%s367 + $0x30] sm:$0xff]
        %v503 = vld [vmem:[%s367 + $0x38] sm:$0xff]
        %v504 = vld [vmem:[%s367 + $0x40] sm:$0xff]
        %v505 = vld [vmem:[%s367 + $0x48] sm:$0xff]
        %v506 = vld [vmem:[%s367 + $0x50] sm:$0xff]
        %v507 = vld [vmem:[%s367 + $0x58] sm:$0xff]
        %v508 = vld [vmem:[%s367 + $0x60] sm:$0xff]
        %v509 = vld [vmem:[%s367 + $0x68] sm:$0xff]
        %v510 = vld [vmem:[%s367 + $0x70] sm:$0xff]
        %v511 = vld [vmem:[%s367 + $0x78] sm:$0xff]
        %v512 = vld [vmem:[%s367 + $0x80] sm:$0xff]
        %v513 = vld [vmem:[%s367 + $0x88] sm:$0xff]
        %v514 = vld [vmem:[%s367 + $0x90] sm:$0xff]
        %v515 = vld [vmem:[%s367 + $0x98] sm:$0xff]
        %v516 = vld [vmem:[%s367 + $0xa0] sm:$0xff]
        %v517 = vld [vmem:[%s367 + $0xa8] sm:$0xff]
        %v518 = vld [vmem:[%s367 + $0xb0] sm:$0xff]
        %v519 = vld [vmem:[%s367 + $0xb8] sm:$0xff]
        %v520 = vld [vmem:[%s367 + $0xc0] sm:$0xff]
        %v521 = vld [vmem:[%s367 + $0xc8] sm:$0xff]
        %v522 = vld [vmem:[%s367 + $0xd0] sm:$0xff]
        %v523 = vld [vmem:[%s367 + $0xd8] sm:$0xff]
        %v524 = vld [vmem:[%s367 + $0xe0] sm:$0xff]
        %v525 = vld [vmem:[%s367 + $0xe8] sm:$0xff]
        %v526 = vld [vmem:[%s367 + $0xf0] sm:$0xff]
        %v527 = vld [vmem:[%s367 + $0xf8] sm:$0xff]
        %v528 = vld [vmem:[%s367 + $0x100] sm:$0xff]
        %v529 = vld [vmem:[%s367 + $0x108] sm:$0xff]
        %v530 = vld [vmem:[%s367 + $0x110] sm:$0xff]
        %v531 = vld [vmem:[%s367 + $0x118] sm:$0xff]
        %v532 = vld [vmem:[%s367 + $0x120] sm:$0xff]
        %v533 = vld [vmem:[%s367 + $0x128] sm:$0xff]
        %v534 = vld [vmem:[%s367 + $0x130] sm:$0xff]
        %v535 = vld [vmem:[%s367 + $0x138] sm:$0xff]
        %v536 = vld [vmem:[%s367 + $0x140] sm:$0xff]
        %v537 = vld [vmem:[%s367 + $0x148] sm:$0xff]
        %v538 = vld [vmem:[%s367 + $0x150] sm:$0xff]
        %v539 = vld [vmem:[%s367 + $0x158] sm:$0xff]
        %v540 = vld [vmem:[%s367 + $0x160] sm:$0xff]
        %v541 = vld [vmem:[%s367 + $0x168] sm:$0xff]
        %v542 = vld [vmem:[%s367 + $0x170] sm:$0xff]
        %v543 = vld [vmem:[%s367 + $0x178] sm:$0xff]
        %v544 = vld [vmem:[%s367 + $0x180] sm:$0xff]
        %v545 = vld [vmem:[%s367 + $0x188] sm:$0xff]
        %v546 = vld [vmem:[%s367 + $0x190] sm:$0xff]
        %v547 = vld [vmem:[%s367 + $0x198] sm:$0xff]
        %v548 = vld [vmem:[%s367 + $0x1a0] sm:$0xff]
        %v549 = vld [vmem:[%s367 + $0x1a8] sm:$0xff]
        %v550 = vld [vmem:[%s367 + $0x1b0] sm:$0xff]
        %v551 = vld [vmem:[%s367 + $0x1b8] sm:$0xff]
        %v552 = vld [vmem:[%s367 + $0x1c0] sm:$0xff]
        %v553 = vld [vmem:[%s367 + $0x1c8] sm:$0xff]
        %v554 = vld [vmem:[%s367 + $0x1d0] sm:$0xff]
        %v555 = vld [vmem:[%s367 + $0x1d8] sm:$0xff]
        %v556 = vld [vmem:[%s367 + $0x1e0] sm:$0xff]
        %v557 = vld [vmem:[%s367 + $0x1e8] sm:$0xff]
        %v558 = vld [vmem:[%s367 + $0x1f0] sm:$0xff]
        %v559 = vld [vmem:[%s367 + $0x1f8] sm:$0xff]
        %v560 = vld [vmem:[%s413] sm:$0xf]
        %v561 = vld [vmem:[%s413 + $0x4] sm:$0xf]
        %v562 = vld [vmem:[%s413 + $0x8] sm:$0xf]
        %v563 = vld [vmem:[%s413 + $0xc] sm:$0xf]
        %v564 = vld [vmem:[%s413 + $0x10] sm:$0xf]
        %v565 = vld [vmem:[%s413 + $0x14] sm:$0xf]
        %v566 = vld [vmem:[%s413 + $0x18] sm:$0xf]
        %v567 = vld [vmem:[%s413 + $0x1c] sm:$0xf]
        %v568 = vld [vmem:[%s413 + $0x20] sm:$0xf]
        %v569 = vld [vmem:[%s413 + $0x24] sm:$0xf]
        %v570 = vld [vmem:[%s413 + $0x28] sm:$0xf]
        %v571 = vld [vmem:[%s413 + $0x2c] sm:$0xf]
        %v572 = vld [vmem:[%s413 + $0x30] sm:$0xf]
        %v573 = vld [vmem:[%s413 + $0x34] sm:$0xf]
        %v574 = vld [vmem:[%s413 + $0x38] sm:$0xf]
        %v575 = vld [vmem:[%s413 + $0x3c] sm:$0xf]
        %v576 = vld [vmem:[%s413 + $0x40] sm:$0xf]
        %v577 = vld [vmem:[%s413 + $0x44] sm:$0xf]
        %v578 = vld [vmem:[%s413 + $0x48] sm:$0xf]
        %v579 = vld [vmem:[%s413 + $0x4c] sm:$0xf]
        %v580 = vld [vmem:[%s413 + $0x50] sm:$0xf]
        %v581 = vld [vmem:[%s413 + $0x54] sm:$0xf]
        %v582 = vld [vmem:[%s413 + $0x58] sm:$0xf]
        %v583 = vld [vmem:[%s413 + $0x5c] sm:$0xf]
        %v584 = vld [vmem:[%s413 + $0x60] sm:$0xf]
        %v585 = vld [vmem:[%s413 + $0x64] sm:$0xf]
        %v586 = vld [vmem:[%s413 + $0x68] sm:$0xf]
        %v587 = vld [vmem:[%s413 + $0x6c] sm:$0xf]
        %v588 = vld [vmem:[%s413 + $0x70] sm:$0xf]
        %v589 = vld [vmem:[%s413 + $0x74] sm:$0xf]
        %v590 = vld [vmem:[%s413 + $0x78] sm:$0xf]
        %v591 = vld [vmem:[%s413 + $0x7c] sm:$0xf]
        %v592 = vld [vmem:[%s413 + $0x80] sm:$0xf]
        %v593 = vld [vmem:[%s413 + $0x84] sm:$0xf]
        %v594 = vld [vmem:[%s413 + $0x88] sm:$0xf]
        %v595 = vld [vmem:[%s413 + $0x8c] sm:$0xf]
        %v596 = vld [vmem:[%s413 + $0x90] sm:$0xf]
        %v597 = vld [vmem:[%s413 + $0x94] sm:$0xf]
        %v598 = vld [vmem:[%s413 + $0x98] sm:$0xf]
        %v599 = vld [vmem:[%s413 + $0x9c] sm:$0xf]
        %v600 = vld [vmem:[%s413 + $0xa0] sm:$0xf]
        %v601 = vld [vmem:[%s413 + $0xa4] sm:$0xf]
        %v602 = vld [vmem:[%s413 + $0xa8] sm:$0xf]
        %v603 = vld [vmem:[%s413 + $0xac] sm:$0xf]
        %v604 = vld [vmem:[%s413 + $0xb0] sm:$0xf]
        %v605 = vld [vmem:[%s413 + $0xb4] sm:$0xf]
        %v606 = vld [vmem:[%s413 + $0xb8] sm:$0xf]
        %v607 = vld [vmem:[%s413 + $0xbc] sm:$0xf]
        %v608 = vld [vmem:[%s413 + $0xc0] sm:$0xf]
        %v609 = vld [vmem:[%s413 + $0xc4] sm:$0xf]
        %v610 = vld [vmem:[%s413 + $0xc8] sm:$0xf]
        %v611 = vld [vmem:[%s413 + $0xcc] sm:$0xf]
        %v612 = vld [vmem:[%s413 + $0xd0] sm:$0xf]
        %v613 = vld [vmem:[%s413 + $0xd4] sm:$0xf]
        %v614 = vld [vmem:[%s413 + $0xd8] sm:$0xf]
        %v615 = vld [vmem:[%s413 + $0xdc] sm:$0xf]
        %v616 = vld [vmem:[%s413 + $0xe0] sm:$0xf]
        %v617 = vld [vmem:[%s413 + $0xe4] sm:$0xf]
        %v618 = vld [vmem:[%s413 + $0xe8] sm:$0xf]
        %v619 = vld [vmem:[%s413 + $0xec] sm:$0xf]
        %v620 = vld [vmem:[%s413 + $0xf0] sm:$0xf]
        %v621 = vld [vmem:[%s413 + $0xf4] sm:$0xf]
        %v622 = vld [vmem:[%s413 + $0xf8] sm:$0xf]
        %v623 = vld [vmem:[%s413 + $0xfc] sm:$0xf]
        %v688 = vunpack.c.l.b16 %v496
        %v689 = vunpack.c.h.b16 %v496
        %v690 = vunpack.c.l.b16 %v497
        %v691 = vunpack.c.h.b16 %v497
        %v692 = vunpack.c.l.b16 %v498
        %v693 = vunpack.c.h.b16 %v498
        %v694 = vunpack.c.l.b16 %v499
        %v695 = vunpack.c.h.b16 %v499
        %v696 = vunpack.c.l.b16 %v500
        %v697 = vunpack.c.h.b16 %v500
        %v698 = vunpack.c.l.b16 %v501
        %v699 = vunpack.c.h.b16 %v501
        %v700 = vunpack.c.l.b16 %v502
        %v701 = vunpack.c.h.b16 %v502
        %v702 = vunpack.c.l.b16 %v503
        %v703 = vunpack.c.h.b16 %v503
        %v704 = vunpack.c.l.b16 %v504
        %v705 = vunpack.c.h.b16 %v504
        %v706 = vunpack.c.l.b16 %v505
        %v707 = vunpack.c.h.b16 %v505
        %v708 = vunpack.c.l.b16 %v506
        %v709 = vunpack.c.h.b16 %v506
        %v710 = vunpack.c.l.b16 %v507
        %v711 = vunpack.c.h.b16 %v507
        %v712 = vunpack.c.l.b16 %v508
        %v713 = vunpack.c.h.b16 %v508
        %v714 = vunpack.c.l.b16 %v509
        %v715 = vunpack.c.h.b16 %v509
        %v716 = vunpack.c.l.b16 %v510
        %v717 = vunpack.c.h.b16 %v510
        %v718 = vunpack.c.l.b16 %v511
        %v719 = vunpack.c.h.b16 %v511
        %v720 = vunpack.c.l.b16 %v512
        %v721 = vunpack.c.h.b16 %v512
        %v722 = vunpack.c.l.b16 %v513
        %v723 = vunpack.c.h.b16 %v513
        %v724 = vunpack.c.l.b16 %v514
        %v725 = vunpack.c.h.b16 %v514
        %v726 = vunpack.c.l.b16 %v515
        %v727 = vunpack.c.h.b16 %v515
        %v728 = vunpack.c.l.b16 %v516
        %v729 = vunpack.c.h.b16 %v516
        %v730 = vunpack.c.l.b16 %v517
        %v731 = vunpack.c.h.b16 %v517
        %v732 = vunpack.c.l.b16 %v518
        %v733 = vunpack.c.h.b16 %v518
        %v734 = vunpack.c.l.b16 %v519
        %v735 = vunpack.c.h.b16 %v519
        %v736 = vunpack.c.l.b16 %v520
        %v737 = vunpack.c.h.b16 %v520
        %v738 = vunpack.c.l.b16 %v521
        %v739 = vunpack.c.h.b16 %v521
        %v740 = vunpack.c.l.b16 %v522
        %v741 = vunpack.c.h.b16 %v522
        %v742 = vunpack.c.l.b16 %v523
        %v743 = vunpack.c.h.b16 %v523
        %v744 = vunpack.c.l.b16 %v524
        %v745 = vunpack.c.h.b16 %v524
        %v746 = vunpack.c.l.b16 %v525
        %v747 = vunpack.c.h.b16 %v525
        %v748 = vunpack.c.l.b16 %v526
        %v749 = vunpack.c.h.b16 %v526
        %v750 = vunpack.c.l.b16 %v527
        %v751 = vunpack.c.h.b16 %v527
        %v752 = vunpack.c.l.b16 %v528
        %v753 = vunpack.c.h.b16 %v528
        %v754 = vunpack.c.l.b16 %v529
        %v755 = vunpack.c.h.b16 %v529
        %v756 = vunpack.c.l.b16 %v530
        %v757 = vunpack.c.h.b16 %v530
        %v758 = vunpack.c.l.b16 %v531
        %v759 = vunpack.c.h.b16 %v531
        %v760 = vunpack.c.l.b16 %v532
        %v761 = vunpack.c.h.b16 %v532
        %v762 = vunpack.c.l.b16 %v533
        %v763 = vunpack.c.h.b16 %v533
        %v764 = vunpack.c.l.b16 %v534
        %v765 = vunpack.c.h.b16 %v534
        %v766 = vunpack.c.l.b16 %v535
        %v767 = vunpack.c.h.b16 %v535
        %v768 = vunpack.c.l.b16 %v536
        %v769 = vunpack.c.h.b16 %v536
        %v770 = vunpack.c.l.b16 %v537
        %v771 = vunpack.c.h.b16 %v537
        %v772 = vunpack.c.l.b16 %v538
        %v773 = vunpack.c.h.b16 %v538
        %v774 = vunpack.c.l.b16 %v539
        %v775 = vunpack.c.h.b16 %v539
        %v776 = vunpack.c.l.b16 %v540
        %v777 = vunpack.c.h.b16 %v540
        %v778 = vunpack.c.l.b16 %v541
        %v779 = vunpack.c.h.b16 %v541
        %v780 = vunpack.c.l.b16 %v542
        %v781 = vunpack.c.h.b16 %v542
        %v782 = vunpack.c.l.b16 %v543
        %v783 = vunpack.c.h.b16 %v543
        %v784 = vunpack.c.l.b16 %v544
        %v785 = vunpack.c.h.b16 %v544
        %v786 = vunpack.c.l.b16 %v545
        %v787 = vunpack.c.h.b16 %v545
        %v788 = vunpack.c.l.b16 %v546
        %v789 = vunpack.c.h.b16 %v546
        %v790 = vunpack.c.l.b16 %v547
        %v791 = vunpack.c.h.b16 %v547
        %v792 = vunpack.c.l.b16 %v548
        %v793 = vunpack.c.h.b16 %v548
        %v794 = vunpack.c.l.b16 %v549
        %v795 = vunpack.c.h.b16 %v549
        %v796 = vunpack.c.l.b16 %v550
        %v797 = vunpack.c.h.b16 %v550
        %v798 = vunpack.c.l.b16 %v551
        %v799 = vunpack.c.h.b16 %v551
        %v800 = vunpack.c.l.b16 %v552
        %v801 = vunpack.c.h.b16 %v552
        %v802 = vunpack.c.l.b16 %v553
        %v803 = vunpack.c.h.b16 %v553
        %v804 = vunpack.c.l.b16 %v554
        %v805 = vunpack.c.h.b16 %v554
        %v806 = vunpack.c.l.b16 %v555
        %v807 = vunpack.c.h.b16 %v555
        %v808 = vunpack.c.l.b16 %v556
        %v809 = vunpack.c.h.b16 %v556
        %v810 = vunpack.c.l.b16 %v557
        %v811 = vunpack.c.h.b16 %v557
        %v812 = vunpack.c.l.b16 %v558
        %v813 = vunpack.c.h.b16 %v558
        %v814 = vunpack.c.l.b16 %v559
        %v815 = vunpack.c.h.b16 %v559
        %v816 = vpack.c.b16 %v692, %v688
        %v817 = vpack.c.b16 %v693, %v689
        %v818 = vpack.c.b16 %v694, %v690
        %v819 = vpack.c.b16 %v695, %v691
        %v820 = vpack.c.b16 %v700, %v696
        %v821 = vpack.c.b16 %v701, %v697
        %v822 = vpack.c.b16 %v702, %v698
        %v823 = vpack.c.b16 %v703, %v699
        %v824 = vpack.c.b16 %v708, %v704
        %v825 = vpack.c.b16 %v709, %v705
        %v826 = vpack.c.b16 %v710, %v706
        %v827 = vpack.c.b16 %v711, %v707
        %v828 = vpack.c.b16 %v716, %v712
        %v829 = vpack.c.b16 %v717, %v713
        %v830 = vpack.c.b16 %v718, %v714
        %v831 = vpack.c.b16 %v719, %v715
        %v832 = vpack.c.b16 %v724, %v720
        %v833 = vpack.c.b16 %v725, %v721
        %v834 = vpack.c.b16 %v726, %v722
        %v835 = vpack.c.b16 %v727, %v723
        %v836 = vpack.c.b16 %v732, %v728
        %v837 = vpack.c.b16 %v733, %v729
        %v838 = vpack.c.b16 %v734, %v730
        %v839 = vpack.c.b16 %v735, %v731
        %v840 = vpack.c.b16 %v740, %v736
        %v841 = vpack.c.b16 %v741, %v737
        %v842 = vpack.c.b16 %v742, %v738
        %v843 = vpack.c.b16 %v743, %v739
        %v844 = vpack.c.b16 %v748, %v744
        %v845 = vpack.c.b16 %v749, %v745
        %v846 = vpack.c.b16 %v750, %v746
        %v847 = vpack.c.b16 %v751, %v747
        %v848 = vpack.c.b16 %v756, %v752
        %v849 = vpack.c.b16 %v757, %v753
        %v850 = vpack.c.b16 %v758, %v754
        %v851 = vpack.c.b16 %v759, %v755
        %v852 = vpack.c.b16 %v764, %v760
        %v853 = vpack.c.b16 %v765, %v761
        %v854 = vpack.c.b16 %v766, %v762
        %v855 = vpack.c.b16 %v767, %v763
        %v856 = vpack.c.b16 %v772, %v768
        %v857 = vpack.c.b16 %v773, %v769
        %v858 = vpack.c.b16 %v774, %v770
        %v859 = vpack.c.b16 %v775, %v771
        %v860 = vpack.c.b16 %v780, %v776
        %v861 = vpack.c.b16 %v781, %v777
        %v862 = vpack.c.b16 %v782, %v778
        %v863 = vpack.c.b16 %v783, %v779
        %v864 = vpack.c.b16 %v788, %v784
        %v865 = vpack.c.b16 %v789, %v785
        %v866 = vpack.c.b16 %v790, %v786
        %v867 = vpack.c.b16 %v791, %v787
        %v868 = vpack.c.b16 %v796, %v792
        %v869 = vpack.c.b16 %v797, %v793
        %v870 = vpack.c.b16 %v798, %v794
        %v871 = vpack.c.b16 %v799, %v795
        %v872 = vpack.c.b16 %v804, %v800
        %v873 = vpack.c.b16 %v805, %v801
        %v874 = vpack.c.b16 %v806, %v802
        %v875 = vpack.c.b16 %v807, %v803
        %v876 = vpack.c.b16 %v812, %v808
        %v877 = vpack.c.b16 %v813, %v809
        %v878 = vpack.c.b16 %v814, %v810
        %v879 = vpack.c.b16 %v815, %v811
        %v1008 = vunpack.c.l.b16 %v560
        %v1009 = vunpack.c.l.b16 %v561
        %v1010 = vunpack.c.l.b16 %v562
        %v1011 = vunpack.c.l.b16 %v563
        %v1012 = vunpack.c.l.b16 %v564
        %v1013 = vunpack.c.l.b16 %v565
        %v1014 = vunpack.c.l.b16 %v566
        %v1015 = vunpack.c.l.b16 %v567
        %v1016 = vunpack.c.l.b16 %v568
        %v1017 = vunpack.c.l.b16 %v569
        %v1018 = vunpack.c.l.b16 %v570
        %v1019 = vunpack.c.l.b16 %v571
        %v1020 = vunpack.c.l.b16 %v572
        %v1021 = vunpack.c.l.b16 %v573
        %v1022 = vunpack.c.l.b16 %v574
        %v1023 = vunpack.c.l.b16 %v575
        %v1024 = vunpack.c.l.b16 %v576
        %v1025 = vunpack.c.l.b16 %v577
        %v1026 = vunpack.c.l.b16 %v578
        %v1027 = vunpack.c.l.b16 %v579
        %v1028 = vunpack.c.l.b16 %v580
        %v1029 = vunpack.c.l.b16 %v581
        %v1030 = vunpack.c.l.b16 %v582
        %v1031 = vunpack.c.l.b16 %v583
        %v1032 = vunpack.c.l.b16 %v584
        %v1033 = vunpack.c.l.b16 %v585
        %v1034 = vunpack.c.l.b16 %v586
        %v1035 = vunpack.c.l.b16 %v587
        %v1036 = vunpack.c.l.b16 %v588
        %v1037 = vunpack.c.l.b16 %v589
        %v1038 = vunpack.c.l.b16 %v590
        %v1039 = vunpack.c.l.b16 %v591
        %v1040 = vunpack.c.l.b16 %v592
        %v1041 = vunpack.c.l.b16 %v593
        %v1042 = vunpack.c.l.b16 %v594
        %v1043 = vunpack.c.l.b16 %v595
        %v1044 = vunpack.c.l.b16 %v596
        %v1045 = vunpack.c.l.b16 %v597
        %v1046 = vunpack.c.l.b16 %v598
        %v1047 = vunpack.c.l.b16 %v599
        %v1048 = vunpack.c.l.b16 %v600
        %v1049 = vunpack.c.l.b16 %v601
        %v1050 = vunpack.c.l.b16 %v602
        %v1051 = vunpack.c.l.b16 %v603
        %v1052 = vunpack.c.l.b16 %v604
        %v1053 = vunpack.c.l.b16 %v605
        %v1054 = vunpack.c.l.b16 %v606
        %v1055 = vunpack.c.l.b16 %v607
        %v1056 = vunpack.c.l.b16 %v608
        %v1057 = vunpack.c.l.b16 %v609
        %v1058 = vunpack.c.l.b16 %v610
        %v1059 = vunpack.c.l.b16 %v611
        %v1060 = vunpack.c.l.b16 %v612
        %v1061 = vunpack.c.l.b16 %v613
        %v1062 = vunpack.c.l.b16 %v614
        %v1063 = vunpack.c.l.b16 %v615
        %v1064 = vunpack.c.l.b16 %v616
        %v1065 = vunpack.c.l.b16 %v617
        %v1066 = vunpack.c.l.b16 %v618
        %v1067 = vunpack.c.l.b16 %v619
        %v1068 = vunpack.c.l.b16 %v620
        %v1069 = vunpack.c.l.b16 %v621
        %v1070 = vunpack.c.l.b16 %v622
        %v1071 = vunpack.c.l.b16 %v623
        %v1072 = vpack.c.b16 %v1009, %v1008
        %v1073 = vpack.c.b16 %v1011, %v1010
        %v1074 = vpack.c.b16 %v1013, %v1012
        %v1075 = vpack.c.b16 %v1015, %v1014
        %v1076 = vpack.c.b16 %v1017, %v1016
        %v1077 = vpack.c.b16 %v1019, %v1018
        %v1078 = vpack.c.b16 %v1021, %v1020
        %v1079 = vpack.c.b16 %v1023, %v1022
        %v1080 = vpack.c.b16 %v1025, %v1024
        %v1081 = vpack.c.b16 %v1027, %v1026
        %v1082 = vpack.c.b16 %v1029, %v1028
        %v1083 = vpack.c.b16 %v1031, %v1030
        %v1084 = vpack.c.b16 %v1033, %v1032
        %v1085 = vpack.c.b16 %v1035, %v1034
        %v1086 = vpack.c.b16 %v1037, %v1036
        %v1087 = vpack.c.b16 %v1039, %v1038
        %v1088 = vpack.c.b16 %v1041, %v1040
        %v1089 = vpack.c.b16 %v1043, %v1042
        %v1090 = vpack.c.b16 %v1045, %v1044
        %v1091 = vpack.c.b16 %v1047, %v1046
        %v1092 = vpack.c.b16 %v1049, %v1048
        %v1093 = vpack.c.b16 %v1051, %v1050
        %v1094 = vpack.c.b16 %v1053, %v1052
        %v1095 = vpack.c.b16 %v1055, %v1054
        %v1096 = vpack.c.b16 %v1057, %v1056
        %v1097 = vpack.c.b16 %v1059, %v1058
        %v1098 = vpack.c.b16 %v1061, %v1060
        %v1099 = vpack.c.b16 %v1063, %v1062
        %v1100 = vpack.c.b16 %v1065, %v1064
        %v1101 = vpack.c.b16 %v1067, %v1066
        %v1102 = vpack.c.b16 %v1069, %v1068
        %v1103 = vpack.c.b16 %v1071, %v1070
        %1136 = vmatprep.subr.bf16.mxu0 0
        %1137 = vmatpush1.bf16.msra.mxu0 %v1072
        %1138 = vmatprep.subr.bf16.mxu0 0
        %1139 = vmatpush1.bf16.msra.mxu0 %v1073
        %1140 = vmatprep.subr.bf16.mxu0 0
        %1141 = vmatpush1.bf16.msra.mxu0 %v1074
        %1142 = vmatprep.subr.bf16.mxu0 0
        %1143 = vmatpush1.bf16.msra.mxu0 %v1075
        %1144 = vmatprep.subr.bf16.mxu0 0
        %1145 = vmatpush1.bf16.msra.mxu0 %v1076
        %1146 = vmatprep.subr.bf16.mxu0 0
        %1147 = vmatpush1.bf16.msra.mxu0 %v1077
        %1148 = vmatprep.subr.bf16.mxu0 0
        %1149 = vmatpush1.bf16.msra.mxu0 %v1078
        %1150 = vmatprep.subr.bf16.mxu0 0
        %1151 = vmatpush1.bf16.msra.mxu0 %v1079
        %1152 = vmatprep.subr.bf16.mxu0 0
        %1153 = vmatpush1.bf16.msra.mxu0 %v1080
        %1154 = vmatprep.subr.bf16.mxu0 0
        %1155 = vmatpush1.bf16.msra.mxu0 %v1081
        %1156 = vmatprep.subr.bf16.mxu0 0
        %1157 = vmatpush1.bf16.msra.mxu0 %v1082
        %1158 = vmatprep.subr.bf16.mxu0 0
        %1159 = vmatpush1.bf16.msra.mxu0 %v1083
        %1160 = vmatprep.subr.bf16.mxu0 0
        %1161 = vmatpush1.bf16.msra.mxu0 %v1084
        %1162 = vmatprep.subr.bf16.mxu0 0
        %1163 = vmatpush1.bf16.msra.mxu0 %v1085
        %1164 = vmatprep.subr.bf16.mxu0 0
        %1165 = vmatpush1.bf16.msra.mxu0 %v1086
        %1166 = vmatprep.subr.bf16.mxu0 0
        %1167 = vmatpush1.bf16.msra.mxu0 %v1087
        %1168 = vmatprep.mubr.bf16.mxu0 %v817
        %1169 = vmatmul.mubr.bf16.gmra.mrb[0].mxu0 %v816
        %v1170 = vpop.f32.mrb[0].mxu0
        %v1171 = vadd.f32 0.0, %v1170
        %v1172 = vpop.f32.mrb[0].mxu0
        %v1173 = vpop.f32.mrb[0].mxu0
        %v1174 = vadd.f32 0.0, %v1173
        %v1175 = vpop.f32.mrb[0].mxu0
        %1176 = vmatprep.mubr.bf16.mxu0 %v821
        %1177 = vmatmul.mubr.bf16.gmra.mrb[0].mxu0 %v820
        %v1178 = vpop.f32.mrb[0].mxu0
        %v1179 = vadd.f32 0.0, %v1178
        %v1180 = vpop.f32.mrb[0].mxu0
        %v1181 = vpop.f32.mrb[0].mxu0
        %v1182 = vadd.f32 0.0, %v1181
        %v1183 = vpop.f32.mrb[0].mxu0
        %1184 = vmatprep.mubr.bf16.mxu0 %v825
        %1185 = vmatmul.mubr.bf16.gmra.mrb[0].mxu0 %v824
        %v1186 = vpop.f32.mrb[0].mxu0
        %v1187 = vadd.f32 0.0, %v1186
        %v1188 = vpop.f32.mrb[0].mxu0
        %v1189 = vpop.f32.mrb[0].mxu0
        %v1190 = vadd.f32 0.0, %v1189
        %v1191 = vpop.f32.mrb[0].mxu0
        %1192 = vmatprep.mubr.bf16.mxu0 %v829
        %1193 = vmatmul.mubr.bf16.gmra.mrb[0].mxu0 %v828
        %v1194 = vpop.f32.mrb[0].mxu0
        %v1195 = vadd.f32 0.0, %v1194
        %v1196 = vpop.f32.mrb[0].mxu0
        %v1197 = vpop.f32.mrb[0].mxu0
        %v1198 = vadd.f32 0.0, %v1197
        %v1199 = vpop.f32.mrb[0].mxu0
        %1200 = vmatprep.mubr.bf16.mxu0 %v833
        %1201 = vmatmul.mubr.bf16.gmra.mrb[0].mxu0 %v832
        %v1202 = vpop.f32.mrb[0].mxu0
        %v1203 = vadd.f32 0.0, %v1202
        %v1204 = vpop.f32.mrb[0].mxu0
        %v1205 = vpop.f32.mrb[0].mxu0
        %v1206 = vadd.f32 0.0, %v1205
        %v1207 = vpop.f32.mrb[0].mxu0
        %1208 = vmatprep.mubr.bf16.mxu0 %v837
        %1209 = vmatmul.mubr.bf16.gmra.mrb[0].mxu0 %v836
        %v1210 = vpop.f32.mrb[0].mxu0
        %v1211 = vadd.f32 0.0, %v1210
        %v1212 = vpop.f32.mrb[0].mxu0
        %v1213 = vpop.f32.mrb[0].mxu0
        %v1214 = vadd.f32 0.0, %v1213
        %v1215 = vpop.f32.mrb[0].mxu0
        %1216 = vmatprep.mubr.bf16.mxu0 %v841
        %1217 = vmatmul.mubr.bf16.gmra.mrb[0].mxu0 %v840
        %v1218 = vpop.f32.mrb[0].mxu0
        %v1219 = vadd.f32 0.0, %v1218
        %v1220 = vpop.f32.mrb[0].mxu0
        %v1221 = vpop.f32.mrb[0].mxu0
        %v1222 = vadd.f32 0.0, %v1221
        %v1223 = vpop.f32.mrb[0].mxu0
        %1224 = vmatprep.mubr.bf16.mxu0 %v845
        %1225 = vmatmul.mubr.bf16.gmra.mrb[0].mxu0 %v844
        %v1226 = vpop.f32.mrb[0].mxu0
        %v1227 = vadd.f32 0.0, %v1226
        %v1228 = vpop.f32.mrb[0].mxu0
        %v1229 = vpop.f32.mrb[0].mxu0
        %v1230 = vadd.f32 0.0, %v1229
        %v1231 = vpop.f32.mrb[0].mxu0
        %1232 = vmatprep.mubr.bf16.mxu0 %v849
        %1233 = vmatmul.mubr.bf16.gmra.mrb[0].mxu0 %v848
        %v1234 = vpop.f32.mrb[0].mxu0
        %v1235 = vadd.f32 0.0, %v1234
        %v1236 = vpop.f32.mrb[0].mxu0
        %v1237 = vpop.f32.mrb[0].mxu0
        %v1238 = vadd.f32 0.0, %v1237
        %v1239 = vpop.f32.mrb[0].mxu0
        %1240 = vmatprep.mubr.bf16.mxu0 %v853
        %1241 = vmatmul.mubr.bf16.gmra.mrb[0].mxu0 %v852
        %v1242 = vpop.f32.mrb[0].mxu0
        %v1243 = vadd.f32 0.0, %v1242
        %v1244 = vpop.f32.mrb[0].mxu0
        %v1245 = vpop.f32.mrb[0].mxu0
        %v1246 = vadd.f32 0.0, %v1245
        %v1247 = vpop.f32.mrb[0].mxu0
        %1248 = vmatprep.mubr.bf16.mxu0 %v857
        %1249 = vmatmul.mubr.bf16.gmra.mrb[0].mxu0 %v856
        %v1250 = vpop.f32.mrb[0].mxu0
        %v1251 = vadd.f32 0.0, %v1250
        %v1252 = vpop.f32.mrb[0].mxu0
        %v1253 = vpop.f32.mrb[0].mxu0
        %v1254 = vadd.f32 0.0, %v1253
        %v1255 = vpop.f32.mrb[0].mxu0
        %1256 = vmatprep.mubr.bf16.mxu0 %v861
        %1257 = vmatmul.mubr.bf16.gmra.mrb[0].mxu0 %v860
        %v1258 = vpop.f32.mrb[0].mxu0
        %v1259 = vadd.f32 0.0, %v1258
        %v1260 = vpop.f32.mrb[0].mxu0
        %v1261 = vpop.f32.mrb[0].mxu0
        %v1262 = vadd.f32 0.0, %v1261
        %v1263 = vpop.f32.mrb[0].mxu0
        %1264 = vmatprep.mubr.bf16.mxu0 %v865
        %1265 = vmatmul.mubr.bf16.gmra.mrb[0].mxu0 %v864
        %v1266 = vpop.f32.mrb[0].mxu0
        %v1267 = vadd.f32 0.0, %v1266
        %v1268 = vpop.f32.mrb[0].mxu0
        %v1269 = vpop.f32.mrb[0].mxu0
        %v1270 = vadd.f32 0.0, %v1269
        %v1271 = vpop.f32.mrb[0].mxu0
        %1272 = vmatprep.mubr.bf16.mxu0 %v869
        %1273 = vmatmul.mubr.bf16.gmra.mrb[0].mxu0 %v868
        %v1274 = vpop.f32.mrb[0].mxu0
        %v1275 = vadd.f32 0.0, %v1274
        %v1276 = vpop.f32.mrb[0].mxu0
        %v1277 = vpop.f32.mrb[0].mxu0
        %v1278 = vadd.f32 0.0, %v1277
        %v1279 = vpop.f32.mrb[0].mxu0
        %1280 = vmatprep.mubr.bf16.mxu0 %v873
        %1281 = vmatmul.mubr.bf16.gmra.mrb[0].mxu0 %v872
        %v1282 = vpop.f32.mrb[0].mxu0
        %v1283 = vadd.f32 0.0, %v1282
        %v1284 = vpop.f32.mrb[0].mxu0
        %v1285 = vpop.f32.mrb[0].mxu0
        %v1286 = vadd.f32 0.0, %v1285
        %v1287 = vpop.f32.mrb[0].mxu0
        %1288 = vmatprep.mubr.bf16.mxu0 %v877
        %1289 = vmatmul.mubr.bf16.gmra.mrb[0].mxu0 %v876
        %v1290 = vpop.f32.mrb[0].mxu0
        %v1291 = vadd.f32 0.0, %v1290
        %v1292 = vpop.f32.mrb[0].mxu0
        %v1293 = vpop.f32.mrb[0].mxu0
        %v1294 = vadd.f32 0.0, %v1293
        %v1295 = vpop.f32.mrb[0].mxu0
        %1296 = vdwg.mxu0
        %1297 = vmatprep.subr.bf16.mxu0 0
        %1298 = vmatpush1.bf16.msra.mxu0 %v1088
        %1299 = vmatprep.subr.bf16.mxu0 0
        %1300 = vmatpush1.bf16.msra.mxu0 %v1089
        %1301 = vmatprep.subr.bf16.mxu0 0
        %1302 = vmatpush1.bf16.msra.mxu0 %v1090
        %1303 = vmatprep.subr.bf16.mxu0 0
        %1304 = vmatpush1.bf16.msra.mxu0 %v1091
        %1305 = vmatprep.subr.bf16.mxu0 0
        %1306 = vmatpush1.bf16.msra.mxu0 %v1092
        %1307 = vmatprep.subr.bf16.mxu0 0
        %1308 = vmatpush1.bf16.msra.mxu0 %v1093
        %1309 = vmatprep.subr.bf16.mxu0 0
        %1310 = vmatpush1.bf16.msra.mxu0 %v1094
        %1311 = vmatprep.subr.bf16.mxu0 0
        %1312 = vmatpush1.bf16.msra.mxu0 %v1095
        %1313 = vmatprep.subr.bf16.mxu0 0
        %1314 = vmatpush1.bf16.msra.mxu0 %v1096
        %1315 = vmatprep.subr.bf16.mxu0 0
        %1316 = vmatpush1.bf16.msra.mxu0 %v1097
        %1317 = vmatprep.subr.bf16.mxu0 0
        %1318 = vmatpush1.bf16.msra.mxu0 %v1098
        %1319 = vmatprep.subr.bf16.mxu0 0
        %1320 = vmatpush1.bf16.msra.mxu0 %v1099
        %1321 = vmatprep.subr.bf16.mxu0 0
        %1322 = vmatpush1.bf16.msra.mxu0 %v1100
        %1323 = vmatprep.subr.bf16.mxu0 0
        %1324 = vmatpush1.bf16.msra.mxu0 %v1101
        %1325 = vmatprep.subr.bf16.mxu0 0
        %1326 = vmatpush1.bf16.msra.mxu0 %v1102
        %1327 = vmatprep.subr.bf16.mxu0 0
        %1328 = vmatpush1.bf16.msra.mxu0 %v1103
        %1329 = vmatprep.mubr.bf16.mxu0 %v819
        %1330 = vmatmul.mubr.bf16.gmra.mrb[0].mxu0 %v818
        %v1331 = vpop.f32.mrb[0].mxu0
        %v1332 = vadd.f32 %v1171, %v1331
        %v1333 = vpop.f32.mrb[0].mxu0
        %v1334 = vpop.f32.mrb[0].mxu0
        %v1335 = vadd.f32 %v1174, %v1334
        %v1336 = vpop.f32.mrb[0].mxu0
        %1337 = vmatprep.mubr.bf16.mxu0 %v823
        %1338 = vmatmul.mubr.bf16.gmra.mrb[0].mxu0 %v822
        %v1339 = vpop.f32.mrb[0].mxu0
        %v1340 = vadd.f32 %v1179, %v1339
        %v1341 = vpop.f32.mrb[0].mxu0
        %v1342 = vpop.f32.mrb[0].mxu0
        %v1343 = vadd.f32 %v1182, %v1342
        %v1344 = vpop.f32.mrb[0].mxu0
        %1345 = vmatprep.mubr.bf16.mxu0 %v827
        %1346 = vmatmul.mubr.bf16.gmra.mrb[0].mxu0 %v826
        %v1347 = vpop.f32.mrb[0].mxu0
        %v1348 = vadd.f32 %v1187, %v1347
        %v1349 = vpop.f32.mrb[0].mxu0
        %v1350 = vpop.f32.mrb[0].mxu0
        %v1351 = vadd.f32 %v1190, %v1350
        %v1352 = vpop.f32.mrb[0].mxu0
        %1353 = vmatprep.mubr.bf16.mxu0 %v831
        %1354 = vmatmul.mubr.bf16.gmra.mrb[0].mxu0 %v830
        %v1355 = vpop.f32.mrb[0].mxu0
        %v1356 = vadd.f32 %v1195, %v1355
        %v1357 = vpop.f32.mrb[0].mxu0
        %v1358 = vpop.f32.mrb[0].mxu0
        %v1359 = vadd.f32 %v1198, %v1358
        %v1360 = vpop.f32.mrb[0].mxu0
        %1361 = vmatprep.mubr.bf16.mxu0 %v835
        %1362 = vmatmul.mubr.bf16.gmra.mrb[0].mxu0 %v834
        %v1363 = vpop.f32.mrb[0].mxu0
        %v1364 = vadd.f32 %v1203, %v1363
        %v1365 = vpop.f32.mrb[0].mxu0
        %v1366 = vpop.f32.mrb[0].mxu0
        %v1367 = vadd.f32 %v1206, %v1366
        %v1368 = vpop.f32.mrb[0].mxu0
        %1369 = vmatprep.mubr.bf16.mxu0 %v839
        %1370 = vmatmul.mubr.bf16.gmra.mrb[0].mxu0 %v838
        %v1371 = vpop.f32.mrb[0].mxu0
        %v1372 = vadd.f32 %v1211, %v1371
        %v1373 = vpop.f32.mrb[0].mxu0
        %v1374 = vpop.f32.mrb[0].mxu0
        %v1375 = vadd.f32 %v1214, %v1374
        %v1376 = vpop.f32.mrb[0].mxu0
        %1377 = vmatprep.mubr.bf16.mxu0 %v843
        %1378 = vmatmul.mubr.bf16.gmra.mrb[0].mxu0 %v842
        %v1379 = vpop.f32.mrb[0].mxu0
        %v1380 = vadd.f32 %v1219, %v1379
        %v1381 = vpop.f32.mrb[0].mxu0
        %v1382 = vpop.f32.mrb[0].mxu0
        %v1383 = vadd.f32 %v1222, %v1382
        %v1384 = vpop.f32.mrb[0].mxu0
        %1385 = vmatprep.mubr.bf16.mxu0 %v847
        %1386 = vmatmul.mubr.bf16.gmra.mrb[0].mxu0 %v846
        %v1387 = vpop.f32.mrb[0].mxu0
        %v1388 = vadd.f32 %v1227, %v1387
        %v1389 = vpop.f32.mrb[0].mxu0
        %v1390 = vpop.f32.mrb[0].mxu0
        %v1391 = vadd.f32 %v1230, %v1390
        %v1392 = vpop.f32.mrb[0].mxu0
        %1393 = vmatprep.mubr.bf16.mxu0 %v851
        %1394 = vmatmul.mubr.bf16.gmra.mrb[0].mxu0 %v850
        %v1395 = vpop.f32.mrb[0].mxu0
        %v1396 = vadd.f32 %v1235, %v1395
        %v1397 = vpop.f32.mrb[0].mxu0
        %v1398 = vpop.f32.mrb[0].mxu0
        %v1399 = vadd.f32 %v1238, %v1398
        %v1400 = vpop.f32.mrb[0].mxu0
        %1401 = vmatprep.mubr.bf16.mxu0 %v855
        %1402 = vmatmul.mubr.bf16.gmra.mrb[0].mxu0 %v854
        %v1403 = vpop.f32.mrb[0].mxu0
        %v1404 = vadd.f32 %v1243, %v1403
        %v1405 = vpop.f32.mrb[0].mxu0
        %v1406 = vpop.f32.mrb[0].mxu0
        %v1407 = vadd.f32 %v1246, %v1406
        %v1408 = vpop.f32.mrb[0].mxu0
        %1409 = vmatprep.mubr.bf16.mxu0 %v859
        %1410 = vmatmul.mubr.bf16.gmra.mrb[0].mxu0 %v858
        %v1411 = vpop.f32.mrb[0].mxu0
        %v1412 = vadd.f32 %v1251, %v1411
        %v1413 = vpop.f32.mrb[0].mxu0
        %v1414 = vpop.f32.mrb[0].mxu0
        %v1415 = vadd.f32 %v1254, %v1414
        %v1416 = vpop.f32.mrb[0].mxu0
        %1417 = vmatprep.mubr.bf16.mxu0 %v863
        %1418 = vmatmul.mubr.bf16.gmra.mrb[0].mxu0 %v862
        %v1419 = vpop.f32.mrb[0].mxu0
        %v1420 = vadd.f32 %v1259, %v1419
        %v1421 = vpop.f32.mrb[0].mxu0
        %v1422 = vpop.f32.mrb[0].mxu0
        %v1423 = vadd.f32 %v1262, %v1422
        %v1424 = vpop.f32.mrb[0].mxu0
        %1425 = vmatprep.mubr.bf16.mxu0 %v867
        %1426 = vmatmul.mubr.bf16.gmra.mrb[0].mxu0 %v866
        %v1427 = vpop.f32.mrb[0].mxu0
        %v1428 = vadd.f32 %v1267, %v1427
        %v1429 = vpop.f32.mrb[0].mxu0
        %v1430 = vpop.f32.mrb[0].mxu0
        %v1431 = vadd.f32 %v1270, %v1430
        %v1432 = vpop.f32.mrb[0].mxu0
        %1433 = vmatprep.mubr.bf16.mxu0 %v871
        %1434 = vmatmul.mubr.bf16.gmra.mrb[0].mxu0 %v870
        %v1435 = vpop.f32.mrb[0].mxu0
        %v1436 = vadd.f32 %v1275, %v1435
        %v1437 = vpop.f32.mrb[0].mxu0
        %v1438 = vpop.f32.mrb[0].mxu0
        %v1439 = vadd.f32 %v1278, %v1438
        %v1440 = vpop.f32.mrb[0].mxu0
        %1441 = vmatprep.mubr.bf16.mxu0 %v875
        %1442 = vmatmul.mubr.bf16.gmra.mrb[0].mxu0 %v874
        %v1443 = vpop.f32.mrb[0].mxu0
        %v1444 = vadd.f32 %v1283, %v1443
        %v1445 = vpop.f32.mrb[0].mxu0
        %v1446 = vpop.f32.mrb[0].mxu0
        %v1447 = vadd.f32 %v1286, %v1446
        %v1448 = vpop.f32.mrb[0].mxu0
        %1449 = vmatprep.mubr.bf16.mxu0 %v879
        %1450 = vmatmul.mubr.bf16.gmra.mrb[0].mxu0 %v878
        %v1451 = vpop.f32.mrb[0].mxu0
        %v1452 = vadd.f32 %v1291, %v1451
        %v1453 = vpop.f32.mrb[0].mxu0
        %v1454 = vpop.f32.mrb[0].mxu0
        %v1455 = vadd.f32 %v1294, %v1454
        %v1456 = vpop.f32.mrb[0].mxu0
        %1457 = vdwg.mxu0
        %v1458 = vadd.f32 %v464, %v1332
        %v1459 = vadd.f32 %v465, %v1335
        %v1460 = vadd.f32 %v466, %v1340
        %v1461 = vadd.f32 %v467, %v1343
        %v1462 = vadd.f32 %v468, %v1348
        %v1463 = vadd.f32 %v469, %v1351
        %v1464 = vadd.f32 %v470, %v1356
        %v1465 = vadd.f32 %v471, %v1359
        %v1466 = vadd.f32 %v472, %v1364
        %v1467 = vadd.f32 %v473, %v1367
        %v1468 = vadd.f32 %v474, %v1372
        %v1469 = vadd.f32 %v475, %v1375
        %v1470 = vadd.f32 %v476, %v1380
        %v1471 = vadd.f32 %v477, %v1383
        %v1472 = vadd.f32 %v478, %v1388
        %v1473 = vadd.f32 %v479, %v1391
        %v1474 = vadd.f32 %v480, %v1396
        %v1475 = vadd.f32 %v481, %v1399
        %v1476 = vadd.f32 %v482, %v1404
        %v1477 = vadd.f32 %v483, %v1407
        %v1478 = vadd.f32 %v484, %v1412
        %v1479 = vadd.f32 %v485, %v1415
        %v1480 = vadd.f32 %v486, %v1420
        %v1481 = vadd.f32 %v487, %v1423
        %v1482 = vadd.f32 %v488, %v1428
        %v1483 = vadd.f32 %v489, %v1431
        %v1484 = vadd.f32 %v490, %v1436
        %v1485 = vadd.f32 %v491, %v1439
        %v1486 = vadd.f32 %v492, %v1444
        %v1487 = vadd.f32 %v493, %v1447
        %v1488 = vadd.f32 %v494, %v1452
        %v1489 = vadd.f32 %v495, %v1455
        %1490 = vst [vmem:[#allocation2] sm:$0xff] %v1458
        %1491 = vst [vmem:[#allocation2 + $0x8] sm:$0xff] %v1459
        %1492 = vst [vmem:[#allocation2 + $0x10] sm:$0xff] %v1460
        %1493 = vst [vmem:[#allocation2 + $0x18] sm:$0xff] %v1461
        %1494 = vst [vmem:[#allocation2 + $0x20] sm:$0xff] %v1462
        %1495 = vst [vmem:[#allocation2 + $0x28] sm:$0xff] %v1463
        %1496 = vst [vmem:[#allocation2 + $0x30] sm:$0xff] %v1464
        %1497 = vst [vmem:[#allocation2 + $0x38] sm:$0xff] %v1465
        %1498 = vst [vmem:[#allocation2 + $0x40] sm:$0xff] %v1466
        %1499 = vst [vmem:[#allocation2 + $0x48] sm:$0xff] %v1467
        %1500 = vst [vmem:[#allocation2 + $0x50] sm:$0xff] %v1468
        %1501 = vst [vmem:[#allocation2 + $0x58] sm:$0xff] %v1469
        %1502 = vst [vmem:[#allocation2 + $0x60] sm:$0xff] %v1470
        %1503 = vst [vmem:[#allocation2 + $0x68] sm:$0xff] %v1471
        %1504 = vst [vmem:[#allocation2 + $0x70] sm:$0xff] %v1472
        %1505 = vst [vmem:[#allocation2 + $0x78] sm:$0xff] %v1473
        %1506 = vst [vmem:[#allocation2 + $0x80] sm:$0xff] %v1474
        %1507 = vst [vmem:[#allocation2 + $0x88] sm:$0xff] %v1475
        %1508 = vst [vmem:[#allocation2 + $0x90] sm:$0xff] %v1476
        %1509 = vst [vmem:[#allocation2 + $0x98] sm:$0xff] %v1477
        %1510 = vst [vmem:[#allocation2 + $0xa0] sm:$0xff] %v1478
        %1511 = vst [vmem:[#allocation2 + $0xa8] sm:$0xff] %v1479
        %1512 = vst [vmem:[#allocation2 + $0xb0] sm:$0xff] %v1480
        %1513 = vst [vmem:[#allocation2 + $0xb8] sm:$0xff] %v1481
        %1514 = vst [vmem:[#allocation2 + $0xc0] sm:$0xff] %v1482
        %1515 = vst [vmem:[#allocation2 + $0xc8] sm:$0xff] %v1483
        %1516 = vst [vmem:[#allocation2 + $0xd0] sm:$0xff] %v1484
        %1517 = vst [vmem:[#allocation2 + $0xd8] sm:$0xff] %v1485
        %1518 = vst [vmem:[#allocation2 + $0xe0] sm:$0xff] %v1486
        %1519 = vst [vmem:[#allocation2 + $0xe8] sm:$0xff] %v1487
        %1520 = vst [vmem:[#allocation2 + $0xf0] sm:$0xff] %v1488
        %1521 = vst [vmem:[#allocation2 + $0xf8] sm:$0xff] %v1489
        %p1522 = scmp.eq.s32.totalorder %s23, 3
        // Predicated region
        $region64: #{discriminator_forward.26} parent=54 // pred_check
          %p1523 = pneg %p1522
        $region65: #{discriminator_forward.26} parent=54 // pred_check_branch
          %1525 = sbr.rel (%p1523) target = $region67
        $region66: #{discriminator_forward.26} parent=54 // pred_region
          %v1526 = vld [vmem:[#allocation2] sm:$0xff]
          %v1527 = vld [vmem:[#allocation2 + $0x8] sm:$0xff]
          %v1528 = vld [vmem:[#allocation2 + $0x10] sm:$0xff]
          %v1529 = vld [vmem:[#allocation2 + $0x18] sm:$0xff]
          %v1530 = vld [vmem:[#allocation2 + $0x20] sm:$0xff]
          %v1531 = vld [vmem:[#allocation2 + $0x28] sm:$0xff]
          %v1532 = vld [vmem:[#allocation2 + $0x30] sm:$0xff]
          %v1533 = vld [vmem:[#allocation2 + $0x38] sm:$0xff]
          %v1534 = vld [vmem:[#allocation2 + $0x40] sm:$0xff]
          %v1535 = vld [vmem:[#allocation2 + $0x48] sm:$0xff]
          %v1536 = vld [vmem:[#allocation2 + $0x50] sm:$0xff]
          %v1537 = vld [vmem:[#allocation2 + $0x58] sm:$0xff]
          %v1538 = vld [vmem:[#allocation2 + $0x60] sm:$0xff]
          %v1539 = vld [vmem:[#allocation2 + $0x68] sm:$0xff]
          %v1540 = vld [vmem:[#allocation2 + $0x70] sm:$0xff]
          %v1541 = vld [vmem:[#allocation2 + $0x78] sm:$0xff]
          %v1542 = vld [vmem:[#allocation2 + $0x80] sm:$0xff]
          %v1543 = vld [vmem:[#allocation2 + $0x88] sm:$0xff]
          %v1544 = vld [vmem:[#allocation2 + $0x90] sm:$0xff]
          %v1545 = vld [vmem:[#allocation2 + $0x98] sm:$0xff]
          %v1546 = vld [vmem:[#allocation2 + $0xa0] sm:$0xff]
          %v1547 = vld [vmem:[#allocation2 + $0xa8] sm:$0xff]
          %v1548 = vld [vmem:[#allocation2 + $0xb0] sm:$0xff]
          %v1549 = vld [vmem:[#allocation2 + $0xb8] sm:$0xff]
          %v1550 = vld [vmem:[#allocation2 + $0xc0] sm:$0xff]
          %v1551 = vld [vmem:[#allocation2 + $0xc8] sm:$0xff]
          %v1552 = vld [vmem:[#allocation2 + $0xd0] sm:$0xff]
          %v1553 = vld [vmem:[#allocation2 + $0xd8] sm:$0xff]
          %v1554 = vld [vmem:[#allocation2 + $0xe0] sm:$0xff]
          %v1555 = vld [vmem:[#allocation2 + $0xe8] sm:$0xff]
          %v1556 = vld [vmem:[#allocation2 + $0xf0] sm:$0xff]
          %v1557 = vld [vmem:[#allocation2 + $0xf8] sm:$0xff]
          %s1558 = sld [smem:[#allocation3]]
          %v1559 = vstv %s1558
          %v1560 = vmul.f32 %v1526, %v1559
          %v1561 = vmul.f32 %v1527, %v1559
          %v1562 = vmul.f32 %v1528, %v1559
          %v1563 = vmul.f32 %v1529, %v1559
          %v1564 = vmul.f32 %v1530, %v1559
          %v1565 = vmul.f32 %v1531, %v1559
          %v1566 = vmul.f32 %v1532, %v1559
          %v1567 = vmul.f32 %v1533, %v1559
          %v1568 = vmul.f32 %v1534, %v1559
          %v1569 = vmul.f32 %v1535, %v1559
          %v1570 = vmul.f32 %v1536, %v1559
          %v1571 = vmul.f32 %v1537, %v1559
          %v1572 = vmul.f32 %v1538, %v1559
          %v1573 = vmul.f32 %v1539, %v1559
          %v1574 = vmul.f32 %v1540, %v1559
          %v1575 = vmul.f32 %v1541, %v1559
          %v1576 = vmul.f32 %v1542, %v1559
          %v1577 = vmul.f32 %v1543, %v1559
          %v1578 = vmul.f32 %v1544, %v1559
          %v1579 = vmul.f32 %v1545, %v1559
          %v1580 = vmul.f32 %v1546, %v1559
          %v1581 = vmul.f32 %v1547, %v1559
          %v1582 = vmul.f32 %v1548, %v1559
          %v1583 = vmul.f32 %v1549, %v1559
          %v1584 = vmul.f32 %v1550, %v1559
          %v1585 = vmul.f32 %v1551, %v1559
          %v1586 = vmul.f32 %v1552, %v1559
          %v1587 = vmul.f32 %v1553, %v1559
          %v1588 = vmul.f32 %v1554, %v1559
          %v1589 = vmul.f32 %v1555, %v1559
          %v1590 = vmul.f32 %v1556, %v1559
          %v1591 = vmul.f32 %v1557, %v1559
          %v1592 = vld [vmem:[%s417] sm:$0x1]
          %v1594 = vlaneseq
          %v1595 = vshrl.u32 %v1594, 7
          %v1596 = vsub.s32 0, %v1595
          %v1597 = vrot.slane %v1592, %v1596
          %v1599 = vadd.f32 %v1560, %v1597
          %v1600 = vadd.f32 %v1561, %v1597
          %v1601 = vadd.f32 %v1562, %v1597
          %v1602 = vadd.f32 %v1563, %v1597
          %v1603 = vadd.f32 %v1564, %v1597
          %v1604 = vadd.f32 %v1565, %v1597
          %v1605 = vadd.f32 %v1566, %v1597
          %v1606 = vadd.f32 %v1567, %v1597
          %v1607 = vadd.f32 %v1568, %v1597
          %v1608 = vadd.f32 %v1569, %v1597
          %v1609 = vadd.f32 %v1570, %v1597
          %v1610 = vadd.f32 %v1571, %v1597
          %v1611 = vadd.f32 %v1572, %v1597
          %v1612 = vadd.f32 %v1573, %v1597
          %v1613 = vadd.f32 %v1574, %v1597
          %v1614 = vadd.f32 %v1575, %v1597
          %v1615 = vadd.f32 %v1576, %v1597
          %v1616 = vadd.f32 %v1577, %v1597
          %v1617 = vadd.f32 %v1578, %v1597
          %v1618 = vadd.f32 %v1579, %v1597
          %v1619 = vadd.f32 %v1580, %v1597
          %v1620 = vadd.f32 %v1581, %v1597
          %v1621 = vadd.f32 %v1582, %v1597
          %v1622 = vadd.f32 %v1583, %v1597
          %v1623 = vadd.f32 %v1584, %v1597
          %v1624 = vadd.f32 %v1585, %v1597
          %v1625 = vadd.f32 %v1586, %v1597
          %v1626 = vadd.f32 %v1587, %v1597
          %v1627 = vadd.f32 %v1588, %v1597
          %v1628 = vadd.f32 %v1589, %v1597
          %v1629 = vadd.f32 %v1590, %v1597
          %v1630 = vadd.f32 %v1591, %v1597
          %v1631 = vpack.c.bf16 %v1600, %v1599
          %v1632 = vpack.c.bf16 %v1602, %v1601
          %v1633 = vpack.c.bf16 %v1604, %v1603
          %v1634 = vpack.c.bf16 %v1606, %v1605
          %v1635 = vpack.c.bf16 %v1608, %v1607
          %v1636 = vpack.c.bf16 %v1610, %v1609
          %v1637 = vpack.c.bf16 %v1612, %v1611
          %v1638 = vpack.c.bf16 %v1614, %v1613
          %v1639 = vpack.c.bf16 %v1616, %v1615
          %v1640 = vpack.c.bf16 %v1618, %v1617
          %v1641 = vpack.c.bf16 %v1620, %v1619
          %v1642 = vpack.c.bf16 %v1622, %v1621
          %v1643 = vpack.c.bf16 %v1624, %v1623
          %v1644 = vpack.c.bf16 %v1626, %v1625
          %v1645 = vpack.c.bf16 %v1628, %v1627
          %v1646 = vpack.c.bf16 %v1630, %v1629
          %v1663 = vunpack.c.l.b16 %v1631
          %v1664 = vunpack.c.h.b16 %v1631
          %v1665 = vunpack.c.l.b16 %v1632
          %v1666 = vunpack.c.h.b16 %v1632
          %v1667 = vunpack.c.l.b16 %v1633
          %v1668 = vunpack.c.h.b16 %v1633
          %v1669 = vunpack.c.l.b16 %v1634
          %v1670 = vunpack.c.h.b16 %v1634
          %v1671 = vunpack.c.l.b16 %v1635
          %v1672 = vunpack.c.h.b16 %v1635
          %v1673 = vunpack.c.l.b16 %v1636
          %v1674 = vunpack.c.h.b16 %v1636
          %v1675 = vunpack.c.l.b16 %v1637
          %v1676 = vunpack.c.h.b16 %v1637
          %v1677 = vunpack.c.l.b16 %v1638
          %v1678 = vunpack.c.h.b16 %v1638
          %v1679 = vunpack.c.l.b16 %v1639
          %v1680 = vunpack.c.h.b16 %v1639
          %v1681 = vunpack.c.l.b16 %v1640
          %v1682 = vunpack.c.h.b16 %v1640
          %v1683 = vunpack.c.l.b16 %v1641
          %v1684 = vunpack.c.h.b16 %v1641
          %v1685 = vunpack.c.l.b16 %v1642
          %v1686 = vunpack.c.h.b16 %v1642
          %v1687 = vunpack.c.l.b16 %v1643
          %v1688 = vunpack.c.h.b16 %v1643
          %v1689 = vunpack.c.l.b16 %v1644
          %v1690 = vunpack.c.h.b16 %v1644
          %v1691 = vunpack.c.l.b16 %v1645
          %v1692 = vunpack.c.h.b16 %v1645
          %v1693 = vunpack.c.l.b16 %v1646
          %v1694 = vunpack.c.h.b16 %v1646
          %v1695 = vpack.c.b16 %v1663, %v1663
          %v1696 = vpack.c.b16 %v1664, %v1664
          %v1697 = vpack.c.b16 %v1665, %v1665
          %v1698 = vpack.c.b16 %v1666, %v1666
          %v1699 = vpack.c.b16 %v1667, %v1667
          %v1700 = vpack.c.b16 %v1668, %v1668
          %v1701 = vpack.c.b16 %v1669, %v1669
          %v1702 = vpack.c.b16 %v1670, %v1670
          %v1703 = vpack.c.b16 %v1671, %v1671
          %v1704 = vpack.c.b16 %v1672, %v1672
          %v1705 = vpack.c.b16 %v1673, %v1673
          %v1706 = vpack.c.b16 %v1674, %v1674
          %v1707 = vpack.c.b16 %v1675, %v1675
          %v1708 = vpack.c.b16 %v1676, %v1676
          %v1709 = vpack.c.b16 %v1677, %v1677
          %v1710 = vpack.c.b16 %v1678, %v1678
          %v1711 = vpack.c.b16 %v1679, %v1679
          %v1712 = vpack.c.b16 %v1680, %v1680
          %v1713 = vpack.c.b16 %v1681, %v1681
          %v1714 = vpack.c.b16 %v1682, %v1682
          %v1715 = vpack.c.b16 %v1683, %v1683
          %v1716 = vpack.c.b16 %v1684, %v1684
          %v1717 = vpack.c.b16 %v1685, %v1685
          %v1718 = vpack.c.b16 %v1686, %v1686
          %v1719 = vpack.c.b16 %v1687, %v1687
          %v1720 = vpack.c.b16 %v1688, %v1688
          %v1721 = vpack.c.b16 %v1689, %v1689
          %v1722 = vpack.c.b16 %v1690, %v1690
          %v1723 = vpack.c.b16 %v1691, %v1691
          %v1724 = vpack.c.b16 %v1692, %v1692
          %v1725 = vpack.c.b16 %v1693, %v1693
          %v1726 = vpack.c.b16 %v1694, %v1694
          %1759 = vst [vmem:[%s425] sm:$0xf] %v1695
          %1760 = vst [vmem:[%s425 + $0x4] sm:$0xf] %v1696
          %1761 = vst [vmem:[%s425 + $0x8] sm:$0xf] %v1697
          %1762 = vst [vmem:[%s425 + $0xc] sm:$0xf] %v1698
          %1763 = vst [vmem:[%s425 + $0x10] sm:$0xf] %v1699
          %1764 = vst [vmem:[%s425 + $0x14] sm:$0xf] %v1700
          %1765 = vst [vmem:[%s425 + $0x18] sm:$0xf] %v1701
          %1766 = vst [vmem:[%s425 + $0x1c] sm:$0xf] %v1702
          %1767 = vst [vmem:[%s425 + $0x20] sm:$0xf] %v1703
          %1768 = vst [vmem:[%s425 + $0x24] sm:$0xf] %v1704
          %1769 = vst [vmem:[%s425 + $0x28] sm:$0xf] %v1705
          %1770 = vst [vmem:[%s425 + $0x2c] sm:$0xf] %v1706
          %1771 = vst [vmem:[%s425 + $0x30] sm:$0xf] %v1707
          %1772 = vst [vmem:[%s425 + $0x34] sm:$0xf] %v1708
          %1773 = vst [vmem:[%s425 + $0x38] sm:$0xf] %v1709
          %1774 = vst [vmem:[%s425 + $0x3c] sm:$0xf] %v1710
          %1775 = vst [vmem:[%s425 + $0x40] sm:$0xf] %v1711
          %1776 = vst [vmem:[%s425 + $0x44] sm:$0xf] %v1712
          %1777 = vst [vmem:[%s425 + $0x48] sm:$0xf] %v1713
          %1778 = vst [vmem:[%s425 + $0x4c] sm:$0xf] %v1714
          %1779 = vst [vmem:[%s425 + $0x50] sm:$0xf] %v1715
          %1780 = vst [vmem:[%s425 + $0x54] sm:$0xf] %v1716
          %1781 = vst [vmem:[%s425 + $0x58] sm:$0xf] %v1717
          %1782 = vst [vmem:[%s425 + $0x5c] sm:$0xf] %v1718
          %1783 = vst [vmem:[%s425 + $0x60] sm:$0xf] %v1719
          %1784 = vst [vmem:[%s425 + $0x64] sm:$0xf] %v1720
          %1785 = vst [vmem:[%s425 + $0x68] sm:$0xf] %v1721
          %1786 = vst [vmem:[%s425 + $0x6c] sm:$0xf] %v1722
          %1787 = vst [vmem:[%s425 + $0x70] sm:$0xf] %v1723
          %1788 = vst [vmem:[%s425 + $0x74] sm:$0xf] %v1724
          %1789 = vst [vmem:[%s425 + $0x78] sm:$0xf] %v1725
          %1790 = vst [vmem:[%s425 + $0x7c] sm:$0xf] %v1726
        $region67: #{discriminator_forward.26} parent=54 // pred_fallthru
          _
        %s1791 = smul.u32 32, %s21
        %p1792 = scmp.lt.s32.totalorder %s1791, 63
        %s1793 = scalar_select %p1792, %s1791, 63
        %p1794 = scmp.lt.s32.totalorder %s22, 0
        %s1795 = scalar_select %p1794, %s22, 0
        %s1796 = sadd.s32 %s1795, %s1793
        %s1797 = smul.addr %s1796, 4
        %s1798 = scalar_lea.vmem %s4, %s1797
        // Predicated region
        $region68: #{discriminator_forward.26} parent=54 // pred_check
          %p1799 = pneg %p158
        $region69: #{discriminator_forward.26} parent=54 // pred_check_branch
          %1801 = sbr.rel (%p1799) target = $region71
        $region70: #{discriminator_forward.26} parent=54 // pred_region
          %s1802 = smul.u32 32, %s21
        $region71: #{discriminator_forward.26} parent=54 // pred_fallthru
          _
      $region55: #{discriminator_forward.26} parent=5 // pred_fallthru
        _
      %p1803 = scmp.le.s32.totalorder 2, %s11
      // Predicated region
      $region72: #{discriminator_forward.26} parent=5 // pred_check
        %p1804 = pneg %p1803
      $region73: #{discriminator_forward.26} parent=5 // pred_check_branch
        %1806 = sbr.rel (%p1804) target = $region75
      $region74: #{discriminator_forward.26} parent=5 // pred_region
        %s1807 = ssub.s32 %s11, 2
        // Predicated region
        $region76: #{discriminator_forward.26} parent=74 // pred_check
          %p1808 = pneg %p164
        $region77: #{discriminator_forward.26} parent=74 // pred_check_branch
          %1810 = sbr.rel (%p1808) target = $region79
        $region78: #{discriminator_forward.26} parent=74 // pred_region
          %s1811 = smul.u32 32, %s24
          %p1812 = scmp.lt.s32.totalorder %s1811, 63
          %s1813 = scalar_select %p1812, %s1811, 63
          %p1814 = scmp.lt.s32.totalorder %s25, 0
          %s1815 = scalar_select %p1814, %s25, 0
          %s1816 = sadd.s32 %s1815, %s1813
          %s1817 = smul.addr %s1816, 4
          %s1818 = scalar_lea.vmem %s4, %s1817
        $region79: #{discriminator_forward.26} parent=74 // pred_fallthru
          _
      $region75: #{discriminator_forward.26} parent=5 // pred_fallthru
        _
    $region6: #{discriminator_forward.26} parent=1 // loop_footer
      %s15 = sadd.s32 1, %s11
    $region7: #{discriminator_forward.26} parent=1 // loop_footer_branch
      %10 = sbr.rel target = $region3
    $region8: #{discriminator_forward.26} parent=1 // loop_exit
      _

// kernel: discriminator_forward.27
$region0: #{discriminator_forward.27}
  #allocation0 [shape = 'u32[]', space=smem, size = 0x4, offset = 0x4, fixed_abs, tag = 'smem constant byte address 0x4 - core index']
  #allocation1 [shape = 'u32[144,128]{1,0:T(1,128)}', space=vmem, size = 0x12000, scoped, tag = 'internal scratch']
  %s0 = inlined_call_operand.vmem [shape: bf16[512,128], index: 0, kind: input, shape index: {}]
  %s1 = inlined_call_operand.vmem [shape: f32[1,128], index: 1, kind: output, shape index: {0}]
  %s2 = inlined_call_operand.vmem [shape: f32[1,128], index: 2, kind: output, shape index: {1}]
  %3 = xla_tuple %s1, %s2
  %s4 = sld [smem:[#allocation0]]
  $region30: #{discriminator_forward.27} parent=0
    _
  %s6 = ssub.s32 1, %s4
  %s7 = scalar_select 0, %s6, %s4
  // Predicated region
  $region2: #{discriminator_forward.27} parent=0 // pred_check
    _
  $region3: #{discriminator_forward.27} parent=0 // pred_check_branch
    %9 = sbr.rel (0) target = $region5
  $region4: #{discriminator_forward.27} parent=0 // pred_region
    _
  $region5: #{discriminator_forward.27} parent=0 // pred_fallthru
    _
  %p10 = scmp.eq.s32.totalorder 0, 0
  // Predicated region
  $region6: #{discriminator_forward.27} parent=0 // pred_check
    %p11 = pneg %p10
  $region7: #{discriminator_forward.27} parent=0 // pred_check_branch
    %13 = sbr.rel (%p11) target = $region9
  $region8: #{discriminator_forward.27} parent=0 // pred_region
    %14 = vst [vmem:[%s1] sm:$0x1] 0.0
    %15 = vst [vmem:[%s2] sm:$0x1] 0.0
  $region9: #{discriminator_forward.27} parent=0 // pred_fallthru
    _
  %v16 = vld [vmem:[%s0] sm:$0xf]
  %v17 = vld [vmem:[%s0 + $0x4] sm:$0xf]
  %v18 = vld [vmem:[%s0 + $0x8] sm:$0xf]
  %v19 = vld [vmem:[%s0 + $0xc] sm:$0xf]
  %v20 = vld [vmem:[%s0 + $0x10] sm:$0xf]
  %v21 = vld [vmem:[%s0 + $0x14] sm:$0xf]
  %v22 = vld [vmem:[%s0 + $0x18] sm:$0xf]
  %v23 = vld [vmem:[%s0 + $0x1c] sm:$0xf]
  %v24 = vld [vmem:[%s0 + $0x20] sm:$0xf]
  %v25 = vld [vmem:[%s0 + $0x24] sm:$0xf]
  %v26 = vld [vmem:[%s0 + $0x28] sm:$0xf]
  %v27 = vld [vmem:[%s0 + $0x2c] sm:$0xf]
  %v28 = vld [vmem:[%s0 + $0x30] sm:$0xf]
  %v29 = vld [vmem:[%s0 + $0x34] sm:$0xf]
  %v30 = vld [vmem:[%s0 + $0x38] sm:$0xf]
  %v31 = vld [vmem:[%s0 + $0x3c] sm:$0xf]
  %v32 = vld [vmem:[%s0 + $0x40] sm:$0xf]
  %v33 = vld [vmem:[%s0 + $0x44] sm:$0xf]
  %v34 = vld [vmem:[%s0 + $0x48] sm:$0xf]
  %v35 = vld [vmem:[%s0 + $0x4c] sm:$0xf]
  %v36 = vld [vmem:[%s0 + $0x50] sm:$0xf]
  %v37 = vld [vmem:[%s0 + $0x54] sm:$0xf]
  %v38 = vld [vmem:[%s0 + $0x58] sm:$0xf]
  %v39 = vld [vmem:[%s0 + $0x5c] sm:$0xf]
  %v40 = vld [vmem:[%s0 + $0x60] sm:$0xf]
  %v41 = vld [vmem:[%s0 + $0x64] sm:$0xf]
  %v42 = vld [vmem:[%s0 + $0x68] sm:$0xf]
  %v43 = vld [vmem:[%s0 + $0x6c] sm:$0xf]
  %v44 = vld [vmem:[%s0 + $0x70] sm:$0xf]
  %v45 = vld [vmem:[%s0 + $0x74] sm:$0xf]
  %v46 = vld [vmem:[%s0 + $0x78] sm:$0xf]
  %v47 = vld [vmem:[%s0 + $0x7c] sm:$0xf]
  %v48 = vld [vmem:[%s0 + $0x80] sm:$0xf]
  %v49 = vld [vmem:[%s0 + $0x84] sm:$0xf]
  %v50 = vld [vmem:[%s0 + $0x88] sm:$0xf]
  %v51 = vld [vmem:[%s0 + $0x8c] sm:$0xf]
  %v52 = vld [vmem:[%s0 + $0x90] sm:$0xf]
  %v53 = vld [vmem:[%s0 + $0x94] sm:$0xf]
  %v54 = vld [vmem:[%s0 + $0x98] sm:$0xf]
  %v55 = vld [vmem:[%s0 + $0x9c] sm:$0xf]
  %v56 = vld [vmem:[%s0 + $0xa0] sm:$0xf]
  %v57 = vld [vmem:[%s0 + $0xa4] sm:$0xf]
  %v58 = vld [vmem:[%s0 + $0xa8] sm:$0xf]
  %v59 = vld [vmem:[%s0 + $0xac] sm:$0xf]
  %v60 = vld [vmem:[%s0 + $0xb0] sm:$0xf]
  %v61 = vld [vmem:[%s0 + $0xb4] sm:$0xf]
  %v62 = vld [vmem:[%s0 + $0xb8] sm:$0xf]
  %v63 = vld [vmem:[%s0 + $0xbc] sm:$0xf]
  %v64 = vld [vmem:[%s0 + $0xc0] sm:$0xf]
  %v65 = vld [vmem:[%s0 + $0xc4] sm:$0xf]
  %v66 = vld [vmem:[%s0 + $0xc8] sm:$0xf]
  %v67 = vld [vmem:[%s0 + $0xcc] sm:$0xf]
  %v68 = vld [vmem:[%s0 + $0xd0] sm:$0xf]
  %v69 = vld [vmem:[%s0 + $0xd4] sm:$0xf]
  %v70 = vld [vmem:[%s0 + $0xd8] sm:$0xf]
  %v71 = vld [vmem:[%s0 + $0xdc] sm:$0xf]
  %v72 = vld [vmem:[%s0 + $0xe0] sm:$0xf]
  %v73 = vld [vmem:[%s0 + $0xe4] sm:$0xf]
  %v74 = vld [vmem:[%s0 + $0xe8] sm:$0xf]
  %v75 = vld [vmem:[%s0 + $0xec] sm:$0xf]
  %v76 = vld [vmem:[%s0 + $0xf0] sm:$0xf]
  %v77 = vld [vmem:[%s0 + $0xf4] sm:$0xf]
  %v78 = vld [vmem:[%s0 + $0xf8] sm:$0xf]
  %v79 = vld [vmem:[%s0 + $0xfc] sm:$0xf]
  %v80 = vunpack.c.l.bf16 %v16
  %v81 = vunpack.c.l.bf16 %v17
  %v82 = vunpack.c.l.bf16 %v18
  %v83 = vunpack.c.l.bf16 %v19
  %v84 = vunpack.c.l.bf16 %v20
  %v85 = vunpack.c.l.bf16 %v21
  %v86 = vunpack.c.l.bf16 %v22
  %v87 = vunpack.c.l.bf16 %v23
  %v88 = vunpack.c.l.bf16 %v24
  %v89 = vunpack.c.l.bf16 %v25
  %v90 = vunpack.c.l.bf16 %v26
  %v91 = vunpack.c.l.bf16 %v27
  %v92 = vunpack.c.l.bf16 %v28
  %v93 = vunpack.c.l.bf16 %v29
  %v94 = vunpack.c.l.bf16 %v30
  %v95 = vunpack.c.l.bf16 %v31
  %v96 = vunpack.c.l.bf16 %v32
  %v97 = vunpack.c.l.bf16 %v33
  %v98 = vunpack.c.l.bf16 %v34
  %v99 = vunpack.c.l.bf16 %v35
  %v100 = vunpack.c.l.bf16 %v36
  %v101 = vunpack.c.l.bf16 %v37
  %v102 = vunpack.c.l.bf16 %v38
  %v103 = vunpack.c.l.bf16 %v39
  %v104 = vunpack.c.l.bf16 %v40
  %v105 = vunpack.c.l.bf16 %v41
  %v106 = vunpack.c.l.bf16 %v42
  %v107 = vunpack.c.l.bf16 %v43
  %v108 = vunpack.c.l.bf16 %v44
  %v109 = vunpack.c.l.bf16 %v45
  %v110 = vunpack.c.l.bf16 %v46
  %v111 = vunpack.c.l.bf16 %v47
  %v112 = vunpack.c.l.bf16 %v48
  %v113 = vunpack.c.l.bf16 %v49
  %v114 = vunpack.c.l.bf16 %v50
  %v115 = vunpack.c.l.bf16 %v51
  %v116 = vunpack.c.l.bf16 %v52
  %v117 = vunpack.c.l.bf16 %v53
  %v118 = vunpack.c.l.bf16 %v54
  %v119 = vunpack.c.l.bf16 %v55
  %v120 = vunpack.c.l.bf16 %v56
  %v121 = vunpack.c.l.bf16 %v57
  %v122 = vunpack.c.l.bf16 %v58
  %v123 = vunpack.c.l.bf16 %v59
  %v124 = vunpack.c.l.bf16 %v60
  %v125 = vunpack.c.l.bf16 %v61
  %v126 = vunpack.c.l.bf16 %v62
  %v127 = vunpack.c.l.bf16 %v63
  %v128 = vunpack.c.l.bf16 %v64
  %v129 = vunpack.c.l.bf16 %v65
  %v130 = vunpack.c.l.bf16 %v66
  %v131 = vunpack.c.l.bf16 %v67
  %v132 = vunpack.c.l.bf16 %v68
  %v133 = vunpack.c.l.bf16 %v69
  %v134 = vunpack.c.l.bf16 %v70
  %v135 = vunpack.c.l.bf16 %v71
  %v136 = vunpack.c.l.bf16 %v72
  %v137 = vunpack.c.l.bf16 %v73
  %v138 = vunpack.c.l.bf16 %v74
  %v139 = vunpack.c.l.bf16 %v75
  %v140 = vunpack.c.l.bf16 %v76
  %v141 = vunpack.c.l.bf16 %v77
  %v142 = vunpack.c.l.bf16 %v78
  %v143 = vunpack.c.l.bf16 %v79
  %v144 = vld [vmem:[%s1] sm:$0x1]
  %v145 = vadd.f32 %v80, %v81
  %v146 = vadd.f32 %v145, %v82
  %v147 = vadd.f32 %v146, %v83
  %v148 = vadd.f32 %v147, %v84
  %v149 = vadd.f32 %v148, %v85
  %v150 = vadd.f32 %v149, %v86
  %v151 = vadd.f32 %v150, %v87
  %v152 = vadd.f32 %v151, %v88
  %v153 = vadd.f32 %v152, %v89
  %v154 = vadd.f32 %v153, %v90
  %v155 = vadd.f32 %v154, %v91
  %v156 = vadd.f32 %v155, %v92
  %v157 = vadd.f32 %v156, %v93
  %v158 = vadd.f32 %v157, %v94
  %v159 = vadd.f32 %v158, %v95
  %v160 = vadd.f32 %v159, %v96
  %v161 = vadd.f32 %v160, %v97
  %v162 = vadd.f32 %v161, %v98
  %v163 = vadd.f32 %v162, %v99
  %v164 = vadd.f32 %v163, %v100
  %v165 = vadd.f32 %v164, %v101
  %v166 = vadd.f32 %v165, %v102
  %v167 = vadd.f32 %v166, %v103
  %v168 = vadd.f32 %v167, %v104
  %v169 = vadd.f32 %v168, %v105
  %v170 = vadd.f32 %v169, %v106
  %v171 = vadd.f32 %v170, %v107
  %v172 = vadd.f32 %v171, %v108
  %v173 = vadd.f32 %v172, %v109
  %v174 = vadd.f32 %v173, %v110
  %v175 = vadd.f32 %v174, %v111
  %v176 = vadd.f32 %v175, %v112
  %v177 = vadd.f32 %v176, %v113
  %v178 = vadd.f32 %v177, %v114
  %v179 = vadd.f32 %v178, %v115
  %v180 = vadd.f32 %v179, %v116
  %v181 = vadd.f32 %v180, %v117
  %v182 = vadd.f32 %v181, %v118
  %v183 = vadd.f32 %v182, %v119
  %v184 = vadd.f32 %v183, %v120
  %v185 = vadd.f32 %v184, %v121
  %v186 = vadd.f32 %v185, %v122
  %v187 = vadd.f32 %v186, %v123
  %v188 = vadd.f32 %v187, %v124
  %v189 = vadd.f32 %v188, %v125
  %v190 = vadd.f32 %v189, %v126
  %v191 = vadd.f32 %v190, %v127
  %v192 = vadd.f32 %v191, %v128
  %v193 = vadd.f32 %v192, %v129
  %v194 = vadd.f32 %v193, %v130
  %v195 = vadd.f32 %v194, %v131
  %v196 = vadd.f32 %v195, %v132
  %v197 = vadd.f32 %v196, %v133
  %v198 = vadd.f32 %v197, %v134
  %v199 = vadd.f32 %v198, %v135
  %v200 = vadd.f32 %v199, %v136
  %v201 = vadd.f32 %v200, %v137
  %v202 = vadd.f32 %v201, %v138
  %v203 = vadd.f32 %v202, %v139
  %v204 = vadd.f32 %v203, %v140
  %v205 = vadd.f32 %v204, %v141
  %v206 = vadd.f32 %v205, %v142
  %v207 = vadd.f32 %v206, %v143
  %v208 = vrot.slane %v207, 4
  %v209 = vadd.f32 %v207, %v208
  %v210 = vrot.slane %v209, 2
  %v211 = vadd.f32 %v209, %v210
  %v212 = vrot.slane %v211, 1
  %v213 = vadd.f32 %v211, %v212
  %v214 = vadd.f32 %v144, %v213
  %215 = vst [vmem:[%s1] sm:$0x1] %v214
  %v216 = vld [vmem:[%s2] sm:$0x1]
  %v217 = vmul.f32 %v80, %v80
  %v218 = vmul.f32 %v81, %v81
  %v219 = vmul.f32 %v82, %v82
  %v220 = vmul.f32 %v83, %v83
  %v221 = vmul.f32 %v84, %v84
  %v222 = vmul.f32 %v85, %v85
  %v223 = vmul.f32 %v86, %v86
  %v224 = vmul.f32 %v87, %v87
  %v225 = vmul.f32 %v88, %v88
  %v226 = vmul.f32 %v89, %v89
  %v227 = vmul.f32 %v90, %v90
  %v228 = vmul.f32 %v91, %v91
  %v229 = vmul.f32 %v92, %v92
  %v230 = vmul.f32 %v93, %v93
  %v231 = vmul.f32 %v94, %v94
  %v232 = vmul.f32 %v95, %v95
  %v233 = vmul.f32 %v96, %v96
  %v234 = vmul.f32 %v97, %v97
  %v235 = vmul.f32 %v98, %v98
  %v236 = vmul.f32 %v99, %v99
  %v237 = vmul.f32 %v100, %v100
  %v238 = vmul.f32 %v101, %v101
  %v239 = vmul.f32 %v102, %v102
  %v240 = vmul.f32 %v103, %v103
  %v241 = vmul.f32 %v104, %v104
  %v242 = vmul.f32 %v105, %v105
  %v243 = vmul.f32 %v106, %v106
  %v244 = vmul.f32 %v107, %v107
  %v245 = vmul.f32 %v108, %v108
  %v246 = vmul.f32 %v109, %v109
  %v247 = vmul.f32 %v110, %v110
  %v248 = vmul.f32 %v111, %v111
  %v249 = vmul.f32 %v112, %v112
  %v250 = vmul.f32 %v113, %v113
  %v251 = vmul.f32 %v114, %v114
  %v252 = vmul.f32 %v115, %v115
  %v253 = vmul.f32 %v116, %v116
  %v254 = vmul.f32 %v117, %v117
  %v255 = vmul.f32 %v118, %v118
  %v256 = vmul.f32 %v119, %v119
  %v257 = vmul.f32 %v120, %v120
  %v258 = vmul.f32 %v121, %v121
  %v259 = vmul.f32 %v122, %v122
  %v260 = vmul.f32 %v123, %v123
  %v261 = vmul.f32 %v124, %v124
  %v262 = vmul.f32 %v125, %v125
  %v263 = vmul.f32 %v126, %v126
  %v264 = vmul.f32 %v127, %v127
  %v265 = vmul.f32 %v128, %v128
  %v266 = vmul.f32 %v129, %v129
  %v267 = vmul.f32 %v130, %v130
  %v268 = vmul.f32 %v131, %v131
  %v269 = vmul.f32 %v132, %v132
  %v270 = vmul.f32 %v133, %v133
  %v271 = vmul.f32 %v134, %v134
  %v272 = vmul.f32 %v135, %v135
  %v273 = vmul.f32 %v136, %v136
  %v274 = vmul.f32 %v137, %v137
  %v275 = vmul.f32 %v138, %v138
  %v276 = vmul.f32 %v139, %v139
  %v277 = vmul.f32 %v140, %v140
  %v278 = vmul.f32 %v141, %v141
  %v279 = vmul.f32 %v142, %v142
  %v280 = vmul.f32 %v143, %v143
  %v281 = vadd.f32 %v217, %v218
  %v282 = vadd.f32 %v281, %v219
  %v283 = vadd.f32 %v282, %v220
  %v284 = vadd.f32 %v283, %v221
  %v285 = vadd.f32 %v284, %v222
  %v286 = vadd.f32 %v285, %v223
  %v287 = vadd.f32 %v286, %v224
  %v288 = vadd.f32 %v287, %v225
  %v289 = vadd.f32 %v288, %v226
  %v290 = vadd.f32 %v289, %v227
  %v291 = vadd.f32 %v290, %v228
  %v292 = vadd.f32 %v291, %v229
  %v293 = vadd.f32 %v292, %v230
  %v294 = vadd.f32 %v293, %v231
  %v295 = vadd.f32 %v294, %v232
  %v296 = vadd.f32 %v295, %v233
  %v297 = vadd.f32 %v296, %v234
  %v298 = vadd.f32 %v297, %v235
  %v299 = vadd.f32 %v298, %v236
  %v300 = vadd.f32 %v299, %v237
  %v301 = vadd.f32 %v300, %v238
  %v302 = vadd.f32 %v301, %v239
  %v303 = vadd.f32 %v302, %v240
  %v304 = vadd.f32 %v303, %v241
  %v305 = vadd.f32 %v304, %v242
  %v306 = vadd.f32 %v305, %v243
  %v307 = vadd.f32 %v306, %v244
  %v308 = vadd.f32 %v307, %v245
  %v309 = vadd.f32 %v308, %v246
  %v310 = vadd.f32 %v309, %v247
  %v311 = vadd.f32 %v310, %v248
  %v312 = vadd.f32 %v311, %v249
  %v313 = vadd.f32 %v312, %v250
  %v314 = vadd.f32 %v313, %v251
  %v315 = vadd.f32 %v314, %v252
  %v316 = vadd.f32 %v315, %v253
  %v317 = vadd.f32 %v316, %v254
  %v318 = vadd.f32 %v317, %v255
  %v319 = vadd.f32 %v318, %v256
  %v320 = vadd.f32 %v319, %v257
  %v321 = vadd.f32 %v320, %v258
  %v322 = vadd.f32 %v321, %v259
  %v323 = vadd.f32 %v322, %v260
  %v324 = vadd.f32 %v323, %v261
  %v325 = vadd.f32 %v324, %v262
  %v326 = vadd.f32 %v325, %v263
  %v327 = vadd.f32 %v326, %v264
  %v328 = vadd.f32 %v327, %v265
  %v329 = vadd.f32 %v328, %v266
  %v330 = vadd.f32 %v329, %v267
  %v331 = vadd.f32 %v330, %v268
  %v332 = vadd.f32 %v331, %v269
  %v333 = vadd.f32 %v332, %v270
  %v334 = vadd.f32 %v333, %v271
  %v335 = vadd.f32 %v334, %v272
  %v336 = vadd.f32 %v335, %v273
  %v337 = vadd.f32 %v336, %v274
  %v338 = vadd.f32 %v337, %v275
  %v339 = vadd.f32 %v338, %v276
  %v340 = vadd.f32 %v339, %v277
  %v341 = vadd.f32 %v340, %v278
  %v342 = vadd.f32 %v341, %v279
  %v343 = vadd.f32 %v342, %v280
  %v344 = vrot.slane %v343, 4
  %v345 = vadd.f32 %v343, %v344
  %v346 = vrot.slane %v345, 2
  %v347 = vadd.f32 %v345, %v346
  %v348 = vrot.slane %v347, 1
  %v349 = vadd.f32 %v347, %v348
  %v350 = vadd.f32 %v216, %v349
  %351 = vst [vmem:[%s2] sm:$0x1] %v350
  // Predicated region
  $region10: #{discriminator_forward.27} parent=0 // pred_check
    %p352 = pneg %p10
  $region11: #{discriminator_forward.27} parent=0 // pred_check_branch
    %354 = sbr.rel (%p352) target = $region13
  $region12: #{discriminator_forward.27} parent=0 // pred_region
    %v355 = vld [vmem:[%s1] sm:$0x1]
    %v356 = vmul.f32 %v355, 0.001953125
    %v357 = vld [vmem:[%s2] sm:$0x1]
    %v358 = vmul.f32 %v357, 0.001953125
    %v359 = vmul.f32 %v356, %v356
    %v360 = vsub.f32 %v358, %v359
    %v361 = vmax.f32 %v360, 0.0
    %362 = vst [vmem:[%s1] sm:$0x1] %v356
    %363 = vst [vmem:[%s2] sm:$0x1] %v361
  $region13: #{discriminator_forward.27} parent=0 // pred_fallthru
    _
  // Predicated region
  $region14: #{discriminator_forward.27} parent=0 // pred_check
    _
  $region15: #{discriminator_forward.27} parent=0 // pred_check_branch
    %365 = sbr.rel (0) target = $region17
  $region16: #{discriminator_forward.27} parent=0 // pred_region
    _
  $region17: #{discriminator_forward.27} parent=0 // pred_fallthru
    _
  // Predicated region
  $region18: #{discriminator_forward.27} parent=0 // pred_check
    _
  $region19: #{discriminator_forward.27} parent=0 // pred_check_branch
    %367 = sbr.rel (0) target = $region21
  $region20: #{discriminator_forward.27} parent=0 // pred_region
    _
  $region21: #{discriminator_forward.27} parent=0 // pred_fallthru
    _
  // Predicated region
  $region22: #{discriminator_forward.27} parent=0 // pred_check
    _
  $region23: #{discriminator_forward.27} parent=0 // pred_check_branch
    %369 = sbr.rel (0) target = $region25
  $region24: #{discriminator_forward.27} parent=0 // pred_region
    _
  $region25: #{discriminator_forward.27} parent=0 // pred_fallthru
    _
  // Predicated region
  $region26: #{discriminator_forward.27} parent=0 // pred_check
    _
  $region27: #{discriminator_forward.27} parent=0 // pred_check_branch
    %371 = sbr.rel (0) target = $region29
  $region28: #{discriminator_forward.27} parent=0 // pred_region
    _
  $region29: #{discriminator_forward.27} parent=0 // pred_fallthru
    _

// kernel: discriminator_forward.28
$region0: #{discriminator_forward.28}
  #allocation0 [shape = 'u32[]', space=smem, size = 0x4, offset = 0x4, fixed_abs, tag = 'smem constant byte address 0x4 - core index']
  #allocation1 [shape = 'u32[144,128]{1,0:T(1,128)}', space=vmem, size = 0x12000, scoped, tag = 'internal scratch']
  %s0 = inlined_call_operand.vmem [shape: bf16[512,128], index: 0, kind: input, shape index: {}]
  %s1 = inlined_call_operand.vmem [shape: f32[1,128], index: 1, kind: input, shape index: {}]
  %s2 = inlined_call_operand.vmem [shape: f32[1,128], index: 2, kind: input, shape index: {}]
  %s3 = inlined_call_operand.vmem [shape: f32[1,128], index: 3, kind: input, shape index: {}]
  %s4 = inlined_call_operand.vmem [shape: f32[1,128], index: 4, kind: input, shape index: {}]
  %s5 = inlined_call_operand.vmem [shape: bf16[512,128], index: 5, kind: output, shape index: {}]
  %s6 = sld [smem:[#allocation0]]
  $region30: #{discriminator_forward.28} parent=0
    _
  %s8 = ssub.s32 1, %s6
  %s9 = scalar_select 0, %s8, %s6
  // Predicated region
  $region2: #{discriminator_forward.28} parent=0 // pred_check
    _
  $region3: #{discriminator_forward.28} parent=0 // pred_check_branch
    %11 = sbr.rel (0) target = $region5
  $region4: #{discriminator_forward.28} parent=0 // pred_region
    _
  $region5: #{discriminator_forward.28} parent=0 // pred_fallthru
    _
  // Predicated region
  $region6: #{discriminator_forward.28} parent=0 // pred_check
    _
  $region7: #{discriminator_forward.28} parent=0 // pred_check_branch
    %13 = sbr.rel (0) target = $region9
  $region8: #{discriminator_forward.28} parent=0 // pred_region
    _
  $region9: #{discriminator_forward.28} parent=0 // pred_fallthru
    _
  // Predicated region
  $region10: #{discriminator_forward.28} parent=0 // pred_check
    _
  $region11: #{discriminator_forward.28} parent=0 // pred_check_branch
    %15 = sbr.rel (0) target = $region13
  $region12: #{discriminator_forward.28} parent=0 // pred_region
    _
  $region13: #{discriminator_forward.28} parent=0 // pred_fallthru
    _
  // Predicated region
  $region14: #{discriminator_forward.28} parent=0 // pred_check
    _
  $region15: #{discriminator_forward.28} parent=0 // pred_check_branch
    %17 = sbr.rel (0) target = $region17
  $region16: #{discriminator_forward.28} parent=0 // pred_region
    _
  $region17: #{discriminator_forward.28} parent=0 // pred_fallthru
    _
  // Predicated region
  $region18: #{discriminator_forward.28} parent=0 // pred_check
    _
  $region19: #{discriminator_forward.28} parent=0 // pred_check_branch
    %19 = sbr.rel (0) target = $region21
  $region20: #{discriminator_forward.28} parent=0 // pred_region
    _
  $region21: #{discriminator_forward.28} parent=0 // pred_fallthru
    _
  %v20 = vld [vmem:[%s3] sm:$0x1]
  %v21 = vld [vmem:[%s2] sm:$0x1]
  %v22 = vadd.f32 %v21, 1e-05
  %v23 = vrsqrt.pop %v22
  %v24 = vmul.f32 %v20, %v23
  %v25 = vld [vmem:[%s4] sm:$0x1]
  %v26 = vld [vmem:[%s1] sm:$0x1]
  %v27 = vmul.f32 %v26, %v24
  %v28 = vsub.f32 %v25, %v27
  %v29 = vld [vmem:[%s0] sm:$0xf]
  %v30 = vld [vmem:[%s0 + $0x4] sm:$0xf]
  %v31 = vld [vmem:[%s0 + $0x8] sm:$0xf]
  %v32 = vld [vmem:[%s0 + $0xc] sm:$0xf]
  %v33 = vld [vmem:[%s0 + $0x10] sm:$0xf]
  %v34 = vld [vmem:[%s0 + $0x14] sm:$0xf]
  %v35 = vld [vmem:[%s0 + $0x18] sm:$0xf]
  %v36 = vld [vmem:[%s0 + $0x1c] sm:$0xf]
  %v37 = vld [vmem:[%s0 + $0x20] sm:$0xf]
  %v38 = vld [vmem:[%s0 + $0x24] sm:$0xf]
  %v39 = vld [vmem:[%s0 + $0x28] sm:$0xf]
  %v40 = vld [vmem:[%s0 + $0x2c] sm:$0xf]
  %v41 = vld [vmem:[%s0 + $0x30] sm:$0xf]
  %v42 = vld [vmem:[%s0 + $0x34] sm:$0xf]
  %v43 = vld [vmem:[%s0 + $0x38] sm:$0xf]
  %v44 = vld [vmem:[%s0 + $0x3c] sm:$0xf]
  %v45 = vld [vmem:[%s0 + $0x40] sm:$0xf]
  %v46 = vld [vmem:[%s0 + $0x44] sm:$0xf]
  %v47 = vld [vmem:[%s0 + $0x48] sm:$0xf]
  %v48 = vld [vmem:[%s0 + $0x4c] sm:$0xf]
  %v49 = vld [vmem:[%s0 + $0x50] sm:$0xf]
  %v50 = vld [vmem:[%s0 + $0x54] sm:$0xf]
  %v51 = vld [vmem:[%s0 + $0x58] sm:$0xf]
  %v52 = vld [vmem:[%s0 + $0x5c] sm:$0xf]
  %v53 = vld [vmem:[%s0 + $0x60] sm:$0xf]
  %v54 = vld [vmem:[%s0 + $0x64] sm:$0xf]
  %v55 = vld [vmem:[%s0 + $0x68] sm:$0xf]
  %v56 = vld [vmem:[%s0 + $0x6c] sm:$0xf]
  %v57 = vld [vmem:[%s0 + $0x70] sm:$0xf]
  %v58 = vld [vmem:[%s0 + $0x74] sm:$0xf]
  %v59 = vld [vmem:[%s0 + $0x78] sm:$0xf]
  %v60 = vld [vmem:[%s0 + $0x7c] sm:$0xf]
  %v61 = vld [vmem:[%s0 + $0x80] sm:$0xf]
  %v62 = vld [vmem:[%s0 + $0x84] sm:$0xf]
  %v63 = vld [vmem:[%s0 + $0x88] sm:$0xf]
  %v64 = vld [vmem:[%s0 + $0x8c] sm:$0xf]
  %v65 = vld [vmem:[%s0 + $0x90] sm:$0xf]
  %v66 = vld [vmem:[%s0 + $0x94] sm:$0xf]
  %v67 = vld [vmem:[%s0 + $0x98] sm:$0xf]
  %v68 = vld [vmem:[%s0 + $0x9c] sm:$0xf]
  %v69 = vld [vmem:[%s0 + $0xa0] sm:$0xf]
  %v70 = vld [vmem:[%s0 + $0xa4] sm:$0xf]
  %v71 = vld [vmem:[%s0 + $0xa8] sm:$0xf]
  %v72 = vld [vmem:[%s0 + $0xac] sm:$0xf]
  %v73 = vld [vmem:[%s0 + $0xb0] sm:$0xf]
  %v74 = vld [vmem:[%s0 + $0xb4] sm:$0xf]
  %v75 = vld [vmem:[%s0 + $0xb8] sm:$0xf]
  %v76 = vld [vmem:[%s0 + $0xbc] sm:$0xf]
  %v77 = vld [vmem:[%s0 + $0xc0] sm:$0xf]
  %v78 = vld [vmem:[%s0 + $0xc4] sm:$0xf]
  %v79 = vld [vmem:[%s0 + $0xc8] sm:$0xf]
  %v80 = vld [vmem:[%s0 + $0xcc] sm:$0xf]
  %v81 = vld [vmem:[%s0 + $0xd0] sm:$0xf]
  %v82 = vld [vmem:[%s0 + $0xd4] sm:$0xf]
  %v83 = vld [vmem:[%s0 + $0xd8] sm:$0xf]
  %v84 = vld [vmem:[%s0 + $0xdc] sm:$0xf]
  %v85 = vld [vmem:[%s0 + $0xe0] sm:$0xf]
  %v86 = vld [vmem:[%s0 + $0xe4] sm:$0xf]
  %v87 = vld [vmem:[%s0 + $0xe8] sm:$0xf]
  %v88 = vld [vmem:[%s0 + $0xec] sm:$0xf]
  %v89 = vld [vmem:[%s0 + $0xf0] sm:$0xf]
  %v90 = vld [vmem:[%s0 + $0xf4] sm:$0xf]
  %v91 = vld [vmem:[%s0 + $0xf8] sm:$0xf]
  %v92 = vld [vmem:[%s0 + $0xfc] sm:$0xf]
  %v93 = vunpack.c.l.bf16 %v29
  %v94 = vunpack.c.l.bf16 %v30
  %v95 = vunpack.c.l.bf16 %v31
  %v96 = vunpack.c.l.bf16 %v32
  %v97 = vunpack.c.l.bf16 %v33
  %v98 = vunpack.c.l.bf16 %v34
  %v99 = vunpack.c.l.bf16 %v35
  %v100 = vunpack.c.l.bf16 %v36
  %v101 = vunpack.c.l.bf16 %v37
  %v102 = vunpack.c.l.bf16 %v38
  %v103 = vunpack.c.l.bf16 %v39
  %v104 = vunpack.c.l.bf16 %v40
  %v105 = vunpack.c.l.bf16 %v41
  %v106 = vunpack.c.l.bf16 %v42
  %v107 = vunpack.c.l.bf16 %v43
  %v108 = vunpack.c.l.bf16 %v44
  %v109 = vunpack.c.l.bf16 %v45
  %v110 = vunpack.c.l.bf16 %v46
  %v111 = vunpack.c.l.bf16 %v47
  %v112 = vunpack.c.l.bf16 %v48
  %v113 = vunpack.c.l.bf16 %v49
  %v114 = vunpack.c.l.bf16 %v50
  %v115 = vunpack.c.l.bf16 %v51
  %v116 = vunpack.c.l.bf16 %v52
  %v117 = vunpack.c.l.bf16 %v53
  %v118 = vunpack.c.l.bf16 %v54
  %v119 = vunpack.c.l.bf16 %v55
  %v120 = vunpack.c.l.bf16 %v56
  %v121 = vunpack.c.l.bf16 %v57
  %v122 = vunpack.c.l.bf16 %v58
  %v123 = vunpack.c.l.bf16 %v59
  %v124 = vunpack.c.l.bf16 %v60
  %v125 = vunpack.c.l.bf16 %v61
  %v126 = vunpack.c.l.bf16 %v62
  %v127 = vunpack.c.l.bf16 %v63
  %v128 = vunpack.c.l.bf16 %v64
  %v129 = vunpack.c.l.bf16 %v65
  %v130 = vunpack.c.l.bf16 %v66
  %v131 = vunpack.c.l.bf16 %v67
  %v132 = vunpack.c.l.bf16 %v68
  %v133 = vunpack.c.l.bf16 %v69
  %v134 = vunpack.c.l.bf16 %v70
  %v135 = vunpack.c.l.bf16 %v71
  %v136 = vunpack.c.l.bf16 %v72
  %v137 = vunpack.c.l.bf16 %v73
  %v138 = vunpack.c.l.bf16 %v74
  %v139 = vunpack.c.l.bf16 %v75
  %v140 = vunpack.c.l.bf16 %v76
  %v141 = vunpack.c.l.bf16 %v77
  %v142 = vunpack.c.l.bf16 %v78
  %v143 = vunpack.c.l.bf16 %v79
  %v144 = vunpack.c.l.bf16 %v80
  %v145 = vunpack.c.l.bf16 %v81
  %v146 = vunpack.c.l.bf16 %v82
  %v147 = vunpack.c.l.bf16 %v83
  %v148 = vunpack.c.l.bf16 %v84
  %v149 = vunpack.c.l.bf16 %v85
  %v150 = vunpack.c.l.bf16 %v86
  %v151 = vunpack.c.l.bf16 %v87
  %v152 = vunpack.c.l.bf16 %v88
  %v153 = vunpack.c.l.bf16 %v89
  %v154 = vunpack.c.l.bf16 %v90
  %v155 = vunpack.c.l.bf16 %v91
  %v156 = vunpack.c.l.bf16 %v92
  %v158 = vlaneseq
  %v159 = vshrl.u32 %v158, 7
  %v160 = vsub.s32 0, %v159
  %v161 = vrot.slane %v24, %v160
  %v163 = vmul.f32 %v93, %v161
  %v164 = vmul.f32 %v94, %v161
  %v165 = vmul.f32 %v95, %v161
  %v166 = vmul.f32 %v96, %v161
  %v167 = vmul.f32 %v97, %v161
  %v168 = vmul.f32 %v98, %v161
  %v169 = vmul.f32 %v99, %v161
  %v170 = vmul.f32 %v100, %v161
  %v171 = vmul.f32 %v101, %v161
  %v172 = vmul.f32 %v102, %v161
  %v173 = vmul.f32 %v103, %v161
  %v174 = vmul.f32 %v104, %v161
  %v175 = vmul.f32 %v105, %v161
  %v176 = vmul.f32 %v106, %v161
  %v177 = vmul.f32 %v107, %v161
  %v178 = vmul.f32 %v108, %v161
  %v179 = vmul.f32 %v109, %v161
  %v180 = vmul.f32 %v110, %v161
  %v181 = vmul.f32 %v111, %v161
  %v182 = vmul.f32 %v112, %v161
  %v183 = vmul.f32 %v113, %v161
  %v184 = vmul.f32 %v114, %v161
  %v185 = vmul.f32 %v115, %v161
  %v186 = vmul.f32 %v116, %v161
  %v187 = vmul.f32 %v117, %v161
  %v188 = vmul.f32 %v118, %v161
  %v189 = vmul.f32 %v119, %v161
  %v190 = vmul.f32 %v120, %v161
  %v191 = vmul.f32 %v121, %v161
  %v192 = vmul.f32 %v122, %v161
  %v193 = vmul.f32 %v123, %v161
  %v194 = vmul.f32 %v124, %v161
  %v195 = vmul.f32 %v125, %v161
  %v196 = vmul.f32 %v126, %v161
  %v197 = vmul.f32 %v127, %v161
  %v198 = vmul.f32 %v128, %v161
  %v199 = vmul.f32 %v129, %v161
  %v200 = vmul.f32 %v130, %v161
  %v201 = vmul.f32 %v131, %v161
  %v202 = vmul.f32 %v132, %v161
  %v203 = vmul.f32 %v133, %v161
  %v204 = vmul.f32 %v134, %v161
  %v205 = vmul.f32 %v135, %v161
  %v206 = vmul.f32 %v136, %v161
  %v207 = vmul.f32 %v137, %v161
  %v208 = vmul.f32 %v138, %v161
  %v209 = vmul.f32 %v139, %v161
  %v210 = vmul.f32 %v140, %v161
  %v211 = vmul.f32 %v141, %v161
  %v212 = vmul.f32 %v142, %v161
  %v213 = vmul.f32 %v143, %v161
  %v214 = vmul.f32 %v144, %v161
  %v215 = vmul.f32 %v145, %v161
  %v216 = vmul.f32 %v146, %v161
  %v217 = vmul.f32 %v147, %v161
  %v218 = vmul.f32 %v148, %v161
  %v219 = vmul.f32 %v149, %v161
  %v220 = vmul.f32 %v150, %v161
  %v221 = vmul.f32 %v151, %v161
  %v222 = vmul.f32 %v152, %v161
  %v223 = vmul.f32 %v153, %v161
  %v224 = vmul.f32 %v154, %v161
  %v225 = vmul.f32 %v155, %v161
  %v226 = vmul.f32 %v156, %v161
  %v228 = vlaneseq
  %v229 = vshrl.u32 %v228, 7
  %v230 = vsub.s32 0, %v229
  %v231 = vrot.slane %v28, %v230
  %v233 = vadd.f32 %v163, %v231
  %v234 = vadd.f32 %v164, %v231
  %v235 = vadd.f32 %v165, %v231
  %v236 = vadd.f32 %v166, %v231
  %v237 = vadd.f32 %v167, %v231
  %v238 = vadd.f32 %v168, %v231
  %v239 = vadd.f32 %v169, %v231
  %v240 = vadd.f32 %v170, %v231
  %v241 = vadd.f32 %v171, %v231
  %v242 = vadd.f32 %v172, %v231
  %v243 = vadd.f32 %v173, %v231
  %v244 = vadd.f32 %v174, %v231
  %v245 = vadd.f32 %v175, %v231
  %v246 = vadd.f32 %v176, %v231
  %v247 = vadd.f32 %v177, %v231
  %v248 = vadd.f32 %v178, %v231
  %v249 = vadd.f32 %v179, %v231
  %v250 = vadd.f32 %v180, %v231
  %v251 = vadd.f32 %v181, %v231
  %v252 = vadd.f32 %v182, %v231
  %v253 = vadd.f32 %v183, %v231
  %v254 = vadd.f32 %v184, %v231
  %v255 = vadd.f32 %v185, %v231
  %v256 = vadd.f32 %v186, %v231
  %v257 = vadd.f32 %v187, %v231
  %v258 = vadd.f32 %v188, %v231
  %v259 = vadd.f32 %v189, %v231
  %v260 = vadd.f32 %v190, %v231
  %v261 = vadd.f32 %v191, %v231
  %v262 = vadd.f32 %v192, %v231
  %v263 = vadd.f32 %v193, %v231
  %v264 = vadd.f32 %v194, %v231
  %v265 = vadd.f32 %v195, %v231
  %v266 = vadd.f32 %v196, %v231
  %v267 = vadd.f32 %v197, %v231
  %v268 = vadd.f32 %v198, %v231
  %v269 = vadd.f32 %v199, %v231
  %v270 = vadd.f32 %v200, %v231
  %v271 = vadd.f32 %v201, %v231
  %v272 = vadd.f32 %v202, %v231
  %v273 = vadd.f32 %v203, %v231
  %v274 = vadd.f32 %v204, %v231
  %v275 = vadd.f32 %v205, %v231
  %v276 = vadd.f32 %v206, %v231
  %v277 = vadd.f32 %v207, %v231
  %v278 = vadd.f32 %v208, %v231
  %v279 = vadd.f32 %v209, %v231
  %v280 = vadd.f32 %v210, %v231
  %v281 = vadd.f32 %v211, %v231
  %v282 = vadd.f32 %v212, %v231
  %v283 = vadd.f32 %v213, %v231
  %v284 = vadd.f32 %v214, %v231
  %v285 = vadd.f32 %v215, %v231
  %v286 = vadd.f32 %v216, %v231
  %v287 = vadd.f32 %v217, %v231
  %v288 = vadd.f32 %v218, %v231
  %v289 = vadd.f32 %v219, %v231
  %v290 = vadd.f32 %v220, %v231
  %v291 = vadd.f32 %v221, %v231
  %v292 = vadd.f32 %v222, %v231
  %v293 = vadd.f32 %v223, %v231
  %v294 = vadd.f32 %v224, %v231
  %v295 = vadd.f32 %v225, %v231
  %v296 = vadd.f32 %v226, %v231
  %vm297 = vcmp.ge.f32.partialorder %v233, 0.0
  %vm298 = vcmp.ge.f32.partialorder %v234, 0.0
  %vm299 = vcmp.ge.f32.partialorder %v235, 0.0
  %vm300 = vcmp.ge.f32.partialorder %v236, 0.0
  %vm301 = vcmp.ge.f32.partialorder %v237, 0.0
  %vm302 = vcmp.ge.f32.partialorder %v238, 0.0
  %vm303 = vcmp.ge.f32.partialorder %v239, 0.0
  %vm304 = vcmp.ge.f32.partialorder %v240, 0.0
  %vm305 = vcmp.ge.f32.partialorder %v241, 0.0
  %vm306 = vcmp.ge.f32.partialorder %v242, 0.0
  %vm307 = vcmp.ge.f32.partialorder %v243, 0.0
  %vm308 = vcmp.ge.f32.partialorder %v244, 0.0
  %vm309 = vcmp.ge.f32.partialorder %v245, 0.0
  %vm310 = vcmp.ge.f32.partialorder %v246, 0.0
  %vm311 = vcmp.ge.f32.partialorder %v247, 0.0
  %vm312 = vcmp.ge.f32.partialorder %v248, 0.0
  %vm313 = vcmp.ge.f32.partialorder %v249, 0.0
  %vm314 = vcmp.ge.f32.partialorder %v250, 0.0
  %vm315 = vcmp.ge.f32.partialorder %v251, 0.0
  %vm316 = vcmp.ge.f32.partialorder %v252, 0.0
  %vm317 = vcmp.ge.f32.partialorder %v253, 0.0
  %vm318 = vcmp.ge.f32.partialorder %v254, 0.0
  %vm319 = vcmp.ge.f32.partialorder %v255, 0.0
  %vm320 = vcmp.ge.f32.partialorder %v256, 0.0
  %vm321 = vcmp.ge.f32.partialorder %v257, 0.0
  %vm322 = vcmp.ge.f32.partialorder %v258, 0.0
  %vm323 = vcmp.ge.f32.partialorder %v259, 0.0
  %vm324 = vcmp.ge.f32.partialorder %v260, 0.0
  %vm325 = vcmp.ge.f32.partialorder %v261, 0.0
  %vm326 = vcmp.ge.f32.partialorder %v262, 0.0
  %vm327 = vcmp.ge.f32.partialorder %v263, 0.0
  %vm328 = vcmp.ge.f32.partialorder %v264, 0.0
  %vm329 = vcmp.ge.f32.partialorder %v265, 0.0
  %vm330 = vcmp.ge.f32.partialorder %v266, 0.0
  %vm331 = vcmp.ge.f32.partialorder %v267, 0.0
  %vm332 = vcmp.ge.f32.partialorder %v268, 0.0
  %vm333 = vcmp.ge.f32.partialorder %v269, 0.0
  %vm334 = vcmp.ge.f32.partialorder %v270, 0.0
  %vm335 = vcmp.ge.f32.partialorder %v271, 0.0
  %vm336 = vcmp.ge.f32.partialorder %v272, 0.0
  %vm337 = vcmp.ge.f32.partialorder %v273, 0.0
  %vm338 = vcmp.ge.f32.partialorder %v274, 0.0
  %vm339 = vcmp.ge.f32.partialorder %v275, 0.0
  %vm340 = vcmp.ge.f32.partialorder %v276, 0.0
  %vm341 = vcmp.ge.f32.partialorder %v277, 0.0
  %vm342 = vcmp.ge.f32.partialorder %v278, 0.0
  %vm343 = vcmp.ge.f32.partialorder %v279, 0.0
  %vm344 = vcmp.ge.f32.partialorder %v280, 0.0
  %vm345 = vcmp.ge.f32.partialorder %v281, 0.0
  %vm346 = vcmp.ge.f32.partialorder %v282, 0.0
  %vm347 = vcmp.ge.f32.partialorder %v283, 0.0
  %vm348 = vcmp.ge.f32.partialorder %v284, 0.0
  %vm349 = vcmp.ge.f32.partialorder %v285, 0.0
  %vm350 = vcmp.ge.f32.partialorder %v286, 0.0
  %vm351 = vcmp.ge.f32.partialorder %v287, 0.0
  %vm352 = vcmp.ge.f32.partialorder %v288, 0.0
  %vm353 = vcmp.ge.f32.partialorder %v289, 0.0
  %vm354 = vcmp.ge.f32.partialorder %v290, 0.0
  %vm355 = vcmp.ge.f32.partialorder %v291, 0.0
  %vm356 = vcmp.ge.f32.partialorder %v292, 0.0
  %vm357 = vcmp.ge.f32.partialorder %v293, 0.0
  %vm358 = vcmp.ge.f32.partialorder %v294, 0.0
  %vm359 = vcmp.ge.f32.partialorder %v295, 0.0
  %vm360 = vcmp.ge.f32.partialorder %v296, 0.0
  %v361 = vmul.f32 %v233, 0.2
  %v362 = vmul.f32 %v234, 0.2
  %v363 = vmul.f32 %v235, 0.2
  %v364 = vmul.f32 %v236, 0.2
  %v365 = vmul.f32 %v237, 0.2
  %v366 = vmul.f32 %v238, 0.2
  %v367 = vmul.f32 %v239, 0.2
  %v368 = vmul.f32 %v240, 0.2
  %v369 = vmul.f32 %v241, 0.2
  %v370 = vmul.f32 %v242, 0.2
  %v371 = vmul.f32 %v243, 0.2
  %v372 = vmul.f32 %v244, 0.2
  %v373 = vmul.f32 %v245, 0.2
  %v374 = vmul.f32 %v246, 0.2
  %v375 = vmul.f32 %v247, 0.2
  %v376 = vmul.f32 %v248, 0.2
  %v377 = vmul.f32 %v249, 0.2
  %v378 = vmul.f32 %v250, 0.2
  %v379 = vmul.f32 %v251, 0.2
  %v380 = vmul.f32 %v252, 0.2
  %v381 = vmul.f32 %v253, 0.2
  %v382 = vmul.f32 %v254, 0.2
  %v383 = vmul.f32 %v255, 0.2
  %v384 = vmul.f32 %v256, 0.2
  %v385 = vmul.f32 %v257, 0.2
  %v386 = vmul.f32 %v258, 0.2
  %v387 = vmul.f32 %v259, 0.2
  %v388 = vmul.f32 %v260, 0.2
  %v389 = vmul.f32 %v261, 0.2
  %v390 = vmul.f32 %v262, 0.2
  %v391 = vmul.f32 %v263, 0.2
  %v392 = vmul.f32 %v264, 0.2
  %v393 = vmul.f32 %v265, 0.2
  %v394 = vmul.f32 %v266, 0.2
  %v395 = vmul.f32 %v267, 0.2
  %v396 = vmul.f32 %v268, 0.2
  %v397 = vmul.f32 %v269, 0.2
  %v398 = vmul.f32 %v270, 0.2
  %v399 = vmul.f32 %v271, 0.2
  %v400 = vmul.f32 %v272, 0.2
  %v401 = vmul.f32 %v273, 0.2
  %v402 = vmul.f32 %v274, 0.2
  %v403 = vmul.f32 %v275, 0.2
  %v404 = vmul.f32 %v276, 0.2
  %v405 = vmul.f32 %v277, 0.2
  %v406 = vmul.f32 %v278, 0.2
  %v407 = vmul.f32 %v279, 0.2
  %v408 = vmul.f32 %v280, 0.2
  %v409 = vmul.f32 %v281, 0.2
  %v410 = vmul.f32 %v282, 0.2
  %v411 = vmul.f32 %v283, 0.2
  %v412 = vmul.f32 %v284, 0.2
  %v413 = vmul.f32 %v285, 0.2
  %v414 = vmul.f32 %v286, 0.2
  %v415 = vmul.f32 %v287, 0.2
  %v416 = vmul.f32 %v288, 0.2
  %v417 = vmul.f32 %v289, 0.2
  %v418 = vmul.f32 %v290, 0.2
  %v419 = vmul.f32 %v291, 0.2
  %v420 = vmul.f32 %v292, 0.2
  %v421 = vmul.f32 %v293, 0.2
  %v422 = vmul.f32 %v294, 0.2
  %v423 = vmul.f32 %v295, 0.2
  %v424 = vmul.f32 %v296, 0.2
  %v425 = vsel %vm297, %v233, %v361
  %v426 = vsel %vm298, %v234, %v362
  %v427 = vsel %vm299, %v235, %v363
  %v428 = vsel %vm300, %v236, %v364
  %v429 = vsel %vm301, %v237, %v365
  %v430 = vsel %vm302, %v238, %v366
  %v431 = vsel %vm303, %v239, %v367
  %v432 = vsel %vm304, %v240, %v368
  %v433 = vsel %vm305, %v241, %v369
  %v434 = vsel %vm306, %v242, %v370
  %v435 = vsel %vm307, %v243, %v371
  %v436 = vsel %vm308, %v244, %v372
  %v437 = vsel %vm309, %v245, %v373
  %v438 = vsel %vm310, %v246, %v374
  %v439 = vsel %vm311, %v247, %v375
  %v440 = vsel %vm312, %v248, %v376
  %v441 = vsel %vm313, %v249, %v377
  %v442 = vsel %vm314, %v250, %v378
  %v443 = vsel %vm315, %v251, %v379
  %v444 = vsel %vm316, %v252, %v380
  %v445 = vsel %vm317, %v253, %v381
  %v446 = vsel %vm318, %v254, %v382
  %v447 = vsel %vm319, %v255, %v383
  %v448 = vsel %vm320, %v256, %v384
  %v449 = vsel %vm321, %v257, %v385
  %v450 = vsel %vm322, %v258, %v386
  %v451 = vsel %vm323, %v259, %v387
  %v452 = vsel %vm324, %v260, %v388
  %v453 = vsel %vm325, %v261, %v389
  %v454 = vsel %vm326, %v262, %v390
  %v455 = vsel %vm327, %v263, %v391
  %v456 = vsel %vm328, %v264, %v392
  %v457 = vsel %vm329, %v265, %v393
  %v458 = vsel %vm330, %v266, %v394
  %v459 = vsel %vm331, %v267, %v395
  %v460 = vsel %vm332, %v268, %v396
  %v461 = vsel %vm333, %v269, %v397
  %v462 = vsel %vm334, %v270, %v398
  %v463 = vsel %vm335, %v271, %v399
  %v464 = vsel %vm336, %v272, %v400
  %v465 = vsel %vm337, %v273, %v401
  %v466 = vsel %vm338, %v274, %v402
  %v467 = vsel %vm339, %v275, %v403
  %v468 = vsel %vm340, %v276, %v404
  %v469 = vsel %vm341, %v277, %v405
  %v470 = vsel %vm342, %v278, %v406
  %v471 = vsel %vm343, %v279, %v407
  %v472 = vsel %vm344, %v280, %v408
  %v473 = vsel %vm345, %v281, %v409
  %v474 = vsel %vm346, %v282, %v410
  %v475 = vsel %vm347, %v283, %v411
  %v476 = vsel %vm348, %v284, %v412
  %v477 = vsel %vm349, %v285, %v413
  %v478 = vsel %vm350, %v286, %v414
  %v479 = vsel %vm351, %v287, %v415
  %v480 = vsel %vm352, %v288, %v416
  %v481 = vsel %vm353, %v289, %v417
  %v482 = vsel %vm354, %v290, %v418
  %v483 = vsel %vm355, %v291, %v419
  %v484 = vsel %vm356, %v292, %v420
  %v485 = vsel %vm357, %v293, %v421
  %v486 = vsel %vm358, %v294, %v422
  %v487 = vsel %vm359, %v295, %v423
  %v488 = vsel %vm360, %v296, %v424
  %v489 = vpack.c.bf16 %v426, %v425
  %v490 = vpack.c.bf16 %v428, %v427
  %v491 = vpack.c.bf16 %v430, %v429
  %v492 = vpack.c.bf16 %v432, %v431
  %v493 = vpack.c.bf16 %v434, %v433
  %v494 = vpack.c.bf16 %v436, %v435
  %v495 = vpack.c.bf16 %v438, %v437
  %v496 = vpack.c.bf16 %v440, %v439
  %v497 = vpack.c.bf16 %v442, %v441
  %v498 = vpack.c.bf16 %v444, %v443
  %v499 = vpack.c.bf16 %v446, %v445
  %v500 = vpack.c.bf16 %v448, %v447
  %v501 = vpack.c.bf16 %v450, %v449
  %v502 = vpack.c.bf16 %v452, %v451
  %v503 = vpack.c.bf16 %v454, %v453
  %v504 = vpack.c.bf16 %v456, %v455
  %v505 = vpack.c.bf16 %v458, %v457
  %v506 = vpack.c.bf16 %v460, %v459
  %v507 = vpack.c.bf16 %v462, %v461
  %v508 = vpack.c.bf16 %v464, %v463
  %v509 = vpack.c.bf16 %v466, %v465
  %v510 = vpack.c.bf16 %v468, %v467
  %v511 = vpack.c.bf16 %v470, %v469
  %v512 = vpack.c.bf16 %v472, %v471
  %v513 = vpack.c.bf16 %v474, %v473
  %v514 = vpack.c.bf16 %v476, %v475
  %v515 = vpack.c.bf16 %v478, %v477
  %v516 = vpack.c.bf16 %v480, %v479
  %v517 = vpack.c.bf16 %v482, %v481
  %v518 = vpack.c.bf16 %v484, %v483
  %v519 = vpack.c.bf16 %v486, %v485
  %v520 = vpack.c.bf16 %v488, %v487
  %v553 = vunpack.c.l.b16 %v489
  %v554 = vunpack.c.h.b16 %v489
  %v555 = vunpack.c.l.b16 %v490
  %v556 = vunpack.c.h.b16 %v490
  %v557 = vunpack.c.l.b16 %v491
  %v558 = vunpack.c.h.b16 %v491
  %v559 = vunpack.c.l.b16 %v492
  %v560 = vunpack.c.h.b16 %v492
  %v561 = vunpack.c.l.b16 %v493
  %v562 = vunpack.c.h.b16 %v493
  %v563 = vunpack.c.l.b16 %v494
  %v564 = vunpack.c.h.b16 %v494
  %v565 = vunpack.c.l.b16 %v495
  %v566 = vunpack.c.h.b16 %v495
  %v567 = vunpack.c.l.b16 %v496
  %v568 = vunpack.c.h.b16 %v496
  %v569 = vunpack.c.l.b16 %v497
  %v570 = vunpack.c.h.b16 %v497
  %v571 = vunpack.c.l.b16 %v498
  %v572 = vunpack.c.h.b16 %v498
  %v573 = vunpack.c.l.b16 %v499
  %v574 = vunpack.c.h.b16 %v499
  %v575 = vunpack.c.l.b16 %v500
  %v576 = vunpack.c.h.b16 %v500
  %v577 = vunpack.c.l.b16 %v501
  %v578 = vunpack.c.h.b16 %v501
  %v579 = vunpack.c.l.b16 %v502
  %v580 = vunpack.c.h.b16 %v502
  %v581 = vunpack.c.l.b16 %v503
  %v582 = vunpack.c.h.b16 %v503
  %v583 = vunpack.c.l.b16 %v504
  %v584 = vunpack.c.h.b16 %v504
  %v585 = vunpack.c.l.b16 %v505
  %v586 = vunpack.c.h.b16 %v505
  %v587 = vunpack.c.l.b16 %v506
  %v588 = vunpack.c.h.b16 %v506
  %v589 = vunpack.c.l.b16 %v507
  %v590 = vunpack.c.h.b16 %v507
  %v591 = vunpack.c.l.b16 %v508
  %v592 = vunpack.c.h.b16 %v508
  %v593 = vunpack.c.l.b16 %v509
  %v594 = vunpack.c.h.b16 %v509
  %v595 = vunpack.c.l.b16 %v510
  %v596 = vunpack.c.h.b16 %v510
  %v597 = vunpack.c.l.b16 %v511
  %v598 = vunpack.c.h.b16 %v511
  %v599 = vunpack.c.l.b16 %v512
  %v600 = vunpack.c.h.b16 %v512
  %v601 = vunpack.c.l.b16 %v513
  %v602 = vunpack.c.h.b16 %v513
  %v603 = vunpack.c.l.b16 %v514
  %v604 = vunpack.c.h.b16 %v514
  %v605 = vunpack.c.l.b16 %v515
  %v606 = vunpack.c.h.b16 %v515
  %v607 = vunpack.c.l.b16 %v516
  %v608 = vunpack.c.h.b16 %v516
  %v609 = vunpack.c.l.b16 %v517
  %v610 = vunpack.c.h.b16 %v517
  %v611 = vunpack.c.l.b16 %v518
  %v612 = vunpack.c.h.b16 %v518
  %v613 = vunpack.c.l.b16 %v519
  %v614 = vunpack.c.h.b16 %v519
  %v615 = vunpack.c.l.b16 %v520
  %v616 = vunpack.c.h.b16 %v520
  %v617 = vpack.c.b16 %v553, %v553
  %v618 = vpack.c.b16 %v554, %v554
  %v619 = vpack.c.b16 %v555, %v555
  %v620 = vpack.c.b16 %v556, %v556
  %v621 = vpack.c.b16 %v557, %v557
  %v622 = vpack.c.b16 %v558, %v558
  %v623 = vpack.c.b16 %v559, %v559
  %v624 = vpack.c.b16 %v560, %v560
  %v625 = vpack.c.b16 %v561, %v561
  %v626 = vpack.c.b16 %v562, %v562
  %v627 = vpack.c.b16 %v563, %v563
  %v628 = vpack.c.b16 %v564, %v564
  %v629 = vpack.c.b16 %v565, %v565
  %v630 = vpack.c.b16 %v566, %v566
  %v631 = vpack.c.b16 %v567, %v567
  %v632 = vpack.c.b16 %v568, %v568
  %v633 = vpack.c.b16 %v569, %v569
  %v634 = vpack.c.b16 %v570, %v570
  %v635 = vpack.c.b16 %v571, %v571
  %v636 = vpack.c.b16 %v572, %v572
  %v637 = vpack.c.b16 %v573, %v573
  %v638 = vpack.c.b16 %v574, %v574
  %v639 = vpack.c.b16 %v575, %v575
  %v640 = vpack.c.b16 %v576, %v576
  %v641 = vpack.c.b16 %v577, %v577
  %v642 = vpack.c.b16 %v578, %v578
  %v643 = vpack.c.b16 %v579, %v579
  %v644 = vpack.c.b16 %v580, %v580
  %v645 = vpack.c.b16 %v581, %v581
  %v646 = vpack.c.b16 %v582, %v582
  %v647 = vpack.c.b16 %v583, %v583
  %v648 = vpack.c.b16 %v584, %v584
  %v649 = vpack.c.b16 %v585, %v585
  %v650 = vpack.c.b16 %v586, %v586
  %v651 = vpack.c.b16 %v587, %v587
  %v652 = vpack.c.b16 %v588, %v588
  %v653 = vpack.c.b16 %v589, %v589
  %v654 = vpack.c.b16 %v590, %v590
  %v655 = vpack.c.b16 %v591, %v591
  %v656 = vpack.c.b16 %v592, %v592
  %v657 = vpack.c.b16 %v593, %v593
  %v658 = vpack.c.b16 %v594, %v594
  %v659 = vpack.c.b16 %v595, %v595
  %v660 = vpack.c.b16 %v596, %v596
  %v661 = vpack.c.b16 %v597, %v597
  %v662 = vpack.c.b16 %v598, %v598
  %v663 = vpack.c.b16 %v599, %v599
  %v664 = vpack.c.b16 %v600, %v600
  %v665 = vpack.c.b16 %v601, %v601
  %v666 = vpack.c.b16 %v602, %v602
  %v667 = vpack.c.b16 %v603, %v603
  %v668 = vpack.c.b16 %v604, %v604
  %v669 = vpack.c.b16 %v605, %v605
  %v670 = vpack.c.b16 %v606, %v606
  %v671 = vpack.c.b16 %v607, %v607
  %v672 = vpack.c.b16 %v608, %v608
  %v673 = vpack.c.b16 %v609, %v609
  %v674 = vpack.c.b16 %v610, %v610
  %v675 = vpack.c.b16 %v611, %v611
  %v676 = vpack.c.b16 %v612, %v612
  %v677 = vpack.c.b16 %v613, %v613
  %v678 = vpack.c.b16 %v614, %v614
  %v679 = vpack.c.b16 %v615, %v615
  %v680 = vpack.c.b16 %v616, %v616
  %745 = vst [vmem:[%s5] sm:$0xf] %v617
  %746 = vst [vmem:[%s5 + $0x4] sm:$0xf] %v618
  %747 = vst [vmem:[%s5 + $0x8] sm:$0xf] %v619
  %748 = vst [vmem:[%s5 + $0xc] sm:$0xf] %v620
  %749 = vst [vmem:[%s5 + $0x10] sm:$0xf] %v621
  %750 = vst [vmem:[%s5 + $0x14] sm:$0xf] %v622
  %751 = vst [vmem:[%s5 + $0x18] sm:$0xf] %v623
  %752 = vst [vmem:[%s5 + $0x1c] sm:$0xf] %v624
  %753 = vst [vmem:[%s5 + $0x20] sm:$0xf] %v625
  %754 = vst [vmem:[%s5 + $0x24] sm:$0xf] %v626
  %755 = vst [vmem:[%s5 + $0x28] sm:$0xf] %v627
  %756 = vst [vmem:[%s5 + $0x2c] sm:$0xf] %v628
  %757 = vst [vmem:[%s5 + $0x30] sm:$0xf] %v629
  %758 = vst [vmem:[%s5 + $0x34] sm:$0xf] %v630
  %759 = vst [vmem:[%s5 + $0x38] sm:$0xf] %v631
  %760 = vst [vmem:[%s5 + $0x3c] sm:$0xf] %v632
  %761 = vst [vmem:[%s5 + $0x40] sm:$0xf] %v633
  %762 = vst [vmem:[%s5 + $0x44] sm:$0xf] %v634
  %763 = vst [vmem:[%s5 + $0x48] sm:$0xf] %v635
  %764 = vst [vmem:[%s5 + $0x4c] sm:$0xf] %v636
  %765 = vst [vmem:[%s5 + $0x50] sm:$0xf] %v637
  %766 = vst [vmem:[%s5 + $0x54] sm:$0xf] %v638
  %767 = vst [vmem:[%s5 + $0x58] sm:$0xf] %v639
  %768 = vst [vmem:[%s5 + $0x5c] sm:$0xf] %v640
  %769 = vst [vmem:[%s5 + $0x60] sm:$0xf] %v641
  %770 = vst [vmem:[%s5 + $0x64] sm:$0xf] %v642
  %771 = vst [vmem:[%s5 + $0x68] sm:$0xf] %v643
  %772 = vst [vmem:[%s5 + $0x6c] sm:$0xf] %v644
  %773 = vst [vmem:[%s5 + $0x70] sm:$0xf] %v645
  %774 = vst [vmem:[%s5 + $0x74] sm:$0xf] %v646
  %775 = vst [vmem:[%s5 + $0x78] sm:$0xf] %v647
  %776 = vst [vmem:[%s5 + $0x7c] sm:$0xf] %v648
  %777 = vst [vmem:[%s5 + $0x80] sm:$0xf] %v649
  %778 = vst [vmem:[%s5 + $0x84] sm:$0xf] %v650
  %779 = vst [vmem:[%s5 + $0x88] sm:$0xf] %v651
  %780 = vst [vmem:[%s5 + $0x8c] sm:$0xf] %v652
  %781 = vst [vmem:[%s5 + $0x90] sm:$0xf] %v653
  %782 = vst [vmem:[%s5 + $0x94] sm:$0xf] %v654
  %783 = vst [vmem:[%s5 + $0x98] sm:$0xf] %v655
  %784 = vst [vmem:[%s5 + $0x9c] sm:$0xf] %v656
  %785 = vst [vmem:[%s5 + $0xa0] sm:$0xf] %v657
  %786 = vst [vmem:[%s5 + $0xa4] sm:$0xf] %v658
  %787 = vst [vmem:[%s5 + $0xa8] sm:$0xf] %v659
  %788 = vst [vmem:[%s5 + $0xac] sm:$0xf] %v660
  %789 = vst [vmem:[%s5 + $0xb0] sm:$0xf] %v661
  %790 = vst [vmem:[%s5 + $0xb4] sm:$0xf] %v662
  %791 = vst [vmem:[%s5 + $0xb8] sm:$0xf] %v663
  %792 = vst [vmem:[%s5 + $0xbc] sm:$0xf] %v664
  %793 = vst [vmem:[%s5 + $0xc0] sm:$0xf] %v665
  %794 = vst [vmem:[%s5 + $0xc4] sm:$0xf] %v666
  %795 = vst [vmem:[%s5 + $0xc8] sm:$0xf] %v667
  %796 = vst [vmem:[%s5 + $0xcc] sm:$0xf] %v668
  %797 = vst [vmem:[%s5 + $0xd0] sm:$0xf] %v669
  %798 = vst [vmem:[%s5 + $0xd4] sm:$0xf] %v670
  %799 = vst [vmem:[%s5 + $0xd8] sm:$0xf] %v671
  %800 = vst [vmem:[%s5 + $0xdc] sm:$0xf] %v672
  %801 = vst [vmem:[%s5 + $0xe0] sm:$0xf] %v673
  %802 = vst [vmem:[%s5 + $0xe4] sm:$0xf] %v674
  %803 = vst [vmem:[%s5 + $0xe8] sm:$0xf] %v675
  %804 = vst [vmem:[%s5 + $0xec] sm:$0xf] %v676
  %805 = vst [vmem:[%s5 + $0xf0] sm:$0xf] %v677
  %806 = vst [vmem:[%s5 + $0xf4] sm:$0xf] %v678
  %807 = vst [vmem:[%s5 + $0xf8] sm:$0xf] %v679
  %808 = vst [vmem:[%s5 + $0xfc] sm:$0xf] %v680
  // Predicated region
  $region22: #{discriminator_forward.28} parent=0 // pred_check
    _
  $region23: #{discriminator_forward.28} parent=0 // pred_check_branch
    %810 = sbr.rel (0) target = $region25
  $region24: #{discriminator_forward.28} parent=0 // pred_region
    _
  $region25: #{discriminator_forward.28} parent=0 // pred_fallthru
    _
  // Predicated region
  $region26: #{discriminator_forward.28} parent=0 // pred_check
    _
  $region27: #{discriminator_forward.28} parent=0 // pred_check_branch
    %812 = sbr.rel (0) target = $region29
  $region28: #{discriminator_forward.28} parent=0 // pred_region
    _
  $region29: #{discriminator_forward.28} parent=0 // pred_fallthru
    _

// kernel: discriminator_forward.29
$region0: #{discriminator_forward.29}
  #allocation0 [shape = 'u32[]', space=smem, size = 0x4, offset = 0x4, fixed_abs, tag = 'smem constant byte address 0x4 - core index']
  #allocation1 [shape = 'u32[144,128]{1,0:T(1,128)}', space=vmem, size = 0x12000, scoped, tag = 'internal scratch']
  #allocation2 [shape = 'f32[128,128]{1,0:T(8,128)}', space=vmem, size = 0x10000, scoped, tag = 'scratch operand']
  #allocation3 [shape = 'f32[1,1]{1,0:T(1,128)S(6)}', space=smem, size = 0x200, scoped, tag = 'scoped memory for discriminator_forward.29']
  %s0 = inlined_call_operand.<no memory space> [shape: f32[1,1], index: 0, kind: input, shape index: {}]
  %s1 = inlined_call_operand.vmem [shape: bf16[128,2048], index: 1, kind: input, shape index: {}]
  %s2 = inlined_call_operand.vmem [shape: bf16[2048,128], index: 2, kind: input, shape index: {}]
  %s3 = inlined_call_operand.vmem [shape: f32[1,128], index: 3, kind: input, shape index: {}]
  %s4 = inlined_call_operand.vmem [shape: bf16[128,128], index: 4, kind: output, shape index: {}]
  %s5 = sld [smem:[#allocation0]]
  $region80: #{discriminator_forward.29} parent=0
    _
  %s7 = ssub.s32 1, %s5
  %s8 = scalar_select 0, %s7, %s5
  %9 = sst [smem:[#allocation3]] %s0
  $region1: #{discriminator_forward.29} parent=0
    #allocation4 [shape = 'u8[262144]{0}', space=vmem, size = 0x40000, scoped, tag = 'input window, operand 1']
    loop: start=0, step=1, limit=6
    $region2: #{discriminator_forward.29} parent=1 // loop_pre_header
      _
    $region3: #{discriminator_forward.29} parent=1 // loop_header
      %s11 = sphi 0, %s15
      %p12 = scmp.ge.s32.totalorder %s11, 6
      %s18 = sphi 0, %s37
      %s19 = sphi 0, %s33
      %s20 = sphi 0, %s29
      %s21 = sphi 0, %s18
      %s22 = sphi 0, %s19
      %s23 = sphi 0, %s20
      %s24 = sphi 0, %s21
      %s25 = sphi 0, %s22
      %s26 = sphi 0, %s23
      %s38 = sphi 0, %s38
      %s40 = sphi 0, %s38
      %s41 = sphi 0, %s40
      %s55 = sphi 0, %s41
      %s63 = sphi 0, %s65
      %s66 = sphi 0, %s63
      %s67 = sphi 0, %s66
      %s83 = sphi 0, %s67
      %s91 = sphi 0, %s93
      %s94 = sphi 0, %s91
      %s95 = sphi 0, %s94
      %s111 = sphi 0, %s95
      %s117 = sphi 0, %s119
      %s120 = sphi 0, %s117
      %s121 = sphi 0, %s120
      %s137 = sphi 0, %s121
      %s145 = sphi 0, %s147
      %s148 = sphi 0, %s145
      %s149 = sphi 0, %s148
      %s165 = sphi 0, %s149
    $region4: #{discriminator_forward.29} parent=1 // loop_header_branch
      %14 = sbr.rel (%p12) target = $region8
    $region5: #{discriminator_forward.29} parent=1 // loop_body
      %s16 = ssub.s32 %s11, 1
      %s17 = ssub.s32 %s11, 2
      %s27 = sadd.s32 1, %s20
      %p28 = scmp.ge.s32.totalorder %s27, 4
      %s29 = scalar_select %p28, 0, %s27
      %s30 = sadd.s32 1, %s19
      %s31 = scalar_select %p28, %s30, %s19
      %p32 = scmp.ge.s32.totalorder %s31, 1
      %s33 = scalar_select %p32, 0, %s31
      %s34 = sadd.s32 1, %s18
      %s35 = scalar_select %p32, %s34, %s18
      %p36 = scmp.ge.s32.totalorder %s35, 1
      %s37 = scalar_select %p36, 0, %s35
      %s39 = sadd.s32 %s38, 1
      %p42 = scmp.eq.s32.totalorder %s11, 3
      %p43 = scmp.ne.s32.totalorder %s38, %s40
      %p44 = scmp.eq.s32.totalorder %s11, 0
      %p45 = por %p43, %p44
      %p46 = scmp.ne.s32.totalorder %s38, %s40
      %p47 = scmp.eq.s32.totalorder %s16, 3
      %p48 = por %p46, %p47
      %p49 = scmp.ne.s32.totalorder %s40, %s41
      %p50 = scmp.eq.s32.totalorder %s16, 0
      %p51 = por %p49, %p50
      %p52 = scmp.ne.s32.totalorder %s40, %s41
      %p53 = scmp.eq.s32.totalorder %s17, 3
      %p54 = por %p52, %p53
      %p56 = scmp.ne.s32.totalorder %s41, %s55
      %p57 = scmp.eq.s32.totalorder %s17, 0
      %p58 = por %p56, %p57
      %s59 = ssub.s32 %s18, %s37
      %s60 = ssub.s32 %s20, %s29
      %s61 = sor.u32 %s59, %s60
      %p62 = scmp.eq.s32.totalorder %s61, 0
      %s64 = sadd.s32 %s63, 1
      %s65 = scalar_select %p62, %s63, %s64
      %p68 = pneg %p62
      %p69 = scmp.eq.s32.totalorder %s11, 3
      %p70 = por %p68, %p69
      %p71 = scmp.ne.s32.totalorder %s63, %s66
      %p72 = scmp.eq.s32.totalorder %s11, 0
      %p73 = por %p71, %p72
      %p74 = scmp.ne.s32.totalorder %s63, %s66
      %p75 = scmp.eq.s32.totalorder %s16, 3
      %p76 = por %p74, %p75
      %p77 = scmp.ne.s32.totalorder %s66, %s67
      %p78 = scmp.eq.s32.totalorder %s16, 0
      %p79 = por %p77, %p78
      %p80 = scmp.ne.s32.totalorder %s66, %s67
      %p81 = scmp.eq.s32.totalorder %s17, 3
      %p82 = por %p80, %p81
      %p84 = scmp.ne.s32.totalorder %s67, %s83
      %p85 = scmp.eq.s32.totalorder %s17, 0
      %p86 = por %p84, %p85
      %s87 = ssub.s32 %s20, %s29
      %s88 = ssub.s32 %s19, %s33
      %s89 = sor.u32 %s87, %s88
      %p90 = scmp.eq.s32.totalorder %s89, 0
      %s92 = sadd.s32 %s91, 1
      %s93 = scalar_select %p90, %s91, %s92
      %p96 = pneg %p90
      %p97 = scmp.eq.s32.totalorder %s11, 3
      %p98 = por %p96, %p97
      %p99 = scmp.ne.s32.totalorder %s91, %s94
      %p100 = scmp.eq.s32.totalorder %s11, 0
      %p101 = por %p99, %p100
      %p102 = scmp.ne.s32.totalorder %s91, %s94
      %p103 = scmp.eq.s32.totalorder %s16, 3
      %p104 = por %p102, %p103
      %p105 = scmp.ne.s32.totalorder %s94, %s95
      %p106 = scmp.eq.s32.totalorder %s16, 0
      %p107 = por %p105, %p106
      %p108 = scmp.ne.s32.totalorder %s94, %s95
      %p109 = scmp.eq.s32.totalorder %s17, 3
      %p110 = por %p108, %p109
      %p112 = scmp.ne.s32.totalorder %s95, %s111
      %p113 = scmp.eq.s32.totalorder %s17, 0
      %p114 = por %p112, %p113
      %s115 = ssub.s32 %s19, %s33
      %p116 = scmp.eq.s32.totalorder %s115, 0
      %s118 = sadd.s32 %s117, 1
      %s119 = scalar_select %p116, %s117, %s118
      %p122 = pneg %p116
      %p123 = scmp.eq.s32.totalorder %s11, 3
      %p124 = por %p122, %p123
      %p125 = scmp.ne.s32.totalorder %s117, %s120
      %p126 = scmp.eq.s32.totalorder %s11, 0
      %p127 = por %p125, %p126
      %p128 = scmp.ne.s32.totalorder %s117, %s120
      %p129 = scmp.eq.s32.totalorder %s16, 3
      %p130 = por %p128, %p129
      %p131 = scmp.ne.s32.totalorder %s120, %s121
      %p132 = scmp.eq.s32.totalorder %s16, 0
      %p133 = por %p131, %p132
      %p134 = scmp.ne.s32.totalorder %s120, %s121
      %p135 = scmp.eq.s32.totalorder %s17, 3
      %p136 = por %p134, %p135
      %p138 = scmp.ne.s32.totalorder %s121, %s137
      %p139 = scmp.eq.s32.totalorder %s17, 0
      %p140 = por %p138, %p139
      %s141 = ssub.s32 %s18, %s37
      %s142 = ssub.s32 %s19, %s33
      %s143 = sor.u32 %s141, %s142
      %p144 = scmp.eq.s32.totalorder %s143, 0
      %s146 = sadd.s32 %s145, 1
      %s147 = scalar_select %p144, %s145, %s146
      %p150 = pneg %p144
      %p151 = scmp.eq.s32.totalorder %s11, 3
      %p152 = por %p150, %p151
      %p153 = scmp.ne.s32.totalorder %s145, %s148
      %p154 = scmp.eq.s32.totalorder %s11, 0
      %p155 = por %p153, %p154
      %p156 = scmp.ne.s32.totalorder %s145, %s148
      %p157 = scmp.eq.s32.totalorder %s16, 3
      %p158 = por %p156, %p157
      %p159 = scmp.ne.s32.totalorder %s148, %s149
      %p160 = scmp.eq.s32.totalorder %s16, 0
      %p161 = por %p159, %p160
      %p162 = scmp.ne.s32.totalorder %s148, %s149
      %p163 = scmp.eq.s32.totalorder %s17, 3
      %p164 = por %p162, %p163
      %p166 = scmp.ne.s32.totalorder %s149, %s165
      %p167 = scmp.eq.s32.totalorder %s17, 0
      %p168 = por %p166, %p167
      %p169 = scmp.le.s32.totalorder 1, %s11
      %p170 = scmp.lt.s32.totalorder %s11, 5
      %p171 = pnand %p169, %p170
      %p172 = pneg %p171
      // Predicated region
      $region9: #{discriminator_forward.29} parent=5 // pred_check
        _
      $region10: #{discriminator_forward.29} parent=5 // pred_check_branch
        %174 = sbr.rel (%p171) target = $region12
      $region11: #{discriminator_forward.29} parent=5 // pred_region
        %s175 = ssub.s32 %s11, 1
        // Predicated region
        $region13: #{discriminator_forward.29} parent=11 // pred_check
          %p176 = pneg %p51
        $region14: #{discriminator_forward.29} parent=11 // pred_check_branch
          %178 = sbr.rel (%p176) target = $region16
        $region15: #{discriminator_forward.29} parent=11 // pred_region
          _
        $region16: #{discriminator_forward.29} parent=11 // pred_fallthru
          _
        // Predicated region
        $region17: #{discriminator_forward.29} parent=11 // pred_check
          %p179 = pneg %p133
        $region18: #{discriminator_forward.29} parent=11 // pred_check_branch
          %181 = sbr.rel (%p179) target = $region20
        $region19: #{discriminator_forward.29} parent=11 // pred_region
          %p182 = scmp.lt.s32.totalorder %s22, 0
          %s183 = scalar_select %p182, %s22, 0
          %s184 = scalar_lea.vmem %s3, %s183
        $region20: #{discriminator_forward.29} parent=11 // pred_fallthru
          _
      $region12: #{discriminator_forward.29} parent=5 // pred_fallthru
        _
      %p185 = scmp.lt.s32.totalorder %s11, 4
      // Predicated region
      $region21: #{discriminator_forward.29} parent=5 // pred_check
        %p186 = pneg %p185
      $region22: #{discriminator_forward.29} parent=5 // pred_check_branch
        %188 = sbr.rel (%p186) target = $region24
      $region23: #{discriminator_forward.29} parent=5 // pred_region
        // Predicated region
        $region25: #{discriminator_forward.29} parent=23 // pred_check
          %p189 = pneg %p73
        $region26: #{discriminator_forward.29} parent=23 // pred_check_branch
          %191 = sbr.rel (%p189) target = $region28
        $region27: #{discriminator_forward.29} parent=23 // pred_region
          %s192 = sand.u32 %s63, 1
          %s193 = sand.u32 %s63, 1
          %s194 = smul.addr %s193, 256
          %s195 = scalar_lea.vmem [#allocation4], %s194
          %s196 = smul.u32 16, %s18
          %s197 = smul.u32 4, %s20
          %s198 = smul.addr %s196, 16
          %s199 = sadd.s32 %s197, %s198
          %s200 = smul.addr %s199, 4
          %s201 = scalar_lea.vmem %s1, %s200
          // Predicated region
          $region29: #{discriminator_forward.29} parent=27 // pred_check
            _
          $region30: #{discriminator_forward.29} parent=27 // pred_check_branch
            %203 = sbr.rel (0) target = $region32
          $region31: #{discriminator_forward.29} parent=27 // pred_region
            // Predicated region
            $region33: #{discriminator_forward.29} parent=31 // pred_check
              _
            $region34: #{discriminator_forward.29} parent=31 // pred_check_branch
              %205 = sbr.rel (0) target = $region36
            $region35: #{discriminator_forward.29} parent=31 // pred_region
              loop: start=0, step=1, limit=1
              $region37: #{discriminator_forward.29} parent=35 // loop_pre_header
                _
              $region38: #{discriminator_forward.29} parent=35 // loop_header
                %s207 = sphi 0, %s211
                %p208 = scmp.ge.s32.totalorder %s207, 1
                %s212 = sphi %s201, %s201
                %s213 = sphi %s195, %s195
              $region39: #{discriminator_forward.29} parent=35 // loop_header_branch
                %210 = sbr.rel (%p208) target = $region43
              $region40: #{discriminator_forward.29} parent=35 // loop_body
                %v214 = vld [vmem:[%s212] sm:$0xff]
                %215 = vst [vmem:[%s213] sm:$0xff] %v214
                %v216 = vld [vmem:[%s212 + $0x8] sm:$0xff]
                %217 = vst [vmem:[%s213 + $0x8] sm:$0xff] %v216
                %v218 = vld [vmem:[%s212 + $0x40] sm:$0xff]
                %219 = vst [vmem:[%s213 + $0x10] sm:$0xff] %v218
                %v220 = vld [vmem:[%s212 + $0x48] sm:$0xff]
                %221 = vst [vmem:[%s213 + $0x18] sm:$0xff] %v220
                %v222 = vld [vmem:[%s212 + $0x80] sm:$0xff]
                %223 = vst [vmem:[%s213 + $0x20] sm:$0xff] %v222
                %v224 = vld [vmem:[%s212 + $0x88] sm:$0xff]
                %225 = vst [vmem:[%s213 + $0x28] sm:$0xff] %v224
                %v226 = vld [vmem:[%s212 + $0xc0] sm:$0xff]
                %227 = vst [vmem:[%s213 + $0x30] sm:$0xff] %v226
                %v228 = vld [vmem:[%s212 + $0xc8] sm:$0xff]
                %229 = vst [vmem:[%s213 + $0x38] sm:$0xff] %v228
                %v230 = vld [vmem:[%s212 + $0x100] sm:$0xff]
                %231 = vst [vmem:[%s213 + $0x40] sm:$0xff] %v230
                %v232 = vld [vmem:[%s212 + $0x108] sm:$0xff]
                %233 = vst [vmem:[%s213 + $0x48] sm:$0xff] %v232
                %v234 = vld [vmem:[%s212 + $0x140] sm:$0xff]
                %235 = vst [vmem:[%s213 + $0x50] sm:$0xff] %v234
                %v236 = vld [vmem:[%s212 + $0x148] sm:$0xff]
                %237 = vst [vmem:[%s213 + $0x58] sm:$0xff] %v236
                %v238 = vld [vmem:[%s212 + $0x180] sm:$0xff]
                %239 = vst [vmem:[%s213 + $0x60] sm:$0xff] %v238
                %v240 = vld [vmem:[%s212 + $0x188] sm:$0xff]
                %241 = vst [vmem:[%s213 + $0x68] sm:$0xff] %v240
                %v242 = vld [vmem:[%s212 + $0x1c0] sm:$0xff]
                %243 = vst [vmem:[%s213 + $0x70] sm:$0xff] %v242
                %v244 = vld [vmem:[%s212 + $0x1c8] sm:$0xff]
                %245 = vst [vmem:[%s213 + $0x78] sm:$0xff] %v244
                %v246 = vld [vmem:[%s212 + $0x200] sm:$0xff]
                %247 = vst [vmem:[%s213 + $0x80] sm:$0xff] %v246
                %v248 = vld [vmem:[%s212 + $0x208] sm:$0xff]
                %249 = vst [vmem:[%s213 + $0x88] sm:$0xff] %v248
                %v250 = vld [vmem:[%s212 + $0x240] sm:$0xff]
                %251 = vst [vmem:[%s213 + $0x90] sm:$0xff] %v250
                %v252 = vld [vmem:[%s212 + $0x248] sm:$0xff]
                %253 = vst [vmem:[%s213 + $0x98] sm:$0xff] %v252
                %v254 = vld [vmem:[%s212 + $0x280] sm:$0xff]
                %255 = vst [vmem:[%s213 + $0xa0] sm:$0xff] %v254
                %v256 = vld [vmem:[%s212 + $0x288] sm:$0xff]
                %257 = vst [vmem:[%s213 + $0xa8] sm:$0xff] %v256
                %v258 = vld [vmem:[%s212 + $0x2c0] sm:$0xff]
                %259 = vst [vmem:[%s213 + $0xb0] sm:$0xff] %v258
                %v260 = vld [vmem:[%s212 + $0x2c8] sm:$0xff]
                %261 = vst [vmem:[%s213 + $0xb8] sm:$0xff] %v260
                %v262 = vld [vmem:[%s212 + $0x300] sm:$0xff]
                %263 = vst [vmem:[%s213 + $0xc0] sm:$0xff] %v262
                %v264 = vld [vmem:[%s212 + $0x308] sm:$0xff]
                %265 = vst [vmem:[%s213 + $0xc8] sm:$0xff] %v264
                %v266 = vld [vmem:[%s212 + $0x340] sm:$0xff]
                %267 = vst [vmem:[%s213 + $0xd0] sm:$0xff] %v266
                %v268 = vld [vmem:[%s212 + $0x348] sm:$0xff]
                %269 = vst [vmem:[%s213 + $0xd8] sm:$0xff] %v268
                %v270 = vld [vmem:[%s212 + $0x380] sm:$0xff]
                %271 = vst [vmem:[%s213 + $0xe0] sm:$0xff] %v270
                %v272 = vld [vmem:[%s212 + $0x388] sm:$0xff]
                %273 = vst [vmem:[%s213 + $0xe8] sm:$0xff] %v272
                %v274 = vld [vmem:[%s212 + $0x3c0] sm:$0xff]
                %275 = vst [vmem:[%s213 + $0xf0] sm:$0xff] %v274
                %v276 = vld [vmem:[%s212 + $0x3c8] sm:$0xff]
                %277 = vst [vmem:[%s213 + $0xf8] sm:$0xff] %v276
              $region41: #{discriminator_forward.29} parent=35 // loop_footer
                %s211 = sadd.s32 1, %s207
              $region42: #{discriminator_forward.29} parent=35 // loop_footer_branch
                %206 = sbr.rel target = $region38
              $region43: #{discriminator_forward.29} parent=35 // loop_exit
                _
            $region36: #{discriminator_forward.29} parent=31 // pred_fallthru
              _
            // Predicated region
            $region44: #{discriminator_forward.29} parent=31 // pred_check
              _
            $region45: #{discriminator_forward.29} parent=31 // pred_check_branch
              %279 = sbr.rel target = $region47
            $region46: #{discriminator_forward.29} parent=31 // pred_region
              _
            $region47: #{discriminator_forward.29} parent=31 // pred_fallthru
              _
          $region32: #{discriminator_forward.29} parent=27 // pred_fallthru
            _
          %280 = vnop
        $region28: #{discriminator_forward.29} parent=23 // pred_fallthru
          _
        // Predicated region
        $region48: #{discriminator_forward.29} parent=23 // pred_check
          %p281 = pneg %p101
        $region49: #{discriminator_forward.29} parent=23 // pred_check_branch
          %283 = sbr.rel (%p281) target = $region51
        $region50: #{discriminator_forward.29} parent=23 // pred_region
          %s284 = smul.u32 64, %s20
          %p285 = scmp.lt.s32.totalorder %s284, 255
          %s286 = scalar_select %p285, %s284, 255
          %p287 = scmp.lt.s32.totalorder %s19, 0
          %s288 = scalar_select %p287, %s19, 0
          %s289 = sadd.s32 %s288, %s286
          %s290 = smul.addr %s289, 4
          %s291 = scalar_lea.vmem %s2, %s290
          %s292 = smul.u32 64, %s20
        $region51: #{discriminator_forward.29} parent=23 // pred_fallthru
          _
      $region24: #{discriminator_forward.29} parent=5 // pred_fallthru
        _
      %p293 = scmp.le.s32.totalorder 1, %s11
      %p294 = scmp.lt.s32.totalorder %s11, 5
      %p295 = pnand %p293, %p294
      %p296 = pneg %p295
      // Predicated region
      $region52: #{discriminator_forward.29} parent=5 // pred_check
        _
      $region53: #{discriminator_forward.29} parent=5 // pred_check_branch
        %298 = sbr.rel (%p295) target = $region55
      $region54: #{discriminator_forward.29} parent=5 // pred_region
        %s299 = ssub.s32 %s11, 1
        %s300 = sand.u32 %s66, 1
        %s301 = sand.u32 %s66, 1
        %s302 = smul.addr %s301, 256
        %s303 = scalar_lea.vmem [#allocation4], %s302
        // Predicated region
        $region56: #{discriminator_forward.29} parent=54 // pred_check
          %p304 = pneg %p79
        $region57: #{discriminator_forward.29} parent=54 // pred_check_branch
          %306 = sbr.rel (%p304) target = $region59
        $region58: #{discriminator_forward.29} parent=54 // pred_region
          _
        $region59: #{discriminator_forward.29} parent=54 // pred_fallthru
          _
        %p307 = pneg %p51
        %p308 = pneg %p48
        %s309 = sand.u32 %s66, 1
        %s310 = sand.u32 %s66, 1
        %s311 = smul.addr %s310, 256
        %s312 = scalar_lea.vmem [#allocation4], %s311
        %p313 = pneg %p79
        %p314 = pneg %p76
        %s315 = smul.u32 64, %s23
        %p316 = scmp.lt.s32.totalorder %s315, 255
        %s317 = scalar_select %p316, %s315, 255
        %p318 = scmp.lt.s32.totalorder %s22, 0
        %s319 = scalar_select %p318, %s22, 0
        %s320 = sadd.s32 %s319, %s317
        %s321 = smul.addr %s320, 4
        %s322 = scalar_lea.vmem %s2, %s321
        %p323 = pneg %p107
        %p324 = pneg %p104
        %p325 = scmp.lt.s32.totalorder %s22, 0
        %s326 = scalar_select %p325, %s22, 0
        %s327 = scalar_lea.vmem %s3, %s326
        %p328 = pneg %p133
        %p329 = pneg %p130
        %p330 = pneg %p161
        %p331 = pneg %p158
        %s332 = smul.u32 16, %s21
        %p333 = scmp.lt.s32.totalorder %s332, 15
        %s334 = scalar_select %p333, %s332, 15
        %p335 = scmp.lt.s32.totalorder %s22, 0
        %s336 = scalar_select %p335, %s22, 0
        %s337 = sadd.s32 %s336, %s334
        %s338 = smul.addr %s337, 4
        %s339 = scalar_lea.vmem %s4, %s338
        %s340 = smul.u32 16, %s21
        %s341 = smul.u32 4, %s23
        %s342 = smul.u32 64, %s23
        %p343 = scmp.lt.s32.totalorder %s342, 255
        %s344 = scalar_select %p343, %s342, 255
        %p345 = scmp.lt.s32.totalorder %s22, 0
        %s346 = scalar_select %p345, %s22, 0
        %s347 = sadd.s32 %s346, %s344
        %s348 = smul.addr %s347, 4
        %s349 = scalar_lea.vmem %s2, %s348
        %s350 = smul.u32 64, %s23
        %p351 = scmp.lt.s32.totalorder %s22, 0
        %s352 = scalar_select %p351, %s22, 0
        %s353 = scalar_lea.vmem %s3, %s352
        %s354 = smul.u32 16, %s21
        %p355 = scmp.lt.s32.totalorder %s354, 15
        %s356 = scalar_select %p355, %s354, 15
        %p357 = scmp.lt.s32.totalorder %s22, 0
        %s358 = scalar_select %p357, %s22, 0
        %s359 = sadd.s32 %s358, %s356
        %s360 = smul.addr %s359, 4
        %s361 = scalar_lea.vmem %s4, %s360
        %s362 = smul.u32 16, %s21
        %p364 = scmp.eq.s32.totalorder %s23, 0
        // Predicated region
        $region60: #{discriminator_forward.29} parent=54 // pred_check
          %p365 = pneg %p364
        $region61: #{discriminator_forward.29} parent=54 // pred_check_branch
          %367 = sbr.rel (%p365) target = $region63
        $region62: #{discriminator_forward.29} parent=54 // pred_region
          %368 = vst [vmem:[#allocation2] sm:$0xff] 0.0
          %369 = vst [vmem:[#allocation2 + $0x8] sm:$0xff] 0.0
          %370 = vst [vmem:[#allocation2 + $0x10] sm:$0xff] 0.0
          %371 = vst [vmem:[#allocation2 + $0x18] sm:$0xff] 0.0
          %372 = vst [vmem:[#allocation2 + $0x20] sm:$0xff] 0.0
          %373 = vst [vmem:[#allocation2 + $0x28] sm:$0xff] 0.0
          %374 = vst [vmem:[#allocation2 + $0x30] sm:$0xff] 0.0
          %375 = vst [vmem:[#allocation2 + $0x38] sm:$0xff] 0.0
          %376 = vst [vmem:[#allocation2 + $0x40] sm:$0xff] 0.0
          %377 = vst [vmem:[#allocation2 + $0x48] sm:$0xff] 0.0
          %378 = vst [vmem:[#allocation2 + $0x50] sm:$0xff] 0.0
          %379 = vst [vmem:[#allocation2 + $0x58] sm:$0xff] 0.0
          %380 = vst [vmem:[#allocation2 + $0x60] sm:$0xff] 0.0
          %381 = vst [vmem:[#allocation2 + $0x68] sm:$0xff] 0.0
          %382 = vst [vmem:[#allocation2 + $0x70] sm:$0xff] 0.0
          %383 = vst [vmem:[#allocation2 + $0x78] sm:$0xff] 0.0
        $region63: #{discriminator_forward.29} parent=54 // pred_fallthru
          _
        %v384 = vld [vmem:[#allocation2] sm:$0xff]
        %v385 = vld [vmem:[#allocation2 + $0x8] sm:$0xff]
        %v386 = vld [vmem:[#allocation2 + $0x10] sm:$0xff]
        %v387 = vld [vmem:[#allocation2 + $0x18] sm:$0xff]
        %v388 = vld [vmem:[#allocation2 + $0x20] sm:$0xff]
        %v389 = vld [vmem:[#allocation2 + $0x28] sm:$0xff]
        %v390 = vld [vmem:[#allocation2 + $0x30] sm:$0xff]
        %v391 = vld [vmem:[#allocation2 + $0x38] sm:$0xff]
        %v392 = vld [vmem:[#allocation2 + $0x40] sm:$0xff]
        %v393 = vld [vmem:[#allocation2 + $0x48] sm:$0xff]
        %v394 = vld [vmem:[#allocation2 + $0x50] sm:$0xff]
        %v395 = vld [vmem:[#allocation2 + $0x58] sm:$0xff]
        %v396 = vld [vmem:[#allocation2 + $0x60] sm:$0xff]
        %v397 = vld [vmem:[#allocation2 + $0x68] sm:$0xff]
        %v398 = vld [vmem:[#allocation2 + $0x70] sm:$0xff]
        %v399 = vld [vmem:[#allocation2 + $0x78] sm:$0xff]
        %v400 = vld [vmem:[%s303] sm:$0xff]
        %v401 = vld [vmem:[%s303 + $0x8] sm:$0xff]
        %v402 = vld [vmem:[%s303 + $0x10] sm:$0xff]
        %v403 = vld [vmem:[%s303 + $0x18] sm:$0xff]
        %v404 = vld [vmem:[%s303 + $0x20] sm:$0xff]
        %v405 = vld [vmem:[%s303 + $0x28] sm:$0xff]
        %v406 = vld [vmem:[%s303 + $0x30] sm:$0xff]
        %v407 = vld [vmem:[%s303 + $0x38] sm:$0xff]
        %v408 = vld [vmem:[%s303 + $0x40] sm:$0xff]
        %v409 = vld [vmem:[%s303 + $0x48] sm:$0xff]
        %v410 = vld [vmem:[%s303 + $0x50] sm:$0xff]
        %v411 = vld [vmem:[%s303 + $0x58] sm:$0xff]
        %v412 = vld [vmem:[%s303 + $0x60] sm:$0xff]
        %v413 = vld [vmem:[%s303 + $0x68] sm:$0xff]
        %v414 = vld [vmem:[%s303 + $0x70] sm:$0xff]
        %v415 = vld [vmem:[%s303 + $0x78] sm:$0xff]
        %v416 = vld [vmem:[%s303 + $0x80] sm:$0xff]
        %v417 = vld [vmem:[%s303 + $0x88] sm:$0xff]
        %v418 = vld [vmem:[%s303 + $0x90] sm:$0xff]
        %v419 = vld [vmem:[%s303 + $0x98] sm:$0xff]
        %v420 = vld [vmem:[%s303 + $0xa0] sm:$0xff]
        %v421 = vld [vmem:[%s303 + $0xa8] sm:$0xff]
        %v422 = vld [vmem:[%s303 + $0xb0] sm:$0xff]
        %v423 = vld [vmem:[%s303 + $0xb8] sm:$0xff]
        %v424 = vld [vmem:[%s303 + $0xc0] sm:$0xff]
        %v425 = vld [vmem:[%s303 + $0xc8] sm:$0xff]
        %v426 = vld [vmem:[%s303 + $0xd0] sm:$0xff]
        %v427 = vld [vmem:[%s303 + $0xd8] sm:$0xff]
        %v428 = vld [vmem:[%s303 + $0xe0] sm:$0xff]
        %v429 = vld [vmem:[%s303 + $0xe8] sm:$0xff]
        %v430 = vld [vmem:[%s303 + $0xf0] sm:$0xff]
        %v431 = vld [vmem:[%s303 + $0xf8] sm:$0xff]
        %v432 = vld [vmem:[%s349] sm:$0xf]
        %v433 = vld [vmem:[%s349 + $0x4] sm:$0xf]
        %v434 = vld [vmem:[%s349 + $0x8] sm:$0xf]
        %v435 = vld [vmem:[%s349 + $0xc] sm:$0xf]
        %v436 = vld [vmem:[%s349 + $0x10] sm:$0xf]
        %v437 = vld [vmem:[%s349 + $0x14] sm:$0xf]
        %v438 = vld [vmem:[%s349 + $0x18] sm:$0xf]
        %v439 = vld [vmem:[%s349 + $0x1c] sm:$0xf]
        %v440 = vld [vmem:[%s349 + $0x20] sm:$0xf]
        %v441 = vld [vmem:[%s349 + $0x24] sm:$0xf]
        %v442 = vld [vmem:[%s349 + $0x28] sm:$0xf]
        %v443 = vld [vmem:[%s349 + $0x2c] sm:$0xf]
        %v444 = vld [vmem:[%s349 + $0x30] sm:$0xf]
        %v445 = vld [vmem:[%s349 + $0x34] sm:$0xf]
        %v446 = vld [vmem:[%s349 + $0x38] sm:$0xf]
        %v447 = vld [vmem:[%s349 + $0x3c] sm:$0xf]
        %v448 = vld [vmem:[%s349 + $0x40] sm:$0xf]
        %v449 = vld [vmem:[%s349 + $0x44] sm:$0xf]
        %v450 = vld [vmem:[%s349 + $0x48] sm:$0xf]
        %v451 = vld [vmem:[%s349 + $0x4c] sm:$0xf]
        %v452 = vld [vmem:[%s349 + $0x50] sm:$0xf]
        %v453 = vld [vmem:[%s349 + $0x54] sm:$0xf]
        %v454 = vld [vmem:[%s349 + $0x58] sm:$0xf]
        %v455 = vld [vmem:[%s349 + $0x5c] sm:$0xf]
        %v456 = vld [vmem:[%s349 + $0x60] sm:$0xf]
        %v457 = vld [vmem:[%s349 + $0x64] sm:$0xf]
        %v458 = vld [vmem:[%s349 + $0x68] sm:$0xf]
        %v459 = vld [vmem:[%s349 + $0x6c] sm:$0xf]
        %v460 = vld [vmem:[%s349 + $0x70] sm:$0xf]
        %v461 = vld [vmem:[%s349 + $0x74] sm:$0xf]
        %v462 = vld [vmem:[%s349 + $0x78] sm:$0xf]
        %v463 = vld [vmem:[%s349 + $0x7c] sm:$0xf]
        %v464 = vld [vmem:[%s349 + $0x80] sm:$0xf]
        %v465 = vld [vmem:[%s349 + $0x84] sm:$0xf]
        %v466 = vld [vmem:[%s349 + $0x88] sm:$0xf]
        %v467 = vld [vmem:[%s349 + $0x8c] sm:$0xf]
        %v468 = vld [vmem:[%s349 + $0x90] sm:$0xf]
        %v469 = vld [vmem:[%s349 + $0x94] sm:$0xf]
        %v470 = vld [vmem:[%s349 + $0x98] sm:$0xf]
        %v471 = vld [vmem:[%s349 + $0x9c] sm:$0xf]
        %v472 = vld [vmem:[%s349 + $0xa0] sm:$0xf]
        %v473 = vld [vmem:[%s349 + $0xa4] sm:$0xf]
        %v474 = vld [vmem:[%s349 + $0xa8] sm:$0xf]
        %v475 = vld [vmem:[%s349 + $0xac] sm:$0xf]
        %v476 = vld [vmem:[%s349 + $0xb0] sm:$0xf]
        %v477 = vld [vmem:[%s349 + $0xb4] sm:$0xf]
        %v478 = vld [vmem:[%s349 + $0xb8] sm:$0xf]
        %v479 = vld [vmem:[%s349 + $0xbc] sm:$0xf]
        %v480 = vld [vmem:[%s349 + $0xc0] sm:$0xf]
        %v481 = vld [vmem:[%s349 + $0xc4] sm:$0xf]
        %v482 = vld [vmem:[%s349 + $0xc8] sm:$0xf]
        %v483 = vld [vmem:[%s349 + $0xcc] sm:$0xf]
        %v484 = vld [vmem:[%s349 + $0xd0] sm:$0xf]
        %v485 = vld [vmem:[%s349 + $0xd4] sm:$0xf]
        %v486 = vld [vmem:[%s349 + $0xd8] sm:$0xf]
        %v487 = vld [vmem:[%s349 + $0xdc] sm:$0xf]
        %v488 = vld [vmem:[%s349 + $0xe0] sm:$0xf]
        %v489 = vld [vmem:[%s349 + $0xe4] sm:$0xf]
        %v490 = vld [vmem:[%s349 + $0xe8] sm:$0xf]
        %v491 = vld [vmem:[%s349 + $0xec] sm:$0xf]
        %v492 = vld [vmem:[%s349 + $0xf0] sm:$0xf]
        %v493 = vld [vmem:[%s349 + $0xf4] sm:$0xf]
        %v494 = vld [vmem:[%s349 + $0xf8] sm:$0xf]
        %v495 = vld [vmem:[%s349 + $0xfc] sm:$0xf]
        %v528 = vunpack.c.l.b16 %v400
        %v529 = vunpack.c.h.b16 %v400
        %v530 = vunpack.c.l.b16 %v401
        %v531 = vunpack.c.h.b16 %v401
        %v532 = vunpack.c.l.b16 %v402
        %v533 = vunpack.c.h.b16 %v402
        %v534 = vunpack.c.l.b16 %v403
        %v535 = vunpack.c.h.b16 %v403
        %v536 = vunpack.c.l.b16 %v404
        %v537 = vunpack.c.h.b16 %v404
        %v538 = vunpack.c.l.b16 %v405
        %v539 = vunpack.c.h.b16 %v405
        %v540 = vunpack.c.l.b16 %v406
        %v541 = vunpack.c.h.b16 %v406
        %v542 = vunpack.c.l.b16 %v407
        %v543 = vunpack.c.h.b16 %v407
        %v544 = vunpack.c.l.b16 %v408
        %v545 = vunpack.c.h.b16 %v408
        %v546 = vunpack.c.l.b16 %v409
        %v547 = vunpack.c.h.b16 %v409
        %v548 = vunpack.c.l.b16 %v410
        %v549 = vunpack.c.h.b16 %v410
        %v550 = vunpack.c.l.b16 %v411
        %v551 = vunpack.c.h.b16 %v411
        %v552 = vunpack.c.l.b16 %v412
        %v553 = vunpack.c.h.b16 %v412
        %v554 = vunpack.c.l.b16 %v413
        %v555 = vunpack.c.h.b16 %v413
        %v556 = vunpack.c.l.b16 %v414
        %v557 = vunpack.c.h.b16 %v414
        %v558 = vunpack.c.l.b16 %v415
        %v559 = vunpack.c.h.b16 %v415
        %v560 = vunpack.c.l.b16 %v416
        %v561 = vunpack.c.h.b16 %v416
        %v562 = vunpack.c.l.b16 %v417
        %v563 = vunpack.c.h.b16 %v417
        %v564 = vunpack.c.l.b16 %v418
        %v565 = vunpack.c.h.b16 %v418
        %v566 = vunpack.c.l.b16 %v419
        %v567 = vunpack.c.h.b16 %v419
        %v568 = vunpack.c.l.b16 %v420
        %v569 = vunpack.c.h.b16 %v420
        %v570 = vunpack.c.l.b16 %v421
        %v571 = vunpack.c.h.b16 %v421
        %v572 = vunpack.c.l.b16 %v422
        %v573 = vunpack.c.h.b16 %v422
        %v574 = vunpack.c.l.b16 %v423
        %v575 = vunpack.c.h.b16 %v423
        %v576 = vunpack.c.l.b16 %v424
        %v577 = vunpack.c.h.b16 %v424
        %v578 = vunpack.c.l.b16 %v425
        %v579 = vunpack.c.h.b16 %v425
        %v580 = vunpack.c.l.b16 %v426
        %v581 = vunpack.c.h.b16 %v426
        %v582 = vunpack.c.l.b16 %v427
        %v583 = vunpack.c.h.b16 %v427
        %v584 = vunpack.c.l.b16 %v428
        %v585 = vunpack.c.h.b16 %v428
        %v586 = vunpack.c.l.b16 %v429
        %v587 = vunpack.c.h.b16 %v429
        %v588 = vunpack.c.l.b16 %v430
        %v589 = vunpack.c.h.b16 %v430
        %v590 = vunpack.c.l.b16 %v431
        %v591 = vunpack.c.h.b16 %v431
        %v592 = vpack.c.b16 %v532, %v528
        %v593 = vpack.c.b16 %v533, %v529
        %v594 = vpack.c.b16 %v534, %v530
        %v595 = vpack.c.b16 %v535, %v531
        %v596 = vpack.c.b16 %v540, %v536
        %v597 = vpack.c.b16 %v541, %v537
        %v598 = vpack.c.b16 %v542, %v538
        %v599 = vpack.c.b16 %v543, %v539
        %v600 = vpack.c.b16 %v548, %v544
        %v601 = vpack.c.b16 %v549, %v545
        %v602 = vpack.c.b16 %v550, %v546
        %v603 = vpack.c.b16 %v551, %v547
        %v604 = vpack.c.b16 %v556, %v552
        %v605 = vpack.c.b16 %v557, %v553
        %v606 = vpack.c.b16 %v558, %v554
        %v607 = vpack.c.b16 %v559, %v555
        %v608 = vpack.c.b16 %v564, %v560
        %v609 = vpack.c.b16 %v565, %v561
        %v610 = vpack.c.b16 %v566, %v562
        %v611 = vpack.c.b16 %v567, %v563
        %v612 = vpack.c.b16 %v572, %v568
        %v613 = vpack.c.b16 %v573, %v569
        %v614 = vpack.c.b16 %v574, %v570
        %v615 = vpack.c.b16 %v575, %v571
        %v616 = vpack.c.b16 %v580, %v576
        %v617 = vpack.c.b16 %v581, %v577
        %v618 = vpack.c.b16 %v582, %v578
        %v619 = vpack.c.b16 %v583, %v579
        %v620 = vpack.c.b16 %v588, %v584
        %v621 = vpack.c.b16 %v589, %v585
        %v622 = vpack.c.b16 %v590, %v586
        %v623 = vpack.c.b16 %v591, %v587
        %v720 = vunpack.c.l.b16 %v432
        %v721 = vunpack.c.l.b16 %v433
        %v722 = vunpack.c.l.b16 %v434
        %v723 = vunpack.c.l.b16 %v435
        %v724 = vunpack.c.l.b16 %v436
        %v725 = vunpack.c.l.b16 %v437
        %v726 = vunpack.c.l.b16 %v438
        %v727 = vunpack.c.l.b16 %v439
        %v728 = vunpack.c.l.b16 %v440
        %v729 = vunpack.c.l.b16 %v441
        %v730 = vunpack.c.l.b16 %v442
        %v731 = vunpack.c.l.b16 %v443
        %v732 = vunpack.c.l.b16 %v444
        %v733 = vunpack.c.l.b16 %v445
        %v734 = vunpack.c.l.b16 %v446
        %v735 = vunpack.c.l.b16 %v447
        %v736 = vunpack.c.l.b16 %v448
        %v737 = vunpack.c.l.b16 %v449
        %v738 = vunpack.c.l.b16 %v450
        %v739 = vunpack.c.l.b16 %v451
        %v740 = vunpack.c.l.b16 %v452
        %v741 = vunpack.c.l.b16 %v453
        %v742 = vunpack.c.l.b16 %v454
        %v743 = vunpack.c.l.b16 %v455
        %v744 = vunpack.c.l.b16 %v456
        %v745 = vunpack.c.l.b16 %v457
        %v746 = vunpack.c.l.b16 %v458
        %v747 = vunpack.c.l.b16 %v459
        %v748 = vunpack.c.l.b16 %v460
        %v749 = vunpack.c.l.b16 %v461
        %v750 = vunpack.c.l.b16 %v462
        %v751 = vunpack.c.l.b16 %v463
        %v752 = vunpack.c.l.b16 %v464
        %v753 = vunpack.c.l.b16 %v465
        %v754 = vunpack.c.l.b16 %v466
        %v755 = vunpack.c.l.b16 %v467
        %v756 = vunpack.c.l.b16 %v468
        %v757 = vunpack.c.l.b16 %v469
        %v758 = vunpack.c.l.b16 %v470
        %v759 = vunpack.c.l.b16 %v471
        %v760 = vunpack.c.l.b16 %v472
        %v761 = vunpack.c.l.b16 %v473
        %v762 = vunpack.c.l.b16 %v474
        %v763 = vunpack.c.l.b16 %v475
        %v764 = vunpack.c.l.b16 %v476
        %v765 = vunpack.c.l.b16 %v477
        %v766 = vunpack.c.l.b16 %v478
        %v767 = vunpack.c.l.b16 %v479
        %v768 = vunpack.c.l.b16 %v480
        %v769 = vunpack.c.l.b16 %v481
        %v770 = vunpack.c.l.b16 %v482
        %v771 = vunpack.c.l.b16 %v483
        %v772 = vunpack.c.l.b16 %v484
        %v773 = vunpack.c.l.b16 %v485
        %v774 = vunpack.c.l.b16 %v486
        %v775 = vunpack.c.l.b16 %v487
        %v776 = vunpack.c.l.b16 %v488
        %v777 = vunpack.c.l.b16 %v489
        %v778 = vunpack.c.l.b16 %v490
        %v779 = vunpack.c.l.b16 %v491
        %v780 = vunpack.c.l.b16 %v492
        %v781 = vunpack.c.l.b16 %v493
        %v782 = vunpack.c.l.b16 %v494
        %v783 = vunpack.c.l.b16 %v495
        %v784 = vpack.c.b16 %v721, %v720
        %v785 = vpack.c.b16 %v723, %v722
        %v786 = vpack.c.b16 %v725, %v724
        %v787 = vpack.c.b16 %v727, %v726
        %v788 = vpack.c.b16 %v729, %v728
        %v789 = vpack.c.b16 %v731, %v730
        %v790 = vpack.c.b16 %v733, %v732
        %v791 = vpack.c.b16 %v735, %v734
        %v792 = vpack.c.b16 %v737, %v736
        %v793 = vpack.c.b16 %v739, %v738
        %v794 = vpack.c.b16 %v741, %v740
        %v795 = vpack.c.b16 %v743, %v742
        %v796 = vpack.c.b16 %v745, %v744
        %v797 = vpack.c.b16 %v747, %v746
        %v798 = vpack.c.b16 %v749, %v748
        %v799 = vpack.c.b16 %v751, %v750
        %v800 = vpack.c.b16 %v753, %v752
        %v801 = vpack.c.b16 %v755, %v754
        %v802 = vpack.c.b16 %v757, %v756
        %v803 = vpack.c.b16 %v759, %v758
        %v804 = vpack.c.b16 %v761, %v760
        %v805 = vpack.c.b16 %v763, %v762
        %v806 = vpack.c.b16 %v765, %v764
        %v807 = vpack.c.b16 %v767, %v766
        %v808 = vpack.c.b16 %v769, %v768
        %v809 = vpack.c.b16 %v771, %v770
        %v810 = vpack.c.b16 %v773, %v772
        %v811 = vpack.c.b16 %v775, %v774
        %v812 = vpack.c.b16 %v777, %v776
        %v813 = vpack.c.b16 %v779, %v778
        %v814 = vpack.c.b16 %v781, %v780
        %v815 = vpack.c.b16 %v783, %v782
        %848 = vmatprep.subr.bf16.mxu0 0
        %849 = vmatpush1.bf16.msra.mxu0 %v784
        %850 = vmatprep.subr.bf16.mxu0 0
        %851 = vmatpush1.bf16.msra.mxu0 %v785
        %852 = vmatprep.subr.bf16.mxu0 0
        %853 = vmatpush1.bf16.msra.mxu0 %v786
        %854 = vmatprep.subr.bf16.mxu0 0
        %855 = vmatpush1.bf16.msra.mxu0 %v787
        %856 = vmatprep.subr.bf16.mxu0 0
        %857 = vmatpush1.bf16.msra.mxu0 %v788
        %858 = vmatprep.subr.bf16.mxu0 0
        %859 = vmatpush1.bf16.msra.mxu0 %v789
        %860 = vmatprep.subr.bf16.mxu0 0
        %861 = vmatpush1.bf16.msra.mxu0 %v790
        %862 = vmatprep.subr.bf16.mxu0 0
        %863 = vmatpush1.bf16.msra.mxu0 %v791
        %864 = vmatprep.subr.bf16.mxu0 0
        %865 = vmatpush1.bf16.msra.mxu0 %v792
        %866 = vmatprep.subr.bf16.mxu0 0
        %867 = vmatpush1.bf16.msra.mxu0 %v793
        %868 = vmatprep.subr.bf16.mxu0 0
        %869 = vmatpush1.bf16.msra.mxu0 %v794
        %870 = vmatprep.subr.bf16.mxu0 0
        %871 = vmatpush1.bf16.msra.mxu0 %v795
        %872 = vmatprep.subr.bf16.mxu0 0
        %873 = vmatpush1.bf16.msra.mxu0 %v796
        %874 = vmatprep.subr.bf16.mxu0 0
        %875 = vmatpush1.bf16.msra.mxu0 %v797
        %876 = vmatprep.subr.bf16.mxu0 0
        %877 = vmatpush1.bf16.msra.mxu0 %v798
        %878 = vmatprep.subr.bf16.mxu0 0
        %879 = vmatpush1.bf16.msra.mxu0 %v799
        %880 = vmatprep.mubr.bf16.mxu0 %v593
        %881 = vmatmul.mubr.bf16.gmra.mrb[0].mxu0 %v592
        %v882 = vpop.f32.mrb[0].mxu0
        %v883 = vadd.f32 0.0, %v882
        %v884 = vpop.f32.mrb[0].mxu0
        %v885 = vpop.f32.mrb[0].mxu0
        %v886 = vadd.f32 0.0, %v885
        %v887 = vpop.f32.mrb[0].mxu0
        %888 = vmatprep.mubr.bf16.mxu0 %v597
        %889 = vmatmul.mubr.bf16.gmra.mrb[0].mxu0 %v596
        %v890 = vpop.f32.mrb[0].mxu0
        %v891 = vadd.f32 0.0, %v890
        %v892 = vpop.f32.mrb[0].mxu0
        %v893 = vpop.f32.mrb[0].mxu0
        %v894 = vadd.f32 0.0, %v893
        %v895 = vpop.f32.mrb[0].mxu0
        %896 = vmatprep.mubr.bf16.mxu0 %v601
        %897 = vmatmul.mubr.bf16.gmra.mrb[0].mxu0 %v600
        %v898 = vpop.f32.mrb[0].mxu0
        %v899 = vadd.f32 0.0, %v898
        %v900 = vpop.f32.mrb[0].mxu0
        %v901 = vpop.f32.mrb[0].mxu0
        %v902 = vadd.f32 0.0, %v901
        %v903 = vpop.f32.mrb[0].mxu0
        %904 = vmatprep.mubr.bf16.mxu0 %v605
        %905 = vmatmul.mubr.bf16.gmra.mrb[0].mxu0 %v604
        %v906 = vpop.f32.mrb[0].mxu0
        %v907 = vadd.f32 0.0, %v906
        %v908 = vpop.f32.mrb[0].mxu0
        %v909 = vpop.f32.mrb[0].mxu0
        %v910 = vadd.f32 0.0, %v909
        %v911 = vpop.f32.mrb[0].mxu0
        %912 = vmatprep.mubr.bf16.mxu0 %v609
        %913 = vmatmul.mubr.bf16.gmra.mrb[0].mxu0 %v608
        %v914 = vpop.f32.mrb[0].mxu0
        %v915 = vadd.f32 0.0, %v914
        %v916 = vpop.f32.mrb[0].mxu0
        %v917 = vpop.f32.mrb[0].mxu0
        %v918 = vadd.f32 0.0, %v917
        %v919 = vpop.f32.mrb[0].mxu0
        %920 = vmatprep.mubr.bf16.mxu0 %v613
        %921 = vmatmul.mubr.bf16.gmra.mrb[0].mxu0 %v612
        %v922 = vpop.f32.mrb[0].mxu0
        %v923 = vadd.f32 0.0, %v922
        %v924 = vpop.f32.mrb[0].mxu0
        %v925 = vpop.f32.mrb[0].mxu0
        %v926 = vadd.f32 0.0, %v925
        %v927 = vpop.f32.mrb[0].mxu0
        %928 = vmatprep.mubr.bf16.mxu0 %v617
        %929 = vmatmul.mubr.bf16.gmra.mrb[0].mxu0 %v616
        %v930 = vpop.f32.mrb[0].mxu0
        %v931 = vadd.f32 0.0, %v930
        %v932 = vpop.f32.mrb[0].mxu0
        %v933 = vpop.f32.mrb[0].mxu0
        %v934 = vadd.f32 0.0, %v933
        %v935 = vpop.f32.mrb[0].mxu0
        %936 = vmatprep.mubr.bf16.mxu0 %v621
        %937 = vmatmul.mubr.bf16.gmra.mrb[0].mxu0 %v620
        %v938 = vpop.f32.mrb[0].mxu0
        %v939 = vadd.f32 0.0, %v938
        %v940 = vpop.f32.mrb[0].mxu0
        %v941 = vpop.f32.mrb[0].mxu0
        %v942 = vadd.f32 0.0, %v941
        %v943 = vpop.f32.mrb[0].mxu0
        %944 = vdwg.mxu0
        %945 = vmatprep.subr.bf16.mxu0 0
        %946 = vmatpush1.bf16.msra.mxu0 %v800
        %947 = vmatprep.subr.bf16.mxu0 0
        %948 = vmatpush1.bf16.msra.mxu0 %v801
        %949 = vmatprep.subr.bf16.mxu0 0
        %950 = vmatpush1.bf16.msra.mxu0 %v802
        %951 = vmatprep.subr.bf16.mxu0 0
        %952 = vmatpush1.bf16.msra.mxu0 %v803
        %953 = vmatprep.subr.bf16.mxu0 0
        %954 = vmatpush1.bf16.msra.mxu0 %v804
        %955 = vmatprep.subr.bf16.mxu0 0
        %956 = vmatpush1.bf16.msra.mxu0 %v805
        %957 = vmatprep.subr.bf16.mxu0 0
        %958 = vmatpush1.bf16.msra.mxu0 %v806
        %959 = vmatprep.subr.bf16.mxu0 0
        %960 = vmatpush1.bf16.msra.mxu0 %v807
        %961 = vmatprep.subr.bf16.mxu0 0
        %962 = vmatpush1.bf16.msra.mxu0 %v808
        %963 = vmatprep.subr.bf16.mxu0 0
        %964 = vmatpush1.bf16.msra.mxu0 %v809
        %965 = vmatprep.subr.bf16.mxu0 0
        %966 = vmatpush1.bf16.msra.mxu0 %v810
        %967 = vmatprep.subr.bf16.mxu0 0
        %968 = vmatpush1.bf16.msra.mxu0 %v811
        %969 = vmatprep.subr.bf16.mxu0 0
        %970 = vmatpush1.bf16.msra.mxu0 %v812
        %971 = vmatprep.subr.bf16.mxu0 0
        %972 = vmatpush1.bf16.msra.mxu0 %v813
        %973 = vmatprep.subr.bf16.mxu0 0
        %974 = vmatpush1.bf16.msra.mxu0 %v814
        %975 = vmatprep.subr.bf16.mxu0 0
        %976 = vmatpush1.bf16.msra.mxu0 %v815
        %977 = vmatprep.mubr.bf16.mxu0 %v595
        %978 = vmatmul.mubr.bf16.gmra.mrb[0].mxu0 %v594
        %v979 = vpop.f32.mrb[0].mxu0
        %v980 = vadd.f32 %v883, %v979
        %v981 = vpop.f32.mrb[0].mxu0
        %v982 = vpop.f32.mrb[0].mxu0
        %v983 = vadd.f32 %v886, %v982
        %v984 = vpop.f32.mrb[0].mxu0
        %985 = vmatprep.mubr.bf16.mxu0 %v599
        %986 = vmatmul.mubr.bf16.gmra.mrb[0].mxu0 %v598
        %v987 = vpop.f32.mrb[0].mxu0
        %v988 = vadd.f32 %v891, %v987
        %v989 = vpop.f32.mrb[0].mxu0
        %v990 = vpop.f32.mrb[0].mxu0
        %v991 = vadd.f32 %v894, %v990
        %v992 = vpop.f32.mrb[0].mxu0
        %993 = vmatprep.mubr.bf16.mxu0 %v603
        %994 = vmatmul.mubr.bf16.gmra.mrb[0].mxu0 %v602
        %v995 = vpop.f32.mrb[0].mxu0
        %v996 = vadd.f32 %v899, %v995
        %v997 = vpop.f32.mrb[0].mxu0
        %v998 = vpop.f32.mrb[0].mxu0
        %v999 = vadd.f32 %v902, %v998
        %v1000 = vpop.f32.mrb[0].mxu0
        %1001 = vmatprep.mubr.bf16.mxu0 %v607
        %1002 = vmatmul.mubr.bf16.gmra.mrb[0].mxu0 %v606
        %v1003 = vpop.f32.mrb[0].mxu0
        %v1004 = vadd.f32 %v907, %v1003
        %v1005 = vpop.f32.mrb[0].mxu0
        %v1006 = vpop.f32.mrb[0].mxu0
        %v1007 = vadd.f32 %v910, %v1006
        %v1008 = vpop.f32.mrb[0].mxu0
        %1009 = vmatprep.mubr.bf16.mxu0 %v611
        %1010 = vmatmul.mubr.bf16.gmra.mrb[0].mxu0 %v610
        %v1011 = vpop.f32.mrb[0].mxu0
        %v1012 = vadd.f32 %v915, %v1011
        %v1013 = vpop.f32.mrb[0].mxu0
        %v1014 = vpop.f32.mrb[0].mxu0
        %v1015 = vadd.f32 %v918, %v1014
        %v1016 = vpop.f32.mrb[0].mxu0
        %1017 = vmatprep.mubr.bf16.mxu0 %v615
        %1018 = vmatmul.mubr.bf16.gmra.mrb[0].mxu0 %v614
        %v1019 = vpop.f32.mrb[0].mxu0
        %v1020 = vadd.f32 %v923, %v1019
        %v1021 = vpop.f32.mrb[0].mxu0
        %v1022 = vpop.f32.mrb[0].mxu0
        %v1023 = vadd.f32 %v926, %v1022
        %v1024 = vpop.f32.mrb[0].mxu0
        %1025 = vmatprep.mubr.bf16.mxu0 %v619
        %1026 = vmatmul.mubr.bf16.gmra.mrb[0].mxu0 %v618
        %v1027 = vpop.f32.mrb[0].mxu0
        %v1028 = vadd.f32 %v931, %v1027
        %v1029 = vpop.f32.mrb[0].mxu0
        %v1030 = vpop.f32.mrb[0].mxu0
        %v1031 = vadd.f32 %v934, %v1030
        %v1032 = vpop.f32.mrb[0].mxu0
        %1033 = vmatprep.mubr.bf16.mxu0 %v623
        %1034 = vmatmul.mubr.bf16.gmra.mrb[0].mxu0 %v622
        %v1035 = vpop.f32.mrb[0].mxu0
        %v1036 = vadd.f32 %v939, %v1035
        %v1037 = vpop.f32.mrb[0].mxu0
        %v1038 = vpop.f32.mrb[0].mxu0
        %v1039 = vadd.f32 %v942, %v1038
        %v1040 = vpop.f32.mrb[0].mxu0
        %1041 = vdwg.mxu0
        %v1042 = vadd.f32 %v384, %v980
        %v1043 = vadd.f32 %v385, %v983
        %v1044 = vadd.f32 %v386, %v988
        %v1045 = vadd.f32 %v387, %v991
        %v1046 = vadd.f32 %v388, %v996
        %v1047 = vadd.f32 %v389, %v999
        %v1048 = vadd.f32 %v390, %v1004
        %v1049 = vadd.f32 %v391, %v1007
        %v1050 = vadd.f32 %v392, %v1012
        %v1051 = vadd.f32 %v393, %v1015
        %v1052 = vadd.f32 %v394, %v1020
        %v1053 = vadd.f32 %v395, %v1023
        %v1054 = vadd.f32 %v396, %v1028
        %v1055 = vadd.f32 %v397, %v1031
        %v1056 = vadd.f32 %v398, %v1036
        %v1057 = vadd.f32 %v399, %v1039
        %1058 = vst [vmem:[#allocation2] sm:$0xff] %v1042
        %1059 = vst [vmem:[#allocation2 + $0x8] sm:$0xff] %v1043
        %1060 = vst [vmem:[#allocation2 + $0x10] sm:$0xff] %v1044
        %1061 = vst [vmem:[#allocation2 + $0x18] sm:$0xff] %v1045
        %1062 = vst [vmem:[#allocation2 + $0x20] sm:$0xff] %v1046
        %1063 = vst [vmem:[#allocation2 + $0x28] sm:$0xff] %v1047
        %1064 = vst [vmem:[#allocation2 + $0x30] sm:$0xff] %v1048
        %1065 = vst [vmem:[#allocation2 + $0x38] sm:$0xff] %v1049
        %1066 = vst [vmem:[#allocation2 + $0x40] sm:$0xff] %v1050
        %1067 = vst [vmem:[#allocation2 + $0x48] sm:$0xff] %v1051
        %1068 = vst [vmem:[#allocation2 + $0x50] sm:$0xff] %v1052
        %1069 = vst [vmem:[#allocation2 + $0x58] sm:$0xff] %v1053
        %1070 = vst [vmem:[#allocation2 + $0x60] sm:$0xff] %v1054
        %1071 = vst [vmem:[#allocation2 + $0x68] sm:$0xff] %v1055
        %1072 = vst [vmem:[#allocation2 + $0x70] sm:$0xff] %v1056
        %1073 = vst [vmem:[#allocation2 + $0x78] sm:$0xff] %v1057
        %p1074 = scmp.eq.s32.totalorder %s23, 3
        // Predicated region
        $region64: #{discriminator_forward.29} parent=54 // pred_check
          %p1075 = pneg %p1074
        $region65: #{discriminator_forward.29} parent=54 // pred_check_branch
          %1077 = sbr.rel (%p1075) target = $region67
        $region66: #{discriminator_forward.29} parent=54 // pred_region
          %v1078 = vld [vmem:[#allocation2] sm:$0xff]
          %v1079 = vld [vmem:[#allocation2 + $0x8] sm:$0xff]
          %v1080 = vld [vmem:[#allocation2 + $0x10] sm:$0xff]
          %v1081 = vld [vmem:[#allocation2 + $0x18] sm:$0xff]
          %v1082 = vld [vmem:[#allocation2 + $0x20] sm:$0xff]
          %v1083 = vld [vmem:[#allocation2 + $0x28] sm:$0xff]
          %v1084 = vld [vmem:[#allocation2 + $0x30] sm:$0xff]
          %v1085 = vld [vmem:[#allocation2 + $0x38] sm:$0xff]
          %v1086 = vld [vmem:[#allocation2 + $0x40] sm:$0xff]
          %v1087 = vld [vmem:[#allocation2 + $0x48] sm:$0xff]
          %v1088 = vld [vmem:[#allocation2 + $0x50] sm:$0xff]
          %v1089 = vld [vmem:[#allocation2 + $0x58] sm:$0xff]
          %v1090 = vld [vmem:[#allocation2 + $0x60] sm:$0xff]
          %v1091 = vld [vmem:[#allocation2 + $0x68] sm:$0xff]
          %v1092 = vld [vmem:[#allocation2 + $0x70] sm:$0xff]
          %v1093 = vld [vmem:[#allocation2 + $0x78] sm:$0xff]
          %s1094 = sld [smem:[#allocation3]]
          %v1095 = vstv %s1094
          %v1096 = vmul.f32 %v1078, %v1095
          %v1097 = vmul.f32 %v1079, %v1095
          %v1098 = vmul.f32 %v1080, %v1095
          %v1099 = vmul.f32 %v1081, %v1095
          %v1100 = vmul.f32 %v1082, %v1095
          %v1101 = vmul.f32 %v1083, %v1095
          %v1102 = vmul.f32 %v1084, %v1095
          %v1103 = vmul.f32 %v1085, %v1095
          %v1104 = vmul.f32 %v1086, %v1095
          %v1105 = vmul.f32 %v1087, %v1095
          %v1106 = vmul.f32 %v1088, %v1095
          %v1107 = vmul.f32 %v1089, %v1095
          %v1108 = vmul.f32 %v1090, %v1095
          %v1109 = vmul.f32 %v1091, %v1095
          %v1110 = vmul.f32 %v1092, %v1095
          %v1111 = vmul.f32 %v1093, %v1095
          %v1112 = vld [vmem:[%s353] sm:$0x1]
          %v1114 = vlaneseq
          %v1115 = vshrl.u32 %v1114, 7
          %v1116 = vsub.s32 0, %v1115
          %v1117 = vrot.slane %v1112, %v1116
          %v1119 = vadd.f32 %v1096, %v1117
          %v1120 = vadd.f32 %v1097, %v1117
          %v1121 = vadd.f32 %v1098, %v1117
          %v1122 = vadd.f32 %v1099, %v1117
          %v1123 = vadd.f32 %v1100, %v1117
          %v1124 = vadd.f32 %v1101, %v1117
          %v1125 = vadd.f32 %v1102, %v1117
          %v1126 = vadd.f32 %v1103, %v1117
          %v1127 = vadd.f32 %v1104, %v1117
          %v1128 = vadd.f32 %v1105, %v1117
          %v1129 = vadd.f32 %v1106, %v1117
          %v1130 = vadd.f32 %v1107, %v1117
          %v1131 = vadd.f32 %v1108, %v1117
          %v1132 = vadd.f32 %v1109, %v1117
          %v1133 = vadd.f32 %v1110, %v1117
          %v1134 = vadd.f32 %v1111, %v1117
          %v1135 = vpack.c.bf16 %v1120, %v1119
          %v1136 = vpack.c.bf16 %v1122, %v1121
          %v1137 = vpack.c.bf16 %v1124, %v1123
          %v1138 = vpack.c.bf16 %v1126, %v1125
          %v1139 = vpack.c.bf16 %v1128, %v1127
          %v1140 = vpack.c.bf16 %v1130, %v1129
          %v1141 = vpack.c.bf16 %v1132, %v1131
          %v1142 = vpack.c.bf16 %v1134, %v1133
          %v1151 = vunpack.c.l.b16 %v1135
          %v1152 = vunpack.c.h.b16 %v1135
          %v1153 = vunpack.c.l.b16 %v1136
          %v1154 = vunpack.c.h.b16 %v1136
          %v1155 = vunpack.c.l.b16 %v1137
          %v1156 = vunpack.c.h.b16 %v1137
          %v1157 = vunpack.c.l.b16 %v1138
          %v1158 = vunpack.c.h.b16 %v1138
          %v1159 = vunpack.c.l.b16 %v1139
          %v1160 = vunpack.c.h.b16 %v1139
          %v1161 = vunpack.c.l.b16 %v1140
          %v1162 = vunpack.c.h.b16 %v1140
          %v1163 = vunpack.c.l.b16 %v1141
          %v1164 = vunpack.c.h.b16 %v1141
          %v1165 = vunpack.c.l.b16 %v1142
          %v1166 = vunpack.c.h.b16 %v1142
          %v1167 = vpack.c.b16 %v1151, %v1151
          %v1168 = vpack.c.b16 %v1152, %v1152
          %v1169 = vpack.c.b16 %v1153, %v1153
          %v1170 = vpack.c.b16 %v1154, %v1154
          %v1171 = vpack.c.b16 %v1155, %v1155
          %v1172 = vpack.c.b16 %v1156, %v1156
          %v1173 = vpack.c.b16 %v1157, %v1157
          %v1174 = vpack.c.b16 %v1158, %v1158
          %v1175 = vpack.c.b16 %v1159, %v1159
          %v1176 = vpack.c.b16 %v1160, %v1160
          %v1177 = vpack.c.b16 %v1161, %v1161
          %v1178 = vpack.c.b16 %v1162, %v1162
          %v1179 = vpack.c.b16 %v1163, %v1163
          %v1180 = vpack.c.b16 %v1164, %v1164
          %v1181 = vpack.c.b16 %v1165, %v1165
          %v1182 = vpack.c.b16 %v1166, %v1166
          %1199 = vst [vmem:[%s361] sm:$0xf] %v1167
          %1200 = vst [vmem:[%s361 + $0x4] sm:$0xf] %v1168
          %1201 = vst [vmem:[%s361 + $0x8] sm:$0xf] %v1169
          %1202 = vst [vmem:[%s361 + $0xc] sm:$0xf] %v1170
          %1203 = vst [vmem:[%s361 + $0x10] sm:$0xf] %v1171
          %1204 = vst [vmem:[%s361 + $0x14] sm:$0xf] %v1172
          %1205 = vst [vmem:[%s361 + $0x18] sm:$0xf] %v1173
          %1206 = vst [vmem:[%s361 + $0x1c] sm:$0xf] %v1174
          %1207 = vst [vmem:[%s361 + $0x20] sm:$0xf] %v1175
          %1208 = vst [vmem:[%s361 + $0x24] sm:$0xf] %v1176
          %1209 = vst [vmem:[%s361 + $0x28] sm:$0xf] %v1177
          %1210 = vst [vmem:[%s361 + $0x2c] sm:$0xf] %v1178
          %1211 = vst [vmem:[%s361 + $0x30] sm:$0xf] %v1179
          %1212 = vst [vmem:[%s361 + $0x34] sm:$0xf] %v1180
          %1213 = vst [vmem:[%s361 + $0x38] sm:$0xf] %v1181
          %1214 = vst [vmem:[%s361 + $0x3c] sm:$0xf] %v1182
        $region67: #{discriminator_forward.29} parent=54 // pred_fallthru
          _
        %s1215 = smul.u32 16, %s21
        %p1216 = scmp.lt.s32.totalorder %s1215, 15
        %s1217 = scalar_select %p1216, %s1215, 15
        %p1218 = scmp.lt.s32.totalorder %s22, 0
        %s1219 = scalar_select %p1218, %s22, 0
        %s1220 = sadd.s32 %s1219, %s1217
        %s1221 = smul.addr %s1220, 4
        %s1222 = scalar_lea.vmem %s4, %s1221
        // Predicated region
        $region68: #{discriminator_forward.29} parent=54 // pred_check
          %p1223 = pneg %p158
        $region69: #{discriminator_forward.29} parent=54 // pred_check_branch
          %1225 = sbr.rel (%p1223) target = $region71
        $region70: #{discriminator_forward.29} parent=54 // pred_region
          %s1226 = smul.u32 16, %s21
        $region71: #{discriminator_forward.29} parent=54 // pred_fallthru
          _
        // Predicated region
        $region72: #{discriminator_forward.29} parent=54 // pred_check
          %p1227 = pneg %p158
        $region73: #{discriminator_forward.29} parent=54 // pred_check_branch
          %1229 = sbr.rel (%p1227) target = $region75
        $region74: #{discriminator_forward.29} parent=54 // pred_region
          %s1230 = smul.u32 16, %s21
          %p1231 = scmp.lt.s32.totalorder %s1230, 15
          %s1232 = scalar_select %p1231, %s1230, 15
          %p1233 = scmp.lt.s32.totalorder %s22, 0
          %s1234 = scalar_select %p1233, %s22, 0
          %s1235 = sadd.s32 %s1234, %s1232
          %s1236 = smul.addr %s1235, 4
          %s1237 = scalar_lea.vmem %s4, %s1236
        $region75: #{discriminator_forward.29} parent=54 // pred_fallthru
          _
      $region55: #{discriminator_forward.29} parent=5 // pred_fallthru
        _
      %p1238 = scmp.le.s32.totalorder 2, %s11
      // Predicated region
      $region76: #{discriminator_forward.29} parent=5 // pred_check
        %p1239 = pneg %p1238
      $region77: #{discriminator_forward.29} parent=5 // pred_check_branch
        %1241 = sbr.rel (%p1239) target = $region79
      $region78: #{discriminator_forward.29} parent=5 // pred_region
        %s1242 = ssub.s32 %s11, 2
      $region79: #{discriminator_forward.29} parent=5 // pred_fallthru
        _
    $region6: #{discriminator_forward.29} parent=1 // loop_footer
      %s15 = sadd.s32 1, %s11
    $region7: #{discriminator_forward.29} parent=1 // loop_footer_branch
      %10 = sbr.rel target = $region3
    $region8: #{discriminator_forward.29} parent=1 // loop_exit
      _

// kernel: discriminator_forward.30
$region0: #{discriminator_forward.30}
  #allocation0 [shape = 'u32[]', space=smem, size = 0x4, offset = 0x4, fixed_abs, tag = 'smem constant byte address 0x4 - core index']
  #allocation1 [shape = 'u32[144,128]{1,0:T(1,128)}', space=vmem, size = 0x12000, scoped, tag = 'internal scratch']
  %s0 = inlined_call_operand.vmem [shape: bf16[128,128], index: 0, kind: input, shape index: {}]
  %s1 = inlined_call_operand.vmem [shape: f32[1,128], index: 1, kind: output, shape index: {0}]
  %s2 = inlined_call_operand.vmem [shape: f32[1,128], index: 2, kind: output, shape index: {1}]
  %3 = xla_tuple %s1, %s2
  %s4 = sld [smem:[#allocation0]]
  $region30: #{discriminator_forward.30} parent=0
    _
  %s6 = ssub.s32 1, %s4
  %s7 = scalar_select 0, %s6, %s4
  // Predicated region
  $region2: #{discriminator_forward.30} parent=0 // pred_check
    _
  $region3: #{discriminator_forward.30} parent=0 // pred_check_branch
    %9 = sbr.rel (0) target = $region5
  $region4: #{discriminator_forward.30} parent=0 // pred_region
    _
  $region5: #{discriminator_forward.30} parent=0 // pred_fallthru
    _
  %p10 = scmp.eq.s32.totalorder 0, 0
  // Predicated region
  $region6: #{discriminator_forward.30} parent=0 // pred_check
    %p11 = pneg %p10
  $region7: #{discriminator_forward.30} parent=0 // pred_check_branch
    %13 = sbr.rel (%p11) target = $region9
  $region8: #{discriminator_forward.30} parent=0 // pred_region
    %14 = vst [vmem:[%s1] sm:$0x1] 0.0
    %15 = vst [vmem:[%s2] sm:$0x1] 0.0
  $region9: #{discriminator_forward.30} parent=0 // pred_fallthru
    _
  %v16 = vld [vmem:[%s0] sm:$0xf]
  %v17 = vld [vmem:[%s0 + $0x4] sm:$0xf]
  %v18 = vld [vmem:[%s0 + $0x8] sm:$0xf]
  %v19 = vld [vmem:[%s0 + $0xc] sm:$0xf]
  %v20 = vld [vmem:[%s0 + $0x10] sm:$0xf]
  %v21 = vld [vmem:[%s0 + $0x14] sm:$0xf]
  %v22 = vld [vmem:[%s0 + $0x18] sm:$0xf]
  %v23 = vld [vmem:[%s0 + $0x1c] sm:$0xf]
  %v24 = vld [vmem:[%s0 + $0x20] sm:$0xf]
  %v25 = vld [vmem:[%s0 + $0x24] sm:$0xf]
  %v26 = vld [vmem:[%s0 + $0x28] sm:$0xf]
  %v27 = vld [vmem:[%s0 + $0x2c] sm:$0xf]
  %v28 = vld [vmem:[%s0 + $0x30] sm:$0xf]
  %v29 = vld [vmem:[%s0 + $0x34] sm:$0xf]
  %v30 = vld [vmem:[%s0 + $0x38] sm:$0xf]
  %v31 = vld [vmem:[%s0 + $0x3c] sm:$0xf]
  %v32 = vunpack.c.l.bf16 %v16
  %v33 = vunpack.c.l.bf16 %v17
  %v34 = vunpack.c.l.bf16 %v18
  %v35 = vunpack.c.l.bf16 %v19
  %v36 = vunpack.c.l.bf16 %v20
  %v37 = vunpack.c.l.bf16 %v21
  %v38 = vunpack.c.l.bf16 %v22
  %v39 = vunpack.c.l.bf16 %v23
  %v40 = vunpack.c.l.bf16 %v24
  %v41 = vunpack.c.l.bf16 %v25
  %v42 = vunpack.c.l.bf16 %v26
  %v43 = vunpack.c.l.bf16 %v27
  %v44 = vunpack.c.l.bf16 %v28
  %v45 = vunpack.c.l.bf16 %v29
  %v46 = vunpack.c.l.bf16 %v30
  %v47 = vunpack.c.l.bf16 %v31
  %v48 = vld [vmem:[%s1] sm:$0x1]
  %v49 = vadd.f32 %v32, %v33
  %v50 = vadd.f32 %v49, %v34
  %v51 = vadd.f32 %v50, %v35
  %v52 = vadd.f32 %v51, %v36
  %v53 = vadd.f32 %v52, %v37
  %v54 = vadd.f32 %v53, %v38
  %v55 = vadd.f32 %v54, %v39
  %v56 = vadd.f32 %v55, %v40
  %v57 = vadd.f32 %v56, %v41
  %v58 = vadd.f32 %v57, %v42
  %v59 = vadd.f32 %v58, %v43
  %v60 = vadd.f32 %v59, %v44
  %v61 = vadd.f32 %v60, %v45
  %v62 = vadd.f32 %v61, %v46
  %v63 = vadd.f32 %v62, %v47
  %v64 = vrot.slane %v63, 4
  %v65 = vadd.f32 %v63, %v64
  %v66 = vrot.slane %v65, 2
  %v67 = vadd.f32 %v65, %v66
  %v68 = vrot.slane %v67, 1
  %v69 = vadd.f32 %v67, %v68
  %v70 = vadd.f32 %v48, %v69
  %71 = vst [vmem:[%s1] sm:$0x1] %v70
  %v72 = vld [vmem:[%s2] sm:$0x1]
  %v73 = vmul.f32 %v32, %v32
  %v74 = vmul.f32 %v33, %v33
  %v75 = vmul.f32 %v34, %v34
  %v76 = vmul.f32 %v35, %v35
  %v77 = vmul.f32 %v36, %v36
  %v78 = vmul.f32 %v37, %v37
  %v79 = vmul.f32 %v38, %v38
  %v80 = vmul.f32 %v39, %v39
  %v81 = vmul.f32 %v40, %v40
  %v82 = vmul.f32 %v41, %v41
  %v83 = vmul.f32 %v42, %v42
  %v84 = vmul.f32 %v43, %v43
  %v85 = vmul.f32 %v44, %v44
  %v86 = vmul.f32 %v45, %v45
  %v87 = vmul.f32 %v46, %v46
  %v88 = vmul.f32 %v47, %v47
  %v89 = vadd.f32 %v73, %v74
  %v90 = vadd.f32 %v89, %v75
  %v91 = vadd.f32 %v90, %v76
  %v92 = vadd.f32 %v91, %v77
  %v93 = vadd.f32 %v92, %v78
  %v94 = vadd.f32 %v93, %v79
  %v95 = vadd.f32 %v94, %v80
  %v96 = vadd.f32 %v95, %v81
  %v97 = vadd.f32 %v96, %v82
  %v98 = vadd.f32 %v97, %v83
  %v99 = vadd.f32 %v98, %v84
  %v100 = vadd.f32 %v99, %v85
  %v101 = vadd.f32 %v100, %v86
  %v102 = vadd.f32 %v101, %v87
  %v103 = vadd.f32 %v102, %v88
  %v104 = vrot.slane %v103, 4
  %v105 = vadd.f32 %v103, %v104
  %v106 = vrot.slane %v105, 2
  %v107 = vadd.f32 %v105, %v106
  %v108 = vrot.slane %v107, 1
  %v109 = vadd.f32 %v107, %v108
  %v110 = vadd.f32 %v72, %v109
  %111 = vst [vmem:[%s2] sm:$0x1] %v110
  // Predicated region
  $region10: #{discriminator_forward.30} parent=0 // pred_check
    %p112 = pneg %p10
  $region11: #{discriminator_forward.30} parent=0 // pred_check_branch
    %114 = sbr.rel (%p112) target = $region13
  $region12: #{discriminator_forward.30} parent=0 // pred_region
    %v115 = vld [vmem:[%s1] sm:$0x1]
    %v116 = vmul.f32 %v115, 0.0078125
    %v117 = vld [vmem:[%s2] sm:$0x1]
    %v118 = vmul.f32 %v117, 0.0078125
    %v119 = vmul.f32 %v116, %v116
    %v120 = vsub.f32 %v118, %v119
    %v121 = vmax.f32 %v120, 0.0
    %122 = vst [vmem:[%s1] sm:$0x1] %v116
    %123 = vst [vmem:[%s2] sm:$0x1] %v121
  $region13: #{discriminator_forward.30} parent=0 // pred_fallthru
    _
  // Predicated region
  $region14: #{discriminator_forward.30} parent=0 // pred_check
    _
  $region15: #{discriminator_forward.30} parent=0 // pred_check_branch
    %125 = sbr.rel (0) target = $region17
  $region16: #{discriminator_forward.30} parent=0 // pred_region
    _
  $region17: #{discriminator_forward.30} parent=0 // pred_fallthru
    _
  // Predicated region
  $region18: #{discriminator_forward.30} parent=0 // pred_check
    _
  $region19: #{discriminator_forward.30} parent=0 // pred_check_branch
    %127 = sbr.rel (0) target = $region21
  $region20: #{discriminator_forward.30} parent=0 // pred_region
    _
  $region21: #{discriminator_forward.30} parent=0 // pred_fallthru
    _
  // Predicated region
  $region22: #{discriminator_forward.30} parent=0 // pred_check
    _
  $region23: #{discriminator_forward.30} parent=0 // pred_check_branch
    %129 = sbr.rel (0) target = $region25
  $region24: #{discriminator_forward.30} parent=0 // pred_region
    _
  $region25: #{discriminator_forward.30} parent=0 // pred_fallthru
    _
  // Predicated region
  $region26: #{discriminator_forward.30} parent=0 // pred_check
    _
  $region27: #{discriminator_forward.30} parent=0 // pred_check_branch
    %131 = sbr.rel (0) target = $region29
  $region28: #{discriminator_forward.30} parent=0 // pred_region
    _
  $region29: #{discriminator_forward.30} parent=0 // pred_fallthru
    _

// kernel: discriminator_forward.31
$region0: #{discriminator_forward.31}
  #allocation0 [shape = 'u32[]', space=smem, size = 0x4, offset = 0x4, fixed_abs, tag = 'smem constant byte address 0x4 - core index']
  #allocation1 [shape = 'u32[144,128]{1,0:T(1,128)}', space=vmem, size = 0x12000, scoped, tag = 'internal scratch']
  %s0 = inlined_call_operand.vmem [shape: bf16[128,128], index: 0, kind: input, shape index: {}]
  %s1 = inlined_call_operand.vmem [shape: f32[1,128], index: 1, kind: input, shape index: {}]
  %s2 = inlined_call_operand.vmem [shape: f32[1,128], index: 2, kind: input, shape index: {}]
  %s3 = inlined_call_operand.vmem [shape: f32[1,128], index: 3, kind: input, shape index: {}]
  %s4 = inlined_call_operand.vmem [shape: f32[1,128], index: 4, kind: input, shape index: {}]
  %s5 = inlined_call_operand.vmem [shape: bf16[128,128], index: 5, kind: output, shape index: {}]
  %s6 = sld [smem:[#allocation0]]
  $region30: #{discriminator_forward.31} parent=0
    _
  %s8 = ssub.s32 1, %s6
  %s9 = scalar_select 0, %s8, %s6
  // Predicated region
  $region2: #{discriminator_forward.31} parent=0 // pred_check
    _
  $region3: #{discriminator_forward.31} parent=0 // pred_check_branch
    %11 = sbr.rel (0) target = $region5
  $region4: #{discriminator_forward.31} parent=0 // pred_region
    _
  $region5: #{discriminator_forward.31} parent=0 // pred_fallthru
    _
  // Predicated region
  $region6: #{discriminator_forward.31} parent=0 // pred_check
    _
  $region7: #{discriminator_forward.31} parent=0 // pred_check_branch
    %13 = sbr.rel (0) target = $region9
  $region8: #{discriminator_forward.31} parent=0 // pred_region
    _
  $region9: #{discriminator_forward.31} parent=0 // pred_fallthru
    _
  // Predicated region
  $region10: #{discriminator_forward.31} parent=0 // pred_check
    _
  $region11: #{discriminator_forward.31} parent=0 // pred_check_branch
    %15 = sbr.rel (0) target = $region13
  $region12: #{discriminator_forward.31} parent=0 // pred_region
    _
  $region13: #{discriminator_forward.31} parent=0 // pred_fallthru
    _
  // Predicated region
  $region14: #{discriminator_forward.31} parent=0 // pred_check
    _
  $region15: #{discriminator_forward.31} parent=0 // pred_check_branch
    %17 = sbr.rel (0) target = $region17
  $region16: #{discriminator_forward.31} parent=0 // pred_region
    _
  $region17: #{discriminator_forward.31} parent=0 // pred_fallthru
    _
  // Predicated region
  $region18: #{discriminator_forward.31} parent=0 // pred_check
    _
  $region19: #{discriminator_forward.31} parent=0 // pred_check_branch
    %19 = sbr.rel (0) target = $region21
  $region20: #{discriminator_forward.31} parent=0 // pred_region
    _
  $region21: #{discriminator_forward.31} parent=0 // pred_fallthru
    _
  %v20 = vld [vmem:[%s3] sm:$0x1]
  %v21 = vld [vmem:[%s2] sm:$0x1]
  %v22 = vadd.f32 %v21, 1e-05
  %v23 = vrsqrt.pop %v22
  %v24 = vmul.f32 %v20, %v23
  %v25 = vld [vmem:[%s4] sm:$0x1]
  %v26 = vld [vmem:[%s1] sm:$0x1]
  %v27 = vmul.f32 %v26, %v24
  %v28 = vsub.f32 %v25, %v27
  %v29 = vld [vmem:[%s0] sm:$0xf]
  %v30 = vld [vmem:[%s0 + $0x4] sm:$0xf]
  %v31 = vld [vmem:[%s0 + $0x8] sm:$0xf]
  %v32 = vld [vmem:[%s0 + $0xc] sm:$0xf]
  %v33 = vld [vmem:[%s0 + $0x10] sm:$0xf]
  %v34 = vld [vmem:[%s0 + $0x14] sm:$0xf]
  %v35 = vld [vmem:[%s0 + $0x18] sm:$0xf]
  %v36 = vld [vmem:[%s0 + $0x1c] sm:$0xf]
  %v37 = vld [vmem:[%s0 + $0x20] sm:$0xf]
  %v38 = vld [vmem:[%s0 + $0x24] sm:$0xf]
  %v39 = vld [vmem:[%s0 + $0x28] sm:$0xf]
  %v40 = vld [vmem:[%s0 + $0x2c] sm:$0xf]
  %v41 = vld [vmem:[%s0 + $0x30] sm:$0xf]
  %v42 = vld [vmem:[%s0 + $0x34] sm:$0xf]
  %v43 = vld [vmem:[%s0 + $0x38] sm:$0xf]
  %v44 = vld [vmem:[%s0 + $0x3c] sm:$0xf]
  %v45 = vunpack.c.l.bf16 %v29
  %v46 = vunpack.c.l.bf16 %v30
  %v47 = vunpack.c.l.bf16 %v31
  %v48 = vunpack.c.l.bf16 %v32
  %v49 = vunpack.c.l.bf16 %v33
  %v50 = vunpack.c.l.bf16 %v34
  %v51 = vunpack.c.l.bf16 %v35
  %v52 = vunpack.c.l.bf16 %v36
  %v53 = vunpack.c.l.bf16 %v37
  %v54 = vunpack.c.l.bf16 %v38
  %v55 = vunpack.c.l.bf16 %v39
  %v56 = vunpack.c.l.bf16 %v40
  %v57 = vunpack.c.l.bf16 %v41
  %v58 = vunpack.c.l.bf16 %v42
  %v59 = vunpack.c.l.bf16 %v43
  %v60 = vunpack.c.l.bf16 %v44
  %v62 = vlaneseq
  %v63 = vshrl.u32 %v62, 7
  %v64 = vsub.s32 0, %v63
  %v65 = vrot.slane %v24, %v64
  %v67 = vmul.f32 %v45, %v65
  %v68 = vmul.f32 %v46, %v65
  %v69 = vmul.f32 %v47, %v65
  %v70 = vmul.f32 %v48, %v65
  %v71 = vmul.f32 %v49, %v65
  %v72 = vmul.f32 %v50, %v65
  %v73 = vmul.f32 %v51, %v65
  %v74 = vmul.f32 %v52, %v65
  %v75 = vmul.f32 %v53, %v65
  %v76 = vmul.f32 %v54, %v65
  %v77 = vmul.f32 %v55, %v65
  %v78 = vmul.f32 %v56, %v65
  %v79 = vmul.f32 %v57, %v65
  %v80 = vmul.f32 %v58, %v65
  %v81 = vmul.f32 %v59, %v65
  %v82 = vmul.f32 %v60, %v65
  %v84 = vlaneseq
  %v85 = vshrl.u32 %v84, 7
  %v86 = vsub.s32 0, %v85
  %v87 = vrot.slane %v28, %v86
  %v89 = vadd.f32 %v67, %v87
  %v90 = vadd.f32 %v68, %v87
  %v91 = vadd.f32 %v69, %v87
  %v92 = vadd.f32 %v70, %v87
  %v93 = vadd.f32 %v71, %v87
  %v94 = vadd.f32 %v72, %v87
  %v95 = vadd.f32 %v73, %v87
  %v96 = vadd.f32 %v74, %v87
  %v97 = vadd.f32 %v75, %v87
  %v98 = vadd.f32 %v76, %v87
  %v99 = vadd.f32 %v77, %v87
  %v100 = vadd.f32 %v78, %v87
  %v101 = vadd.f32 %v79, %v87
  %v102 = vadd.f32 %v80, %v87
  %v103 = vadd.f32 %v81, %v87
  %v104 = vadd.f32 %v82, %v87
  %vm105 = vcmp.ge.f32.partialorder %v89, 0.0
  %vm106 = vcmp.ge.f32.partialorder %v90, 0.0
  %vm107 = vcmp.ge.f32.partialorder %v91, 0.0
  %vm108 = vcmp.ge.f32.partialorder %v92, 0.0
  %vm109 = vcmp.ge.f32.partialorder %v93, 0.0
  %vm110 = vcmp.ge.f32.partialorder %v94, 0.0
  %vm111 = vcmp.ge.f32.partialorder %v95, 0.0
  %vm112 = vcmp.ge.f32.partialorder %v96, 0.0
  %vm113 = vcmp.ge.f32.partialorder %v97, 0.0
  %vm114 = vcmp.ge.f32.partialorder %v98, 0.0
  %vm115 = vcmp.ge.f32.partialorder %v99, 0.0
  %vm116 = vcmp.ge.f32.partialorder %v100, 0.0
  %vm117 = vcmp.ge.f32.partialorder %v101, 0.0
  %vm118 = vcmp.ge.f32.partialorder %v102, 0.0
  %vm119 = vcmp.ge.f32.partialorder %v103, 0.0
  %vm120 = vcmp.ge.f32.partialorder %v104, 0.0
  %v121 = vmul.f32 %v89, 0.2
  %v122 = vmul.f32 %v90, 0.2
  %v123 = vmul.f32 %v91, 0.2
  %v124 = vmul.f32 %v92, 0.2
  %v125 = vmul.f32 %v93, 0.2
  %v126 = vmul.f32 %v94, 0.2
  %v127 = vmul.f32 %v95, 0.2
  %v128 = vmul.f32 %v96, 0.2
  %v129 = vmul.f32 %v97, 0.2
  %v130 = vmul.f32 %v98, 0.2
  %v131 = vmul.f32 %v99, 0.2
  %v132 = vmul.f32 %v100, 0.2
  %v133 = vmul.f32 %v101, 0.2
  %v134 = vmul.f32 %v102, 0.2
  %v135 = vmul.f32 %v103, 0.2
  %v136 = vmul.f32 %v104, 0.2
  %v137 = vsel %vm105, %v89, %v121
  %v138 = vsel %vm106, %v90, %v122
  %v139 = vsel %vm107, %v91, %v123
  %v140 = vsel %vm108, %v92, %v124
  %v141 = vsel %vm109, %v93, %v125
  %v142 = vsel %vm110, %v94, %v126
  %v143 = vsel %vm111, %v95, %v127
  %v144 = vsel %vm112, %v96, %v128
  %v145 = vsel %vm113, %v97, %v129
  %v146 = vsel %vm114, %v98, %v130
  %v147 = vsel %vm115, %v99, %v131
  %v148 = vsel %vm116, %v100, %v132
  %v149 = vsel %vm117, %v101, %v133
  %v150 = vsel %vm118, %v102, %v134
  %v151 = vsel %vm119, %v103, %v135
  %v152 = vsel %vm120, %v104, %v136
  %v153 = vpack.c.bf16 %v138, %v137
  %v154 = vpack.c.bf16 %v140, %v139
  %v155 = vpack.c.bf16 %v142, %v141
  %v156 = vpack.c.bf16 %v144, %v143
  %v157 = vpack.c.bf16 %v146, %v145
  %v158 = vpack.c.bf16 %v148, %v147
  %v159 = vpack.c.bf16 %v150, %v149
  %v160 = vpack.c.bf16 %v152, %v151
  %v169 = vunpack.c.l.b16 %v153
  %v170 = vunpack.c.h.b16 %v153
  %v171 = vunpack.c.l.b16 %v154
  %v172 = vunpack.c.h.b16 %v154
  %v173 = vunpack.c.l.b16 %v155
  %v174 = vunpack.c.h.b16 %v155
  %v175 = vunpack.c.l.b16 %v156
  %v176 = vunpack.c.h.b16 %v156
  %v177 = vunpack.c.l.b16 %v157
  %v178 = vunpack.c.h.b16 %v157
  %v179 = vunpack.c.l.b16 %v158
  %v180 = vunpack.c.h.b16 %v158
  %v181 = vunpack.c.l.b16 %v159
  %v182 = vunpack.c.h.b16 %v159
  %v183 = vunpack.c.l.b16 %v160
  %v184 = vunpack.c.h.b16 %v160
  %v185 = vpack.c.b16 %v169, %v169
  %v186 = vpack.c.b16 %v170, %v170
  %v187 = vpack.c.b16 %v171, %v171
  %v188 = vpack.c.b16 %v172, %v172
  %v189 = vpack.c.b16 %v173, %v173
  %v190 = vpack.c.b16 %v174, %v174
  %v191 = vpack.c.b16 %v175, %v175
  %v192 = vpack.c.b16 %v176, %v176
  %v193 = vpack.c.b16 %v177, %v177
  %v194 = vpack.c.b16 %v178, %v178
  %v195 = vpack.c.b16 %v179, %v179
  %v196 = vpack.c.b16 %v180, %v180
  %v197 = vpack.c.b16 %v181, %v181
  %v198 = vpack.c.b16 %v182, %v182
  %v199 = vpack.c.b16 %v183, %v183
  %v200 = vpack.c.b16 %v184, %v184
  %217 = vst [vmem:[%s5] sm:$0xf] %v185
  %218 = vst [vmem:[%s5 + $0x4] sm:$0xf] %v186
  %219 = vst [vmem:[%s5 + $0x8] sm:$0xf] %v187
  %220 = vst [vmem:[%s5 + $0xc] sm:$0xf] %v188
  %221 = vst [vmem:[%s5 + $0x10] sm:$0xf] %v189
  %222 = vst [vmem:[%s5 + $0x14] sm:$0xf] %v190
  %223 = vst [vmem:[%s5 + $0x18] sm:$0xf] %v191
  %224 = vst [vmem:[%s5 + $0x1c] sm:$0xf] %v192
  %225 = vst [vmem:[%s5 + $0x20] sm:$0xf] %v193
  %226 = vst [vmem:[%s5 + $0x24] sm:$0xf] %v194
  %227 = vst [vmem:[%s5 + $0x28] sm:$0xf] %v195
  %228 = vst [vmem:[%s5 + $0x2c] sm:$0xf] %v196
  %229 = vst [vmem:[%s5 + $0x30] sm:$0xf] %v197
  %230 = vst [vmem:[%s5 + $0x34] sm:$0xf] %v198
  %231 = vst [vmem:[%s5 + $0x38] sm:$0xf] %v199
  %232 = vst [vmem:[%s5 + $0x3c] sm:$0xf] %v200
  // Predicated region
  $region22: #{discriminator_forward.31} parent=0 // pred_check
    _
  $region23: #{discriminator_forward.31} parent=0 // pred_check_branch
    %234 = sbr.rel (0) target = $region25
  $region24: #{discriminator_forward.31} parent=0 // pred_region
    _
  $region25: #{discriminator_forward.31} parent=0 // pred_fallthru
    _
  // Predicated region
  $region26: #{discriminator_forward.31} parent=0 // pred_check
    _
  $region27: #{discriminator_forward.31} parent=0 // pred_check_branch
    %236 = sbr.rel (0) target = $region29
  $region28: #{discriminator_forward.31} parent=0 // pred_region
    _
  $region29: #{discriminator_forward.31} parent=0 // pred_fallthru
    _

// kernel: discriminator_forward.47
$region0: #{discriminator_forward.47}
  #allocation0 [shape = 'u32[]', space=smem, size = 0x4, offset = 0x4, fixed_abs, tag = 'smem constant byte address 0x4 - core index']
  #allocation1 [shape = 'u32[144,128]{1,0:T(1,128)}', space=vmem, size = 0x12000, scoped, tag = 'internal scratch']
  %s0 = inlined_call_operand.vmem [shape: bf16[112,256], index: 0, kind: input, shape index: {}]
  %s1 = inlined_call_operand.vmem [shape: f32[1,256], index: 1, kind: output, shape index: {0}]
  %s2 = inlined_call_operand.vmem [shape: f32[1,256], index: 2, kind: output, shape index: {1}]
  %3 = xla_tuple %s1, %s2
  %s4 = sld [smem:[#allocation0]]
  $region30: #{discriminator_forward.47} parent=0
    _
  %s6 = ssub.s32 1, %s4
  %s7 = scalar_select 0, %s6, %s4
  // Predicated region
  $region2: #{discriminator_forward.47} parent=0 // pred_check
    _
  $region3: #{discriminator_forward.47} parent=0 // pred_check_branch
    %9 = sbr.rel (0) target = $region5
  $region4: #{discriminator_forward.47} parent=0 // pred_region
    _
  $region5: #{discriminator_forward.47} parent=0 // pred_fallthru
    _
  %p10 = scmp.eq.s32.totalorder 0, 0
  // Predicated region
  $region6: #{discriminator_forward.47} parent=0 // pred_check
    %p11 = pneg %p10
  $region7: #{discriminator_forward.47} parent=0 // pred_check_branch
    %13 = sbr.rel (%p11) target = $region9
  $region8: #{discriminator_forward.47} parent=0 // pred_region
    %v14 = vlaneseq
    %vm15 = vcmp.ge.s32.totalorder %v14, 0
    %vm16 = vcmp.lt.s32.totalorder %v14, 256
    %vm17 = vmand %vm15, %vm16
    %18 = vst.msk [vmem:[%s1] sm:$0x3] %vm17, 0.0
    %19 = vst.msk [vmem:[%s2] sm:$0x3] %vm17, 0.0
  $region9: #{discriminator_forward.47} parent=0 // pred_fallthru
    _
  %v20 = vld [vmem:[%s0] sm:$0xff]
  %v21 = vld [vmem:[%s0 + $0x8] sm:$0xff]
  %v22 = vld [vmem:[%s0 + $0x10] sm:$0xff]
  %v23 = vld [vmem:[%s0 + $0x18] sm:$0xff]
  %v24 = vld [vmem:[%s0 + $0x20] sm:$0xff]
  %v25 = vld [vmem:[%s0 + $0x28] sm:$0xff]
  %v26 = vld [vmem:[%s0 + $0x30] sm:$0xff]
  %v27 = vld [vmem:[%s0 + $0x38] sm:$0xff]
  %v28 = vld [vmem:[%s0 + $0x40] sm:$0xff]
  %v29 = vld [vmem:[%s0 + $0x48] sm:$0xff]
  %v30 = vld [vmem:[%s0 + $0x50] sm:$0xff]
  %v31 = vld [vmem:[%s0 + $0x58] sm:$0xff]
  %v32 = vld [vmem:[%s0 + $0x60] sm:$0xff]
  %v33 = vld [vmem:[%s0 + $0x68] sm:$0xff]
  %v34 = vunpack.c.l.bf16 %v20
  %v35 = vunpack.c.h.bf16 %v20
  %v36 = vunpack.c.l.bf16 %v21
  %v37 = vunpack.c.h.bf16 %v21
  %v38 = vunpack.c.l.bf16 %v22
  %v39 = vunpack.c.h.bf16 %v22
  %v40 = vunpack.c.l.bf16 %v23
  %v41 = vunpack.c.h.bf16 %v23
  %v42 = vunpack.c.l.bf16 %v24
  %v43 = vunpack.c.h.bf16 %v24
  %v44 = vunpack.c.l.bf16 %v25
  %v45 = vunpack.c.h.bf16 %v25
  %v46 = vunpack.c.l.bf16 %v26
  %v47 = vunpack.c.h.bf16 %v26
  %v48 = vunpack.c.l.bf16 %v27
  %v49 = vunpack.c.h.bf16 %v27
  %v50 = vunpack.c.l.bf16 %v28
  %v51 = vunpack.c.h.bf16 %v28
  %v52 = vunpack.c.l.bf16 %v29
  %v53 = vunpack.c.h.bf16 %v29
  %v54 = vunpack.c.l.bf16 %v30
  %v55 = vunpack.c.h.bf16 %v30
  %v56 = vunpack.c.l.bf16 %v31
  %v57 = vunpack.c.h.bf16 %v31
  %v58 = vunpack.c.l.bf16 %v32
  %v59 = vunpack.c.h.bf16 %v32
  %v60 = vunpack.c.l.bf16 %v33
  %v61 = vunpack.c.h.bf16 %v33
  %v62 = vld [vmem:[%s1] sm:$0x3]
  %v63 = vadd.f32 %v34, %v36
  %v64 = vadd.f32 %v63, %v38
  %v65 = vadd.f32 %v64, %v40
  %v66 = vadd.f32 %v65, %v42
  %v67 = vadd.f32 %v66, %v44
  %v68 = vadd.f32 %v67, %v46
  %v69 = vadd.f32 %v68, %v48
  %v70 = vadd.f32 %v69, %v50
  %v71 = vadd.f32 %v70, %v52
  %v72 = vadd.f32 %v71, %v54
  %v73 = vadd.f32 %v72, %v56
  %v74 = vadd.f32 %v73, %v58
  %v75 = vadd.f32 %v74, %v60
  %v76 = vrot.slane %v75, 4
  %v77 = vadd.f32 %v75, %v76
  %v78 = vrot.slane %v77, 2
  %v79 = vadd.f32 %v77, %v78
  %v80 = vrot.slane %v79, 1
  %v81 = vadd.f32 %v79, %v80
  %v82 = vadd.f32 %v35, %v37
  %v83 = vadd.f32 %v82, %v39
  %v84 = vadd.f32 %v83, %v41
  %v85 = vadd.f32 %v84, %v43
  %v86 = vadd.f32 %v85, %v45
  %v87 = vadd.f32 %v86, %v47
  %v88 = vadd.f32 %v87, %v49
  %v89 = vadd.f32 %v88, %v51
  %v90 = vadd.f32 %v89, %v53
  %v91 = vadd.f32 %v90, %v55
  %v92 = vadd.f32 %v91, %v57
  %v93 = vadd.f32 %v92, %v59
  %v94 = vadd.f32 %v93, %v61
  %v95 = vrot.slane %v94, 4
  %v96 = vadd.f32 %v94, %v95
  %v97 = vrot.slane %v96, 2
  %v98 = vadd.f32 %v96, %v97
  %v99 = vrot.slane %v98, 1
  %v100 = vadd.f32 %v98, %v99
  %v103 = vcombine.low %v81, %v100
  %v105 = vunpack.c.l.s4 1966171168
  %v106 = vunpack.c.0.s8 %v105
  %v107 = vlaneseq
  %v108 = vshrl.u32 %v107, 7
  %v109 = vsub.s32 %v106, %v108
  %v110 = vrot.slane %v103, %v109
  %v112 = vunpack.c.l.s4 1966171168
  %v113 = vunpack.c.0.s8 %v112
  %v114 = vlaneseq
  %v115 = vshrl.u32 %v114, 7
  %v116 = vsub.s32 %v113, %v115
  %v117 = vrot.slane %v110, %v116
  %v119 = vadd.f32 %v62, %v117
  %v120 = vlaneseq
  %vm121 = vcmp.ge.s32.totalorder %v120, 0
  %vm122 = vcmp.lt.s32.totalorder %v120, 256
  %vm123 = vmand %vm121, %vm122
  %124 = vst.msk [vmem:[%s1] sm:$0x3] %vm123, %v119
  %v125 = vld [vmem:[%s2] sm:$0x3]
  %v126 = vmul.f32 %v34, %v34
  %v127 = vmul.f32 %v35, %v35
  %v128 = vmul.f32 %v36, %v36
  %v129 = vmul.f32 %v37, %v37
  %v130 = vmul.f32 %v38, %v38
  %v131 = vmul.f32 %v39, %v39
  %v132 = vmul.f32 %v40, %v40
  %v133 = vmul.f32 %v41, %v41
  %v134 = vmul.f32 %v42, %v42
  %v135 = vmul.f32 %v43, %v43
  %v136 = vmul.f32 %v44, %v44
  %v137 = vmul.f32 %v45, %v45
  %v138 = vmul.f32 %v46, %v46
  %v139 = vmul.f32 %v47, %v47
  %v140 = vmul.f32 %v48, %v48
  %v141 = vmul.f32 %v49, %v49
  %v142 = vmul.f32 %v50, %v50
  %v143 = vmul.f32 %v51, %v51
  %v144 = vmul.f32 %v52, %v52
  %v145 = vmul.f32 %v53, %v53
  %v146 = vmul.f32 %v54, %v54
  %v147 = vmul.f32 %v55, %v55
  %v148 = vmul.f32 %v56, %v56
  %v149 = vmul.f32 %v57, %v57
  %v150 = vmul.f32 %v58, %v58
  %v151 = vmul.f32 %v59, %v59
  %v152 = vmul.f32 %v60, %v60
  %v153 = vmul.f32 %v61, %v61
  %v154 = vadd.f32 %v126, %v128
  %v155 = vadd.f32 %v154, %v130
  %v156 = vadd.f32 %v155, %v132
  %v157 = vadd.f32 %v156, %v134
  %v158 = vadd.f32 %v157, %v136
  %v159 = vadd.f32 %v158, %v138
  %v160 = vadd.f32 %v159, %v140
  %v161 = vadd.f32 %v160, %v142
  %v162 = vadd.f32 %v161, %v144
  %v163 = vadd.f32 %v162, %v146
  %v164 = vadd.f32 %v163, %v148
  %v165 = vadd.f32 %v164, %v150
  %v166 = vadd.f32 %v165, %v152
  %v167 = vrot.slane %v166, 4
  %v168 = vadd.f32 %v166, %v167
  %v169 = vrot.slane %v168, 2
  %v170 = vadd.f32 %v168, %v169
  %v171 = vrot.slane %v170, 1
  %v172 = vadd.f32 %v170, %v171
  %v173 = vadd.f32 %v127, %v129
  %v174 = vadd.f32 %v173, %v131
  %v175 = vadd.f32 %v174, %v133
  %v176 = vadd.f32 %v175, %v135
  %v177 = vadd.f32 %v176, %v137
  %v178 = vadd.f32 %v177, %v139
  %v179 = vadd.f32 %v178, %v141
  %v180 = vadd.f32 %v179, %v143
  %v181 = vadd.f32 %v180, %v145
  %v182 = vadd.f32 %v181, %v147
  %v183 = vadd.f32 %v182, %v149
  %v184 = vadd.f32 %v183, %v151
  %v185 = vadd.f32 %v184, %v153
  %v186 = vrot.slane %v185, 4
  %v187 = vadd.f32 %v185, %v186
  %v188 = vrot.slane %v187, 2
  %v189 = vadd.f32 %v187, %v188
  %v190 = vrot.slane %v189, 1
  %v191 = vadd.f32 %v189, %v190
  %v194 = vcombine.low %v172, %v191
  %v196 = vunpack.c.l.s4 1966171168
  %v197 = vunpack.c.0.s8 %v196
  %v198 = vlaneseq
  %v199 = vshrl.u32 %v198, 7
  %v200 = vsub.s32 %v197, %v199
  %v201 = vrot.slane %v194, %v200
  %v203 = vunpack.c.l.s4 1966171168
  %v204 = vunpack.c.0.s8 %v203
  %v205 = vlaneseq
  %v206 = vshrl.u32 %v205, 7
  %v207 = vsub.s32 %v204, %v206
  %v208 = vrot.slane %v201, %v207
  %v210 = vadd.f32 %v125, %v208
  %211 = vst.msk [vmem:[%s2] sm:$0x3] %vm123, %v210
  // Predicated region
  $region10: #{discriminator_forward.47} parent=0 // pred_check
    %p212 = pneg %p10
  $region11: #{discriminator_forward.47} parent=0 // pred_check_branch
    %214 = sbr.rel (%p212) target = $region13
  $region12: #{discriminator_forward.47} parent=0 // pred_region
    %v215 = vld [vmem:[%s1] sm:$0x3]
    %v216 = vmul.f32 %v215, 0.010204081
    %v217 = vld [vmem:[%s2] sm:$0x3]
    %v218 = vmul.f32 %v217, 0.010204081
    %v219 = vmul.f32 %v216, %v216
    %v220 = vsub.f32 %v218, %v219
    %v221 = vmax.f32 %v220, 0.0
    %222 = vst.msk [vmem:[%s1] sm:$0x3] %vm123, %v216
    %223 = vst.msk [vmem:[%s2] sm:$0x3] %vm123, %v221
  $region13: #{discriminator_forward.47} parent=0 // pred_fallthru
    _
  // Predicated region
  $region14: #{discriminator_forward.47} parent=0 // pred_check
    _
  $region15: #{discriminator_forward.47} parent=0 // pred_check_branch
    %225 = sbr.rel (0) target = $region17
  $region16: #{discriminator_forward.47} parent=0 // pred_region
    _
  $region17: #{discriminator_forward.47} parent=0 // pred_fallthru
    _
  // Predicated region
  $region18: #{discriminator_forward.47} parent=0 // pred_check
    _
  $region19: #{discriminator_forward.47} parent=0 // pred_check_branch
    %227 = sbr.rel (0) target = $region21
  $region20: #{discriminator_forward.47} parent=0 // pred_region
    _
  $region21: #{discriminator_forward.47} parent=0 // pred_fallthru
    _
  // Predicated region
  $region22: #{discriminator_forward.47} parent=0 // pred_check
    _
  $region23: #{discriminator_forward.47} parent=0 // pred_check_branch
    %229 = sbr.rel (0) target = $region25
  $region24: #{discriminator_forward.47} parent=0 // pred_region
    _
  $region25: #{discriminator_forward.47} parent=0 // pred_fallthru
    _
  // Predicated region
  $region26: #{discriminator_forward.47} parent=0 // pred_check
    _
  $region27: #{discriminator_forward.47} parent=0 // pred_check_branch
    %231 = sbr.rel (0) target = $region29
  $region28: #{discriminator_forward.47} parent=0 // pred_region
    _
  $region29: #{discriminator_forward.47} parent=0 // pred_fallthru
    _

// kernel: discriminator_forward.48
$region0: #{discriminator_forward.48}
  #allocation0 [shape = 'u32[]', space=smem, size = 0x4, offset = 0x4, fixed_abs, tag = 'smem constant byte address 0x4 - core index']
  #allocation1 [shape = 'u32[144,128]{1,0:T(1,128)}', space=vmem, size = 0x12000, scoped, tag = 'internal scratch']
  %s0 = inlined_call_operand.vmem [shape: bf16[112,256], index: 0, kind: input, shape index: {}]
  %s1 = inlined_call_operand.vmem [shape: f32[1,256], index: 1, kind: input, shape index: {}]
  %s2 = inlined_call_operand.vmem [shape: f32[1,256], index: 2, kind: input, shape index: {}]
  %s3 = inlined_call_operand.vmem [shape: f32[1,256], index: 3, kind: input, shape index: {}]
  %s4 = inlined_call_operand.vmem [shape: f32[1,256], index: 4, kind: input, shape index: {}]
  %s5 = inlined_call_operand.vmem [shape: bf16[112,256], index: 5, kind: output, shape index: {}]
  %s6 = sld [smem:[#allocation0]]
  $region30: #{discriminator_forward.48} parent=0
    _
  %s8 = ssub.s32 1, %s6
  %s9 = scalar_select 0, %s8, %s6
  // Predicated region
  $region2: #{discriminator_forward.48} parent=0 // pred_check
    _
  $region3: #{discriminator_forward.48} parent=0 // pred_check_branch
    %11 = sbr.rel (0) target = $region5
  $region4: #{discriminator_forward.48} parent=0 // pred_region
    _
  $region5: #{discriminator_forward.48} parent=0 // pred_fallthru
    _
  // Predicated region
  $region6: #{discriminator_forward.48} parent=0 // pred_check
    _
  $region7: #{discriminator_forward.48} parent=0 // pred_check_branch
    %13 = sbr.rel (0) target = $region9
  $region8: #{discriminator_forward.48} parent=0 // pred_region
    _
  $region9: #{discriminator_forward.48} parent=0 // pred_fallthru
    _
  // Predicated region
  $region10: #{discriminator_forward.48} parent=0 // pred_check
    _
  $region11: #{discriminator_forward.48} parent=0 // pred_check_branch
    %15 = sbr.rel (0) target = $region13
  $region12: #{discriminator_forward.48} parent=0 // pred_region
    _
  $region13: #{discriminator_forward.48} parent=0 // pred_fallthru
    _
  // Predicated region
  $region14: #{discriminator_forward.48} parent=0 // pred_check
    _
  $region15: #{discriminator_forward.48} parent=0 // pred_check_branch
    %17 = sbr.rel (0) target = $region17
  $region16: #{discriminator_forward.48} parent=0 // pred_region
    _
  $region17: #{discriminator_forward.48} parent=0 // pred_fallthru
    _
  // Predicated region
  $region18: #{discriminator_forward.48} parent=0 // pred_check
    _
  $region19: #{discriminator_forward.48} parent=0 // pred_check_branch
    %19 = sbr.rel (0) target = $region21
  $region20: #{discriminator_forward.48} parent=0 // pred_region
    _
  $region21: #{discriminator_forward.48} parent=0 // pred_fallthru
    _
  %v20 = vld [vmem:[%s3] sm:$0x3]
  %v21 = vld [vmem:[%s2] sm:$0x3]
  %v22 = vadd.f32 %v21, 1e-05
  %v23 = vrsqrt.pop %v22
  %v24 = vmul.f32 %v20, %v23
  %v25 = vld [vmem:[%s4] sm:$0x3]
  %v26 = vld [vmem:[%s1] sm:$0x3]
  %v27 = vmul.f32 %v26, %v24
  %v28 = vsub.f32 %v25, %v27
  %v29 = vld [vmem:[%s0] sm:$0xff]
  %v30 = vld [vmem:[%s0 + $0x8] sm:$0xff]
  %v31 = vld [vmem:[%s0 + $0x10] sm:$0xff]
  %v32 = vld [vmem:[%s0 + $0x18] sm:$0xff]
  %v33 = vld [vmem:[%s0 + $0x20] sm:$0xff]
  %v34 = vld [vmem:[%s0 + $0x28] sm:$0xff]
  %v35 = vld [vmem:[%s0 + $0x30] sm:$0xff]
  %v36 = vld [vmem:[%s0 + $0x38] sm:$0xff]
  %v37 = vld [vmem:[%s0 + $0x40] sm:$0xff]
  %v38 = vld [vmem:[%s0 + $0x48] sm:$0xff]
  %v39 = vld [vmem:[%s0 + $0x50] sm:$0xff]
  %v40 = vld [vmem:[%s0 + $0x58] sm:$0xff]
  %v41 = vld [vmem:[%s0 + $0x60] sm:$0xff]
  %v42 = vld [vmem:[%s0 + $0x68] sm:$0xff]
  %v43 = vunpack.c.l.bf16 %v29
  %v44 = vunpack.c.h.bf16 %v29
  %v45 = vunpack.c.l.bf16 %v30
  %v46 = vunpack.c.h.bf16 %v30
  %v47 = vunpack.c.l.bf16 %v31
  %v48 = vunpack.c.h.bf16 %v31
  %v49 = vunpack.c.l.bf16 %v32
  %v50 = vunpack.c.h.bf16 %v32
  %v51 = vunpack.c.l.bf16 %v33
  %v52 = vunpack.c.h.bf16 %v33
  %v53 = vunpack.c.l.bf16 %v34
  %v54 = vunpack.c.h.bf16 %v34
  %v55 = vunpack.c.l.bf16 %v35
  %v56 = vunpack.c.h.bf16 %v35
  %v57 = vunpack.c.l.bf16 %v36
  %v58 = vunpack.c.h.bf16 %v36
  %v59 = vunpack.c.l.bf16 %v37
  %v60 = vunpack.c.h.bf16 %v37
  %v61 = vunpack.c.l.bf16 %v38
  %v62 = vunpack.c.h.bf16 %v38
  %v63 = vunpack.c.l.bf16 %v39
  %v64 = vunpack.c.h.bf16 %v39
  %v65 = vunpack.c.l.bf16 %v40
  %v66 = vunpack.c.h.bf16 %v40
  %v67 = vunpack.c.l.bf16 %v41
  %v68 = vunpack.c.h.bf16 %v41
  %v69 = vunpack.c.l.bf16 %v42
  %v70 = vunpack.c.h.bf16 %v42
  %v72 = vlaneseq
  %v73 = vshrl.u32 %v72, 7
  %v74 = vsub.s32 0, %v73
  %v75 = vrot.slane %v24, %v74
  %v76 = vlaneseq
  %v77 = vshrl.u32 %v76, 7
  %v78 = vsub.s32 1, %v77
  %v79 = vrot.slane %v24, %v78
  %v82 = vmul.f32 %v43, %v75
  %v83 = vmul.f32 %v44, %v79
  %v84 = vmul.f32 %v45, %v75
  %v85 = vmul.f32 %v46, %v79
  %v86 = vmul.f32 %v47, %v75
  %v87 = vmul.f32 %v48, %v79
  %v88 = vmul.f32 %v49, %v75
  %v89 = vmul.f32 %v50, %v79
  %v90 = vmul.f32 %v51, %v75
  %v91 = vmul.f32 %v52, %v79
  %v92 = vmul.f32 %v53, %v75
  %v93 = vmul.f32 %v54, %v79
  %v94 = vmul.f32 %v55, %v75
  %v95 = vmul.f32 %v56, %v79
  %v96 = vmul.f32 %v57, %v75
  %v97 = vmul.f32 %v58, %v79
  %v98 = vmul.f32 %v59, %v75
  %v99 = vmul.f32 %v60, %v79
  %v100 = vmul.f32 %v61, %v75
  %v101 = vmul.f32 %v62, %v79
  %v102 = vmul.f32 %v63, %v75
  %v103 = vmul.f32 %v64, %v79
  %v104 = vmul.f32 %v65, %v75
  %v105 = vmul.f32 %v66, %v79
  %v106 = vmul.f32 %v67, %v75
  %v107 = vmul.f32 %v68, %v79
  %v108 = vmul.f32 %v69, %v75
  %v109 = vmul.f32 %v70, %v79
  %v111 = vlaneseq
  %v112 = vshrl.u32 %v111, 7
  %v113 = vsub.s32 0, %v112
  %v114 = vrot.slane %v28, %v113
  %v115 = vlaneseq
  %v116 = vshrl.u32 %v115, 7
  %v117 = vsub.s32 1, %v116
  %v118 = vrot.slane %v28, %v117
  %v121 = vadd.f32 %v82, %v114
  %v122 = vadd.f32 %v83, %v118
  %v123 = vadd.f32 %v84, %v114
  %v124 = vadd.f32 %v85, %v118
  %v125 = vadd.f32 %v86, %v114
  %v126 = vadd.f32 %v87, %v118
  %v127 = vadd.f32 %v88, %v114
  %v128 = vadd.f32 %v89, %v118
  %v129 = vadd.f32 %v90, %v114
  %v130 = vadd.f32 %v91, %v118
  %v131 = vadd.f32 %v92, %v114
  %v132 = vadd.f32 %v93, %v118
  %v133 = vadd.f32 %v94, %v114
  %v134 = vadd.f32 %v95, %v118
  %v135 = vadd.f32 %v96, %v114
  %v136 = vadd.f32 %v97, %v118
  %v137 = vadd.f32 %v98, %v114
  %v138 = vadd.f32 %v99, %v118
  %v139 = vadd.f32 %v100, %v114
  %v140 = vadd.f32 %v101, %v118
  %v141 = vadd.f32 %v102, %v114
  %v142 = vadd.f32 %v103, %v118
  %v143 = vadd.f32 %v104, %v114
  %v144 = vadd.f32 %v105, %v118
  %v145 = vadd.f32 %v106, %v114
  %v146 = vadd.f32 %v107, %v118
  %v147 = vadd.f32 %v108, %v114
  %v148 = vadd.f32 %v109, %v118
  %vm149 = vcmp.ge.f32.partialorder %v121, 0.0
  %vm150 = vcmp.ge.f32.partialorder %v122, 0.0
  %vm151 = vcmp.ge.f32.partialorder %v123, 0.0
  %vm152 = vcmp.ge.f32.partialorder %v124, 0.0
  %vm153 = vcmp.ge.f32.partialorder %v125, 0.0
  %vm154 = vcmp.ge.f32.partialorder %v126, 0.0
  %vm155 = vcmp.ge.f32.partialorder %v127, 0.0
  %vm156 = vcmp.ge.f32.partialorder %v128, 0.0
  %vm157 = vcmp.ge.f32.partialorder %v129, 0.0
  %vm158 = vcmp.ge.f32.partialorder %v130, 0.0
  %vm159 = vcmp.ge.f32.partialorder %v131, 0.0
  %vm160 = vcmp.ge.f32.partialorder %v132, 0.0
  %vm161 = vcmp.ge.f32.partialorder %v133, 0.0
  %vm162 = vcmp.ge.f32.partialorder %v134, 0.0
  %vm163 = vcmp.ge.f32.partialorder %v135, 0.0
  %vm164 = vcmp.ge.f32.partialorder %v136, 0.0
  %vm165 = vcmp.ge.f32.partialorder %v137, 0.0
  %vm166 = vcmp.ge.f32.partialorder %v138, 0.0
  %vm167 = vcmp.ge.f32.partialorder %v139, 0.0
  %vm168 = vcmp.ge.f32.partialorder %v140, 0.0
  %vm169 = vcmp.ge.f32.partialorder %v141, 0.0
  %vm170 = vcmp.ge.f32.partialorder %v142, 0.0
  %vm171 = vcmp.ge.f32.partialorder %v143, 0.0
  %vm172 = vcmp.ge.f32.partialorder %v144, 0.0
  %vm173 = vcmp.ge.f32.partialorder %v145, 0.0
  %vm174 = vcmp.ge.f32.partialorder %v146, 0.0
  %vm175 = vcmp.ge.f32.partialorder %v147, 0.0
  %vm176 = vcmp.ge.f32.partialorder %v148, 0.0
  %v177 = vmul.f32 %v121, 0.2
  %v178 = vmul.f32 %v122, 0.2
  %v179 = vmul.f32 %v123, 0.2
  %v180 = vmul.f32 %v124, 0.2
  %v181 = vmul.f32 %v125, 0.2
  %v182 = vmul.f32 %v126, 0.2
  %v183 = vmul.f32 %v127, 0.2
  %v184 = vmul.f32 %v128, 0.2
  %v185 = vmul.f32 %v129, 0.2
  %v186 = vmul.f32 %v130, 0.2
  %v187 = vmul.f32 %v131, 0.2
  %v188 = vmul.f32 %v132, 0.2
  %v189 = vmul.f32 %v133, 0.2
  %v190 = vmul.f32 %v134, 0.2
  %v191 = vmul.f32 %v135, 0.2
  %v192 = vmul.f32 %v136, 0.2
  %v193 = vmul.f32 %v137, 0.2
  %v194 = vmul.f32 %v138, 0.2
  %v195 = vmul.f32 %v139, 0.2
  %v196 = vmul.f32 %v140, 0.2
  %v197 = vmul.f32 %v141, 0.2
  %v198 = vmul.f32 %v142, 0.2
  %v199 = vmul.f32 %v143, 0.2
  %v200 = vmul.f32 %v144, 0.2
  %v201 = vmul.f32 %v145, 0.2
  %v202 = vmul.f32 %v146, 0.2
  %v203 = vmul.f32 %v147, 0.2
  %v204 = vmul.f32 %v148, 0.2
  %v205 = vsel %vm149, %v121, %v177
  %v206 = vsel %vm150, %v122, %v178
  %v207 = vsel %vm151, %v123, %v179
  %v208 = vsel %vm152, %v124, %v180
  %v209 = vsel %vm153, %v125, %v181
  %v210 = vsel %vm154, %v126, %v182
  %v211 = vsel %vm155, %v127, %v183
  %v212 = vsel %vm156, %v128, %v184
  %v213 = vsel %vm157, %v129, %v185
  %v214 = vsel %vm158, %v130, %v186
  %v215 = vsel %vm159, %v131, %v187
  %v216 = vsel %vm160, %v132, %v188
  %v217 = vsel %vm161, %v133, %v189
  %v218 = vsel %vm162, %v134, %v190
  %v219 = vsel %vm163, %v135, %v191
  %v220 = vsel %vm164, %v136, %v192
  %v221 = vsel %vm165, %v137, %v193
  %v222 = vsel %vm166, %v138, %v194
  %v223 = vsel %vm167, %v139, %v195
  %v224 = vsel %vm168, %v140, %v196
  %v225 = vsel %vm169, %v141, %v197
  %v226 = vsel %vm170, %v142, %v198
  %v227 = vsel %vm171, %v143, %v199
  %v228 = vsel %vm172, %v144, %v200
  %v229 = vsel %vm173, %v145, %v201
  %v230 = vsel %vm174, %v146, %v202
  %v231 = vsel %vm175, %v147, %v203
  %v232 = vsel %vm176, %v148, %v204
  %v233 = vpack.c.bf16 %v207, %v205
  %v234 = vpack.c.bf16 %v208, %v206
  %v235 = vpack.c.bf16 %v211, %v209
  %v236 = vpack.c.bf16 %v212, %v210
  %v237 = vpack.c.bf16 %v215, %v213
  %v238 = vpack.c.bf16 %v216, %v214
  %v239 = vpack.c.bf16 %v219, %v217
  %v240 = vpack.c.bf16 %v220, %v218
  %v241 = vpack.c.bf16 %v223, %v221
  %v242 = vpack.c.bf16 %v224, %v222
  %v243 = vpack.c.bf16 %v227, %v225
  %v244 = vpack.c.bf16 %v228, %v226
  %v245 = vpack.c.bf16 %v231, %v229
  %v246 = vpack.c.bf16 %v232, %v230
  %v261 = vunpack.c.l.b16 %v233
  %v262 = vunpack.c.l.b16 %v234
  %v263 = vunpack.c.h.b16 %v233
  %v264 = vunpack.c.h.b16 %v234
  %v265 = vunpack.c.l.b16 %v235
  %v266 = vunpack.c.l.b16 %v236
  %v267 = vunpack.c.h.b16 %v235
  %v268 = vunpack.c.h.b16 %v236
  %v269 = vunpack.c.l.b16 %v237
  %v270 = vunpack.c.l.b16 %v238
  %v271 = vunpack.c.h.b16 %v237
  %v272 = vunpack.c.h.b16 %v238
  %v273 = vunpack.c.l.b16 %v239
  %v274 = vunpack.c.l.b16 %v240
  %v275 = vunpack.c.h.b16 %v239
  %v276 = vunpack.c.h.b16 %v240
  %v277 = vunpack.c.l.b16 %v241
  %v278 = vunpack.c.l.b16 %v242
  %v279 = vunpack.c.h.b16 %v241
  %v280 = vunpack.c.h.b16 %v242
  %v281 = vunpack.c.l.b16 %v243
  %v282 = vunpack.c.l.b16 %v244
  %v283 = vunpack.c.h.b16 %v243
  %v284 = vunpack.c.h.b16 %v244
  %v285 = vunpack.c.l.b16 %v245
  %v286 = vunpack.c.l.b16 %v246
  %v287 = vunpack.c.h.b16 %v245
  %v288 = vunpack.c.h.b16 %v246
  %v289 = vpack.c.b16 %v262, %v261
  %v290 = vpack.c.b16 %v264, %v263
  %v291 = vpack.c.b16 %v266, %v265
  %v292 = vpack.c.b16 %v268, %v267
  %v293 = vpack.c.b16 %v270, %v269
  %v294 = vpack.c.b16 %v272, %v271
  %v295 = vpack.c.b16 %v274, %v273
  %v296 = vpack.c.b16 %v276, %v275
  %v297 = vpack.c.b16 %v278, %v277
  %v298 = vpack.c.b16 %v280, %v279
  %v299 = vpack.c.b16 %v282, %v281
  %v300 = vpack.c.b16 %v284, %v283
  %v301 = vpack.c.b16 %v286, %v285
  %v302 = vpack.c.b16 %v288, %v287
  %317 = vst [vmem:[%s5] sm:$0xff] %v289
  %318 = vst [vmem:[%s5 + $0x8] sm:$0xff] %v290
  %319 = vst [vmem:[%s5 + $0x10] sm:$0xff] %v291
  %320 = vst [vmem:[%s5 + $0x18] sm:$0xff] %v292
  %321 = vst [vmem:[%s5 + $0x20] sm:$0xff] %v293
  %322 = vst [vmem:[%s5 + $0x28] sm:$0xff] %v294
  %323 = vst [vmem:[%s5 + $0x30] sm:$0xff] %v295
  %324 = vst [vmem:[%s5 + $0x38] sm:$0xff] %v296
  %325 = vst [vmem:[%s5 + $0x40] sm:$0xff] %v297
  %326 = vst [vmem:[%s5 + $0x48] sm:$0xff] %v298
  %327 = vst [vmem:[%s5 + $0x50] sm:$0xff] %v299
  %328 = vst [vmem:[%s5 + $0x58] sm:$0xff] %v300
  %329 = vst [vmem:[%s5 + $0x60] sm:$0xff] %v301
  %330 = vst [vmem:[%s5 + $0x68] sm:$0xff] %v302
  // Predicated region
  $region22: #{discriminator_forward.48} parent=0 // pred_check
    _
  $region23: #{discriminator_forward.48} parent=0 // pred_check_branch
    %332 = sbr.rel (0) target = $region25
  $region24: #{discriminator_forward.48} parent=0 // pred_region
    _
  $region25: #{discriminator_forward.48} parent=0 // pred_fallthru
    _
  // Predicated region
  $region26: #{discriminator_forward.48} parent=0 // pred_check
    _
  $region27: #{discriminator_forward.48} parent=0 // pred_check_branch
    %334 = sbr.rel (0) target = $region29
  $region28: #{discriminator_forward.48} parent=0 // pred_region
    _
  $region29: #{discriminator_forward.48} parent=0 // pred_fallthru
    _

// kernel: discriminator_forward.46
$region0: #{discriminator_forward.46}
  #allocation0 [shape = 'u32[]', space=smem, size = 0x4, offset = 0x4, fixed_abs, tag = 'smem constant byte address 0x4 - core index']
  #allocation1 [shape = 'u32[144,128]{1,0:T(1,128)}', space=vmem, size = 0x12000, scoped, tag = 'internal scratch']
  #allocation2 [shape = 'f32[112,256]{1,0:T(8,128)}', space=vmem, size = 0x1c000, scoped, tag = 'scratch operand']
  #allocation3 [shape = 'f32[1,1]{1,0:T(1,128)S(6)}', space=smem, size = 0x200, scoped, tag = 'scoped memory for discriminator_forward.46']
  %s0 = inlined_call_operand.<no memory space> [shape: f32[1,1], index: 0, kind: input, shape index: {}]
  %s1 = inlined_call_operand.vmem [shape: bf16[112,4096], index: 1, kind: input, shape index: {}]
  %s2 = inlined_call_operand.vmem [shape: bf16[4096,256], index: 2, kind: input, shape index: {}]
  %s3 = inlined_call_operand.vmem [shape: f32[1,256], index: 3, kind: input, shape index: {}]
  %s4 = inlined_call_operand.vmem [shape: bf16[112,256], index: 4, kind: output, shape index: {}]
  %s5 = sld [smem:[#allocation0]]
  $region80: #{discriminator_forward.46} parent=0
    _
  %s7 = ssub.s32 1, %s5
  %s8 = scalar_select 0, %s7, %s5
  %9 = sst [smem:[#allocation3]] %s0
  $region1: #{discriminator_forward.46} parent=0
    #allocation4 [shape = 'u8[229376]{0}', space=vmem, size = 0x38000, scoped, tag = 'input window, operand 1']
    loop: start=0, step=1, limit=10
    $region2: #{discriminator_forward.46} parent=1 // loop_pre_header
      _
    $region3: #{discriminator_forward.46} parent=1 // loop_header
      %s11 = sphi 0, %s15
      %p12 = scmp.ge.s32.totalorder %s11, 10
      %s18 = sphi 0, %s37
      %s19 = sphi 0, %s33
      %s20 = sphi 0, %s29
      %s21 = sphi 0, %s18
      %s22 = sphi 0, %s19
      %s23 = sphi 0, %s20
      %s24 = sphi 0, %s21
      %s25 = sphi 0, %s22
      %s26 = sphi 0, %s23
      %s38 = sphi 0, %s38
      %s40 = sphi 0, %s38
      %s41 = sphi 0, %s40
      %s55 = sphi 0, %s41
      %s63 = sphi 0, %s65
      %s66 = sphi 0, %s63
      %s67 = sphi 0, %s66
      %s83 = sphi 0, %s67
      %s91 = sphi 0, %s93
      %s94 = sphi 0, %s91
      %s95 = sphi 0, %s94
      %s111 = sphi 0, %s95
      %s117 = sphi 0, %s119
      %s120 = sphi 0, %s117
      %s121 = sphi 0, %s120
      %s137 = sphi 0, %s121
      %s145 = sphi 0, %s147
      %s148 = sphi 0, %s145
      %s149 = sphi 0, %s148
      %s165 = sphi 0, %s149
    $region4: #{discriminator_forward.46} parent=1 // loop_header_branch
      %14 = sbr.rel (%p12) target = $region8
    $region5: #{discriminator_forward.46} parent=1 // loop_body
      %s16 = ssub.s32 %s11, 1
      %s17 = ssub.s32 %s11, 2
      %s27 = sadd.s32 1, %s20
      %p28 = scmp.ge.s32.totalorder %s27, 8
      %s29 = scalar_select %p28, 0, %s27
      %s30 = sadd.s32 1, %s19
      %s31 = scalar_select %p28, %s30, %s19
      %p32 = scmp.ge.s32.totalorder %s31, 1
      %s33 = scalar_select %p32, 0, %s31
      %s34 = sadd.s32 1, %s18
      %s35 = scalar_select %p32, %s34, %s18
      %p36 = scmp.ge.s32.totalorder %s35, 1
      %s37 = scalar_select %p36, 0, %s35
      %s39 = sadd.s32 %s38, 1
      %p42 = scmp.eq.s32.totalorder %s11, 7
      %p43 = scmp.ne.s32.totalorder %s38, %s40
      %p44 = scmp.eq.s32.totalorder %s11, 0
      %p45 = por %p43, %p44
      %p46 = scmp.ne.s32.totalorder %s38, %s40
      %p47 = scmp.eq.s32.totalorder %s16, 7
      %p48 = por %p46, %p47
      %p49 = scmp.ne.s32.totalorder %s40, %s41
      %p50 = scmp.eq.s32.totalorder %s16, 0
      %p51 = por %p49, %p50
      %p52 = scmp.ne.s32.totalorder %s40, %s41
      %p53 = scmp.eq.s32.totalorder %s17, 7
      %p54 = por %p52, %p53
      %p56 = scmp.ne.s32.totalorder %s41, %s55
      %p57 = scmp.eq.s32.totalorder %s17, 0
      %p58 = por %p56, %p57
      %s59 = ssub.s32 %s18, %s37
      %s60 = ssub.s32 %s20, %s29
      %s61 = sor.u32 %s59, %s60
      %p62 = scmp.eq.s32.totalorder %s61, 0
      %s64 = sadd.s32 %s63, 1
      %s65 = scalar_select %p62, %s63, %s64
      %p68 = pneg %p62
      %p69 = scmp.eq.s32.totalorder %s11, 7
      %p70 = por %p68, %p69
      %p71 = scmp.ne.s32.totalorder %s63, %s66
      %p72 = scmp.eq.s32.totalorder %s11, 0
      %p73 = por %p71, %p72
      %p74 = scmp.ne.s32.totalorder %s63, %s66
      %p75 = scmp.eq.s32.totalorder %s16, 7
      %p76 = por %p74, %p75
      %p77 = scmp.ne.s32.totalorder %s66, %s67
      %p78 = scmp.eq.s32.totalorder %s16, 0
      %p79 = por %p77, %p78
      %p80 = scmp.ne.s32.totalorder %s66, %s67
      %p81 = scmp.eq.s32.totalorder %s17, 7
      %p82 = por %p80, %p81
      %p84 = scmp.ne.s32.totalorder %s67, %s83
      %p85 = scmp.eq.s32.totalorder %s17, 0
      %p86 = por %p84, %p85
      %s87 = ssub.s32 %s20, %s29
      %s88 = ssub.s32 %s19, %s33
      %s89 = sor.u32 %s87, %s88
      %p90 = scmp.eq.s32.totalorder %s89, 0
      %s92 = sadd.s32 %s91, 1
      %s93 = scalar_select %p90, %s91, %s92
      %p96 = pneg %p90
      %p97 = scmp.eq.s32.totalorder %s11, 7
      %p98 = por %p96, %p97
      %p99 = scmp.ne.s32.totalorder %s91, %s94
      %p100 = scmp.eq.s32.totalorder %s11, 0
      %p101 = por %p99, %p100
      %p102 = scmp.ne.s32.totalorder %s91, %s94
      %p103 = scmp.eq.s32.totalorder %s16, 7
      %p104 = por %p102, %p103
      %p105 = scmp.ne.s32.totalorder %s94, %s95
      %p106 = scmp.eq.s32.totalorder %s16, 0
      %p107 = por %p105, %p106
      %p108 = scmp.ne.s32.totalorder %s94, %s95
      %p109 = scmp.eq.s32.totalorder %s17, 7
      %p110 = por %p108, %p109
      %p112 = scmp.ne.s32.totalorder %s95, %s111
      %p113 = scmp.eq.s32.totalorder %s17, 0
      %p114 = por %p112, %p113
      %s115 = ssub.s32 %s19, %s33
      %p116 = scmp.eq.s32.totalorder %s115, 0
      %s118 = sadd.s32 %s117, 1
      %s119 = scalar_select %p116, %s117, %s118
      %p122 = pneg %p116
      %p123 = scmp.eq.s32.totalorder %s11, 7
      %p124 = por %p122, %p123
      %p125 = scmp.ne.s32.totalorder %s117, %s120
      %p126 = scmp.eq.s32.totalorder %s11, 0
      %p127 = por %p125, %p126
      %p128 = scmp.ne.s32.totalorder %s117, %s120
      %p129 = scmp.eq.s32.totalorder %s16, 7
      %p130 = por %p128, %p129
      %p131 = scmp.ne.s32.totalorder %s120, %s121
      %p132 = scmp.eq.s32.totalorder %s16, 0
      %p133 = por %p131, %p132
      %p134 = scmp.ne.s32.totalorder %s120, %s121
      %p135 = scmp.eq.s32.totalorder %s17, 7
      %p136 = por %p134, %p135
      %p138 = scmp.ne.s32.totalorder %s121, %s137
      %p139 = scmp.eq.s32.totalorder %s17, 0
      %p140 = por %p138, %p139
      %s141 = ssub.s32 %s18, %s37
      %s142 = ssub.s32 %s19, %s33
      %s143 = sor.u32 %s141, %s142
      %p144 = scmp.eq.s32.totalorder %s143, 0
      %s146 = sadd.s32 %s145, 1
      %s147 = scalar_select %p144, %s145, %s146
      %p150 = pneg %p144
      %p151 = scmp.eq.s32.totalorder %s11, 7
      %p152 = por %p150, %p151
      %p153 = scmp.ne.s32.totalorder %s145, %s148
      %p154 = scmp.eq.s32.totalorder %s11, 0
      %p155 = por %p153, %p154
      %p156 = scmp.ne.s32.totalorder %s145, %s148
      %p157 = scmp.eq.s32.totalorder %s16, 7
      %p158 = por %p156, %p157
      %p159 = scmp.ne.s32.totalorder %s148, %s149
      %p160 = scmp.eq.s32.totalorder %s16, 0
      %p161 = por %p159, %p160
      %p162 = scmp.ne.s32.totalorder %s148, %s149
      %p163 = scmp.eq.s32.totalorder %s17, 7
      %p164 = por %p162, %p163
      %p166 = scmp.ne.s32.totalorder %s149, %s165
      %p167 = scmp.eq.s32.totalorder %s17, 0
      %p168 = por %p166, %p167
      %p169 = scmp.le.s32.totalorder 1, %s11
      %p170 = scmp.lt.s32.totalorder %s11, 9
      %p171 = pnand %p169, %p170
      %p172 = pneg %p171
      // Predicated region
      $region9: #{discriminator_forward.46} parent=5 // pred_check
        _
      $region10: #{discriminator_forward.46} parent=5 // pred_check_branch
        %174 = sbr.rel (%p171) target = $region12
      $region11: #{discriminator_forward.46} parent=5 // pred_region
        %s175 = ssub.s32 %s11, 1
        // Predicated region
        $region13: #{discriminator_forward.46} parent=11 // pred_check
          %p176 = pneg %p51
        $region14: #{discriminator_forward.46} parent=11 // pred_check_branch
          %178 = sbr.rel (%p176) target = $region16
        $region15: #{discriminator_forward.46} parent=11 // pred_region
          _
        $region16: #{discriminator_forward.46} parent=11 // pred_fallthru
          _
        // Predicated region
        $region17: #{discriminator_forward.46} parent=11 // pred_check
          %p179 = pneg %p133
        $region18: #{discriminator_forward.46} parent=11 // pred_check_branch
          %181 = sbr.rel (%p179) target = $region20
        $region19: #{discriminator_forward.46} parent=11 // pred_region
          %s182 = smul.u32 2, %s22
          %p183 = scmp.lt.s32.totalorder %s182, 1
          %s184 = scalar_select %p183, %s182, 1
          %s185 = scalar_lea.vmem %s3, %s184
          %s186 = smul.u32 2, %s22
        $region20: #{discriminator_forward.46} parent=11 // pred_fallthru
          _
      $region12: #{discriminator_forward.46} parent=5 // pred_fallthru
        _
      %p187 = scmp.lt.s32.totalorder %s11, 8
      // Predicated region
      $region21: #{discriminator_forward.46} parent=5 // pred_check
        %p188 = pneg %p187
      $region22: #{discriminator_forward.46} parent=5 // pred_check_branch
        %190 = sbr.rel (%p188) target = $region24
      $region23: #{discriminator_forward.46} parent=5 // pred_region
        // Predicated region
        $region25: #{discriminator_forward.46} parent=23 // pred_check
          %p191 = pneg %p73
        $region26: #{discriminator_forward.46} parent=23 // pred_check_branch
          %193 = sbr.rel (%p191) target = $region28
        $region27: #{discriminator_forward.46} parent=23 // pred_region
          %s194 = sand.u32 %s63, 1
          %s195 = sand.u32 %s63, 1
          %s196 = smul.addr %s195, 224
          %s197 = scalar_lea.vmem [#allocation4], %s196
          %s198 = smul.u32 14, %s18
          %s199 = smul.u32 4, %s20
          %s200 = smul.addr %s198, 32
          %s201 = sadd.s32 %s199, %s200
          %s202 = smul.addr %s201, 4
          %s203 = scalar_lea.vmem %s1, %s202
          // Predicated region
          $region29: #{discriminator_forward.46} parent=27 // pred_check
            _
          $region30: #{discriminator_forward.46} parent=27 // pred_check_branch
            %205 = sbr.rel (0) target = $region32
          $region31: #{discriminator_forward.46} parent=27 // pred_region
            // Predicated region
            $region33: #{discriminator_forward.46} parent=31 // pred_check
              _
            $region34: #{discriminator_forward.46} parent=31 // pred_check_branch
              %207 = sbr.rel (0) target = $region36
            $region35: #{discriminator_forward.46} parent=31 // pred_region
              loop: start=0, step=1, limit=1
              $region37: #{discriminator_forward.46} parent=35 // loop_pre_header
                _
              $region38: #{discriminator_forward.46} parent=35 // loop_header
                %s209 = sphi 0, %s213
                %p210 = scmp.ge.s32.totalorder %s209, 1
                %s214 = sphi %s203, %s203
                %s215 = sphi %s197, %s197
              $region39: #{discriminator_forward.46} parent=35 // loop_header_branch
                %212 = sbr.rel (%p210) target = $region43
              $region40: #{discriminator_forward.46} parent=35 // loop_body
                %v216 = vld [vmem:[%s214] sm:$0xff]
                %217 = vst [vmem:[%s215] sm:$0xff] %v216
                %v218 = vld [vmem:[%s214 + $0x8] sm:$0xff]
                %219 = vst [vmem:[%s215 + $0x8] sm:$0xff] %v218
                %v220 = vld [vmem:[%s214 + $0x80] sm:$0xff]
                %221 = vst [vmem:[%s215 + $0x10] sm:$0xff] %v220
                %v222 = vld [vmem:[%s214 + $0x88] sm:$0xff]
                %223 = vst [vmem:[%s215 + $0x18] sm:$0xff] %v222
                %v224 = vld [vmem:[%s214 + $0x100] sm:$0xff]
                %225 = vst [vmem:[%s215 + $0x20] sm:$0xff] %v224
                %v226 = vld [vmem:[%s214 + $0x108] sm:$0xff]
                %227 = vst [vmem:[%s215 + $0x28] sm:$0xff] %v226
                %v228 = vld [vmem:[%s214 + $0x180] sm:$0xff]
                %229 = vst [vmem:[%s215 + $0x30] sm:$0xff] %v228
                %v230 = vld [vmem:[%s214 + $0x188] sm:$0xff]
                %231 = vst [vmem:[%s215 + $0x38] sm:$0xff] %v230
                %v232 = vld [vmem:[%s214 + $0x200] sm:$0xff]
                %233 = vst [vmem:[%s215 + $0x40] sm:$0xff] %v232
                %v234 = vld [vmem:[%s214 + $0x208] sm:$0xff]
                %235 = vst [vmem:[%s215 + $0x48] sm:$0xff] %v234
                %v236 = vld [vmem:[%s214 + $0x280] sm:$0xff]
                %237 = vst [vmem:[%s215 + $0x50] sm:$0xff] %v236
                %v238 = vld [vmem:[%s214 + $0x288] sm:$0xff]
                %239 = vst [vmem:[%s215 + $0x58] sm:$0xff] %v238
                %v240 = vld [vmem:[%s214 + $0x300] sm:$0xff]
                %241 = vst [vmem:[%s215 + $0x60] sm:$0xff] %v240
                %v242 = vld [vmem:[%s214 + $0x308] sm:$0xff]
                %243 = vst [vmem:[%s215 + $0x68] sm:$0xff] %v242
                %v244 = vld [vmem:[%s214 + $0x380] sm:$0xff]
                %245 = vst [vmem:[%s215 + $0x70] sm:$0xff] %v244
                %v246 = vld [vmem:[%s214 + $0x388] sm:$0xff]
                %247 = vst [vmem:[%s215 + $0x78] sm:$0xff] %v246
                %v248 = vld [vmem:[%s214 + $0x400] sm:$0xff]
                %249 = vst [vmem:[%s215 + $0x80] sm:$0xff] %v248
                %v250 = vld [vmem:[%s214 + $0x408] sm:$0xff]
                %251 = vst [vmem:[%s215 + $0x88] sm:$0xff] %v250
                %v252 = vld [vmem:[%s214 + $0x480] sm:$0xff]
                %253 = vst [vmem:[%s215 + $0x90] sm:$0xff] %v252
                %v254 = vld [vmem:[%s214 + $0x488] sm:$0xff]
                %255 = vst [vmem:[%s215 + $0x98] sm:$0xff] %v254
                %v256 = vld [vmem:[%s214 + $0x500] sm:$0xff]
                %257 = vst [vmem:[%s215 + $0xa0] sm:$0xff] %v256
                %v258 = vld [vmem:[%s214 + $0x508] sm:$0xff]
                %259 = vst [vmem:[%s215 + $0xa8] sm:$0xff] %v258
                %v260 = vld [vmem:[%s214 + $0x580] sm:$0xff]
                %261 = vst [vmem:[%s215 + $0xb0] sm:$0xff] %v260
                %v262 = vld [vmem:[%s214 + $0x588] sm:$0xff]
                %263 = vst [vmem:[%s215 + $0xb8] sm:$0xff] %v262
                %v264 = vld [vmem:[%s214 + $0x600] sm:$0xff]
                %265 = vst [vmem:[%s215 + $0xc0] sm:$0xff] %v264
                %v266 = vld [vmem:[%s214 + $0x608] sm:$0xff]
                %267 = vst [vmem:[%s215 + $0xc8] sm:$0xff] %v266
                %v268 = vld [vmem:[%s214 + $0x680] sm:$0xff]
                %269 = vst [vmem:[%s215 + $0xd0] sm:$0xff] %v268
                %v270 = vld [vmem:[%s214 + $0x688] sm:$0xff]
                %271 = vst [vmem:[%s215 + $0xd8] sm:$0xff] %v270
              $region41: #{discriminator_forward.46} parent=35 // loop_footer
                %s213 = sadd.s32 1, %s209
              $region42: #{discriminator_forward.46} parent=35 // loop_footer_branch
                %208 = sbr.rel target = $region38
              $region43: #{discriminator_forward.46} parent=35 // loop_exit
                _
            $region36: #{discriminator_forward.46} parent=31 // pred_fallthru
              _
            // Predicated region
            $region44: #{discriminator_forward.46} parent=31 // pred_check
              _
            $region45: #{discriminator_forward.46} parent=31 // pred_check_branch
              %273 = sbr.rel target = $region47
            $region46: #{discriminator_forward.46} parent=31 // pred_region
              _
            $region47: #{discriminator_forward.46} parent=31 // pred_fallthru
              _
          $region32: #{discriminator_forward.46} parent=27 // pred_fallthru
            _
          %274 = vnop
        $region28: #{discriminator_forward.46} parent=23 // pred_fallthru
          _
        // Predicated region
        $region48: #{discriminator_forward.46} parent=23 // pred_check
          %p275 = pneg %p101
        $region49: #{discriminator_forward.46} parent=23 // pred_check_branch
          %277 = sbr.rel (%p275) target = $region51
        $region50: #{discriminator_forward.46} parent=23 // pred_region
          %s278 = smul.u32 64, %s20
          %s279 = smul.u32 2, %s19
          %p280 = scmp.lt.s32.totalorder %s278, 511
          %s281 = scalar_select %p280, %s278, 511
          %p282 = scmp.lt.s32.totalorder %s279, 1
          %s283 = scalar_select %p282, %s279, 1
          %s284 = smul.addr %s281, 2
          %s285 = sadd.s32 %s283, %s284
          %s286 = smul.addr %s285, 4
          %s287 = scalar_lea.vmem %s2, %s286
          %s288 = smul.u32 64, %s20
          %s289 = smul.u32 2, %s19
        $region51: #{discriminator_forward.46} parent=23 // pred_fallthru
          _
      $region24: #{discriminator_forward.46} parent=5 // pred_fallthru
        _
      %p290 = scmp.le.s32.totalorder 1, %s11
      %p291 = scmp.lt.s32.totalorder %s11, 9
      %p292 = pnand %p290, %p291
      %p293 = pneg %p292
      // Predicated region
      $region52: #{discriminator_forward.46} parent=5 // pred_check
        _
      $region53: #{discriminator_forward.46} parent=5 // pred_check_branch
        %295 = sbr.rel (%p292) target = $region55
      $region54: #{discriminator_forward.46} parent=5 // pred_region
        %s296 = ssub.s32 %s11, 1
        %s297 = sand.u32 %s66, 1
        %s298 = sand.u32 %s66, 1
        %s299 = smul.addr %s298, 224
        %s300 = scalar_lea.vmem [#allocation4], %s299
        // Predicated region
        $region56: #{discriminator_forward.46} parent=54 // pred_check
          %p301 = pneg %p79
        $region57: #{discriminator_forward.46} parent=54 // pred_check_branch
          %303 = sbr.rel (%p301) target = $region59
        $region58: #{discriminator_forward.46} parent=54 // pred_region
          _
        $region59: #{discriminator_forward.46} parent=54 // pred_fallthru
          _
        %p304 = pneg %p51
        %p305 = pneg %p48
        %s306 = sand.u32 %s66, 1
        %s307 = sand.u32 %s66, 1
        %s308 = smul.addr %s307, 224
        %s309 = scalar_lea.vmem [#allocation4], %s308
        %p310 = pneg %p79
        %p311 = pneg %p76
        %s312 = smul.u32 64, %s23
        %s313 = smul.u32 2, %s22
        %p314 = scmp.lt.s32.totalorder %s312, 511
        %s315 = scalar_select %p314, %s312, 511
        %p316 = scmp.lt.s32.totalorder %s313, 1
        %s317 = scalar_select %p316, %s313, 1
        %s318 = smul.addr %s315, 2
        %s319 = sadd.s32 %s317, %s318
        %s320 = smul.addr %s319, 4
        %s321 = scalar_lea.vmem %s2, %s320
        %p322 = pneg %p107
        %p323 = pneg %p104
        %s324 = smul.u32 2, %s22
        %p325 = scmp.lt.s32.totalorder %s324, 1
        %s326 = scalar_select %p325, %s324, 1
        %s327 = scalar_lea.vmem %s3, %s326
        %p328 = pneg %p133
        %p329 = pneg %p130
        %p330 = pneg %p161
        %p331 = pneg %p158
        %s332 = smul.u32 14, %s21
        %s333 = smul.u32 2, %s22
        %p334 = scmp.lt.s32.totalorder %s332, 13
        %s335 = scalar_select %p334, %s332, 13
        %p336 = scmp.lt.s32.totalorder %s333, 1
        %s337 = scalar_select %p336, %s333, 1
        %s338 = smul.addr %s335, 2
        %s339 = sadd.s32 %s337, %s338
        %s340 = smul.addr %s339, 4
        %s341 = scalar_lea.vmem %s4, %s340
        %s342 = smul.u32 14, %s21
        %s343 = smul.u32 4, %s23
        %s344 = smul.u32 64, %s23
        %s345 = smul.u32 2, %s22
        %p346 = scmp.lt.s32.totalorder %s344, 511
        %s347 = scalar_select %p346, %s344, 511
        %p348 = scmp.lt.s32.totalorder %s345, 1
        %s349 = scalar_select %p348, %s345, 1
        %s350 = smul.addr %s347, 2
        %s351 = sadd.s32 %s349, %s350
        %s352 = smul.addr %s351, 4
        %s353 = scalar_lea.vmem %s2, %s352
        %s354 = smul.u32 64, %s23
        %s355 = smul.u32 2, %s22
        %s356 = smul.u32 2, %s22
        %p357 = scmp.lt.s32.totalorder %s356, 1
        %s358 = scalar_select %p357, %s356, 1
        %s359 = scalar_lea.vmem %s3, %s358
        %s360 = smul.u32 2, %s22
        %s361 = smul.u32 14, %s21
        %s362 = smul.u32 2, %s22
        %p363 = scmp.lt.s32.totalorder %s361, 13
        %s364 = scalar_select %p363, %s361, 13
        %p365 = scmp.lt.s32.totalorder %s362, 1
        %s366 = scalar_select %p365, %s362, 1
        %s367 = smul.addr %s364, 2
        %s368 = sadd.s32 %s366, %s367
        %s369 = smul.addr %s368, 4
        %s370 = scalar_lea.vmem %s4, %s369
        %s371 = smul.u32 14, %s21
        %s372 = smul.u32 2, %s22
        %p373 = scmp.eq.s32.totalorder %s23, 0
        // Predicated region
        $region60: #{discriminator_forward.46} parent=54 // pred_check
          %p374 = pneg %p373
        $region61: #{discriminator_forward.46} parent=54 // pred_check_branch
          %376 = sbr.rel (%p374) target = $region63
        $region62: #{discriminator_forward.46} parent=54 // pred_region
          %377 = vst [vmem:[#allocation2] sm:$0xff] 0.0
          %378 = vst [vmem:[#allocation2 + $0x8] sm:$0xff] 0.0
          %379 = vst [vmem:[#allocation2 + $0x10] sm:$0xff] 0.0
          %380 = vst [vmem:[#allocation2 + $0x18] sm:$0xff] 0.0
          %381 = vst [vmem:[#allocation2 + $0x20] sm:$0xff] 0.0
          %382 = vst [vmem:[#allocation2 + $0x28] sm:$0xff] 0.0
          %383 = vst [vmem:[#allocation2 + $0x30] sm:$0xff] 0.0
          %384 = vst [vmem:[#allocation2 + $0x38] sm:$0xff] 0.0
          %385 = vst [vmem:[#allocation2 + $0x40] sm:$0xff] 0.0
          %386 = vst [vmem:[#allocation2 + $0x48] sm:$0xff] 0.0
          %387 = vst [vmem:[#allocation2 + $0x50] sm:$0xff] 0.0
          %388 = vst [vmem:[#allocation2 + $0x58] sm:$0xff] 0.0
          %389 = vst [vmem:[#allocation2 + $0x60] sm:$0xff] 0.0
          %390 = vst [vmem:[#allocation2 + $0x68] sm:$0xff] 0.0
          %391 = vst [vmem:[#allocation2 + $0x70] sm:$0xff] 0.0
          %392 = vst [vmem:[#allocation2 + $0x78] sm:$0xff] 0.0
          %393 = vst [vmem:[#allocation2 + $0x80] sm:$0xff] 0.0
          %394 = vst [vmem:[#allocation2 + $0x88] sm:$0xff] 0.0
          %395 = vst [vmem:[#allocation2 + $0x90] sm:$0xff] 0.0
          %396 = vst [vmem:[#allocation2 + $0x98] sm:$0xff] 0.0
          %397 = vst [vmem:[#allocation2 + $0xa0] sm:$0xff] 0.0
          %398 = vst [vmem:[#allocation2 + $0xa8] sm:$0xff] 0.0
          %399 = vst [vmem:[#allocation2 + $0xb0] sm:$0xff] 0.0
          %400 = vst [vmem:[#allocation2 + $0xb8] sm:$0xff] 0.0
          %401 = vst [vmem:[#allocation2 + $0xc0] sm:$0xff] 0.0
          %402 = vst [vmem:[#allocation2 + $0xc8] sm:$0xff] 0.0
          %403 = vst [vmem:[#allocation2 + $0xd0] sm:$0xff] 0.0
          %404 = vst [vmem:[#allocation2 + $0xd8] sm:$0xff] 0.0
        $region63: #{discriminator_forward.46} parent=54 // pred_fallthru
          _
        %v405 = vld [vmem:[#allocation2] sm:$0xff]
        %v406 = vld [vmem:[#allocation2 + $0x8] sm:$0xff]
        %v407 = vld [vmem:[#allocation2 + $0x10] sm:$0xff]
        %v408 = vld [vmem:[#allocation2 + $0x18] sm:$0xff]
        %v409 = vld [vmem:[#allocation2 + $0x20] sm:$0xff]
        %v410 = vld [vmem:[#allocation2 + $0x28] sm:$0xff]
        %v411 = vld [vmem:[#allocation2 + $0x30] sm:$0xff]
        %v412 = vld [vmem:[#allocation2 + $0x38] sm:$0xff]
        %v413 = vld [vmem:[#allocation2 + $0x40] sm:$0xff]
        %v414 = vld [vmem:[#allocation2 + $0x48] sm:$0xff]
        %v415 = vld [vmem:[#allocation2 + $0x50] sm:$0xff]
        %v416 = vld [vmem:[#allocation2 + $0x58] sm:$0xff]
        %v417 = vld [vmem:[#allocation2 + $0x60] sm:$0xff]
        %v418 = vld [vmem:[#allocation2 + $0x68] sm:$0xff]
        %v419 = vld [vmem:[#allocation2 + $0x70] sm:$0xff]
        %v420 = vld [vmem:[#allocation2 + $0x78] sm:$0xff]
        %v421 = vld [vmem:[#allocation2 + $0x80] sm:$0xff]
        %v422 = vld [vmem:[#allocation2 + $0x88] sm:$0xff]
        %v423 = vld [vmem:[#allocation2 + $0x90] sm:$0xff]
        %v424 = vld [vmem:[#allocation2 + $0x98] sm:$0xff]
        %v425 = vld [vmem:[#allocation2 + $0xa0] sm:$0xff]
        %v426 = vld [vmem:[#allocation2 + $0xa8] sm:$0xff]
        %v427 = vld [vmem:[#allocation2 + $0xb0] sm:$0xff]
        %v428 = vld [vmem:[#allocation2 + $0xb8] sm:$0xff]
        %v429 = vld [vmem:[#allocation2 + $0xc0] sm:$0xff]
        %v430 = vld [vmem:[#allocation2 + $0xc8] sm:$0xff]
        %v431 = vld [vmem:[#allocation2 + $0xd0] sm:$0xff]
        %v432 = vld [vmem:[#allocation2 + $0xd8] sm:$0xff]
        %v433 = vld [vmem:[%s300] sm:$0xff]
        %v434 = vld [vmem:[%s300 + $0x8] sm:$0xff]
        %v435 = vld [vmem:[%s300 + $0x10] sm:$0xff]
        %v436 = vld [vmem:[%s300 + $0x18] sm:$0xff]
        %v437 = vld [vmem:[%s300 + $0x20] sm:$0xff]
        %v438 = vld [vmem:[%s300 + $0x28] sm:$0xff]
        %v439 = vld [vmem:[%s300 + $0x30] sm:$0xff]
        %v440 = vld [vmem:[%s300 + $0x38] sm:$0xff]
        %v441 = vld [vmem:[%s300 + $0x40] sm:$0xff]
        %v442 = vld [vmem:[%s300 + $0x48] sm:$0xff]
        %v443 = vld [vmem:[%s300 + $0x50] sm:$0xff]
        %v444 = vld [vmem:[%s300 + $0x58] sm:$0xff]
        %v445 = vld [vmem:[%s300 + $0x60] sm:$0xff]
        %v446 = vld [vmem:[%s300 + $0x68] sm:$0xff]
        %v447 = vld [vmem:[%s300 + $0x70] sm:$0xff]
        %v448 = vld [vmem:[%s300 + $0x78] sm:$0xff]
        %v449 = vld [vmem:[%s300 + $0x80] sm:$0xff]
        %v450 = vld [vmem:[%s300 + $0x88] sm:$0xff]
        %v451 = vld [vmem:[%s300 + $0x90] sm:$0xff]
        %v452 = vld [vmem:[%s300 + $0x98] sm:$0xff]
        %v453 = vld [vmem:[%s300 + $0xa0] sm:$0xff]
        %v454 = vld [vmem:[%s300 + $0xa8] sm:$0xff]
        %v455 = vld [vmem:[%s300 + $0xb0] sm:$0xff]
        %v456 = vld [vmem:[%s300 + $0xb8] sm:$0xff]
        %v457 = vld [vmem:[%s300 + $0xc0] sm:$0xff]
        %v458 = vld [vmem:[%s300 + $0xc8] sm:$0xff]
        %v459 = vld [vmem:[%s300 + $0xd0] sm:$0xff]
        %v460 = vld [vmem:[%s300 + $0xd8] sm:$0xff]
        %v461 = vld [vmem:[%s353] sm:$0xff]
        %v462 = vld [vmem:[%s353 + $0x8] sm:$0xff]
        %v463 = vld [vmem:[%s353 + $0x10] sm:$0xff]
        %v464 = vld [vmem:[%s353 + $0x18] sm:$0xff]
        %v465 = vld [vmem:[%s353 + $0x20] sm:$0xff]
        %v466 = vld [vmem:[%s353 + $0x28] sm:$0xff]
        %v467 = vld [vmem:[%s353 + $0x30] sm:$0xff]
        %v468 = vld [vmem:[%s353 + $0x38] sm:$0xff]
        %v469 = vld [vmem:[%s353 + $0x40] sm:$0xff]
        %v470 = vld [vmem:[%s353 + $0x48] sm:$0xff]
        %v471 = vld [vmem:[%s353 + $0x50] sm:$0xff]
        %v472 = vld [vmem:[%s353 + $0x58] sm:$0xff]
        %v473 = vld [vmem:[%s353 + $0x60] sm:$0xff]
        %v474 = vld [vmem:[%s353 + $0x68] sm:$0xff]
        %v475 = vld [vmem:[%s353 + $0x70] sm:$0xff]
        %v476 = vld [vmem:[%s353 + $0x78] sm:$0xff]
        %v477 = vld [vmem:[%s353 + $0x80] sm:$0xff]
        %v478 = vld [vmem:[%s353 + $0x88] sm:$0xff]
        %v479 = vld [vmem:[%s353 + $0x90] sm:$0xff]
        %v480 = vld [vmem:[%s353 + $0x98] sm:$0xff]
        %v481 = vld [vmem:[%s353 + $0xa0] sm:$0xff]
        %v482 = vld [vmem:[%s353 + $0xa8] sm:$0xff]
        %v483 = vld [vmem:[%s353 + $0xb0] sm:$0xff]
        %v484 = vld [vmem:[%s353 + $0xb8] sm:$0xff]
        %v485 = vld [vmem:[%s353 + $0xc0] sm:$0xff]
        %v486 = vld [vmem:[%s353 + $0xc8] sm:$0xff]
        %v487 = vld [vmem:[%s353 + $0xd0] sm:$0xff]
        %v488 = vld [vmem:[%s353 + $0xd8] sm:$0xff]
        %v489 = vld [vmem:[%s353 + $0xe0] sm:$0xff]
        %v490 = vld [vmem:[%s353 + $0xe8] sm:$0xff]
        %v491 = vld [vmem:[%s353 + $0xf0] sm:$0xff]
        %v492 = vld [vmem:[%s353 + $0xf8] sm:$0xff]
        %v493 = vld [vmem:[%s353 + $0x100] sm:$0xff]
        %v494 = vld [vmem:[%s353 + $0x108] sm:$0xff]
        %v495 = vld [vmem:[%s353 + $0x110] sm:$0xff]
        %v496 = vld [vmem:[%s353 + $0x118] sm:$0xff]
        %v497 = vld [vmem:[%s353 + $0x120] sm:$0xff]
        %v498 = vld [vmem:[%s353 + $0x128] sm:$0xff]
        %v499 = vld [vmem:[%s353 + $0x130] sm:$0xff]
        %v500 = vld [vmem:[%s353 + $0x138] sm:$0xff]
        %v501 = vld [vmem:[%s353 + $0x140] sm:$0xff]
        %v502 = vld [vmem:[%s353 + $0x148] sm:$0xff]
        %v503 = vld [vmem:[%s353 + $0x150] sm:$0xff]
        %v504 = vld [vmem:[%s353 + $0x158] sm:$0xff]
        %v505 = vld [vmem:[%s353 + $0x160] sm:$0xff]
        %v506 = vld [vmem:[%s353 + $0x168] sm:$0xff]
        %v507 = vld [vmem:[%s353 + $0x170] sm:$0xff]
        %v508 = vld [vmem:[%s353 + $0x178] sm:$0xff]
        %v509 = vld [vmem:[%s353 + $0x180] sm:$0xff]
        %v510 = vld [vmem:[%s353 + $0x188] sm:$0xff]
        %v511 = vld [vmem:[%s353 + $0x190] sm:$0xff]
        %v512 = vld [vmem:[%s353 + $0x198] sm:$0xff]
        %v513 = vld [vmem:[%s353 + $0x1a0] sm:$0xff]
        %v514 = vld [vmem:[%s353 + $0x1a8] sm:$0xff]
        %v515 = vld [vmem:[%s353 + $0x1b0] sm:$0xff]
        %v516 = vld [vmem:[%s353 + $0x1b8] sm:$0xff]
        %v517 = vld [vmem:[%s353 + $0x1c0] sm:$0xff]
        %v518 = vld [vmem:[%s353 + $0x1c8] sm:$0xff]
        %v519 = vld [vmem:[%s353 + $0x1d0] sm:$0xff]
        %v520 = vld [vmem:[%s353 + $0x1d8] sm:$0xff]
        %v521 = vld [vmem:[%s353 + $0x1e0] sm:$0xff]
        %v522 = vld [vmem:[%s353 + $0x1e8] sm:$0xff]
        %v523 = vld [vmem:[%s353 + $0x1f0] sm:$0xff]
        %v524 = vld [vmem:[%s353 + $0x1f8] sm:$0xff]
        %v553 = vunpack.c.l.b16 %v433
        %v554 = vunpack.c.h.b16 %v433
        %v555 = vunpack.c.l.b16 %v434
        %v556 = vunpack.c.h.b16 %v434
        %v557 = vunpack.c.l.b16 %v435
        %v558 = vunpack.c.h.b16 %v435
        %v559 = vunpack.c.l.b16 %v436
        %v560 = vunpack.c.h.b16 %v436
        %v561 = vunpack.c.l.b16 %v437
        %v562 = vunpack.c.h.b16 %v437
        %v563 = vunpack.c.l.b16 %v438
        %v564 = vunpack.c.h.b16 %v438
        %v565 = vunpack.c.l.b16 %v439
        %v566 = vunpack.c.h.b16 %v439
        %v567 = vunpack.c.l.b16 %v440
        %v568 = vunpack.c.h.b16 %v440
        %v569 = vunpack.c.l.b16 %v441
        %v570 = vunpack.c.h.b16 %v441
        %v571 = vunpack.c.l.b16 %v442
        %v572 = vunpack.c.h.b16 %v442
        %v573 = vunpack.c.l.b16 %v443
        %v574 = vunpack.c.h.b16 %v443
        %v575 = vunpack.c.l.b16 %v444
        %v576 = vunpack.c.h.b16 %v444
        %v577 = vunpack.c.l.b16 %v445
        %v578 = vunpack.c.h.b16 %v445
        %v579 = vunpack.c.l.b16 %v446
        %v580 = vunpack.c.h.b16 %v446
        %v581 = vunpack.c.l.b16 %v447
        %v582 = vunpack.c.h.b16 %v447
        %v583 = vunpack.c.l.b16 %v448
        %v584 = vunpack.c.h.b16 %v448
        %v585 = vunpack.c.l.b16 %v449
        %v586 = vunpack.c.h.b16 %v449
        %v587 = vunpack.c.l.b16 %v450
        %v588 = vunpack.c.h.b16 %v450
        %v589 = vunpack.c.l.b16 %v451
        %v590 = vunpack.c.h.b16 %v451
        %v591 = vunpack.c.l.b16 %v452
        %v592 = vunpack.c.h.b16 %v452
        %v593 = vunpack.c.l.b16 %v453
        %v594 = vunpack.c.h.b16 %v453
        %v595 = vunpack.c.l.b16 %v454
        %v596 = vunpack.c.h.b16 %v454
        %v597 = vunpack.c.l.b16 %v455
        %v598 = vunpack.c.h.b16 %v455
        %v599 = vunpack.c.l.b16 %v456
        %v600 = vunpack.c.h.b16 %v456
        %v601 = vunpack.c.l.b16 %v457
        %v602 = vunpack.c.h.b16 %v457
        %v603 = vunpack.c.l.b16 %v458
        %v604 = vunpack.c.h.b16 %v458
        %v605 = vunpack.c.l.b16 %v459
        %v606 = vunpack.c.h.b16 %v459
        %v607 = vunpack.c.l.b16 %v460
        %v608 = vunpack.c.h.b16 %v460
        %v609 = vpack.c.b16 %v557, %v553
        %v610 = vpack.c.b16 %v558, %v554
        %v611 = vpack.c.b16 %v559, %v555
        %v612 = vpack.c.b16 %v560, %v556
        %v613 = vpack.c.b16 %v565, %v561
        %v614 = vpack.c.b16 %v566, %v562
        %v615 = vpack.c.b16 %v567, %v563
        %v616 = vpack.c.b16 %v568, %v564
        %v617 = vpack.c.b16 %v573, %v569
        %v618 = vpack.c.b16 %v574, %v570
        %v619 = vpack.c.b16 %v575, %v571
        %v620 = vpack.c.b16 %v576, %v572
        %v621 = vpack.c.b16 %v581, %v577
        %v622 = vpack.c.b16 %v582, %v578
        %v623 = vpack.c.b16 %v583, %v579
        %v624 = vpack.c.b16 %v584, %v580
        %v625 = vpack.c.b16 %v589, %v585
        %v626 = vpack.c.b16 %v590, %v586
        %v627 = vpack.c.b16 %v591, %v587
        %v628 = vpack.c.b16 %v592, %v588
        %v629 = vpack.c.b16 %v597, %v593
        %v630 = vpack.c.b16 %v598, %v594
        %v631 = vpack.c.b16 %v599, %v595
        %v632 = vpack.c.b16 %v600, %v596
        %v633 = vpack.c.b16 %v605, %v601
        %v634 = vpack.c.b16 %v606, %v602
        %v635 = vpack.c.b16 %v607, %v603
        %v636 = vpack.c.b16 %v608, %v604
        %v729 = vunpack.c.l.b16 %v461
        %v730 = vunpack.c.h.b16 %v461
        %v731 = vunpack.c.l.b16 %v462
        %v732 = vunpack.c.h.b16 %v462
        %v733 = vunpack.c.l.b16 %v463
        %v734 = vunpack.c.h.b16 %v463
        %v735 = vunpack.c.l.b16 %v464
        %v736 = vunpack.c.h.b16 %v464
        %v737 = vunpack.c.l.b16 %v465
        %v738 = vunpack.c.h.b16 %v465
        %v739 = vunpack.c.l.b16 %v466
        %v740 = vunpack.c.h.b16 %v466
        %v741 = vunpack.c.l.b16 %v467
        %v742 = vunpack.c.h.b16 %v467
        %v743 = vunpack.c.l.b16 %v468
        %v744 = vunpack.c.h.b16 %v468
        %v745 = vunpack.c.l.b16 %v469
        %v746 = vunpack.c.h.b16 %v469
        %v747 = vunpack.c.l.b16 %v470
        %v748 = vunpack.c.h.b16 %v470
        %v749 = vunpack.c.l.b16 %v471
        %v750 = vunpack.c.h.b16 %v471
        %v751 = vunpack.c.l.b16 %v472
        %v752 = vunpack.c.h.b16 %v472
        %v753 = vunpack.c.l.b16 %v473
        %v754 = vunpack.c.h.b16 %v473
        %v755 = vunpack.c.l.b16 %v474
        %v756 = vunpack.c.h.b16 %v474
        %v757 = vunpack.c.l.b16 %v475
        %v758 = vunpack.c.h.b16 %v475
        %v759 = vunpack.c.l.b16 %v476
        %v760 = vunpack.c.h.b16 %v476
        %v761 = vunpack.c.l.b16 %v477
        %v762 = vunpack.c.h.b16 %v477
        %v763 = vunpack.c.l.b16 %v478
        %v764 = vunpack.c.h.b16 %v478
        %v765 = vunpack.c.l.b16 %v479
        %v766 = vunpack.c.h.b16 %v479
        %v767 = vunpack.c.l.b16 %v480
        %v768 = vunpack.c.h.b16 %v480
        %v769 = vunpack.c.l.b16 %v481
        %v770 = vunpack.c.h.b16 %v481
        %v771 = vunpack.c.l.b16 %v482
        %v772 = vunpack.c.h.b16 %v482
        %v773 = vunpack.c.l.b16 %v483
        %v774 = vunpack.c.h.b16 %v483
        %v775 = vunpack.c.l.b16 %v484
        %v776 = vunpack.c.h.b16 %v484
        %v777 = vunpack.c.l.b16 %v485
        %v778 = vunpack.c.h.b16 %v485
        %v779 = vunpack.c.l.b16 %v486
        %v780 = vunpack.c.h.b16 %v486
        %v781 = vunpack.c.l.b16 %v487
        %v782 = vunpack.c.h.b16 %v487
        %v783 = vunpack.c.l.b16 %v488
        %v784 = vunpack.c.h.b16 %v488
        %v785 = vunpack.c.l.b16 %v489
        %v786 = vunpack.c.h.b16 %v489
        %v787 = vunpack.c.l.b16 %v490
        %v788 = vunpack.c.h.b16 %v490
        %v789 = vunpack.c.l.b16 %v491
        %v790 = vunpack.c.h.b16 %v491
        %v791 = vunpack.c.l.b16 %v492
        %v792 = vunpack.c.h.b16 %v492
        %v793 = vunpack.c.l.b16 %v493
        %v794 = vunpack.c.h.b16 %v493
        %v795 = vunpack.c.l.b16 %v494
        %v796 = vunpack.c.h.b16 %v494
        %v797 = vunpack.c.l.b16 %v495
        %v798 = vunpack.c.h.b16 %v495
        %v799 = vunpack.c.l.b16 %v496
        %v800 = vunpack.c.h.b16 %v496
        %v801 = vunpack.c.l.b16 %v497
        %v802 = vunpack.c.h.b16 %v497
        %v803 = vunpack.c.l.b16 %v498
        %v804 = vunpack.c.h.b16 %v498
        %v805 = vunpack.c.l.b16 %v499
        %v806 = vunpack.c.h.b16 %v499
        %v807 = vunpack.c.l.b16 %v500
        %v808 = vunpack.c.h.b16 %v500
        %v809 = vunpack.c.l.b16 %v501
        %v810 = vunpack.c.h.b16 %v501
        %v811 = vunpack.c.l.b16 %v502
        %v812 = vunpack.c.h.b16 %v502
        %v813 = vunpack.c.l.b16 %v503
        %v814 = vunpack.c.h.b16 %v503
        %v815 = vunpack.c.l.b16 %v504
        %v816 = vunpack.c.h.b16 %v504
        %v817 = vunpack.c.l.b16 %v505
        %v818 = vunpack.c.h.b16 %v505
        %v819 = vunpack.c.l.b16 %v506
        %v820 = vunpack.c.h.b16 %v506
        %v821 = vunpack.c.l.b16 %v507
        %v822 = vunpack.c.h.b16 %v507
        %v823 = vunpack.c.l.b16 %v508
        %v824 = vunpack.c.h.b16 %v508
        %v825 = vunpack.c.l.b16 %v509
        %v826 = vunpack.c.h.b16 %v509
        %v827 = vunpack.c.l.b16 %v510
        %v828 = vunpack.c.h.b16 %v510
        %v829 = vunpack.c.l.b16 %v511
        %v830 = vunpack.c.h.b16 %v511
        %v831 = vunpack.c.l.b16 %v512
        %v832 = vunpack.c.h.b16 %v512
        %v833 = vunpack.c.l.b16 %v513
        %v834 = vunpack.c.h.b16 %v513
        %v835 = vunpack.c.l.b16 %v514
        %v836 = vunpack.c.h.b16 %v514
        %v837 = vunpack.c.l.b16 %v515
        %v838 = vunpack.c.h.b16 %v515
        %v839 = vunpack.c.l.b16 %v516
        %v840 = vunpack.c.h.b16 %v516
        %v841 = vunpack.c.l.b16 %v517
        %v842 = vunpack.c.h.b16 %v517
        %v843 = vunpack.c.l.b16 %v518
        %v844 = vunpack.c.h.b16 %v518
        %v845 = vunpack.c.l.b16 %v519
        %v846 = vunpack.c.h.b16 %v519
        %v847 = vunpack.c.l.b16 %v520
        %v848 = vunpack.c.h.b16 %v520
        %v849 = vunpack.c.l.b16 %v521
        %v850 = vunpack.c.h.b16 %v521
        %v851 = vunpack.c.l.b16 %v522
        %v852 = vunpack.c.h.b16 %v522
        %v853 = vunpack.c.l.b16 %v523
        %v854 = vunpack.c.h.b16 %v523
        %v855 = vunpack.c.l.b16 %v524
        %v856 = vunpack.c.h.b16 %v524
        %v857 = vpack.c.b16 %v731, %v729
        %v858 = vpack.c.b16 %v732, %v730
        %v859 = vpack.c.b16 %v735, %v733
        %v860 = vpack.c.b16 %v736, %v734
        %v861 = vpack.c.b16 %v739, %v737
        %v862 = vpack.c.b16 %v740, %v738
        %v863 = vpack.c.b16 %v743, %v741
        %v864 = vpack.c.b16 %v744, %v742
        %v865 = vpack.c.b16 %v747, %v745
        %v866 = vpack.c.b16 %v748, %v746
        %v867 = vpack.c.b16 %v751, %v749
        %v868 = vpack.c.b16 %v752, %v750
        %v869 = vpack.c.b16 %v755, %v753
        %v870 = vpack.c.b16 %v756, %v754
        %v871 = vpack.c.b16 %v759, %v757
        %v872 = vpack.c.b16 %v760, %v758
        %v873 = vpack.c.b16 %v763, %v761
        %v874 = vpack.c.b16 %v764, %v762
        %v875 = vpack.c.b16 %v767, %v765
        %v876 = vpack.c.b16 %v768, %v766
        %v877 = vpack.c.b16 %v771, %v769
        %v878 = vpack.c.b16 %v772, %v770
        %v879 = vpack.c.b16 %v775, %v773
        %v880 = vpack.c.b16 %v776, %v774
        %v881 = vpack.c.b16 %v779, %v777
        %v882 = vpack.c.b16 %v780, %v778
        %v883 = vpack.c.b16 %v783, %v781
        %v884 = vpack.c.b16 %v784, %v782
        %v885 = vpack.c.b16 %v787, %v785
        %v886 = vpack.c.b16 %v788, %v786
        %v887 = vpack.c.b16 %v791, %v789
        %v888 = vpack.c.b16 %v792, %v790
        %v889 = vpack.c.b16 %v795, %v793
        %v890 = vpack.c.b16 %v796, %v794
        %v891 = vpack.c.b16 %v799, %v797
        %v892 = vpack.c.b16 %v800, %v798
        %v893 = vpack.c.b16 %v803, %v801
        %v894 = vpack.c.b16 %v804, %v802
        %v895 = vpack.c.b16 %v807, %v805
        %v896 = vpack.c.b16 %v808, %v806
        %v897 = vpack.c.b16 %v811, %v809
        %v898 = vpack.c.b16 %v812, %v810
        %v899 = vpack.c.b16 %v815, %v813
        %v900 = vpack.c.b16 %v816, %v814
        %v901 = vpack.c.b16 %v819, %v817
        %v902 = vpack.c.b16 %v820, %v818
        %v903 = vpack.c.b16 %v823, %v821
        %v904 = vpack.c.b16 %v824, %v822
        %v905 = vpack.c.b16 %v827, %v825
        %v906 = vpack.c.b16 %v828, %v826
        %v907 = vpack.c.b16 %v831, %v829
        %v908 = vpack.c.b16 %v832, %v830
        %v909 = vpack.c.b16 %v835, %v833
        %v910 = vpack.c.b16 %v836, %v834
        %v911 = vpack.c.b16 %v839, %v837
        %v912 = vpack.c.b16 %v840, %v838
        %v913 = vpack.c.b16 %v843, %v841
        %v914 = vpack.c.b16 %v844, %v842
        %v915 = vpack.c.b16 %v847, %v845
        %v916 = vpack.c.b16 %v848, %v846
        %v917 = vpack.c.b16 %v851, %v849
        %v918 = vpack.c.b16 %v852, %v850
        %v919 = vpack.c.b16 %v855, %v853
        %v920 = vpack.c.b16 %v856, %v854
        %985 = vmatprep.subr.bf16.mxu0 %v858
        %986 = vmatpush1.bf16.msra.mxu0 %v857
        %987 = vmatprep.subr.bf16.mxu0 %v860
        %988 = vmatpush1.bf16.msra.mxu0 %v859
        %989 = vmatprep.subr.bf16.mxu0 %v862
        %990 = vmatpush1.bf16.msra.mxu0 %v861
        %991 = vmatprep.subr.bf16.mxu0 %v864
        %992 = vmatpush1.bf16.msra.mxu0 %v863
        %993 = vmatprep.subr.bf16.mxu0 %v866
        %994 = vmatpush1.bf16.msra.mxu0 %v865
        %995 = vmatprep.subr.bf16.mxu0 %v868
        %996 = vmatpush1.bf16.msra.mxu0 %v867
        %997 = vmatprep.subr.bf16.mxu0 %v870
        %998 = vmatpush1.bf16.msra.mxu0 %v869
        %999 = vmatprep.subr.bf16.mxu0 %v872
        %1000 = vmatpush1.bf16.msra.mxu0 %v871
        %1001 = vmatprep.subr.bf16.mxu0 %v874
        %1002 = vmatpush1.bf16.msra.mxu0 %v873
        %1003 = vmatprep.subr.bf16.mxu0 %v876
        %1004 = vmatpush1.bf16.msra.mxu0 %v875
        %1005 = vmatprep.subr.bf16.mxu0 %v878
        %1006 = vmatpush1.bf16.msra.mxu0 %v877
        %1007 = vmatprep.subr.bf16.mxu0 %v880
        %1008 = vmatpush1.bf16.msra.mxu0 %v879
        %1009 = vmatprep.subr.bf16.mxu0 %v882
        %1010 = vmatpush1.bf16.msra.mxu0 %v881
        %1011 = vmatprep.subr.bf16.mxu0 %v884
        %1012 = vmatpush1.bf16.msra.mxu0 %v883
        %1013 = vmatprep.subr.bf16.mxu0 %v886
        %1014 = vmatpush1.bf16.msra.mxu0 %v885
        %1015 = vmatprep.subr.bf16.mxu0 %v888
        %1016 = vmatpush1.bf16.msra.mxu0 %v887
        %1017 = vmatprep.mubr.bf16.mxu0 %v610
        %1018 = vmatmul.mubr.bf16.gmra.mrb[0].mxu0 %v609
        %v1019 = vpop.f32.mrb[0].mxu0
        %v1020 = vadd.f32 0.0, %v1019
        %v1021 = vpop.f32.mrb[0].mxu0
        %v1022 = vadd.f32 0.0, %v1021
        %v1023 = vpop.f32.mrb[0].mxu0
        %v1024 = vadd.f32 0.0, %v1023
        %v1025 = vpop.f32.mrb[0].mxu0
        %v1026 = vadd.f32 0.0, %v1025
        %1027 = vmatprep.mubr.bf16.mxu0 %v614
        %1028 = vmatmul.mubr.bf16.gmra.mrb[0].mxu0 %v613
        %v1029 = vpop.f32.mrb[0].mxu0
        %v1030 = vadd.f32 0.0, %v1029
        %v1031 = vpop.f32.mrb[0].mxu0
        %v1032 = vadd.f32 0.0, %v1031
        %v1033 = vpop.f32.mrb[0].mxu0
        %v1034 = vadd.f32 0.0, %v1033
        %v1035 = vpop.f32.mrb[0].mxu0
        %v1036 = vadd.f32 0.0, %v1035
        %1037 = vmatprep.mubr.bf16.mxu0 %v618
        %1038 = vmatmul.mubr.bf16.gmra.mrb[0].mxu0 %v617
        %v1039 = vpop.f32.mrb[0].mxu0
        %v1040 = vadd.f32 0.0, %v1039
        %v1041 = vpop.f32.mrb[0].mxu0
        %v1042 = vadd.f32 0.0, %v1041
        %v1043 = vpop.f32.mrb[0].mxu0
        %v1044 = vadd.f32 0.0, %v1043
        %v1045 = vpop.f32.mrb[0].mxu0
        %v1046 = vadd.f32 0.0, %v1045
        %1047 = vmatprep.mubr.bf16.mxu0 %v622
        %1048 = vmatmul.mubr.bf16.gmra.mrb[0].mxu0 %v621
        %v1049 = vpop.f32.mrb[0].mxu0
        %v1050 = vadd.f32 0.0, %v1049
        %v1051 = vpop.f32.mrb[0].mxu0
        %v1052 = vadd.f32 0.0, %v1051
        %v1053 = vpop.f32.mrb[0].mxu0
        %v1054 = vadd.f32 0.0, %v1053
        %v1055 = vpop.f32.mrb[0].mxu0
        %v1056 = vadd.f32 0.0, %v1055
        %1057 = vmatprep.mubr.bf16.mxu0 %v626
        %1058 = vmatmul.mubr.bf16.gmra.mrb[0].mxu0 %v625
        %v1059 = vpop.f32.mrb[0].mxu0
        %v1060 = vadd.f32 0.0, %v1059
        %v1061 = vpop.f32.mrb[0].mxu0
        %v1062 = vadd.f32 0.0, %v1061
        %v1063 = vpop.f32.mrb[0].mxu0
        %v1064 = vadd.f32 0.0, %v1063
        %v1065 = vpop.f32.mrb[0].mxu0
        %v1066 = vadd.f32 0.0, %v1065
        %1067 = vmatprep.mubr.bf16.mxu0 %v630
        %1068 = vmatmul.mubr.bf16.gmra.mrb[0].mxu0 %v629
        %v1069 = vpop.f32.mrb[0].mxu0
        %v1070 = vadd.f32 0.0, %v1069
        %v1071 = vpop.f32.mrb[0].mxu0
        %v1072 = vadd.f32 0.0, %v1071
        %v1073 = vpop.f32.mrb[0].mxu0
        %v1074 = vadd.f32 0.0, %v1073
        %v1075 = vpop.f32.mrb[0].mxu0
        %v1076 = vadd.f32 0.0, %v1075
        %1077 = vmatprep.mubr.bf16.mxu0 %v634
        %1078 = vmatmul.mubr.bf16.gmra.mrb[0].mxu0 %v633
        %v1079 = vpop.f32.mrb[0].mxu0
        %v1080 = vadd.f32 0.0, %v1079
        %v1081 = vpop.f32.mrb[0].mxu0
        %v1082 = vadd.f32 0.0, %v1081
        %v1083 = vpop.f32.mrb[0].mxu0
        %v1084 = vadd.f32 0.0, %v1083
        %v1085 = vpop.f32.mrb[0].mxu0
        %v1086 = vadd.f32 0.0, %v1085
        %1087 = vdwg.mxu0
        %1088 = vmatprep.subr.bf16.mxu0 %v890
        %1089 = vmatpush1.bf16.msra.mxu0 %v889
        %1090 = vmatprep.subr.bf16.mxu0 %v892
        %1091 = vmatpush1.bf16.msra.mxu0 %v891
        %1092 = vmatprep.subr.bf16.mxu0 %v894
        %1093 = vmatpush1.bf16.msra.mxu0 %v893
        %1094 = vmatprep.subr.bf16.mxu0 %v896
        %1095 = vmatpush1.bf16.msra.mxu0 %v895
        %1096 = vmatprep.subr.bf16.mxu0 %v898
        %1097 = vmatpush1.bf16.msra.mxu0 %v897
        %1098 = vmatprep.subr.bf16.mxu0 %v900
        %1099 = vmatpush1.bf16.msra.mxu0 %v899
        %1100 = vmatprep.subr.bf16.mxu0 %v902
        %1101 = vmatpush1.bf16.msra.mxu0 %v901
        %1102 = vmatprep.subr.bf16.mxu0 %v904
        %1103 = vmatpush1.bf16.msra.mxu0 %v903
        %1104 = vmatprep.subr.bf16.mxu0 %v906
        %1105 = vmatpush1.bf16.msra.mxu0 %v905
        %1106 = vmatprep.subr.bf16.mxu0 %v908
        %1107 = vmatpush1.bf16.msra.mxu0 %v907
        %1108 = vmatprep.subr.bf16.mxu0 %v910
        %1109 = vmatpush1.bf16.msra.mxu0 %v909
        %1110 = vmatprep.subr.bf16.mxu0 %v912
        %1111 = vmatpush1.bf16.msra.mxu0 %v911
        %1112 = vmatprep.subr.bf16.mxu0 %v914
        %1113 = vmatpush1.bf16.msra.mxu0 %v913
        %1114 = vmatprep.subr.bf16.mxu0 %v916
        %1115 = vmatpush1.bf16.msra.mxu0 %v915
        %1116 = vmatprep.subr.bf16.mxu0 %v918
        %1117 = vmatpush1.bf16.msra.mxu0 %v917
        %1118 = vmatprep.subr.bf16.mxu0 %v920
        %1119 = vmatpush1.bf16.msra.mxu0 %v919
        %1120 = vmatprep.mubr.bf16.mxu0 %v612
        %1121 = vmatmul.mubr.bf16.gmra.mrb[0].mxu0 %v611
        %v1122 = vpop.f32.mrb[0].mxu0
        %v1123 = vadd.f32 %v1020, %v1122
        %v1124 = vpop.f32.mrb[0].mxu0
        %v1125 = vadd.f32 %v1022, %v1124
        %v1126 = vpop.f32.mrb[0].mxu0
        %v1127 = vadd.f32 %v1024, %v1126
        %v1128 = vpop.f32.mrb[0].mxu0
        %v1129 = vadd.f32 %v1026, %v1128
        %1130 = vmatprep.mubr.bf16.mxu0 %v616
        %1131 = vmatmul.mubr.bf16.gmra.mrb[0].mxu0 %v615
        %v1132 = vpop.f32.mrb[0].mxu0
        %v1133 = vadd.f32 %v1030, %v1132
        %v1134 = vpop.f32.mrb[0].mxu0
        %v1135 = vadd.f32 %v1032, %v1134
        %v1136 = vpop.f32.mrb[0].mxu0
        %v1137 = vadd.f32 %v1034, %v1136
        %v1138 = vpop.f32.mrb[0].mxu0
        %v1139 = vadd.f32 %v1036, %v1138
        %1140 = vmatprep.mubr.bf16.mxu0 %v620
        %1141 = vmatmul.mubr.bf16.gmra.mrb[0].mxu0 %v619
        %v1142 = vpop.f32.mrb[0].mxu0
        %v1143 = vadd.f32 %v1040, %v1142
        %v1144 = vpop.f32.mrb[0].mxu0
        %v1145 = vadd.f32 %v1042, %v1144
        %v1146 = vpop.f32.mrb[0].mxu0
        %v1147 = vadd.f32 %v1044, %v1146
        %v1148 = vpop.f32.mrb[0].mxu0
        %v1149 = vadd.f32 %v1046, %v1148
        %1150 = vmatprep.mubr.bf16.mxu0 %v624
        %1151 = vmatmul.mubr.bf16.gmra.mrb[0].mxu0 %v623
        %v1152 = vpop.f32.mrb[0].mxu0
        %v1153 = vadd.f32 %v1050, %v1152
        %v1154 = vpop.f32.mrb[0].mxu0
        %v1155 = vadd.f32 %v1052, %v1154
        %v1156 = vpop.f32.mrb[0].mxu0
        %v1157 = vadd.f32 %v1054, %v1156
        %v1158 = vpop.f32.mrb[0].mxu0
        %v1159 = vadd.f32 %v1056, %v1158
        %1160 = vmatprep.mubr.bf16.mxu0 %v628
        %1161 = vmatmul.mubr.bf16.gmra.mrb[0].mxu0 %v627
        %v1162 = vpop.f32.mrb[0].mxu0
        %v1163 = vadd.f32 %v1060, %v1162
        %v1164 = vpop.f32.mrb[0].mxu0
        %v1165 = vadd.f32 %v1062, %v1164
        %v1166 = vpop.f32.mrb[0].mxu0
        %v1167 = vadd.f32 %v1064, %v1166
        %v1168 = vpop.f32.mrb[0].mxu0
        %v1169 = vadd.f32 %v1066, %v1168
        %1170 = vmatprep.mubr.bf16.mxu0 %v632
        %1171 = vmatmul.mubr.bf16.gmra.mrb[0].mxu0 %v631
        %v1172 = vpop.f32.mrb[0].mxu0
        %v1173 = vadd.f32 %v1070, %v1172
        %v1174 = vpop.f32.mrb[0].mxu0
        %v1175 = vadd.f32 %v1072, %v1174
        %v1176 = vpop.f32.mrb[0].mxu0
        %v1177 = vadd.f32 %v1074, %v1176
        %v1178 = vpop.f32.mrb[0].mxu0
        %v1179 = vadd.f32 %v1076, %v1178
        %1180 = vmatprep.mubr.bf16.mxu0 %v636
        %1181 = vmatmul.mubr.bf16.gmra.mrb[0].mxu0 %v635
        %v1182 = vpop.f32.mrb[0].mxu0
        %v1183 = vadd.f32 %v1080, %v1182
        %v1184 = vpop.f32.mrb[0].mxu0
        %v1185 = vadd.f32 %v1082, %v1184
        %v1186 = vpop.f32.mrb[0].mxu0
        %v1187 = vadd.f32 %v1084, %v1186
        %v1188 = vpop.f32.mrb[0].mxu0
        %v1189 = vadd.f32 %v1086, %v1188
        %1190 = vdwg.mxu0
        %v1191 = vadd.f32 %v405, %v1123
        %v1192 = vadd.f32 %v406, %v1125
        %v1193 = vadd.f32 %v407, %v1127
        %v1194 = vadd.f32 %v408, %v1129
        %v1195 = vadd.f32 %v409, %v1133
        %v1196 = vadd.f32 %v410, %v1135
        %v1197 = vadd.f32 %v411, %v1137
        %v1198 = vadd.f32 %v412, %v1139
        %v1199 = vadd.f32 %v413, %v1143
        %v1200 = vadd.f32 %v414, %v1145
        %v1201 = vadd.f32 %v415, %v1147
        %v1202 = vadd.f32 %v416, %v1149
        %v1203 = vadd.f32 %v417, %v1153
        %v1204 = vadd.f32 %v418, %v1155
        %v1205 = vadd.f32 %v419, %v1157
        %v1206 = vadd.f32 %v420, %v1159
        %v1207 = vadd.f32 %v421, %v1163
        %v1208 = vadd.f32 %v422, %v1165
        %v1209 = vadd.f32 %v423, %v1167
        %v1210 = vadd.f32 %v424, %v1169
        %v1211 = vadd.f32 %v425, %v1173
        %v1212 = vadd.f32 %v426, %v1175
        %v1213 = vadd.f32 %v427, %v1177
        %v1214 = vadd.f32 %v428, %v1179
        %v1215 = vadd.f32 %v429, %v1183
        %v1216 = vadd.f32 %v430, %v1185
        %v1217 = vadd.f32 %v431, %v1187
        %v1218 = vadd.f32 %v432, %v1189
        %1219 = vst [vmem:[#allocation2] sm:$0xff] %v1191
        %1220 = vst [vmem:[#allocation2 + $0x8] sm:$0xff] %v1192
        %1221 = vst [vmem:[#allocation2 + $0x10] sm:$0xff] %v1193
        %1222 = vst [vmem:[#allocation2 + $0x18] sm:$0xff] %v1194
        %1223 = vst [vmem:[#allocation2 + $0x20] sm:$0xff] %v1195
        %1224 = vst [vmem:[#allocation2 + $0x28] sm:$0xff] %v1196
        %1225 = vst [vmem:[#allocation2 + $0x30] sm:$0xff] %v1197
        %1226 = vst [vmem:[#allocation2 + $0x38] sm:$0xff] %v1198
        %1227 = vst [vmem:[#allocation2 + $0x40] sm:$0xff] %v1199
        %1228 = vst [vmem:[#allocation2 + $0x48] sm:$0xff] %v1200
        %1229 = vst [vmem:[#allocation2 + $0x50] sm:$0xff] %v1201
        %1230 = vst [vmem:[#allocation2 + $0x58] sm:$0xff] %v1202
        %1231 = vst [vmem:[#allocation2 + $0x60] sm:$0xff] %v1203
        %1232 = vst [vmem:[#allocation2 + $0x68] sm:$0xff] %v1204
        %1233 = vst [vmem:[#allocation2 + $0x70] sm:$0xff] %v1205
        %1234 = vst [vmem:[#allocation2 + $0x78] sm:$0xff] %v1206
        %1235 = vst [vmem:[#allocation2 + $0x80] sm:$0xff] %v1207
        %1236 = vst [vmem:[#allocation2 + $0x88] sm:$0xff] %v1208
        %1237 = vst [vmem:[#allocation2 + $0x90] sm:$0xff] %v1209
        %1238 = vst [vmem:[#allocation2 + $0x98] sm:$0xff] %v1210
        %1239 = vst [vmem:[#allocation2 + $0xa0] sm:$0xff] %v1211
        %1240 = vst [vmem:[#allocation2 + $0xa8] sm:$0xff] %v1212
        %1241 = vst [vmem:[#allocation2 + $0xb0] sm:$0xff] %v1213
        %1242 = vst [vmem:[#allocation2 + $0xb8] sm:$0xff] %v1214
        %1243 = vst [vmem:[#allocation2 + $0xc0] sm:$0xff] %v1215
        %1244 = vst [vmem:[#allocation2 + $0xc8] sm:$0xff] %v1216
        %1245 = vst [vmem:[#allocation2 + $0xd0] sm:$0xff] %v1217
        %1246 = vst [vmem:[#allocation2 + $0xd8] sm:$0xff] %v1218
        %p1247 = scmp.eq.s32.totalorder %s23, 7
        // Predicated region
        $region64: #{discriminator_forward.46} parent=54 // pred_check
          %p1248 = pneg %p1247
        $region65: #{discriminator_forward.46} parent=54 // pred_check_branch
          %1250 = sbr.rel (%p1248) target = $region67
        $region66: #{discriminator_forward.46} parent=54 // pred_region
          %v1251 = vld [vmem:[#allocation2] sm:$0xff]
          %v1252 = vld [vmem:[#allocation2 + $0x8] sm:$0xff]
          %v1253 = vld [vmem:[#allocation2 + $0x10] sm:$0xff]
          %v1254 = vld [vmem:[#allocation2 + $0x18] sm:$0xff]
          %v1255 = vld [vmem:[#allocation2 + $0x20] sm:$0xff]
          %v1256 = vld [vmem:[#allocation2 + $0x28] sm:$0xff]
          %v1257 = vld [vmem:[#allocation2 + $0x30] sm:$0xff]
          %v1258 = vld [vmem:[#allocation2 + $0x38] sm:$0xff]
          %v1259 = vld [vmem:[#allocation2 + $0x40] sm:$0xff]
          %v1260 = vld [vmem:[#allocation2 + $0x48] sm:$0xff]
          %v1261 = vld [vmem:[#allocation2 + $0x50] sm:$0xff]
          %v1262 = vld [vmem:[#allocation2 + $0x58] sm:$0xff]
          %v1263 = vld [vmem:[#allocation2 + $0x60] sm:$0xff]
          %v1264 = vld [vmem:[#allocation2 + $0x68] sm:$0xff]
          %v1265 = vld [vmem:[#allocation2 + $0x70] sm:$0xff]
          %v1266 = vld [vmem:[#allocation2 + $0x78] sm:$0xff]
          %v1267 = vld [vmem:[#allocation2 + $0x80] sm:$0xff]
          %v1268 = vld [vmem:[#allocation2 + $0x88] sm:$0xff]
          %v1269 = vld [vmem:[#allocation2 + $0x90] sm:$0xff]
          %v1270 = vld [vmem:[#allocation2 + $0x98] sm:$0xff]
          %v1271 = vld [vmem:[#allocation2 + $0xa0] sm:$0xff]
          %v1272 = vld [vmem:[#allocation2 + $0xa8] sm:$0xff]
          %v1273 = vld [vmem:[#allocation2 + $0xb0] sm:$0xff]
          %v1274 = vld [vmem:[#allocation2 + $0xb8] sm:$0xff]
          %v1275 = vld [vmem:[#allocation2 + $0xc0] sm:$0xff]
          %v1276 = vld [vmem:[#allocation2 + $0xc8] sm:$0xff]
          %v1277 = vld [vmem:[#allocation2 + $0xd0] sm:$0xff]
          %v1278 = vld [vmem:[#allocation2 + $0xd8] sm:$0xff]
          %s1279 = sld [smem:[#allocation3]]
          %v1280 = vstv %s1279
          %v1281 = vmul.f32 %v1251, %v1280
          %v1282 = vmul.f32 %v1252, %v1280
          %v1283 = vmul.f32 %v1253, %v1280
          %v1284 = vmul.f32 %v1254, %v1280
          %v1285 = vmul.f32 %v1255, %v1280
          %v1286 = vmul.f32 %v1256, %v1280
          %v1287 = vmul.f32 %v1257, %v1280
          %v1288 = vmul.f32 %v1258, %v1280
          %v1289 = vmul.f32 %v1259, %v1280
          %v1290 = vmul.f32 %v1260, %v1280
          %v1291 = vmul.f32 %v1261, %v1280
          %v1292 = vmul.f32 %v1262, %v1280
          %v1293 = vmul.f32 %v1263, %v1280
          %v1294 = vmul.f32 %v1264, %v1280
          %v1295 = vmul.f32 %v1265, %v1280
          %v1296 = vmul.f32 %v1266, %v1280
          %v1297 = vmul.f32 %v1267, %v1280
          %v1298 = vmul.f32 %v1268, %v1280
          %v1299 = vmul.f32 %v1269, %v1280
          %v1300 = vmul.f32 %v1270, %v1280
          %v1301 = vmul.f32 %v1271, %v1280
          %v1302 = vmul.f32 %v1272, %v1280
          %v1303 = vmul.f32 %v1273, %v1280
          %v1304 = vmul.f32 %v1274, %v1280
          %v1305 = vmul.f32 %v1275, %v1280
          %v1306 = vmul.f32 %v1276, %v1280
          %v1307 = vmul.f32 %v1277, %v1280
          %v1308 = vmul.f32 %v1278, %v1280
          %v1309 = vld [vmem:[%s359] sm:$0x3]
          %v1311 = vlaneseq
          %v1312 = vshrl.u32 %v1311, 7
          %v1313 = vsub.s32 0, %v1312
          %v1314 = vrot.slane %v1309, %v1313
          %v1315 = vlaneseq
          %v1316 = vshrl.u32 %v1315, 7
          %v1317 = vsub.s32 1, %v1316
          %v1318 = vrot.slane %v1309, %v1317
          %v1321 = vadd.f32 %v1281, %v1314
          %v1322 = vadd.f32 %v1282, %v1318
          %v1323 = vadd.f32 %v1283, %v1314
          %v1324 = vadd.f32 %v1284, %v1318
          %v1325 = vadd.f32 %v1285, %v1314
          %v1326 = vadd.f32 %v1286, %v1318
          %v1327 = vadd.f32 %v1287, %v1314
          %v1328 = vadd.f32 %v1288, %v1318
          %v1329 = vadd.f32 %v1289, %v1314
          %v1330 = vadd.f32 %v1290, %v1318
          %v1331 = vadd.f32 %v1291, %v1314
          %v1332 = vadd.f32 %v1292, %v1318
          %v1333 = vadd.f32 %v1293, %v1314
          %v1334 = vadd.f32 %v1294, %v1318
          %v1335 = vadd.f32 %v1295, %v1314
          %v1336 = vadd.f32 %v1296, %v1318
          %v1337 = vadd.f32 %v1297, %v1314
          %v1338 = vadd.f32 %v1298, %v1318
          %v1339 = vadd.f32 %v1299, %v1314
          %v1340 = vadd.f32 %v1300, %v1318
          %v1341 = vadd.f32 %v1301, %v1314
          %v1342 = vadd.f32 %v1302, %v1318
          %v1343 = vadd.f32 %v1303, %v1314
          %v1344 = vadd.f32 %v1304, %v1318
          %v1345 = vadd.f32 %v1305, %v1314
          %v1346 = vadd.f32 %v1306, %v1318
          %v1347 = vadd.f32 %v1307, %v1314
          %v1348 = vadd.f32 %v1308, %v1318
          %v1349 = vpack.c.bf16 %v1323, %v1321
          %v1350 = vpack.c.bf16 %v1324, %v1322
          %v1351 = vpack.c.bf16 %v1327, %v1325
          %v1352 = vpack.c.bf16 %v1328, %v1326
          %v1353 = vpack.c.bf16 %v1331, %v1329
          %v1354 = vpack.c.bf16 %v1332, %v1330
          %v1355 = vpack.c.bf16 %v1335, %v1333
          %v1356 = vpack.c.bf16 %v1336, %v1334
          %v1357 = vpack.c.bf16 %v1339, %v1337
          %v1358 = vpack.c.bf16 %v1340, %v1338
          %v1359 = vpack.c.bf16 %v1343, %v1341
          %v1360 = vpack.c.bf16 %v1344, %v1342
          %v1361 = vpack.c.bf16 %v1347, %v1345
          %v1362 = vpack.c.bf16 %v1348, %v1346
          %v1377 = vunpack.c.l.b16 %v1349
          %v1378 = vunpack.c.l.b16 %v1350
          %v1379 = vunpack.c.h.b16 %v1349
          %v1380 = vunpack.c.h.b16 %v1350
          %v1381 = vunpack.c.l.b16 %v1351
          %v1382 = vunpack.c.l.b16 %v1352
          %v1383 = vunpack.c.h.b16 %v1351
          %v1384 = vunpack.c.h.b16 %v1352
          %v1385 = vunpack.c.l.b16 %v1353
          %v1386 = vunpack.c.l.b16 %v1354
          %v1387 = vunpack.c.h.b16 %v1353
          %v1388 = vunpack.c.h.b16 %v1354
          %v1389 = vunpack.c.l.b16 %v1355
          %v1390 = vunpack.c.l.b16 %v1356
          %v1391 = vunpack.c.h.b16 %v1355
          %v1392 = vunpack.c.h.b16 %v1356
          %v1393 = vunpack.c.l.b16 %v1357
          %v1394 = vunpack.c.l.b16 %v1358
          %v1395 = vunpack.c.h.b16 %v1357
          %v1396 = vunpack.c.h.b16 %v1358
          %v1397 = vunpack.c.l.b16 %v1359
          %v1398 = vunpack.c.l.b16 %v1360
          %v1399 = vunpack.c.h.b16 %v1359
          %v1400 = vunpack.c.h.b16 %v1360
          %v1401 = vunpack.c.l.b16 %v1361
          %v1402 = vunpack.c.l.b16 %v1362
          %v1403 = vunpack.c.h.b16 %v1361
          %v1404 = vunpack.c.h.b16 %v1362
          %v1405 = vpack.c.b16 %v1378, %v1377
          %v1406 = vpack.c.b16 %v1380, %v1379
          %v1407 = vpack.c.b16 %v1382, %v1381
          %v1408 = vpack.c.b16 %v1384, %v1383
          %v1409 = vpack.c.b16 %v1386, %v1385
          %v1410 = vpack.c.b16 %v1388, %v1387
          %v1411 = vpack.c.b16 %v1390, %v1389
          %v1412 = vpack.c.b16 %v1392, %v1391
          %v1413 = vpack.c.b16 %v1394, %v1393
          %v1414 = vpack.c.b16 %v1396, %v1395
          %v1415 = vpack.c.b16 %v1398, %v1397
          %v1416 = vpack.c.b16 %v1400, %v1399
          %v1417 = vpack.c.b16 %v1402, %v1401
          %v1418 = vpack.c.b16 %v1404, %v1403
          %1433 = vst [vmem:[%s370] sm:$0xff] %v1405
          %1434 = vst [vmem:[%s370 + $0x8] sm:$0xff] %v1406
          %1435 = vst [vmem:[%s370 + $0x10] sm:$0xff] %v1407
          %1436 = vst [vmem:[%s370 + $0x18] sm:$0xff] %v1408
          %1437 = vst [vmem:[%s370 + $0x20] sm:$0xff] %v1409
          %1438 = vst [vmem:[%s370 + $0x28] sm:$0xff] %v1410
          %1439 = vst [vmem:[%s370 + $0x30] sm:$0xff] %v1411
          %1440 = vst [vmem:[%s370 + $0x38] sm:$0xff] %v1412
          %1441 = vst [vmem:[%s370 + $0x40] sm:$0xff] %v1413
          %1442 = vst [vmem:[%s370 + $0x48] sm:$0xff] %v1414
          %1443 = vst [vmem:[%s370 + $0x50] sm:$0xff] %v1415
          %1444 = vst [vmem:[%s370 + $0x58] sm:$0xff] %v1416
          %1445 = vst [vmem:[%s370 + $0x60] sm:$0xff] %v1417
          %1446 = vst [vmem:[%s370 + $0x68] sm:$0xff] %v1418
        $region67: #{discriminator_forward.46} parent=54 // pred_fallthru
          _
        %s1447 = smul.u32 14, %s21
        %s1448 = smul.u32 2, %s22
        %p1449 = scmp.lt.s32.totalorder %s1447, 13
        %s1450 = scalar_select %p1449, %s1447, 13
        %p1451 = scmp.lt.s32.totalorder %s1448, 1
        %s1452 = scalar_select %p1451, %s1448, 1
        %s1453 = smul.addr %s1450, 2
        %s1454 = sadd.s32 %s1452, %s1453
        %s1455 = smul.addr %s1454, 4
        %s1456 = scalar_lea.vmem %s4, %s1455
        // Predicated region
        $region68: #{discriminator_forward.46} parent=54 // pred_check
          %p1457 = pneg %p158
        $region69: #{discriminator_forward.46} parent=54 // pred_check_branch
          %1459 = sbr.rel (%p1457) target = $region71
        $region70: #{discriminator_forward.46} parent=54 // pred_region
          %s1460 = smul.u32 14, %s21
          %s1461 = smul.u32 2, %s22
        $region71: #{discriminator_forward.46} parent=54 // pred_fallthru
          _
        // Predicated region
        $region72: #{discriminator_forward.46} parent=54 // pred_check
          %p1462 = pneg %p158
        $region73: #{discriminator_forward.46} parent=54 // pred_check_branch
          %1464 = sbr.rel (%p1462) target = $region75
        $region74: #{discriminator_forward.46} parent=54 // pred_region
          %s1465 = smul.u32 14, %s21
          %s1466 = smul.u32 2, %s22
          %p1467 = scmp.lt.s32.totalorder %s1465, 13
          %s1468 = scalar_select %p1467, %s1465, 13
          %p1469 = scmp.lt.s32.totalorder %s1466, 1
          %s1470 = scalar_select %p1469, %s1466, 1
          %s1471 = smul.addr %s1468, 2
          %s1472 = sadd.s32 %s1470, %s1471
          %s1473 = smul.addr %s1472, 4
          %s1474 = scalar_lea.vmem %s4, %s1473
        $region75: #{discriminator_forward.46} parent=54 // pred_fallthru
          _
      $region55: #{discriminator_forward.46} parent=5 // pred_fallthru
        _
      %p1475 = scmp.le.s32.totalorder 2, %s11
      // Predicated region
      $region76: #{discriminator_forward.46} parent=5 // pred_check
        %p1476 = pneg %p1475
      $region77: #{discriminator_forward.46} parent=5 // pred_check_branch
        %1478 = sbr.rel (%p1476) target = $region79
      $region78: #{discriminator_forward.46} parent=5 // pred_region
        %s1479 = ssub.s32 %s11, 2
      $region79: #{discriminator_forward.46} parent=5 // pred_fallthru
        _
    $region6: #{discriminator_forward.46} parent=1 // loop_footer
      %s15 = sadd.s32 1, %s11
    $region7: #{discriminator_forward.46} parent=1 // loop_footer_branch
      %10 = sbr.rel target = $region3
    $region8: #{discriminator_forward.46} parent=1 // loop_exit
      _

// kernel: discriminator_forward.49
$region0: #{discriminator_forward.49}
  #allocation0 [shape = 'u32[]', space=smem, size = 0x4, offset = 0x4, fixed_abs, tag = 'smem constant byte address 0x4 - core index']
  #allocation1 [shape = 'u32[144,128]{1,0:T(1,128)}', space=vmem, size = 0x12000, scoped, tag = 'internal scratch']
  #allocation2 [shape = 'f32[80,128]{1,0:T(8,128)}', space=vmem, size = 0xa000, scoped, tag = 'scratch operand']
  #allocation3 [shape = 'f32[1,1]{1,0:T(1,128)S(6)}', space=smem, size = 0x200, scoped, tag = 'scoped memory for discriminator_forward.49']
  %s0 = inlined_call_operand.<no memory space> [shape: f32[1,1], index: 0, kind: input, shape index: {}]
  %s1 = inlined_call_operand.vmem [shape: bf16[80,4096], index: 1, kind: input, shape index: {}]
  %s2 = inlined_call_operand.vmem [shape: bf16[4096,128], index: 2, kind: input, shape index: {}]
  %s3 = inlined_call_operand.vmem [shape: f32[1,128], index: 3, kind: input, shape index: {}]
  %s4 = inlined_call_operand.vmem [shape: f32[80,128], index: 4, kind: output, shape index: {}]
  %s5 = sld [smem:[#allocation0]]
  $region80: #{discriminator_forward.49} parent=0
    _
  %s7 = ssub.s32 1, %s5
  %s8 = scalar_select 0, %s7, %s5
  %9 = sst [smem:[#allocation3]] %s0
  $region1: #{discriminator_forward.49} parent=0
    #allocation4 [shape = 'u8[163840]{0}', space=vmem, size = 0x28000, scoped, tag = 'input window, operand 1']
    loop: start=0, step=1, limit=10
    $region2: #{discriminator_forward.49} parent=1 // loop_pre_header
      _
    $region3: #{discriminator_forward.49} parent=1 // loop_header
      %s11 = sphi 0, %s15
      %p12 = scmp.ge.s32.totalorder %s11, 10
      %s18 = sphi 0, %s37
      %s19 = sphi 0, %s33
      %s20 = sphi 0, %s29
      %s21 = sphi 0, %s18
      %s22 = sphi 0, %s19
      %s23 = sphi 0, %s20
      %s24 = sphi 0, %s21
      %s25 = sphi 0, %s22
      %s26 = sphi 0, %s23
      %s38 = sphi 0, %s38
      %s40 = sphi 0, %s38
      %s41 = sphi 0, %s40
      %s55 = sphi 0, %s41
      %s63 = sphi 0, %s65
      %s66 = sphi 0, %s63
      %s67 = sphi 0, %s66
      %s83 = sphi 0, %s67
      %s91 = sphi 0, %s93
      %s94 = sphi 0, %s91
      %s95 = sphi 0, %s94
      %s111 = sphi 0, %s95
      %s117 = sphi 0, %s119
      %s120 = sphi 0, %s117
      %s121 = sphi 0, %s120
      %s137 = sphi 0, %s121
      %s145 = sphi 0, %s147
      %s148 = sphi 0, %s145
      %s149 = sphi 0, %s148
      %s165 = sphi 0, %s149
    $region4: #{discriminator_forward.49} parent=1 // loop_header_branch
      %14 = sbr.rel (%p12) target = $region8
    $region5: #{discriminator_forward.49} parent=1 // loop_body
      %s16 = ssub.s32 %s11, 1
      %s17 = ssub.s32 %s11, 2
      %s27 = sadd.s32 1, %s20
      %p28 = scmp.ge.s32.totalorder %s27, 8
      %s29 = scalar_select %p28, 0, %s27
      %s30 = sadd.s32 1, %s19
      %s31 = scalar_select %p28, %s30, %s19
      %p32 = scmp.ge.s32.totalorder %s31, 1
      %s33 = scalar_select %p32, 0, %s31
      %s34 = sadd.s32 1, %s18
      %s35 = scalar_select %p32, %s34, %s18
      %p36 = scmp.ge.s32.totalorder %s35, 1
      %s37 = scalar_select %p36, 0, %s35
      %s39 = sadd.s32 %s38, 1
      %p42 = scmp.eq.s32.totalorder %s11, 7
      %p43 = scmp.ne.s32.totalorder %s38, %s40
      %p44 = scmp.eq.s32.totalorder %s11, 0
      %p45 = por %p43, %p44
      %p46 = scmp.ne.s32.totalorder %s38, %s40
      %p47 = scmp.eq.s32.totalorder %s16, 7
      %p48 = por %p46, %p47
      %p49 = scmp.ne.s32.totalorder %s40, %s41
      %p50 = scmp.eq.s32.totalorder %s16, 0
      %p51 = por %p49, %p50
      %p52 = scmp.ne.s32.totalorder %s40, %s41
      %p53 = scmp.eq.s32.totalorder %s17, 7
      %p54 = por %p52, %p53
      %p56 = scmp.ne.s32.totalorder %s41, %s55
      %p57 = scmp.eq.s32.totalorder %s17, 0
      %p58 = por %p56, %p57
      %s59 = ssub.s32 %s18, %s37
      %s60 = ssub.s32 %s20, %s29
      %s61 = sor.u32 %s59, %s60
      %p62 = scmp.eq.s32.totalorder %s61, 0
      %s64 = sadd.s32 %s63, 1
      %s65 = scalar_select %p62, %s63, %s64
      %p68 = pneg %p62
      %p69 = scmp.eq.s32.totalorder %s11, 7
      %p70 = por %p68, %p69
      %p71 = scmp.ne.s32.totalorder %s63, %s66
      %p72 = scmp.eq.s32.totalorder %s11, 0
      %p73 = por %p71, %p72
      %p74 = scmp.ne.s32.totalorder %s63, %s66
      %p75 = scmp.eq.s32.totalorder %s16, 7
      %p76 = por %p74, %p75
      %p77 = scmp.ne.s32.totalorder %s66, %s67
      %p78 = scmp.eq.s32.totalorder %s16, 0
      %p79 = por %p77, %p78
      %p80 = scmp.ne.s32.totalorder %s66, %s67
      %p81 = scmp.eq.s32.totalorder %s17, 7
      %p82 = por %p80, %p81
      %p84 = scmp.ne.s32.totalorder %s67, %s83
      %p85 = scmp.eq.s32.totalorder %s17, 0
      %p86 = por %p84, %p85
      %s87 = ssub.s32 %s20, %s29
      %s88 = ssub.s32 %s19, %s33
      %s89 = sor.u32 %s87, %s88
      %p90 = scmp.eq.s32.totalorder %s89, 0
      %s92 = sadd.s32 %s91, 1
      %s93 = scalar_select %p90, %s91, %s92
      %p96 = pneg %p90
      %p97 = scmp.eq.s32.totalorder %s11, 7
      %p98 = por %p96, %p97
      %p99 = scmp.ne.s32.totalorder %s91, %s94
      %p100 = scmp.eq.s32.totalorder %s11, 0
      %p101 = por %p99, %p100
      %p102 = scmp.ne.s32.totalorder %s91, %s94
      %p103 = scmp.eq.s32.totalorder %s16, 7
      %p104 = por %p102, %p103
      %p105 = scmp.ne.s32.totalorder %s94, %s95
      %p106 = scmp.eq.s32.totalorder %s16, 0
      %p107 = por %p105, %p106
      %p108 = scmp.ne.s32.totalorder %s94, %s95
      %p109 = scmp.eq.s32.totalorder %s17, 7
      %p110 = por %p108, %p109
      %p112 = scmp.ne.s32.totalorder %s95, %s111
      %p113 = scmp.eq.s32.totalorder %s17, 0
      %p114 = por %p112, %p113
      %s115 = ssub.s32 %s19, %s33
      %p116 = scmp.eq.s32.totalorder %s115, 0
      %s118 = sadd.s32 %s117, 1
      %s119 = scalar_select %p116, %s117, %s118
      %p122 = pneg %p116
      %p123 = scmp.eq.s32.totalorder %s11, 7
      %p124 = por %p122, %p123
      %p125 = scmp.ne.s32.totalorder %s117, %s120
      %p126 = scmp.eq.s32.totalorder %s11, 0
      %p127 = por %p125, %p126
      %p128 = scmp.ne.s32.totalorder %s117, %s120
      %p129 = scmp.eq.s32.totalorder %s16, 7
      %p130 = por %p128, %p129
      %p131 = scmp.ne.s32.totalorder %s120, %s121
      %p132 = scmp.eq.s32.totalorder %s16, 0
      %p133 = por %p131, %p132
      %p134 = scmp.ne.s32.totalorder %s120, %s121
      %p135 = scmp.eq.s32.totalorder %s17, 7
      %p136 = por %p134, %p135
      %p138 = scmp.ne.s32.totalorder %s121, %s137
      %p139 = scmp.eq.s32.totalorder %s17, 0
      %p140 = por %p138, %p139
      %s141 = ssub.s32 %s18, %s37
      %s142 = ssub.s32 %s19, %s33
      %s143 = sor.u32 %s141, %s142
      %p144 = scmp.eq.s32.totalorder %s143, 0
      %s146 = sadd.s32 %s145, 1
      %s147 = scalar_select %p144, %s145, %s146
      %p150 = pneg %p144
      %p151 = scmp.eq.s32.totalorder %s11, 7
      %p152 = por %p150, %p151
      %p153 = scmp.ne.s32.totalorder %s145, %s148
      %p154 = scmp.eq.s32.totalorder %s11, 0
      %p155 = por %p153, %p154
      %p156 = scmp.ne.s32.totalorder %s145, %s148
      %p157 = scmp.eq.s32.totalorder %s16, 7
      %p158 = por %p156, %p157
      %p159 = scmp.ne.s32.totalorder %s148, %s149
      %p160 = scmp.eq.s32.totalorder %s16, 0
      %p161 = por %p159, %p160
      %p162 = scmp.ne.s32.totalorder %s148, %s149
      %p163 = scmp.eq.s32.totalorder %s17, 7
      %p164 = por %p162, %p163
      %p166 = scmp.ne.s32.totalorder %s149, %s165
      %p167 = scmp.eq.s32.totalorder %s17, 0
      %p168 = por %p166, %p167
      %p169 = scmp.le.s32.totalorder 1, %s11
      %p170 = scmp.lt.s32.totalorder %s11, 9
      %p171 = pnand %p169, %p170
      %p172 = pneg %p171
      // Predicated region
      $region9: #{discriminator_forward.49} parent=5 // pred_check
        _
      $region10: #{discriminator_forward.49} parent=5 // pred_check_branch
        %174 = sbr.rel (%p171) target = $region12
      $region11: #{discriminator_forward.49} parent=5 // pred_region
        %s175 = ssub.s32 %s11, 1
        // Predicated region
        $region13: #{discriminator_forward.49} parent=11 // pred_check
          %p176 = pneg %p51
        $region14: #{discriminator_forward.49} parent=11 // pred_check_branch
          %178 = sbr.rel (%p176) target = $region16
        $region15: #{discriminator_forward.49} parent=11 // pred_region
          _
        $region16: #{discriminator_forward.49} parent=11 // pred_fallthru
          _
        // Predicated region
        $region17: #{discriminator_forward.49} parent=11 // pred_check
          %p179 = pneg %p133
        $region18: #{discriminator_forward.49} parent=11 // pred_check_branch
          %181 = sbr.rel (%p179) target = $region20
        $region19: #{discriminator_forward.49} parent=11 // pred_region
          %p182 = scmp.lt.s32.totalorder %s22, 0
          %s183 = scalar_select %p182, %s22, 0
          %s184 = scalar_lea.vmem %s3, %s183
        $region20: #{discriminator_forward.49} parent=11 // pred_fallthru
          _
      $region12: #{discriminator_forward.49} parent=5 // pred_fallthru
        _
      %p185 = scmp.lt.s32.totalorder %s11, 8
      // Predicated region
      $region21: #{discriminator_forward.49} parent=5 // pred_check
        %p186 = pneg %p185
      $region22: #{discriminator_forward.49} parent=5 // pred_check_branch
        %188 = sbr.rel (%p186) target = $region24
      $region23: #{discriminator_forward.49} parent=5 // pred_region
        // Predicated region
        $region25: #{discriminator_forward.49} parent=23 // pred_check
          %p189 = pneg %p73
        $region26: #{discriminator_forward.49} parent=23 // pred_check_branch
          %191 = sbr.rel (%p189) target = $region28
        $region27: #{discriminator_forward.49} parent=23 // pred_region
          %s192 = sand.u32 %s63, 1
          %s193 = sand.u32 %s63, 1
          %s194 = smul.addr %s193, 160
          %s195 = scalar_lea.vmem [#allocation4], %s194
          %s196 = smul.u32 10, %s18
          %s197 = smul.u32 4, %s20
          %s198 = smul.addr %s196, 32
          %s199 = sadd.s32 %s197, %s198
          %s200 = smul.addr %s199, 4
          %s201 = scalar_lea.vmem %s1, %s200
          // Predicated region
          $region29: #{discriminator_forward.49} parent=27 // pred_check
            _
          $region30: #{discriminator_forward.49} parent=27 // pred_check_branch
            %203 = sbr.rel (0) target = $region32
          $region31: #{discriminator_forward.49} parent=27 // pred_region
            // Predicated region
            $region33: #{discriminator_forward.49} parent=31 // pred_check
              _
            $region34: #{discriminator_forward.49} parent=31 // pred_check_branch
              %205 = sbr.rel (0) target = $region36
            $region35: #{discriminator_forward.49} parent=31 // pred_region
              loop: start=0, step=1, limit=1
              $region37: #{discriminator_forward.49} parent=35 // loop_pre_header
                _
              $region38: #{discriminator_forward.49} parent=35 // loop_header
                %s207 = sphi 0, %s211
                %p208 = scmp.ge.s32.totalorder %s207, 1
                %s212 = sphi %s201, %s201
                %s213 = sphi %s195, %s195
              $region39: #{discriminator_forward.49} parent=35 // loop_header_branch
                %210 = sbr.rel (%p208) target = $region43
              $region40: #{discriminator_forward.49} parent=35 // loop_body
                %v214 = vld [vmem:[%s212] sm:$0xff]
                %215 = vst [vmem:[%s213] sm:$0xff] %v214
                %v216 = vld [vmem:[%s212 + $0x8] sm:$0xff]
                %217 = vst [vmem:[%s213 + $0x8] sm:$0xff] %v216
                %v218 = vld [vmem:[%s212 + $0x80] sm:$0xff]
                %219 = vst [vmem:[%s213 + $0x10] sm:$0xff] %v218
                %v220 = vld [vmem:[%s212 + $0x88] sm:$0xff]
                %221 = vst [vmem:[%s213 + $0x18] sm:$0xff] %v220
                %v222 = vld [vmem:[%s212 + $0x100] sm:$0xff]
                %223 = vst [vmem:[%s213 + $0x20] sm:$0xff] %v222
                %v224 = vld [vmem:[%s212 + $0x108] sm:$0xff]
                %225 = vst [vmem:[%s213 + $0x28] sm:$0xff] %v224
                %v226 = vld [vmem:[%s212 + $0x180] sm:$0xff]
                %227 = vst [vmem:[%s213 + $0x30] sm:$0xff] %v226
                %v228 = vld [vmem:[%s212 + $0x188] sm:$0xff]
                %229 = vst [vmem:[%s213 + $0x38] sm:$0xff] %v228
                %v230 = vld [vmem:[%s212 + $0x200] sm:$0xff]
                %231 = vst [vmem:[%s213 + $0x40] sm:$0xff] %v230
                %v232 = vld [vmem:[%s212 + $0x208] sm:$0xff]
                %233 = vst [vmem:[%s213 + $0x48] sm:$0xff] %v232
                %v234 = vld [vmem:[%s212 + $0x280] sm:$0xff]
                %235 = vst [vmem:[%s213 + $0x50] sm:$0xff] %v234
                %v236 = vld [vmem:[%s212 + $0x288] sm:$0xff]
                %237 = vst [vmem:[%s213 + $0x58] sm:$0xff] %v236
                %v238 = vld [vmem:[%s212 + $0x300] sm:$0xff]
                %239 = vst [vmem:[%s213 + $0x60] sm:$0xff] %v238
                %v240 = vld [vmem:[%s212 + $0x308] sm:$0xff]
                %241 = vst [vmem:[%s213 + $0x68] sm:$0xff] %v240
                %v242 = vld [vmem:[%s212 + $0x380] sm:$0xff]
                %243 = vst [vmem:[%s213 + $0x70] sm:$0xff] %v242
                %v244 = vld [vmem:[%s212 + $0x388] sm:$0xff]
                %245 = vst [vmem:[%s213 + $0x78] sm:$0xff] %v244
                %v246 = vld [vmem:[%s212 + $0x400] sm:$0xff]
                %247 = vst [vmem:[%s213 + $0x80] sm:$0xff] %v246
                %v248 = vld [vmem:[%s212 + $0x408] sm:$0xff]
                %249 = vst [vmem:[%s213 + $0x88] sm:$0xff] %v248
                %v250 = vld [vmem:[%s212 + $0x480] sm:$0xff]
                %251 = vst [vmem:[%s213 + $0x90] sm:$0xff] %v250
                %v252 = vld [vmem:[%s212 + $0x488] sm:$0xff]
                %253 = vst [vmem:[%s213 + $0x98] sm:$0xff] %v252
              $region41: #{discriminator_forward.49} parent=35 // loop_footer
                %s211 = sadd.s32 1, %s207
              $region42: #{discriminator_forward.49} parent=35 // loop_footer_branch
                %206 = sbr.rel target = $region38
              $region43: #{discriminator_forward.49} parent=35 // loop_exit
                _
            $region36: #{discriminator_forward.49} parent=31 // pred_fallthru
              _
            // Predicated region
            $region44: #{discriminator_forward.49} parent=31 // pred_check
              _
            $region45: #{discriminator_forward.49} parent=31 // pred_check_branch
              %255 = sbr.rel target = $region47
            $region46: #{discriminator_forward.49} parent=31 // pred_region
              _
            $region47: #{discriminator_forward.49} parent=31 // pred_fallthru
              _
          $region32: #{discriminator_forward.49} parent=27 // pred_fallthru
            _
          %256 = vnop
        $region28: #{discriminator_forward.49} parent=23 // pred_fallthru
          _
        // Predicated region
        $region48: #{discriminator_forward.49} parent=23 // pred_check
          %p257 = pneg %p101
        $region49: #{discriminator_forward.49} parent=23 // pred_check_branch
          %259 = sbr.rel (%p257) target = $region51
        $region50: #{discriminator_forward.49} parent=23 // pred_region
          %s260 = smul.u32 64, %s20
          %p261 = scmp.lt.s32.totalorder %s260, 511
          %s262 = scalar_select %p261, %s260, 511
          %p263 = scmp.lt.s32.totalorder %s19, 0
          %s264 = scalar_select %p263, %s19, 0
          %s265 = sadd.s32 %s264, %s262
          %s266 = smul.addr %s265, 4
          %s267 = scalar_lea.vmem %s2, %s266
          %s268 = smul.u32 64, %s20
        $region51: #{discriminator_forward.49} parent=23 // pred_fallthru
          _
      $region24: #{discriminator_forward.49} parent=5 // pred_fallthru
        _
      %p269 = scmp.le.s32.totalorder 1, %s11
      %p270 = scmp.lt.s32.totalorder %s11, 9
      %p271 = pnand %p269, %p270
      %p272 = pneg %p271
      // Predicated region
      $region52: #{discriminator_forward.49} parent=5 // pred_check
        _
      $region53: #{discriminator_forward.49} parent=5 // pred_check_branch
        %274 = sbr.rel (%p271) target = $region55
      $region54: #{discriminator_forward.49} parent=5 // pred_region
        %s275 = ssub.s32 %s11, 1
        %s276 = sand.u32 %s66, 1
        %s277 = sand.u32 %s66, 1
        %s278 = smul.addr %s277, 160
        %s279 = scalar_lea.vmem [#allocation4], %s278
        // Predicated region
        $region56: #{discriminator_forward.49} parent=54 // pred_check
          %p280 = pneg %p79
        $region57: #{discriminator_forward.49} parent=54 // pred_check_branch
          %282 = sbr.rel (%p280) target = $region59
        $region58: #{discriminator_forward.49} parent=54 // pred_region
          _
        $region59: #{discriminator_forward.49} parent=54 // pred_fallthru
          _
        %p283 = pneg %p51
        %p284 = pneg %p48
        %s285 = sand.u32 %s66, 1
        %s286 = sand.u32 %s66, 1
        %s287 = smul.addr %s286, 160
        %s288 = scalar_lea.vmem [#allocation4], %s287
        %p289 = pneg %p79
        %p290 = pneg %p76
        %s291 = smul.u32 64, %s23
        %p292 = scmp.lt.s32.totalorder %s291, 511
        %s293 = scalar_select %p292, %s291, 511
        %p294 = scmp.lt.s32.totalorder %s22, 0
        %s295 = scalar_select %p294, %s22, 0
        %s296 = sadd.s32 %s295, %s293
        %s297 = smul.addr %s296, 4
        %s298 = scalar_lea.vmem %s2, %s297
        %p299 = pneg %p107
        %p300 = pneg %p104
        %p301 = scmp.lt.s32.totalorder %s22, 0
        %s302 = scalar_select %p301, %s22, 0
        %s303 = scalar_lea.vmem %s3, %s302
        %p304 = pneg %p133
        %p305 = pneg %p130
        %p306 = pneg %p161
        %p307 = pneg %p158
        %s308 = smul.u32 10, %s21
        %p309 = scmp.lt.s32.totalorder %s308, 9
        %s310 = scalar_select %p309, %s308, 9
        %p311 = scmp.lt.s32.totalorder %s22, 0
        %s312 = scalar_select %p311, %s22, 0
        %s313 = sadd.s32 %s312, %s310
        %s314 = smul.addr %s313, 8
        %s315 = scalar_lea.vmem %s4, %s314
        %s316 = smul.u32 10, %s21
        %s317 = smul.u32 4, %s23
        %s318 = smul.u32 64, %s23
        %p319 = scmp.lt.s32.totalorder %s318, 511
        %s320 = scalar_select %p319, %s318, 511
        %p321 = scmp.lt.s32.totalorder %s22, 0
        %s322 = scalar_select %p321, %s22, 0
        %s323 = sadd.s32 %s322, %s320
        %s324 = smul.addr %s323, 4
        %s325 = scalar_lea.vmem %s2, %s324
        %s326 = smul.u32 64, %s23
        %p327 = scmp.lt.s32.totalorder %s22, 0
        %s328 = scalar_select %p327, %s22, 0
        %s329 = scalar_lea.vmem %s3, %s328
        %s330 = smul.u32 10, %s21
        %p331 = scmp.lt.s32.totalorder %s330, 9
        %s332 = scalar_select %p331, %s330, 9
        %p333 = scmp.lt.s32.totalorder %s22, 0
        %s334 = scalar_select %p333, %s22, 0
        %s335 = sadd.s32 %s334, %s332
        %s336 = smul.addr %s335, 8
        %s337 = scalar_lea.vmem %s4, %s336
        %s338 = smul.u32 10, %s21
        %p340 = scmp.eq.s32.totalorder %s23, 0
        // Predicated region
        $region60: #{discriminator_forward.49} parent=54 // pred_check
          %p341 = pneg %p340
        $region61: #{discriminator_forward.49} parent=54 // pred_check_branch
          %343 = sbr.rel (%p341) target = $region63
        $region62: #{discriminator_forward.49} parent=54 // pred_region
          %344 = vst [vmem:[#allocation2] sm:$0xff] 0.0
          %345 = vst [vmem:[#allocation2 + $0x8] sm:$0xff] 0.0
          %346 = vst [vmem:[#allocation2 + $0x10] sm:$0xff] 0.0
          %347 = vst [vmem:[#allocation2 + $0x18] sm:$0xff] 0.0
          %348 = vst [vmem:[#allocation2 + $0x20] sm:$0xff] 0.0
          %349 = vst [vmem:[#allocation2 + $0x28] sm:$0xff] 0.0
          %350 = vst [vmem:[#allocation2 + $0x30] sm:$0xff] 0.0
          %351 = vst [vmem:[#allocation2 + $0x38] sm:$0xff] 0.0
          %352 = vst [vmem:[#allocation2 + $0x40] sm:$0xff] 0.0
          %353 = vst [vmem:[#allocation2 + $0x48] sm:$0xff] 0.0
        $region63: #{discriminator_forward.49} parent=54 // pred_fallthru
          _
        %v354 = vld [vmem:[#allocation2] sm:$0xff]
        %v355 = vld [vmem:[#allocation2 + $0x8] sm:$0xff]
        %v356 = vld [vmem:[#allocation2 + $0x10] sm:$0xff]
        %v357 = vld [vmem:[#allocation2 + $0x18] sm:$0xff]
        %v358 = vld [vmem:[#allocation2 + $0x20] sm:$0xff]
        %v359 = vld [vmem:[#allocation2 + $0x28] sm:$0xff]
        %v360 = vld [vmem:[#allocation2 + $0x30] sm:$0xff]
        %v361 = vld [vmem:[#allocation2 + $0x38] sm:$0xff]
        %v362 = vld [vmem:[#allocation2 + $0x40] sm:$0xff]
        %v363 = vld [vmem:[#allocation2 + $0x48] sm:$0xff]
        %v364 = vld [vmem:[%s279] sm:$0xff]
        %v365 = vld [vmem:[%s279 + $0x8] sm:$0xff]
        %v366 = vld [vmem:[%s279 + $0x10] sm:$0xff]
        %v367 = vld [vmem:[%s279 + $0x18] sm:$0xff]
        %v368 = vld [vmem:[%s279 + $0x20] sm:$0xff]
        %v369 = vld [vmem:[%s279 + $0x28] sm:$0xff]
        %v370 = vld [vmem:[%s279 + $0x30] sm:$0xff]
        %v371 = vld [vmem:[%s279 + $0x38] sm:$0xff]
        %v372 = vld [vmem:[%s279 + $0x40] sm:$0xff]
        %v373 = vld [vmem:[%s279 + $0x48] sm:$0xff]
        %v374 = vld [vmem:[%s279 + $0x50] sm:$0xff]
        %v375 = vld [vmem:[%s279 + $0x58] sm:$0xff]
        %v376 = vld [vmem:[%s279 + $0x60] sm:$0xff]
        %v377 = vld [vmem:[%s279 + $0x68] sm:$0xff]
        %v378 = vld [vmem:[%s279 + $0x70] sm:$0xff]
        %v379 = vld [vmem:[%s279 + $0x78] sm:$0xff]
        %v380 = vld [vmem:[%s279 + $0x80] sm:$0xff]
        %v381 = vld [vmem:[%s279 + $0x88] sm:$0xff]
        %v382 = vld [vmem:[%s279 + $0x90] sm:$0xff]
        %v383 = vld [vmem:[%s279 + $0x98] sm:$0xff]
        %v384 = vld [vmem:[%s325] sm:$0xf]
        %v385 = vld [vmem:[%s325 + $0x4] sm:$0xf]
        %v386 = vld [vmem:[%s325 + $0x8] sm:$0xf]
        %v387 = vld [vmem:[%s325 + $0xc] sm:$0xf]
        %v388 = vld [vmem:[%s325 + $0x10] sm:$0xf]
        %v389 = vld [vmem:[%s325 + $0x14] sm:$0xf]
        %v390 = vld [vmem:[%s325 + $0x18] sm:$0xf]
        %v391 = vld [vmem:[%s325 + $0x1c] sm:$0xf]
        %v392 = vld [vmem:[%s325 + $0x20] sm:$0xf]
        %v393 = vld [vmem:[%s325 + $0x24] sm:$0xf]
        %v394 = vld [vmem:[%s325 + $0x28] sm:$0xf]
        %v395 = vld [vmem:[%s325 + $0x2c] sm:$0xf]
        %v396 = vld [vmem:[%s325 + $0x30] sm:$0xf]
        %v397 = vld [vmem:[%s325 + $0x34] sm:$0xf]
        %v398 = vld [vmem:[%s325 + $0x38] sm:$0xf]
        %v399 = vld [vmem:[%s325 + $0x3c] sm:$0xf]
        %v400 = vld [vmem:[%s325 + $0x40] sm:$0xf]
        %v401 = vld [vmem:[%s325 + $0x44] sm:$0xf]
        %v402 = vld [vmem:[%s325 + $0x48] sm:$0xf]
        %v403 = vld [vmem:[%s325 + $0x4c] sm:$0xf]
        %v404 = vld [vmem:[%s325 + $0x50] sm:$0xf]
        %v405 = vld [vmem:[%s325 + $0x54] sm:$0xf]
        %v406 = vld [vmem:[%s325 + $0x58] sm:$0xf]
        %v407 = vld [vmem:[%s325 + $0x5c] sm:$0xf]
        %v408 = vld [vmem:[%s325 + $0x60] sm:$0xf]
        %v409 = vld [vmem:[%s325 + $0x64] sm:$0xf]
        %v410 = vld [vmem:[%s325 + $0x68] sm:$0xf]
        %v411 = vld [vmem:[%s325 + $0x6c] sm:$0xf]
        %v412 = vld [vmem:[%s325 + $0x70] sm:$0xf]
        %v413 = vld [vmem:[%s325 + $0x74] sm:$0xf]
        %v414 = vld [vmem:[%s325 + $0x78] sm:$0xf]
        %v415 = vld [vmem:[%s325 + $0x7c] sm:$0xf]
        %v416 = vld [vmem:[%s325 + $0x80] sm:$0xf]
        %v417 = vld [vmem:[%s325 + $0x84] sm:$0xf]
        %v418 = vld [vmem:[%s325 + $0x88] sm:$0xf]
        %v419 = vld [vmem:[%s325 + $0x8c] sm:$0xf]
        %v420 = vld [vmem:[%s325 + $0x90] sm:$0xf]
        %v421 = vld [vmem:[%s325 + $0x94] sm:$0xf]
        %v422 = vld [vmem:[%s325 + $0x98] sm:$0xf]
        %v423 = vld [vmem:[%s325 + $0x9c] sm:$0xf]
        %v424 = vld [vmem:[%s325 + $0xa0] sm:$0xf]
        %v425 = vld [vmem:[%s325 + $0xa4] sm:$0xf]
        %v426 = vld [vmem:[%s325 + $0xa8] sm:$0xf]
        %v427 = vld [vmem:[%s325 + $0xac] sm:$0xf]
        %v428 = vld [vmem:[%s325 + $0xb0] sm:$0xf]
        %v429 = vld [vmem:[%s325 + $0xb4] sm:$0xf]
        %v430 = vld [vmem:[%s325 + $0xb8] sm:$0xf]
        %v431 = vld [vmem:[%s325 + $0xbc] sm:$0xf]
        %v432 = vld [vmem:[%s325 + $0xc0] sm:$0xf]
        %v433 = vld [vmem:[%s325 + $0xc4] sm:$0xf]
        %v434 = vld [vmem:[%s325 + $0xc8] sm:$0xf]
        %v435 = vld [vmem:[%s325 + $0xcc] sm:$0xf]
        %v436 = vld [vmem:[%s325 + $0xd0] sm:$0xf]
        %v437 = vld [vmem:[%s325 + $0xd4] sm:$0xf]
        %v438 = vld [vmem:[%s325 + $0xd8] sm:$0xf]
        %v439 = vld [vmem:[%s325 + $0xdc] sm:$0xf]
        %v440 = vld [vmem:[%s325 + $0xe0] sm:$0xf]
        %v441 = vld [vmem:[%s325 + $0xe4] sm:$0xf]
        %v442 = vld [vmem:[%s325 + $0xe8] sm:$0xf]
        %v443 = vld [vmem:[%s325 + $0xec] sm:$0xf]
        %v444 = vld [vmem:[%s325 + $0xf0] sm:$0xf]
        %v445 = vld [vmem:[%s325 + $0xf4] sm:$0xf]
        %v446 = vld [vmem:[%s325 + $0xf8] sm:$0xf]
        %v447 = vld [vmem:[%s325 + $0xfc] sm:$0xf]
        %v468 = vunpack.c.l.b16 %v364
        %v469 = vunpack.c.h.b16 %v364
        %v470 = vunpack.c.l.b16 %v365
        %v471 = vunpack.c.h.b16 %v365
        %v472 = vunpack.c.l.b16 %v366
        %v473 = vunpack.c.h.b16 %v366
        %v474 = vunpack.c.l.b16 %v367
        %v475 = vunpack.c.h.b16 %v367
        %v476 = vunpack.c.l.b16 %v368
        %v477 = vunpack.c.h.b16 %v368
        %v478 = vunpack.c.l.b16 %v369
        %v479 = vunpack.c.h.b16 %v369
        %v480 = vunpack.c.l.b16 %v370
        %v481 = vunpack.c.h.b16 %v370
        %v482 = vunpack.c.l.b16 %v371
        %v483 = vunpack.c.h.b16 %v371
        %v484 = vunpack.c.l.b16 %v372
        %v485 = vunpack.c.h.b16 %v372
        %v486 = vunpack.c.l.b16 %v373
        %v487 = vunpack.c.h.b16 %v373
        %v488 = vunpack.c.l.b16 %v374
        %v489 = vunpack.c.h.b16 %v374
        %v490 = vunpack.c.l.b16 %v375
        %v491 = vunpack.c.h.b16 %v375
        %v492 = vunpack.c.l.b16 %v376
        %v493 = vunpack.c.h.b16 %v376
        %v494 = vunpack.c.l.b16 %v377
        %v495 = vunpack.c.h.b16 %v377
        %v496 = vunpack.c.l.b16 %v378
        %v497 = vunpack.c.h.b16 %v378
        %v498 = vunpack.c.l.b16 %v379
        %v499 = vunpack.c.h.b16 %v379
        %v500 = vunpack.c.l.b16 %v380
        %v501 = vunpack.c.h.b16 %v380
        %v502 = vunpack.c.l.b16 %v381
        %v503 = vunpack.c.h.b16 %v381
        %v504 = vunpack.c.l.b16 %v382
        %v505 = vunpack.c.h.b16 %v382
        %v506 = vunpack.c.l.b16 %v383
        %v507 = vunpack.c.h.b16 %v383
        %v508 = vpack.c.b16 %v472, %v468
        %v509 = vpack.c.b16 %v473, %v469
        %v510 = vpack.c.b16 %v474, %v470
        %v511 = vpack.c.b16 %v475, %v471
        %v512 = vpack.c.b16 %v480, %v476
        %v513 = vpack.c.b16 %v481, %v477
        %v514 = vpack.c.b16 %v482, %v478
        %v515 = vpack.c.b16 %v483, %v479
        %v516 = vpack.c.b16 %v488, %v484
        %v517 = vpack.c.b16 %v489, %v485
        %v518 = vpack.c.b16 %v490, %v486
        %v519 = vpack.c.b16 %v491, %v487
        %v520 = vpack.c.b16 %v496, %v492
        %v521 = vpack.c.b16 %v497, %v493
        %v522 = vpack.c.b16 %v498, %v494
        %v523 = vpack.c.b16 %v499, %v495
        %v524 = vpack.c.b16 %v504, %v500
        %v525 = vpack.c.b16 %v505, %v501
        %v526 = vpack.c.b16 %v506, %v502
        %v527 = vpack.c.b16 %v507, %v503
        %v612 = vunpack.c.l.b16 %v384
        %v613 = vunpack.c.l.b16 %v385
        %v614 = vunpack.c.l.b16 %v386
        %v615 = vunpack.c.l.b16 %v387
        %v616 = vunpack.c.l.b16 %v388
        %v617 = vunpack.c.l.b16 %v389
        %v618 = vunpack.c.l.b16 %v390
        %v619 = vunpack.c.l.b16 %v391
        %v620 = vunpack.c.l.b16 %v392
        %v621 = vunpack.c.l.b16 %v393
        %v622 = vunpack.c.l.b16 %v394
        %v623 = vunpack.c.l.b16 %v395
        %v624 = vunpack.c.l.b16 %v396
        %v625 = vunpack.c.l.b16 %v397
        %v626 = vunpack.c.l.b16 %v398
        %v627 = vunpack.c.l.b16 %v399
        %v628 = vunpack.c.l.b16 %v400
        %v629 = vunpack.c.l.b16 %v401
        %v630 = vunpack.c.l.b16 %v402
        %v631 = vunpack.c.l.b16 %v403
        %v632 = vunpack.c.l.b16 %v404
        %v633 = vunpack.c.l.b16 %v405
        %v634 = vunpack.c.l.b16 %v406
        %v635 = vunpack.c.l.b16 %v407
        %v636 = vunpack.c.l.b16 %v408
        %v637 = vunpack.c.l.b16 %v409
        %v638 = vunpack.c.l.b16 %v410
        %v639 = vunpack.c.l.b16 %v411
        %v640 = vunpack.c.l.b16 %v412
        %v641 = vunpack.c.l.b16 %v413
        %v642 = vunpack.c.l.b16 %v414
        %v643 = vunpack.c.l.b16 %v415
        %v644 = vunpack.c.l.b16 %v416
        %v645 = vunpack.c.l.b16 %v417
        %v646 = vunpack.c.l.b16 %v418
        %v647 = vunpack.c.l.b16 %v419
        %v648 = vunpack.c.l.b16 %v420
        %v649 = vunpack.c.l.b16 %v421
        %v650 = vunpack.c.l.b16 %v422
        %v651 = vunpack.c.l.b16 %v423
        %v652 = vunpack.c.l.b16 %v424
        %v653 = vunpack.c.l.b16 %v425
        %v654 = vunpack.c.l.b16 %v426
        %v655 = vunpack.c.l.b16 %v427
        %v656 = vunpack.c.l.b16 %v428
        %v657 = vunpack.c.l.b16 %v429
        %v658 = vunpack.c.l.b16 %v430
        %v659 = vunpack.c.l.b16 %v431
        %v660 = vunpack.c.l.b16 %v432
        %v661 = vunpack.c.l.b16 %v433
        %v662 = vunpack.c.l.b16 %v434
        %v663 = vunpack.c.l.b16 %v435
        %v664 = vunpack.c.l.b16 %v436
        %v665 = vunpack.c.l.b16 %v437
        %v666 = vunpack.c.l.b16 %v438
        %v667 = vunpack.c.l.b16 %v439
        %v668 = vunpack.c.l.b16 %v440
        %v669 = vunpack.c.l.b16 %v441
        %v670 = vunpack.c.l.b16 %v442
        %v671 = vunpack.c.l.b16 %v443
        %v672 = vunpack.c.l.b16 %v444
        %v673 = vunpack.c.l.b16 %v445
        %v674 = vunpack.c.l.b16 %v446
        %v675 = vunpack.c.l.b16 %v447
        %v676 = vpack.c.b16 %v613, %v612
        %v677 = vpack.c.b16 %v615, %v614
        %v678 = vpack.c.b16 %v617, %v616
        %v679 = vpack.c.b16 %v619, %v618
        %v680 = vpack.c.b16 %v621, %v620
        %v681 = vpack.c.b16 %v623, %v622
        %v682 = vpack.c.b16 %v625, %v624
        %v683 = vpack.c.b16 %v627, %v626
        %v684 = vpack.c.b16 %v629, %v628
        %v685 = vpack.c.b16 %v631, %v630
        %v686 = vpack.c.b16 %v633, %v632
        %v687 = vpack.c.b16 %v635, %v634
        %v688 = vpack.c.b16 %v637, %v636
        %v689 = vpack.c.b16 %v639, %v638
        %v690 = vpack.c.b16 %v641, %v640
        %v691 = vpack.c.b16 %v643, %v642
        %v692 = vpack.c.b16 %v645, %v644
        %v693 = vpack.c.b16 %v647, %v646
        %v694 = vpack.c.b16 %v649, %v648
        %v695 = vpack.c.b16 %v651, %v650
        %v696 = vpack.c.b16 %v653, %v652
        %v697 = vpack.c.b16 %v655, %v654
        %v698 = vpack.c.b16 %v657, %v656
        %v699 = vpack.c.b16 %v659, %v658
        %v700 = vpack.c.b16 %v661, %v660
        %v701 = vpack.c.b16 %v663, %v662
        %v702 = vpack.c.b16 %v665, %v664
        %v703 = vpack.c.b16 %v667, %v666
        %v704 = vpack.c.b16 %v669, %v668
        %v705 = vpack.c.b16 %v671, %v670
        %v706 = vpack.c.b16 %v673, %v672
        %v707 = vpack.c.b16 %v675, %v674
        %740 = vmatprep.subr.bf16.mxu0 0
        %741 = vmatpush1.bf16.msra.mxu0 %v676
        %742 = vmatprep.subr.bf16.mxu0 0
        %743 = vmatpush1.bf16.msra.mxu0 %v677
        %744 = vmatprep.subr.bf16.mxu0 0
        %745 = vmatpush1.bf16.msra.mxu0 %v678
        %746 = vmatprep.subr.bf16.mxu0 0
        %747 = vmatpush1.bf16.msra.mxu0 %v679
        %748 = vmatprep.subr.bf16.mxu0 0
        %749 = vmatpush1.bf16.msra.mxu0 %v680
        %750 = vmatprep.subr.bf16.mxu0 0
        %751 = vmatpush1.bf16.msra.mxu0 %v681
        %752 = vmatprep.subr.bf16.mxu0 0
        %753 = vmatpush1.bf16.msra.mxu0 %v682
        %754 = vmatprep.subr.bf16.mxu0 0
        %755 = vmatpush1.bf16.msra.mxu0 %v683
        %756 = vmatprep.subr.bf16.mxu0 0
        %757 = vmatpush1.bf16.msra.mxu0 %v684
        %758 = vmatprep.subr.bf16.mxu0 0
        %759 = vmatpush1.bf16.msra.mxu0 %v685
        %760 = vmatprep.subr.bf16.mxu0 0
        %761 = vmatpush1.bf16.msra.mxu0 %v686
        %762 = vmatprep.subr.bf16.mxu0 0
        %763 = vmatpush1.bf16.msra.mxu0 %v687
        %764 = vmatprep.subr.bf16.mxu0 0
        %765 = vmatpush1.bf16.msra.mxu0 %v688
        %766 = vmatprep.subr.bf16.mxu0 0
        %767 = vmatpush1.bf16.msra.mxu0 %v689
        %768 = vmatprep.subr.bf16.mxu0 0
        %769 = vmatpush1.bf16.msra.mxu0 %v690
        %770 = vmatprep.subr.bf16.mxu0 0
        %771 = vmatpush1.bf16.msra.mxu0 %v691
        %772 = vmatprep.mubr.bf16.mxu0 %v509
        %773 = vmatmul.mubr.bf16.gmra.mrb[0].mxu0 %v508
        %v774 = vpop.f32.mrb[0].mxu0
        %v775 = vadd.f32 0.0, %v774
        %v776 = vpop.f32.mrb[0].mxu0
        %v777 = vpop.f32.mrb[0].mxu0
        %v778 = vadd.f32 0.0, %v777
        %v779 = vpop.f32.mrb[0].mxu0
        %780 = vmatprep.mubr.bf16.mxu0 %v513
        %781 = vmatmul.mubr.bf16.gmra.mrb[0].mxu0 %v512
        %v782 = vpop.f32.mrb[0].mxu0
        %v783 = vadd.f32 0.0, %v782
        %v784 = vpop.f32.mrb[0].mxu0
        %v785 = vpop.f32.mrb[0].mxu0
        %v786 = vadd.f32 0.0, %v785
        %v787 = vpop.f32.mrb[0].mxu0
        %788 = vmatprep.mubr.bf16.mxu0 %v517
        %789 = vmatmul.mubr.bf16.gmra.mrb[0].mxu0 %v516
        %v790 = vpop.f32.mrb[0].mxu0
        %v791 = vadd.f32 0.0, %v790
        %v792 = vpop.f32.mrb[0].mxu0
        %v793 = vpop.f32.mrb[0].mxu0
        %v794 = vadd.f32 0.0, %v793
        %v795 = vpop.f32.mrb[0].mxu0
        %796 = vmatprep.mubr.bf16.mxu0 %v521
        %797 = vmatmul.mubr.bf16.gmra.mrb[0].mxu0 %v520
        %v798 = vpop.f32.mrb[0].mxu0
        %v799 = vadd.f32 0.0, %v798
        %v800 = vpop.f32.mrb[0].mxu0
        %v801 = vpop.f32.mrb[0].mxu0
        %v802 = vadd.f32 0.0, %v801
        %v803 = vpop.f32.mrb[0].mxu0
        %804 = vmatprep.mubr.bf16.mxu0 %v525
        %805 = vmatmul.mubr.bf16.gmra.mrb[0].mxu0 %v524
        %v806 = vpop.f32.mrb[0].mxu0
        %v807 = vadd.f32 0.0, %v806
        %v808 = vpop.f32.mrb[0].mxu0
        %v809 = vpop.f32.mrb[0].mxu0
        %v810 = vadd.f32 0.0, %v809
        %v811 = vpop.f32.mrb[0].mxu0
        %812 = vdwg.mxu0
        %813 = vmatprep.subr.bf16.mxu0 0
        %814 = vmatpush1.bf16.msra.mxu0 %v692
        %815 = vmatprep.subr.bf16.mxu0 0
        %816 = vmatpush1.bf16.msra.mxu0 %v693
        %817 = vmatprep.subr.bf16.mxu0 0
        %818 = vmatpush1.bf16.msra.mxu0 %v694
        %819 = vmatprep.subr.bf16.mxu0 0
        %820 = vmatpush1.bf16.msra.mxu0 %v695
        %821 = vmatprep.subr.bf16.mxu0 0
        %822 = vmatpush1.bf16.msra.mxu0 %v696
        %823 = vmatprep.subr.bf16.mxu0 0
        %824 = vmatpush1.bf16.msra.mxu0 %v697
        %825 = vmatprep.subr.bf16.mxu0 0
        %826 = vmatpush1.bf16.msra.mxu0 %v698
        %827 = vmatprep.subr.bf16.mxu0 0
        %828 = vmatpush1.bf16.msra.mxu0 %v699
        %829 = vmatprep.subr.bf16.mxu0 0
        %830 = vmatpush1.bf16.msra.mxu0 %v700
        %831 = vmatprep.subr.bf16.mxu0 0
        %832 = vmatpush1.bf16.msra.mxu0 %v701
        %833 = vmatprep.subr.bf16.mxu0 0
        %834 = vmatpush1.bf16.msra.mxu0 %v702
        %835 = vmatprep.subr.bf16.mxu0 0
        %836 = vmatpush1.bf16.msra.mxu0 %v703
        %837 = vmatprep.subr.bf16.mxu0 0
        %838 = vmatpush1.bf16.msra.mxu0 %v704
        %839 = vmatprep.subr.bf16.mxu0 0
        %840 = vmatpush1.bf16.msra.mxu0 %v705
        %841 = vmatprep.subr.bf16.mxu0 0
        %842 = vmatpush1.bf16.msra.mxu0 %v706
        %843 = vmatprep.subr.bf16.mxu0 0
        %844 = vmatpush1.bf16.msra.mxu0 %v707
        %845 = vmatprep.mubr.bf16.mxu0 %v511
        %846 = vmatmul.mubr.bf16.gmra.mrb[0].mxu0 %v510
        %v847 = vpop.f32.mrb[0].mxu0
        %v848 = vadd.f32 %v775, %v847
        %v849 = vpop.f32.mrb[0].mxu0
        %v850 = vpop.f32.mrb[0].mxu0
        %v851 = vadd.f32 %v778, %v850
        %v852 = vpop.f32.mrb[0].mxu0
        %853 = vmatprep.mubr.bf16.mxu0 %v515
        %854 = vmatmul.mubr.bf16.gmra.mrb[0].mxu0 %v514
        %v855 = vpop.f32.mrb[0].mxu0
        %v856 = vadd.f32 %v783, %v855
        %v857 = vpop.f32.mrb[0].mxu0
        %v858 = vpop.f32.mrb[0].mxu0
        %v859 = vadd.f32 %v786, %v858
        %v860 = vpop.f32.mrb[0].mxu0
        %861 = vmatprep.mubr.bf16.mxu0 %v519
        %862 = vmatmul.mubr.bf16.gmra.mrb[0].mxu0 %v518
        %v863 = vpop.f32.mrb[0].mxu0
        %v864 = vadd.f32 %v791, %v863
        %v865 = vpop.f32.mrb[0].mxu0
        %v866 = vpop.f32.mrb[0].mxu0
        %v867 = vadd.f32 %v794, %v866
        %v868 = vpop.f32.mrb[0].mxu0
        %869 = vmatprep.mubr.bf16.mxu0 %v523
        %870 = vmatmul.mubr.bf16.gmra.mrb[0].mxu0 %v522
        %v871 = vpop.f32.mrb[0].mxu0
        %v872 = vadd.f32 %v799, %v871
        %v873 = vpop.f32.mrb[0].mxu0
        %v874 = vpop.f32.mrb[0].mxu0
        %v875 = vadd.f32 %v802, %v874
        %v876 = vpop.f32.mrb[0].mxu0
        %877 = vmatprep.mubr.bf16.mxu0 %v527
        %878 = vmatmul.mubr.bf16.gmra.mrb[0].mxu0 %v526
        %v879 = vpop.f32.mrb[0].mxu0
        %v880 = vadd.f32 %v807, %v879
        %v881 = vpop.f32.mrb[0].mxu0
        %v882 = vpop.f32.mrb[0].mxu0
        %v883 = vadd.f32 %v810, %v882
        %v884 = vpop.f32.mrb[0].mxu0
        %885 = vdwg.mxu0
        %v886 = vadd.f32 %v354, %v848
        %v887 = vadd.f32 %v355, %v851
        %v888 = vadd.f32 %v356, %v856
        %v889 = vadd.f32 %v357, %v859
        %v890 = vadd.f32 %v358, %v864
        %v891 = vadd.f32 %v359, %v867
        %v892 = vadd.f32 %v360, %v872
        %v893 = vadd.f32 %v361, %v875
        %v894 = vadd.f32 %v362, %v880
        %v895 = vadd.f32 %v363, %v883
        %896 = vst [vmem:[#allocation2] sm:$0xff] %v886
        %897 = vst [vmem:[#allocation2 + $0x8] sm:$0xff] %v887
        %898 = vst [vmem:[#allocation2 + $0x10] sm:$0xff] %v888
        %899 = vst [vmem:[#allocation2 + $0x18] sm:$0xff] %v889
        %900 = vst [vmem:[#allocation2 + $0x20] sm:$0xff] %v890
        %901 = vst [vmem:[#allocation2 + $0x28] sm:$0xff] %v891
        %902 = vst [vmem:[#allocation2 + $0x30] sm:$0xff] %v892
        %903 = vst [vmem:[#allocation2 + $0x38] sm:$0xff] %v893
        %904 = vst [vmem:[#allocation2 + $0x40] sm:$0xff] %v894
        %905 = vst [vmem:[#allocation2 + $0x48] sm:$0xff] %v895
        %p906 = scmp.eq.s32.totalorder %s23, 7
        // Predicated region
        $region64: #{discriminator_forward.49} parent=54 // pred_check
          %p907 = pneg %p906
        $region65: #{discriminator_forward.49} parent=54 // pred_check_branch
          %909 = sbr.rel (%p907) target = $region67
        $region66: #{discriminator_forward.49} parent=54 // pred_region
          %v910 = vld [vmem:[#allocation2] sm:$0xff]
          %v911 = vld [vmem:[#allocation2 + $0x8] sm:$0xff]
          %v912 = vld [vmem:[#allocation2 + $0x10] sm:$0xff]
          %v913 = vld [vmem:[#allocation2 + $0x18] sm:$0xff]
          %v914 = vld [vmem:[#allocation2 + $0x20] sm:$0xff]
          %v915 = vld [vmem:[#allocation2 + $0x28] sm:$0xff]
          %v916 = vld [vmem:[#allocation2 + $0x30] sm:$0xff]
          %v917 = vld [vmem:[#allocation2 + $0x38] sm:$0xff]
          %v918 = vld [vmem:[#allocation2 + $0x40] sm:$0xff]
          %v919 = vld [vmem:[#allocation2 + $0x48] sm:$0xff]
          %s920 = sld [smem:[#allocation3]]
          %v921 = vstv %s920
          %v922 = vmul.f32 %v910, %v921
          %v923 = vmul.f32 %v911, %v921
          %v924 = vmul.f32 %v912, %v921
          %v925 = vmul.f32 %v913, %v921
          %v926 = vmul.f32 %v914, %v921
          %v927 = vmul.f32 %v915, %v921
          %v928 = vmul.f32 %v916, %v921
          %v929 = vmul.f32 %v917, %v921
          %v930 = vmul.f32 %v918, %v921
          %v931 = vmul.f32 %v919, %v921
          %v932 = vld [vmem:[%s329] sm:$0x1]
          %v934 = vlaneseq
          %v935 = vshrl.u32 %v934, 7
          %v936 = vsub.s32 0, %v935
          %v937 = vrot.slane %v932, %v936
          %v939 = vadd.f32 %v922, %v937
          %v940 = vadd.f32 %v923, %v937
          %v941 = vadd.f32 %v924, %v937
          %v942 = vadd.f32 %v925, %v937
          %v943 = vadd.f32 %v926, %v937
          %v944 = vadd.f32 %v927, %v937
          %v945 = vadd.f32 %v928, %v937
          %v946 = vadd.f32 %v929, %v937
          %v947 = vadd.f32 %v930, %v937
          %v948 = vadd.f32 %v931, %v937
          %949 = vst [vmem:[%s337] sm:$0xff] %v939
          %950 = vst [vmem:[%s337 + $0x8] sm:$0xff] %v940
          %951 = vst [vmem:[%s337 + $0x10] sm:$0xff] %v941
          %952 = vst [vmem:[%s337 + $0x18] sm:$0xff] %v942
          %953 = vst [vmem:[%s337 + $0x20] sm:$0xff] %v943
          %954 = vst [vmem:[%s337 + $0x28] sm:$0xff] %v944
          %955 = vst [vmem:[%s337 + $0x30] sm:$0xff] %v945
          %956 = vst [vmem:[%s337 + $0x38] sm:$0xff] %v946
          %957 = vst [vmem:[%s337 + $0x40] sm:$0xff] %v947
          %958 = vst [vmem:[%s337 + $0x48] sm:$0xff] %v948
        $region67: #{discriminator_forward.49} parent=54 // pred_fallthru
          _
        %s959 = smul.u32 10, %s21
        %p960 = scmp.lt.s32.totalorder %s959, 9
        %s961 = scalar_select %p960, %s959, 9
        %p962 = scmp.lt.s32.totalorder %s22, 0
        %s963 = scalar_select %p962, %s22, 0
        %s964 = sadd.s32 %s963, %s961
        %s965 = smul.addr %s964, 8
        %s966 = scalar_lea.vmem %s4, %s965
        // Predicated region
        $region68: #{discriminator_forward.49} parent=54 // pred_check
          %p967 = pneg %p158
        $region69: #{discriminator_forward.49} parent=54 // pred_check_branch
          %969 = sbr.rel (%p967) target = $region71
        $region70: #{discriminator_forward.49} parent=54 // pred_region
          %s970 = smul.u32 10, %s21
        $region71: #{discriminator_forward.49} parent=54 // pred_fallthru
          _
        // Predicated region
        $region72: #{discriminator_forward.49} parent=54 // pred_check
          %p971 = pneg %p158
        $region73: #{discriminator_forward.49} parent=54 // pred_check_branch
          %973 = sbr.rel (%p971) target = $region75
        $region74: #{discriminator_forward.49} parent=54 // pred_region
          %s974 = smul.u32 10, %s21
          %p975 = scmp.lt.s32.totalorder %s974, 9
          %s976 = scalar_select %p975, %s974, 9
          %p977 = scmp.lt.s32.totalorder %s22, 0
          %s978 = scalar_select %p977, %s22, 0
          %s979 = sadd.s32 %s978, %s976
          %s980 = smul.addr %s979, 8
          %s981 = scalar_lea.vmem %s4, %s980
        $region75: #{discriminator_forward.49} parent=54 // pred_fallthru
          _
      $region55: #{discriminator_forward.49} parent=5 // pred_fallthru
        _
      %p982 = scmp.le.s32.totalorder 2, %s11
      // Predicated region
      $region76: #{discriminator_forward.49} parent=5 // pred_check
        %p983 = pneg %p982
      $region77: #{discriminator_forward.49} parent=5 // pred_check_branch
        %985 = sbr.rel (%p983) target = $region79
      $region78: #{discriminator_forward.49} parent=5 // pred_region
        %s986 = ssub.s32 %s11, 2
      $region79: #{discriminator_forward.49} parent=5 // pred_fallthru
        _
    $region6: #{discriminator_forward.49} parent=1 // loop_footer
      %s15 = sadd.s32 1, %s11
    $region7: #{discriminator_forward.49} parent=1 // loop_footer_branch
      %10 = sbr.rel target = $region3
    $region8: #{discriminator_forward.49} parent=1 // loop_exit
      _

</llo_original>
